<compile_context>
chip_gen: v5e
topology: v5e:2x2
jax: 0.10.0
libtpu: 0.0.40
codegen_flags: <defaults>
</compile_context>

<pallas_src>
import functools

import jax
import jax.numpy as jnp
from jax.experimental import pallas as pl
from jax.experimental.pallas import tpu as pltpu


# --------------------------- Pallas kernel ---------------------------------

def bottleneck_kernel(x_ref, w1_ref, b1_ref, w2_ref, b2_ref, o_ref,
                      cols1_ref, cols2_ref, *, add, th):
    _, H, W, C1 = x_ref.shape
    Cm = w1_ref.shape[2]
    C2 = w2_ref.shape[2]
    bf = cols1_ref.dtype

    def im2col_w(a):
        # a: (th, W, Cin) -> (th, W, 3*Cin); channel blocks ordered dw = 0,1,2
        # (left / center / right column of the 3x3 window).
        z = jnp.zeros((a.shape[0], 1, a.shape[2]), a.dtype)
        left = jnp.concatenate([z, a[:, :W - 1, :]], axis=1)     # column w-1
        right = jnp.concatenate([a[:, 1:, :], z], axis=1)        # column w+1
        return jnp.concatenate([left, a, right], axis=-1)

    def conv_rows(cols_ref, w_ref, b_ref, h0):
        # Fused 3x3 conv + bias + SiLU for output rows [h0, h0+th):
        # 3 MXU matmuls, K = 3*Cin, f32 accumulation.
        K = w_ref.shape[1]
        Cout = w_ref.shape[2]
        acc = jnp.zeros((th * W, Cout), jnp.float32)
        for dh in range(3):                                       # major-axis slices
            p = cols_ref[h0 + dh:h0 + dh + th].reshape(th * W, K)
            acc = acc + jnp.dot(p, w_ref[dh],
                                preferred_element_type=jnp.float32)
        y = acc + b_ref[...]
        # SiLU: y * sigmoid(y) = y / (1 + exp(-y)); exp + reciprocal on the EUP.
        return y * pl.reciprocal(1.0 + jnp.exp(-y), approx=True)

    # Zero only the halo rows (cheap, every step => megacore-safe; the interior
    # rows are fully overwritten below).
    cols1_ref[0] = jnp.zeros((W, 3 * C1), bf)
    cols1_ref[H + 1] = jnp.zeros((W, 3 * C1), bf)
    cols2_ref[0] = jnp.zeros((W, 3 * Cm), bf)
    cols2_ref[H + 1] = jnp.zeros((W, 3 * Cm), bf)

    # Stage im2col(x) into cols1 (interior rows 1..H), streamed per row chunk.
    for h0 in range(0, H, th):
        cols1_ref[1 + h0:1 + h0 + th] = im2col_w(x_ref[0, h0:h0 + th])

    # cv1: fused conv + SiLU, result staged as im2col(y1) into cols2.
    for h0 in range(0, H, th):
        y1 = conv_rows(cols1_ref, w1_ref, b1_ref, h0)             # (th*W, Cm) f32
        cols2_ref[1 + h0:1 + h0 + th] = im2col_w(
            y1.astype(bf).reshape(th, W, Cm))

    # cv2: RepVGG-equivalent fused conv + SiLU (+ residual), lane-dense store.
    for h0 in range(0, H, th):
        y2 = conv_rows(cols2_ref, w2_ref, b2_ref, h0)             # (th*W, C2) f32
        if add:                                                   # c1 == c2
            y2 = y2 + x_ref[0, h0:h0 + th].reshape(th * W, C1).astype(jnp.float32)
        o_ref[0, h0:h0 + th] = y2.reshape(th, W, C2).astype(o_ref.dtype)


# --------------------------- host-side wrapper ------------------------------

def to_row_taps(w_oihw):
    """(Cout, Cin, 3, 3) -> (3, 3*Cin, Cout); row dh, channel block order dw=0,1,2."""
    co, ci, kh, kw = w_oihw.shape
    return jnp.transpose(w_oihw, (2, 3, 1, 0)).reshape(kh, kw * ci, co)


def bottleneck_pallas(x_nchw, w1_oihw, b1, w2_oihw, b2, *, add):
    """x: (N, C1, H, W) f32.  w1/w2: BN-fused OIHW 3x3 weights.  b1/b2: biases."""
    N, C1, H, W = x_nchw.shape
    Cm = w1_oihw.shape[0]
    C2 = w2_oihw.shape[0]
    assert w1_oihw.shape == (Cm, C1, 3, 3) and w2_oihw.shape == (C2, Cm, 3, 3)
    if add:
        assert C1 == C2, "residual shortcut requires c1 == c2"
    assert C1 % 128 == 0 and C2 % 128 == 0, \
        "TODO(synk): lane-pad C1/C2 that are not multiples of 128"

    # Lane-pad the hidden width so y1 / cv2 operands are 128-lane dense.
    Cmp = ((Cm + 127) // 128) * 128
    w1p = jnp.pad(w1_oihw, ((0, Cmp - Cm), (0, 0), (0, 0), (0, 0)))
    b1p = jnp.pad(b1, ((0, Cmp - Cm),))
    w2p = jnp.pad(w2_oihw, ((0, 0), (0, Cmp - Cm), (0, 0), (0, 0)))

    w1_rows = to_row_taps(w1p).astype(jnp.bfloat16)               # (3, 3*C1, Cmp)
    w2_rows = to_row_taps(w2p).astype(jnp.bfloat16)               # (3, 3*Cmp, C2)
    b1_row = b1p.reshape(1, Cmp).astype(jnp.float32)
    b2_row = b2.reshape(1, C2).astype(jnp.float32)

    # bf16 activations for the MXU; NHWC so C is the lane dim.  (No HBM pad.)
    x_nhwc = jnp.transpose(x_nchw.astype(jnp.bfloat16), (0, 2, 3, 1))

    # Row-chunk size: th*W ~ 128 rows per matmul (bounds the f32 accumulator).
    th = 1
    for cand in range(1, H + 1):
        if H % cand == 0 and cand * W <= 128:
            th = cand

    kernel = functools.partial(bottleneck_kernel, add=add, th=th)
    out_nhwc = pl.pallas_call(
        kernel,
        out_shape=jax.ShapeDtypeStruct((N, H, W, C2), x_nchw.dtype),
        grid=(N,),
        in_specs=[
            pl.BlockSpec((1, H, W, C1), lambda n: (n, 0, 0, 0)),
            pl.BlockSpec((3, 3 * C1, Cmp), lambda n: (0, 0, 0)),
            pl.BlockSpec((1, Cmp), lambda n: (0, 0)),
            pl.BlockSpec((3, 3 * Cmp, C2), lambda n: (0, 0, 0)),
            pl.BlockSpec((1, C2), lambda n: (0, 0)),
        ],
        out_specs=pl.BlockSpec((1, H, W, C2), lambda n: (n, 0, 0, 0)),
        scratch_shapes=[
            pltpu.VMEM((H + 2, W, 3 * C1), jnp.bfloat16),   # im2col(x)
            pltpu.VMEM((H + 2, W, 3 * Cmp), jnp.bfloat16),  # im2col(y1)
        ],
        compiler_params=pltpu.CompilerParams(
            dimension_semantics=("parallel",),
            vmem_limit_bytes=32 * 1024 * 1024),
    )(x_nhwc, w1_rows, b1_row, w2_rows, b2_row)
    return jnp.transpose(out_nhwc, (0, 3, 1, 2))


# ----------------- host-side parameter fusion (inference BN fold) -----------

def fuse_conv_bn(w_oihw, gamma, beta, mean, var, eps=1e-5):
    """Fold inference-mode BatchNorm into a bias-free conv (RepVGG-style)."""
    scale = gamma / jnp.sqrt(var + eps)
    return w_oihw * scale[:, None, None, None], beta - mean * scale


def fuse_repvgg(w_dense, bn_dense, w_1x1, bn_1x1, bn_identity=None, eps=1e-5):
    """RepVGG.get_equivalent_kernel_bias (groups=1), incl. identity BN branch."""
    kd, bd = fuse_conv_bn(w_dense, *bn_dense, eps=eps)
    k1, bb1 = fuse_conv_bn(w_1x1, *bn_1x1, eps=eps)
    k = kd + jnp.pad(k1, ((0, 0), (0, 0), (1, 1), (1, 1)))
    b = bd + bb1
    if bn_identity is not None:                      # only when cin == cout
        cout, cin = w_dense.shape[:2]
        eye = jnp.zeros((cout, cin, 3, 3), w_dense.dtype)
        eye = eye.at[jnp.arange(cout), jnp.arange(cout) % cin, 1, 1].set(1.0)
        kid, bid = fuse_conv_bn(eye, *bn_identity, eps=eps)
        k, b = k + kid, b + bid
    return k, b


# ----------------- pure-JAX references (mirror the PyTorch forward) ---------

def _conv2d(x, w, pad):
    return jax.lax.conv_general_dilated(
        x, w, (1, 1), ((pad, pad), (pad, pad)),
        dimension_numbers=("NCHW", "OIHW", "NCHW"),
        precision=jax.lax.Precision.HIGHEST)


def _silu(z):
    return z * jax.nn.sigmoid(z)


def bottleneck_ref_unfused(x, p):
    def bn(z, g, b, m, v, eps=1e-5):
        s = g / jnp.sqrt(v + eps)
        return (z - m[None, :, None, None]) * s[None, :, None, None] \
            + b[None, :, None, None]
    y1 = _silu(bn(_conv2d(x, p["w_cv1"], 1), *p["bn_cv1"]))          # cv1
    yd = bn(_conv2d(y1, p["w_dense"], 1), *p["bn_dense"])            # rbr_dense
    y11 = bn(_conv2d(y1, p["w_1x1"], 0), *p["bn_1x1"])               # rbr_1x1
    yid = bn(y1, *p["bn_id"]) if p.get("bn_id") is not None else 0.0
    y2 = _silu(yd + y11 + yid)                                       # se=Identity
    return x + y2 if p["add"] else y2


def bottleneck_ref_fused(x, w1, b1, w2, b2, add):
    y1 = _silu(_conv2d(x, w1, 1) + b1[None, :, None, None])
    y2 = _silu(_conv2d(y1, w2, 1) + b2[None, :, None, None])
    return x + y2 if add else y2


# --------------------------------- demo -------------------------------------

if __name__ == "__main__":
    key = jax.random.PRNGKey(0)
    N, C1, C2, H, W = 2, 128, 128, 16, 16      # c1 == c2 -> residual path
    e = 0.5
    Cm = int(C2 * e)                           # 64 (lane-padded to 128 inside)
    shortcut = True
    add = shortcut and (C1 == C2)

    ks = jax.random.split(key, 8)
    x = jax.random.normal(ks[0], (N, C1, H, W), jnp.float32)

    def bn_params(k, c):
        k1, k2, k3, k4 = jax.random.split(k, 4)
        return (1.0 + 0.1 * jax.random.normal(k1, (c,), jnp.float32),          # gamma
                0.1 * jax.random.normal(k2, (c,), jnp.float32),                # beta
                0.1 * jax.random.normal(k3, (c,), jnp.float32),                # mean
                1.0 + 0.1 * jnp.abs(jax.random.normal(k4, (c,), jnp.float32)))  # var

    w_cv1 = 0.05 * jax.random.normal(ks[1], (Cm, C1, 3, 3), jnp.float32)
    bn_cv1 = bn_params(ks[2], Cm)
    w_dense = 0.05 * jax.random.normal(ks[3], (C2, Cm, 3, 3), jnp.float32)
    bn_dense = bn_params(ks[4], C2)
    w_1x1 = 0.05 * jax.random.normal(ks[5], (C2, Cm, 1, 1), jnp.float32)
    bn_1x1 = bn_params(ks[6], C2)
    bn_id = None          # Bottleneck default e=0.5 -> Cm != C2 -> rbr_identity=None

    # Host-side fusion (BN fold + RepVGG reparameterization).
    w1f, b1f = fuse_conv_bn(w_cv1, *bn_cv1)
    w2f, b2f = fuse_repvgg(w_dense, bn_dense, w_1x1, bn_1x1, bn_id)

    # 1) fusion algebra check (pure f32): fused forward == PyTorch-structured forward
    ref_unfused = bottleneck_ref_unfused(
        x, dict(w_cv1=w_cv1, bn_cv1=bn_cv1, w_dense=w_dense, bn_dense=bn_dense,
                w_1x1=w_1x1, bn_1x1=bn_1x1, bn_id=bn_id, add=add))
    ref_fused_f32 = bottleneck_ref_fused(x, w1f, b1f, w2f, b2f, add)
    assert jnp.allclose(ref_fused_f32, ref_unfused, atol=1e-3, rtol=1e-3), \
        float(jnp.max(jnp.abs(ref_fused_f32 - ref_unfused)))

    # 2) Pallas kernel (bf16 MXU operands are a deliberate precision trade-off;
    #    validate against a reference fed the SAME bf16-rounded values).
    out = bottleneck_pallas(x, w1f, b1f, w2f, b2f, add=add)
    jax.block_until_ready(out)
    assert out.shape == x.shape and out.dtype == x.dtype

    q = lambda a: a.astype(jnp.bfloat16).astype(jnp.float32)
    ref_q = bottleneck_ref_fused(q(x), q(w1f), b1f, q(w2f), b2f, add)
    err = float(jnp.max(jnp.abs(out - ref_q)))
    assert err < 5e-2, err

    print("KERNEL_OK")
</pallas_src>

<mosaic_0001>
module attributes {stable_mosaic.version = 11 : i64} {
  func.func @bottleneck_kernel(%arg0: i32, %arg1: memref<1x16x16x128xbf16, #tpu.memory_space<vmem>>, %arg2: memref<3x384x128xbf16, #tpu.memory_space<vmem>>, %arg3: memref<1x128xf32, #tpu.memory_space<vmem>>, %arg4: memref<3x384x128xbf16, #tpu.memory_space<vmem>>, %arg5: memref<1x128xf32, #tpu.memory_space<vmem>>, %arg6: memref<1x16x16x128xf32, #tpu.memory_space<vmem>>, %arg7: memref<18x16x384xbf16, #tpu.memory_space<vmem>>, %arg8: memref<18x16x384xbf16, #tpu.memory_space<vmem>>) attributes {dimension_semantics = [#tpu.dimension_semantics<parallel>], iteration_bounds = array<i64: 2>, scalar_prefetch = 0 : i64, scratch_operands = 2 : i64, tpu.core_type = #tpu.core_type<tc>, window_params = [{transform_indices = @transform_0, window_bounds = array<i64: 1, 16, 16, 128>}, {pipeline_mode = #tpu.pipeline_mode<synchronous>, transform_indices = @transform_1, window_bounds = array<i64: 3, 384, 128>}, {pipeline_mode = #tpu.pipeline_mode<synchronous>, transform_indices = @transform_2, window_bounds = array<i64: 1, 128>}, {pipeline_mode = #tpu.pipeline_mode<synchronous>, transform_indices = @transform_3, window_bounds = array<i64: 3, 384, 128>}, {pipeline_mode = #tpu.pipeline_mode<synchronous>, transform_indices = @transform_4, window_bounds = array<i64: 1, 128>}, {transform_indices = @transform_5, window_bounds = array<i64: 1, 16, 16, 128>}]} {
    %cst = arith.constant 0.000000e+00 : bf16
    %0 = vector.broadcast %cst : bf16 to vector<16x384xbf16>
    %c0 = arith.constant 0 : index
    %c0_0 = arith.constant 0 : index
    %c0_1 = arith.constant 0 : index
    %1 = vector.load %arg7[%c0, %c0_0, %c0_1] : memref<18x16x384xbf16, #tpu.memory_space<vmem>>, vector<1x16x384xbf16>
    %2 = vector.shape_cast %1 : vector<1x16x384xbf16> to vector<16x384xbf16>
    %3 = vector.shape_cast %0 : vector<16x384xbf16> to vector<1x16x384xbf16>
    tpu.vector_store %arg7[%c0, %c0_0, %c0_1], %3 {strides = array<i32>} : memref<18x16x384xbf16, #tpu.memory_space<vmem>>, vector<1x16x384xbf16>,
    %cst_2 = arith.constant 0.000000e+00 : bf16
    %4 = vector.broadcast %cst_2 : bf16 to vector<16x384xbf16>
    %c17 = arith.constant 17 : index
    %c0_3 = arith.constant 0 : index
    %c0_4 = arith.constant 0 : index
    %5 = vector.load %arg7[%c17, %c0_3, %c0_4] : memref<18x16x384xbf16, #tpu.memory_space<vmem>>, vector<1x16x384xbf16>
    %6 = vector.shape_cast %5 : vector<1x16x384xbf16> to vector<16x384xbf16>
    %7 = vector.shape_cast %4 : vector<16x384xbf16> to vector<1x16x384xbf16>
    tpu.vector_store %arg7[%c17, %c0_3, %c0_4], %7 {strides = array<i32>} : memref<18x16x384xbf16, #tpu.memory_space<vmem>>, vector<1x16x384xbf16>,
    %cst_5 = arith.constant 0.000000e+00 : bf16
    %8 = vector.broadcast %cst_5 : bf16 to vector<16x384xbf16>
    %c0_6 = arith.constant 0 : index
    %c0_7 = arith.constant 0 : index
    %c0_8 = arith.constant 0 : index
    %9 = vector.load %arg8[%c0_6, %c0_7, %c0_8] : memref<18x16x384xbf16, #tpu.memory_space<vmem>>, vector<1x16x384xbf16>
    %10 = vector.shape_cast %9 : vector<1x16x384xbf16> to vector<16x384xbf16>
    %11 = vector.shape_cast %8 : vector<16x384xbf16> to vector<1x16x384xbf16>
    tpu.vector_store %arg8[%c0_6, %c0_7, %c0_8], %11 {strides = array<i32>} : memref<18x16x384xbf16, #tpu.memory_space<vmem>>, vector<1x16x384xbf16>,
    %cst_9 = arith.constant 0.000000e+00 : bf16
    %12 = vector.broadcast %cst_9 : bf16 to vector<16x384xbf16>
    %c17_10 = arith.constant 17 : index
    %c0_11 = arith.constant 0 : index
    %c0_12 = arith.constant 0 : index
    %13 = vector.load %arg8[%c17_10, %c0_11, %c0_12] : memref<18x16x384xbf16, #tpu.memory_space<vmem>>, vector<1x16x384xbf16>
    %14 = vector.shape_cast %13 : vector<1x16x384xbf16> to vector<16x384xbf16>
    %15 = vector.shape_cast %12 : vector<16x384xbf16> to vector<1x16x384xbf16>
    tpu.vector_store %arg8[%c17_10, %c0_11, %c0_12], %15 {strides = array<i32>} : memref<18x16x384xbf16, #tpu.memory_space<vmem>>, vector<1x16x384xbf16>,
    %c0_13 = arith.constant 0 : index
    %c0_14 = arith.constant 0 : index
    %c0_15 = arith.constant 0 : index
    %c0_16 = arith.constant 0 : index
    %16 = vector.load %arg1[%c0_13, %c0_14, %c0_15, %c0_16] : memref<1x16x16x128xbf16, #tpu.memory_space<vmem>>, vector<1x8x16x128xbf16>
    %17 = vector.shape_cast %16 : vector<1x8x16x128xbf16> to vector<8x16x128xbf16>
    %cst_17 = arith.constant 0.000000e+00 : bf16
    %18 = vector.broadcast %cst_17 : bf16 to vector<8x1x128xbf16>
    %19 = vector.extract_strided_slice %17 {offsets = [0, 0, 0], sizes = [8, 15, 128], strides = [1, 1, 1]} : vector<8x16x128xbf16> to vector<8x15x128xbf16>
    %20 = tpu.concatenate %18, %19 in 1 : vector<8x1x128xbf16>, vector<8x15x128xbf16> -> vector<8x16x128xbf16>
    %21 = vector.extract_strided_slice %17 {offsets = [0, 1, 0], sizes = [8, 15, 128], strides = [1, 1, 1]} : vector<8x16x128xbf16> to vector<8x15x128xbf16>
    %22 = tpu.concatenate %21, %18 in 1 : vector<8x15x128xbf16>, vector<8x1x128xbf16> -> vector<8x16x128xbf16>
    %23 = tpu.concatenate %20, %17, %22 in 2 : vector<8x16x128xbf16>, vector<8x16x128xbf16>, vector<8x16x128xbf16> -> vector<8x16x384xbf16>
    %c1 = arith.constant 1 : index
    %c0_18 = arith.constant 0 : index
    %c0_19 = arith.constant 0 : index
    %24 = vector.load %arg7[%c1, %c0_18, %c0_19] : memref<18x16x384xbf16, #tpu.memory_space<vmem>>, vector<8x16x384xbf16>
    tpu.vector_store %arg7[%c1, %c0_18, %c0_19], %23 {strides = array<i32>} : memref<18x16x384xbf16, #tpu.memory_space<vmem>>, vector<8x16x384xbf16>,
    %c0_20 = arith.constant 0 : index
    %c8 = arith.constant 8 : index
    %c0_21 = arith.constant 0 : index
    %c0_22 = arith.constant 0 : index
    %25 = vector.load %arg1[%c0_20, %c8, %c0_21, %c0_22] : memref<1x16x16x128xbf16, #tpu.memory_space<vmem>>, vector<1x8x16x128xbf16>
    %26 = vector.shape_cast %25 : vector<1x8x16x128xbf16> to vector<8x16x128xbf16>
    %cst_23 = arith.constant 0.000000e+00 : bf16
    %27 = vector.broadcast %cst_23 : bf16 to vector<8x1x128xbf16>
    %28 = vector.extract_strided_slice %26 {offsets = [0, 0, 0], sizes = [8, 15, 128], strides = [1, 1, 1]} : vector<8x16x128xbf16> to vector<8x15x128xbf16>
    %29 = tpu.concatenate %27, %28 in 1 : vector<8x1x128xbf16>, vector<8x15x128xbf16> -> vector<8x16x128xbf16>
    %30 = vector.extract_strided_slice %26 {offsets = [0, 1, 0], sizes = [8, 15, 128], strides = [1, 1, 1]} : vector<8x16x128xbf16> to vector<8x15x128xbf16>
    %31 = tpu.concatenate %30, %27 in 1 : vector<8x15x128xbf16>, vector<8x1x128xbf16> -> vector<8x16x128xbf16>
    %32 = tpu.concatenate %29, %26, %31 in 2 : vector<8x16x128xbf16>, vector<8x16x128xbf16>, vector<8x16x128xbf16> -> vector<8x16x384xbf16>
    %c9 = arith.constant 9 : index
    %c0_24 = arith.constant 0 : index
    %c0_25 = arith.constant 0 : index
    %33 = vector.load %arg7[%c9, %c0_24, %c0_25] : memref<18x16x384xbf16, #tpu.memory_space<vmem>>, vector<8x16x384xbf16>
    tpu.vector_store %arg7[%c9, %c0_24, %c0_25], %32 {strides = array<i32>} : memref<18x16x384xbf16, #tpu.memory_space<vmem>>, vector<8x16x384xbf16>,
    %cst_26 = arith.constant 0.000000e+00 : f32
    %34 = vector.broadcast %cst_26 : f32 to vector<128x128xf32>
    %c0_27 = arith.constant 0 : index
    %c0_28 = arith.constant 0 : index
    %c0_29 = arith.constant 0 : index
    %35 = vector.load %arg7[%c0_27, %c0_28, %c0_29] : memref<18x16x384xbf16, #tpu.memory_space<vmem>>, vector<8x16x384xbf16>
    %36 = vector.shape_cast %35 : vector<8x16x384xbf16> to vector<128x384xbf16>
    %c0_30 = arith.constant 0 : index
    %c0_31 = arith.constant 0 : index
    %c0_32 = arith.constant 0 : index
    %37 = vector.load %arg2[%c0_30, %c0_31, %c0_32] : memref<3x384x128xbf16, #tpu.memory_space<vmem>>, vector<1x384x128xbf16>
    %38 = vector.shape_cast %37 : vector<1x384x128xbf16> to vector<384x128xbf16>
    %cst_33 = arith.constant dense<0.000000e+00> : vector<128x128xf32>
    %39 = tpu.matmul %36, %38, %cst_33 {dimension_numbers = #tpu.dot_dimension_numbers<[1], [0], [0], [1], [0, 0, 1, 1], [], []>} : vector<128x384xbf16>, vector<384x128xbf16>, vector<128x128xf32> -> vector<128x128xf32>
    %40 = arith.addf %34, %39 : vector<128x128xf32>
    %c1_34 = arith.constant 1 : index
    %c0_35 = arith.constant 0 : index
    %c0_36 = arith.constant 0 : index
    %41 = vector.load %arg7[%c1_34, %c0_35, %c0_36] : memref<18x16x384xbf16, #tpu.memory_space<vmem>>, vector<8x16x384xbf16>
    %42 = vector.shape_cast %41 : vector<8x16x384xbf16> to vector<128x384xbf16>
    %c1_37 = arith.constant 1 : index
    %c0_38 = arith.constant 0 : index
    %c0_39 = arith.constant 0 : index
    %43 = vector.load %arg2[%c1_37, %c0_38, %c0_39] : memref<3x384x128xbf16, #tpu.memory_space<vmem>>, vector<1x384x128xbf16>
    %44 = vector.shape_cast %43 : vector<1x384x128xbf16> to vector<384x128xbf16>
    %cst_40 = arith.constant dense<0.000000e+00> : vector<128x128xf32>
    %45 = tpu.matmul %42, %44, %cst_40 {dimension_numbers = #tpu.dot_dimension_numbers<[1], [0], [0], [1], [0, 0, 1, 1], [], []>} : vector<128x384xbf16>, vector<384x128xbf16>, vector<128x128xf32> -> vector<128x128xf32>
    %46 = arith.addf %40, %45 : vector<128x128xf32>
    %c2 = arith.constant 2 : index
    %c0_41 = arith.constant 0 : index
    %c0_42 = arith.constant 0 : index
    %47 = vector.load %arg7[%c2, %c0_41, %c0_42] : memref<18x16x384xbf16, #tpu.memory_space<vmem>>, vector<8x16x384xbf16>
    %48 = vector.shape_cast %47 : vector<8x16x384xbf16> to vector<128x384xbf16>
    %c2_43 = arith.constant 2 : index
    %c0_44 = arith.constant 0 : index
    %c0_45 = arith.constant 0 : index
    %49 = vector.load %arg2[%c2_43, %c0_44, %c0_45] : memref<3x384x128xbf16, #tpu.memory_space<vmem>>, vector<1x384x128xbf16>
    %50 = vector.shape_cast %49 : vector<1x384x128xbf16> to vector<384x128xbf16>
    %cst_46 = arith.constant dense<0.000000e+00> : vector<128x128xf32>
    %51 = tpu.matmul %48, %50, %cst_46 {dimension_numbers = #tpu.dot_dimension_numbers<[1], [0], [0], [1], [0, 0, 1, 1], [], []>} : vector<128x384xbf16>, vector<384x128xbf16>, vector<128x128xf32> -> vector<128x128xf32>
    %52 = arith.addf %46, %51 : vector<128x128xf32>
    %c0_47 = arith.constant 0 : index
    %c0_48 = arith.constant 0 : index
    %53 = vector.load %arg3[%c0_47, %c0_48] : memref<1x128xf32, #tpu.memory_space<vmem>>, vector<1x128xf32>
    %54 = vector.broadcast %53 : vector<1x128xf32> to vector<128x128xf32>
    %55 = arith.addf %52, %54 : vector<128x128xf32>
    %cst_49 = arith.constant 0.000000e+00 : f32
    %56 = vector.broadcast %cst_49 : f32 to vector<128x128xf32>
    %57 = arith.subf %56, %55 : vector<128x128xf32>
    %58 = math.exp %57 : vector<128x128xf32>
    %cst_50 = arith.constant 1.000000e+00 : f32
    %59 = vector.broadcast %cst_50 : f32 to vector<128x128xf32>
    %60 = arith.addf %59, %58 : vector<128x128xf32>
    %61 = tpu.reciprocal %60 {approx = true} : vector<128x128xf32> -> vector<128x128xf32>
    %62 = arith.mulf %55, %61 : vector<128x128xf32>
    %63 = arith.truncf %62 : vector<128x128xf32> to vector<128x128xbf16>
    %64 = vector.shape_cast %63 : vector<128x128xbf16> to vector<8x16x128xbf16>
    %cst_51 = arith.constant 0.000000e+00 : bf16
    %65 = vector.broadcast %cst_51 : bf16 to vector<8x1x128xbf16>
    %66 = vector.extract_strided_slice %64 {offsets = [0, 0, 0], sizes = [8, 15, 128], strides = [1, 1, 1]} : vector<8x16x128xbf16> to vector<8x15x128xbf16>
    %67 = tpu.concatenate %65, %66 in 1 : vector<8x1x128xbf16>, vector<8x15x128xbf16> -> vector<8x16x128xbf16>
    %68 = vector.extract_strided_slice %64 {offsets = [0, 1, 0], sizes = [8, 15, 128], strides = [1, 1, 1]} : vector<8x16x128xbf16> to vector<8x15x128xbf16>
    %69 = tpu.concatenate %68, %65 in 1 : vector<8x15x128xbf16>, vector<8x1x128xbf16> -> vector<8x16x128xbf16>
    %70 = tpu.concatenate %67, %64, %69 in 2 : vector<8x16x128xbf16>, vector<8x16x128xbf16>, vector<8x16x128xbf16> -> vector<8x16x384xbf16>
    %c1_52 = arith.constant 1 : index
    %c0_53 = arith.constant 0 : index
    %c0_54 = arith.constant 0 : index
    %71 = vector.load %arg8[%c1_52, %c0_53, %c0_54] : memref<18x16x384xbf16, #tpu.memory_space<vmem>>, vector<8x16x384xbf16>
    tpu.vector_store %arg8[%c1_52, %c0_53, %c0_54], %70 {strides = array<i32>} : memref<18x16x384xbf16, #tpu.memory_space<vmem>>, vector<8x16x384xbf16>,
    %cst_55 = arith.constant 0.000000e+00 : f32
    %72 = vector.broadcast %cst_55 : f32 to vector<128x128xf32>
    %c8_56 = arith.constant 8 : index
    %c0_57 = arith.constant 0 : index
    %c0_58 = arith.constant 0 : index
    %73 = vector.load %arg7[%c8_56, %c0_57, %c0_58] : memref<18x16x384xbf16, #tpu.memory_space<vmem>>, vector<8x16x384xbf16>
    %74 = vector.shape_cast %73 : vector<8x16x384xbf16> to vector<128x384xbf16>
    %c0_59 = arith.constant 0 : index
    %c0_60 = arith.constant 0 : index
    %c0_61 = arith.constant 0 : index
    %75 = vector.load %arg2[%c0_59, %c0_60, %c0_61] : memref<3x384x128xbf16, #tpu.memory_space<vmem>>, vector<1x384x128xbf16>
    %76 = vector.shape_cast %75 : vector<1x384x128xbf16> to vector<384x128xbf16>
    %cst_62 = arith.constant dense<0.000000e+00> : vector<128x128xf32>
    %77 = tpu.matmul %74, %76, %cst_62 {dimension_numbers = #tpu.dot_dimension_numbers<[1], [0], [0], [1], [0, 0, 1, 1], [], []>} : vector<128x384xbf16>, vector<384x128xbf16>, vector<128x128xf32> -> vector<128x128xf32>
    %78 = arith.addf %72, %77 : vector<128x128xf32>
    %c9_63 = arith.constant 9 : index
    %c0_64 = arith.constant 0 : index
    %c0_65 = arith.constant 0 : index
    %79 = vector.load %arg7[%c9_63, %c0_64, %c0_65] : memref<18x16x384xbf16, #tpu.memory_space<vmem>>, vector<8x16x384xbf16>
    %80 = vector.shape_cast %79 : vector<8x16x384xbf16> to vector<128x384xbf16>
    %c1_66 = arith.constant 1 : index
    %c0_67 = arith.constant 0 : index
    %c0_68 = arith.constant 0 : index
    %81 = vector.load %arg2[%c1_66, %c0_67, %c0_68] : memref<3x384x128xbf16, #tpu.memory_space<vmem>>, vector<1x384x128xbf16>
    %82 = vector.shape_cast %81 : vector<1x384x128xbf16> to vector<384x128xbf16>
    %cst_69 = arith.constant dense<0.000000e+00> : vector<128x128xf32>
    %83 = tpu.matmul %80, %82, %cst_69 {dimension_numbers = #tpu.dot_dimension_numbers<[1], [0], [0], [1], [0, 0, 1, 1], [], []>} : vector<128x384xbf16>, vector<384x128xbf16>, vector<128x128xf32> -> vector<128x128xf32>
    %84 = arith.addf %78, %83 : vector<128x128xf32>
    %c10 = arith.constant 10 : index
    %c0_70 = arith.constant 0 : index
    %c0_71 = arith.constant 0 : index
    %85 = vector.load %arg7[%c10, %c0_70, %c0_71] : memref<18x16x384xbf16, #tpu.memory_space<vmem>>, vector<8x16x384xbf16>
    %86 = vector.shape_cast %85 : vector<8x16x384xbf16> to vector<128x384xbf16>
    %c2_72 = arith.constant 2 : index
    %c0_73 = arith.constant 0 : index
    %c0_74 = arith.constant 0 : index
    %87 = vector.load %arg2[%c2_72, %c0_73, %c0_74] : memref<3x384x128xbf16, #tpu.memory_space<vmem>>, vector<1x384x128xbf16>
    %88 = vector.shape_cast %87 : vector<1x384x128xbf16> to vector<384x128xbf16>
    %cst_75 = arith.constant dense<0.000000e+00> : vector<128x128xf32>
    %89 = tpu.matmul %86, %88, %cst_75 {dimension_numbers = #tpu.dot_dimension_numbers<[1], [0], [0], [1], [0, 0, 1, 1], [], []>} : vector<128x384xbf16>, vector<384x128xbf16>, vector<128x128xf32> -> vector<128x128xf32>
    %90 = arith.addf %84, %89 : vector<128x128xf32>
    %c0_76 = arith.constant 0 : index
    %c0_77 = arith.constant 0 : index
    %91 = vector.load %arg3[%c0_76, %c0_77] : memref<1x128xf32, #tpu.memory_space<vmem>>, vector<1x128xf32>
    %92 = vector.broadcast %91 : vector<1x128xf32> to vector<128x128xf32>
    %93 = arith.addf %90, %92 : vector<128x128xf32>
    %cst_78 = arith.constant 0.000000e+00 : f32
    %94 = vector.broadcast %cst_78 : f32 to vector<128x128xf32>
    %95 = arith.subf %94, %93 : vector<128x128xf32>
    %96 = math.exp %95 : vector<128x128xf32>
    %cst_79 = arith.constant 1.000000e+00 : f32
    %97 = vector.broadcast %cst_79 : f32 to vector<128x128xf32>
    %98 = arith.addf %97, %96 : vector<128x128xf32>
    %99 = tpu.reciprocal %98 {approx = true} : vector<128x128xf32> -> vector<128x128xf32>
    %100 = arith.mulf %93, %99 : vector<128x128xf32>
    %101 = arith.truncf %100 : vector<128x128xf32> to vector<128x128xbf16>
    %102 = vector.shape_cast %101 : vector<128x128xbf16> to vector<8x16x128xbf16>
    %cst_80 = arith.constant 0.000000e+00 : bf16
    %103 = vector.broadcast %cst_80 : bf16 to vector<8x1x128xbf16>
    %104 = vector.extract_strided_slice %102 {offsets = [0, 0, 0], sizes = [8, 15, 128], strides = [1, 1, 1]} : vector<8x16x128xbf16> to vector<8x15x128xbf16>
    %105 = tpu.concatenate %103, %104 in 1 : vector<8x1x128xbf16>, vector<8x15x128xbf16> -> vector<8x16x128xbf16>
    %106 = vector.extract_strided_slice %102 {offsets = [0, 1, 0], sizes = [8, 15, 128], strides = [1, 1, 1]} : vector<8x16x128xbf16> to vector<8x15x128xbf16>
    %107 = tpu.concatenate %106, %103 in 1 : vector<8x15x128xbf16>, vector<8x1x128xbf16> -> vector<8x16x128xbf16>
    %108 = tpu.concatenate %105, %102, %107 in 2 : vector<8x16x128xbf16>, vector<8x16x128xbf16>, vector<8x16x128xbf16> -> vector<8x16x384xbf16>
    %c9_81 = arith.constant 9 : index
    %c0_82 = arith.constant 0 : index
    %c0_83 = arith.constant 0 : index
    %109 = vector.load %arg8[%c9_81, %c0_82, %c0_83] : memref<18x16x384xbf16, #tpu.memory_space<vmem>>, vector<8x16x384xbf16>
    tpu.vector_store %arg8[%c9_81, %c0_82, %c0_83], %108 {strides = array<i32>} : memref<18x16x384xbf16, #tpu.memory_space<vmem>>, vector<8x16x384xbf16>,
    %cst_84 = arith.constant 0.000000e+00 : f32
    %110 = vector.broadcast %cst_84 : f32 to vector<128x128xf32>
    %c0_85 = arith.constant 0 : index
    %c0_86 = arith.constant 0 : index
    %c0_87 = arith.constant 0 : index
    %111 = vector.load %arg8[%c0_85, %c0_86, %c0_87] : memref<18x16x384xbf16, #tpu.memory_space<vmem>>, vector<8x16x384xbf16>
    %112 = vector.shape_cast %111 : vector<8x16x384xbf16> to vector<128x384xbf16>
    %c0_88 = arith.constant 0 : index
    %c0_89 = arith.constant 0 : index
    %c0_90 = arith.constant 0 : index
    %113 = vector.load %arg4[%c0_88, %c0_89, %c0_90] : memref<3x384x128xbf16, #tpu.memory_space<vmem>>, vector<1x384x128xbf16>
    %114 = vector.shape_cast %113 : vector<1x384x128xbf16> to vector<384x128xbf16>
    %cst_91 = arith.constant dense<0.000000e+00> : vector<128x128xf32>
    %115 = tpu.matmul %112, %114, %cst_91 {dimension_numbers = #tpu.dot_dimension_numbers<[1], [0], [0], [1], [0, 0, 1, 1], [], []>} : vector<128x384xbf16>, vector<384x128xbf16>, vector<128x128xf32> -> vector<128x128xf32>
    %116 = arith.addf %110, %115 : vector<128x128xf32>
    %c1_92 = arith.constant 1 : index
    %c0_93 = arith.constant 0 : index
    %c0_94 = arith.constant 0 : index
    %117 = vector.load %arg8[%c1_92, %c0_93, %c0_94] : memref<18x16x384xbf16, #tpu.memory_space<vmem>>, vector<8x16x384xbf16>
    %118 = vector.shape_cast %117 : vector<8x16x384xbf16> to vector<128x384xbf16>
    %c1_95 = arith.constant 1 : index
    %c0_96 = arith.constant 0 : index
    %c0_97 = arith.constant 0 : index
    %119 = vector.load %arg4[%c1_95, %c0_96, %c0_97] : memref<3x384x128xbf16, #tpu.memory_space<vmem>>, vector<1x384x128xbf16>
    %120 = vector.shape_cast %119 : vector<1x384x128xbf16> to vector<384x128xbf16>
    %cst_98 = arith.constant dense<0.000000e+00> : vector<128x128xf32>
    %121 = tpu.matmul %118, %120, %cst_98 {dimension_numbers = #tpu.dot_dimension_numbers<[1], [0], [0], [1], [0, 0, 1, 1], [], []>} : vector<128x384xbf16>, vector<384x128xbf16>, vector<128x128xf32> -> vector<128x128xf32>
    %122 = arith.addf %116, %121 : vector<128x128xf32>
    %c2_99 = arith.constant 2 : index
    %c0_100 = arith.constant 0 : index
    %c0_101 = arith.constant 0 : index
    %123 = vector.load %arg8[%c2_99, %c0_100, %c0_101] : memref<18x16x384xbf16, #tpu.memory_space<vmem>>, vector<8x16x384xbf16>
    %124 = vector.shape_cast %123 : vector<8x16x384xbf16> to vector<128x384xbf16>
    %c2_102 = arith.constant 2 : index
    %c0_103 = arith.constant 0 : index
    %c0_104 = arith.constant 0 : index
    %125 = vector.load %arg4[%c2_102, %c0_103, %c0_104] : memref<3x384x128xbf16, #tpu.memory_space<vmem>>, vector<1x384x128xbf16>
    %126 = vector.shape_cast %125 : vector<1x384x128xbf16> to vector<384x128xbf16>
    %cst_105 = arith.constant dense<0.000000e+00> : vector<128x128xf32>
    %127 = tpu.matmul %124, %126, %cst_105 {dimension_numbers = #tpu.dot_dimension_numbers<[1], [0], [0], [1], [0, 0, 1, 1], [], []>} : vector<128x384xbf16>, vector<384x128xbf16>, vector<128x128xf32> -> vector<128x128xf32>
    %128 = arith.addf %122, %127 : vector<128x128xf32>
    %c0_106 = arith.constant 0 : index
    %c0_107 = arith.constant 0 : index
    %129 = vector.load %arg5[%c0_106, %c0_107] : memref<1x128xf32, #tpu.memory_space<vmem>>, vector<1x128xf32>
    %130 = vector.broadcast %129 : vector<1x128xf32> to vector<128x128xf32>
    %131 = arith.addf %128, %130 : vector<128x128xf32>
    %cst_108 = arith.constant 0.000000e+00 : f32
    %132 = vector.broadcast %cst_108 : f32 to vector<128x128xf32>
    %133 = arith.subf %132, %131 : vector<128x128xf32>
    %134 = math.exp %133 : vector<128x128xf32>
    %cst_109 = arith.constant 1.000000e+00 : f32
    %135 = vector.broadcast %cst_109 : f32 to vector<128x128xf32>
    %136 = arith.addf %135, %134 : vector<128x128xf32>
    %137 = tpu.reciprocal %136 {approx = true} : vector<128x128xf32> -> vector<128x128xf32>
    %138 = arith.mulf %131, %137 : vector<128x128xf32>
    %c0_110 = arith.constant 0 : index
    %c0_111 = arith.constant 0 : index
    %c0_112 = arith.constant 0 : index
    %c0_113 = arith.constant 0 : index
    %139 = vector.load %arg1[%c0_110, %c0_111, %c0_112, %c0_113] : memref<1x16x16x128xbf16, #tpu.memory_space<vmem>>, vector<1x8x16x128xbf16>
    %140 = vector.shape_cast %139 : vector<1x8x16x128xbf16> to vector<8x16x128xbf16>
    %141 = vector.shape_cast %140 : vector<8x16x128xbf16> to vector<128x128xbf16>
    %142 = arith.extf %141 : vector<128x128xbf16> to vector<128x128xf32>
    %143 = arith.addf %138, %142 : vector<128x128xf32>
    %144 = vector.shape_cast %143 : vector<128x128xf32> to vector<8x16x128xf32>
    %c0_114 = arith.constant 0 : index
    %c0_115 = arith.constant 0 : index
    %c0_116 = arith.constant 0 : index
    %c0_117 = arith.constant 0 : index
    %145 = vector.load %arg6[%c0_114, %c0_115, %c0_116, %c0_117] : memref<1x16x16x128xf32, #tpu.memory_space<vmem>>, vector<1x8x16x128xf32>
    %146 = vector.shape_cast %145 : vector<1x8x16x128xf32> to vector<8x16x128xf32>
    %147 = vector.shape_cast %144 : vector<8x16x128xf32> to vector<1x8x16x128xf32>
    tpu.vector_store %arg6[%c0_114, %c0_115, %c0_116, %c0_117], %147 {strides = array<i32>} : memref<1x16x16x128xf32, #tpu.memory_space<vmem>>, vector<1x8x16x128xf32>,
    %cst_118 = arith.constant 0.000000e+00 : f32
    %148 = vector.broadcast %cst_118 : f32 to vector<128x128xf32>
    %c8_119 = arith.constant 8 : index
    %c0_120 = arith.constant 0 : index
    %c0_121 = arith.constant 0 : index
    %149 = vector.load %arg8[%c8_119, %c0_120, %c0_121] : memref<18x16x384xbf16, #tpu.memory_space<vmem>>, vector<8x16x384xbf16>
    %150 = vector.shape_cast %149 : vector<8x16x384xbf16> to vector<128x384xbf16>
    %c0_122 = arith.constant 0 : index
    %c0_123 = arith.constant 0 : index
    %c0_124 = arith.constant 0 : index
    %151 = vector.load %arg4[%c0_122, %c0_123, %c0_124] : memref<3x384x128xbf16, #tpu.memory_space<vmem>>, vector<1x384x128xbf16>
    %152 = vector.shape_cast %151 : vector<1x384x128xbf16> to vector<384x128xbf16>
    %cst_125 = arith.constant dense<0.000000e+00> : vector<128x128xf32>
    %153 = tpu.matmul %150, %152, %cst_125 {dimension_numbers = #tpu.dot_dimension_numbers<[1], [0], [0], [1], [0, 0, 1, 1], [], []>} : vector<128x384xbf16>, vector<384x128xbf16>, vector<128x128xf32> -> vector<128x128xf32>
    %154 = arith.addf %148, %153 : vector<128x128xf32>
    %c9_126 = arith.constant 9 : index
    %c0_127 = arith.constant 0 : index
    %c0_128 = arith.constant 0 : index
    %155 = vector.load %arg8[%c9_126, %c0_127, %c0_128] : memref<18x16x384xbf16, #tpu.memory_space<vmem>>, vector<8x16x384xbf16>
    %156 = vector.shape_cast %155 : vector<8x16x384xbf16> to vector<128x384xbf16>
    %c1_129 = arith.constant 1 : index
    %c0_130 = arith.constant 0 : index
    %c0_131 = arith.constant 0 : index
    %157 = vector.load %arg4[%c1_129, %c0_130, %c0_131] : memref<3x384x128xbf16, #tpu.memory_space<vmem>>, vector<1x384x128xbf16>
    %158 = vector.shape_cast %157 : vector<1x384x128xbf16> to vector<384x128xbf16>
    %cst_132 = arith.constant dense<0.000000e+00> : vector<128x128xf32>
    %159 = tpu.matmul %156, %158, %cst_132 {dimension_numbers = #tpu.dot_dimension_numbers<[1], [0], [0], [1], [0, 0, 1, 1], [], []>} : vector<128x384xbf16>, vector<384x128xbf16>, vector<128x128xf32> -> vector<128x128xf32>
    %160 = arith.addf %154, %159 : vector<128x128xf32>
    %c10_133 = arith.constant 10 : index
    %c0_134 = arith.constant 0 : index
    %c0_135 = arith.constant 0 : index
    %161 = vector.load %arg8[%c10_133, %c0_134, %c0_135] : memref<18x16x384xbf16, #tpu.memory_space<vmem>>, vector<8x16x384xbf16>
    %162 = vector.shape_cast %161 : vector<8x16x384xbf16> to vector<128x384xbf16>
    %c2_136 = arith.constant 2 : index
    %c0_137 = arith.constant 0 : index
    %c0_138 = arith.constant 0 : index
    %163 = vector.load %arg4[%c2_136, %c0_137, %c0_138] : memref<3x384x128xbf16, #tpu.memory_space<vmem>>, vector<1x384x128xbf16>
    %164 = vector.shape_cast %163 : vector<1x384x128xbf16> to vector<384x128xbf16>
    %cst_139 = arith.constant dense<0.000000e+00> : vector<128x128xf32>
    %165 = tpu.matmul %162, %164, %cst_139 {dimension_numbers = #tpu.dot_dimension_numbers<[1], [0], [0], [1], [0, 0, 1, 1], [], []>} : vector<128x384xbf16>, vector<384x128xbf16>, vector<128x128xf32> -> vector<128x128xf32>
    %166 = arith.addf %160, %165 : vector<128x128xf32>
    %c0_140 = arith.constant 0 : index
    %c0_141 = arith.constant 0 : index
    %167 = vector.load %arg5[%c0_140, %c0_141] : memref<1x128xf32, #tpu.memory_space<vmem>>, vector<1x128xf32>
    %168 = vector.broadcast %167 : vector<1x128xf32> to vector<128x128xf32>
    %169 = arith.addf %166, %168 : vector<128x128xf32>
    %cst_142 = arith.constant 0.000000e+00 : f32
    %170 = vector.broadcast %cst_142 : f32 to vector<128x128xf32>
    %171 = arith.subf %170, %169 : vector<128x128xf32>
    %172 = math.exp %171 : vector<128x128xf32>
    %cst_143 = arith.constant 1.000000e+00 : f32
    %173 = vector.broadcast %cst_143 : f32 to vector<128x128xf32>
    %174 = arith.addf %173, %172 : vector<128x128xf32>
    %175 = tpu.reciprocal %174 {approx = true} : vector<128x128xf32> -> vector<128x128xf32>
    %176 = arith.mulf %169, %175 : vector<128x128xf32>
    %c0_144 = arith.constant 0 : index
    %c8_145 = arith.constant 8 : index
    %c0_146 = arith.constant 0 : index
    %c0_147 = arith.constant 0 : index
    %177 = vector.load %arg1[%c0_144, %c8_145, %c0_146, %c0_147] : memref<1x16x16x128xbf16, #tpu.memory_space<vmem>>, vector<1x8x16x128xbf16>
    %178 = vector.shape_cast %177 : vector<1x8x16x128xbf16> to vector<8x16x128xbf16>
    %179 = vector.shape_cast %178 : vector<8x16x128xbf16> to vector<128x128xbf16>
    %180 = arith.extf %179 : vector<128x128xbf16> to vector<128x128xf32>
    %181 = arith.addf %176, %180 : vector<128x128xf32>
    %182 = vector.shape_cast %181 : vector<128x128xf32> to vector<8x16x128xf32>
    %c0_148 = arith.constant 0 : index
    %c8_149 = arith.constant 8 : index
    %c0_150 = arith.constant 0 : index
    %c0_151 = arith.constant 0 : index
    %183 = vector.load %arg6[%c0_148, %c8_149, %c0_150, %c0_151] : memref<1x16x16x128xf32, #tpu.memory_space<vmem>>, vector<1x8x16x128xf32>
    %184 = vector.shape_cast %183 : vector<1x8x16x128xf32> to vector<8x16x128xf32>
    %185 = vector.shape_cast %182 : vector<8x16x128xf32> to vector<1x8x16x128xf32>
    tpu.vector_store %arg6[%c0_148, %c8_149, %c0_150, %c0_151], %185 {strides = array<i32>} : memref<1x16x16x128xf32, #tpu.memory_space<vmem>>, vector<1x8x16x128xf32>,
    return
  }
  func.func @transform_0(%arg0: i32) -> (i32, i32, i32, i32) {
    %c0_i32 = arith.constant 0 : i32
    %c0_i32_0 = arith.constant 0 : i32
    %c0_i32_1 = arith.constant 0 : i32
    %c0_i32_2 = arith.constant 0 : i32
    return %arg0, %c0_i32, %c0_i32_0, %c0_i32_1 : i32, i32, i32, i32
  }
  func.func @transform_1(%arg0: i32) -> (i32, i32, i32) {
    %c0_i32 = arith.constant 0 : i32
    %c0_i32_0 = arith.constant 0 : i32
    %c0_i32_1 = arith.constant 0 : i32
    %c0_i32_2 = arith.constant 0 : i32
    return %c0_i32, %c0_i32_0, %c0_i32_1 : i32, i32, i32
  }
  func.func @transform_2(%arg0: i32) -> (i32, i32) {
    %c0_i32 = arith.constant 0 : i32
    %c0_i32_0 = arith.constant 0 : i32
    %c0_i32_1 = arith.constant 0 : i32
    return %c0_i32, %c0_i32_0 : i32, i32
  }
  func.func @transform_3(%arg0: i32) -> (i32, i32, i32) {
    %c0_i32 = arith.constant 0 : i32
    %c0_i32_0 = arith.constant 0 : i32
    %c0_i32_1 = arith.constant 0 : i32
    %c0_i32_2 = arith.constant 0 : i32
    return %c0_i32, %c0_i32_0, %c0_i32_1 : i32, i32, i32
  }
  func.func @transform_4(%arg0: i32) -> (i32, i32) {
    %c0_i32 = arith.constant 0 : i32
    %c0_i32_0 = arith.constant 0 : i32
    %c0_i32_1 = arith.constant 0 : i32
    return %c0_i32, %c0_i32_0 : i32, i32
  }
  func.func @transform_5(%arg0: i32) -> (i32, i32, i32, i32) {
    %c0_i32 = arith.constant 0 : i32
    %c0_i32_0 = arith.constant 0 : i32
    %c0_i32_1 = arith.constant 0 : i32
    %c0_i32_2 = arith.constant 0 : i32
    return %arg0, %c0_i32, %c0_i32_0, %c0_i32_1 : i32, i32, i32, i32
  }
}

</mosaic_0001>

<llo_original>
// kernel: tpu_custom_call.1
$region0: #{tpu_custom_call.1}
  #allocation0 [shape = 'u32[]', space=smem, size = 0x4, offset = 0x4, fixed_abs, tag = 'smem constant byte address 0x4 - core index']
  #allocation1 [shape = 'u32[72,128]{1,0:T(1,128)}', space=vmem, size = 0x9000, scoped, tag = 'internal scratch']
  #allocation2 [shape = 'bf16[18,16,384]{2,1,0:T(8,128)(2,1)}', space=vmem, size = 0x36000, scoped, tag = 'scratch operand']
  #allocation3 [shape = 'bf16[18,16,384]{2,1,0:T(8,128)(2,1)}', space=vmem, size = 0x36000, scoped, tag = 'scratch operand']
  %s0 = inlined_call_operand.hbm [shape: bf16[2,16,16,128], index: 0, kind: input, shape index: {}]
  %s1 = inlined_call_operand.hbm [shape: bf16[3,384,128], index: 1, kind: input, shape index: {}]
  %s2 = inlined_call_operand.vmem [shape: f32[1,128], index: 2, kind: input, shape index: {}]
  %s3 = inlined_call_operand.hbm [shape: bf16[3,384,128], index: 3, kind: input, shape index: {}]
  %s4 = inlined_call_operand.vmem [shape: f32[1,128], index: 4, kind: input, shape index: {}]
  %s5 = inlined_call_operand.hbm [shape: f32[2,16,16,128], index: 5, kind: output, shape index: {}]
  %s6 = sld [smem:[#allocation0]]
  $region65: #{tpu_custom_call.1} parent=0
    _
  %s8 = ssub.s32 1, %s6
  %s9 = scalar_select 0, %s8, %s6
  $region1: #{tpu_custom_call.1} parent=0
    #allocation4 [shape = 'u8[131072]{0}', space=vmem, size = 0x20000, scoped, tag = 'input window, operand 0']
    #allocation5 [shape = 's32[2]{0}', space=sflag, size = 0x8, scoped, tag = 'scoped memory for tpu_custom_call.1']
    #allocation6 [shape = 's32[2]{0}', space=sflag, size = 0x8, scoped, tag = 'scoped memory for tpu_custom_call.1']
    #allocation7 [shape = 'u8[294912]{0}', space=vmem, size = 0x48000, scoped, tag = 'input window, operand 1, single buffered']
    #allocation8 [shape = 's32[1]{0}', space=sflag, size = 0x4, scoped, tag = 'scoped memory for tpu_custom_call.1']
    #allocation9 [shape = 'u8[294912]{0}', space=vmem, size = 0x48000, scoped, tag = 'input window, operand 3, single buffered']
    #allocation10 [shape = 'u8[262144]{0}', space=vmem, size = 0x40000, scoped, tag = 'output window, operand 0']
    %10 = vsyncpa [#allocation5], 0
    %s11 = scalar_lea.sflag [#allocation5], 1
    %12 = vsyncpa %s11, 0
    %13 = vsyncpa [#allocation8], 0
    %14 = vsyncpa [#allocation6], 0
    %s15 = scalar_lea.sflag [#allocation6], 1
    %16 = vsyncpa %s15, 0
    loop: start=0, step=1, limit=4
    $region2: #{tpu_custom_call.1} parent=1 // loop_pre_header
      _
    $region3: #{tpu_custom_call.1} parent=1 // loop_header
      %s18 = sphi 0, %s22
      %p19 = scmp.ge.s32.totalorder %s18, 4
      %s28 = sphi 0, %s30
      %s31 = sphi 0, %s28
      %s32 = sphi 0, %s31
      %s48 = sphi 0, %s32
      %s52 = sphi 0, %s52
      %s54 = sphi 0, %s52
      %s55 = sphi 0, %s54
      %s69 = sphi 0, %s55
      %s73 = sphi 0, %s73
      %s75 = sphi 0, %s73
      %s76 = sphi 0, %s75
      %s90 = sphi 0, %s76
      %s94 = sphi 0, %s94
      %s96 = sphi 0, %s94
      %s97 = sphi 0, %s96
      %s111 = sphi 0, %s97
      %s115 = sphi 0, %s115
      %s117 = sphi 0, %s115
      %s118 = sphi 0, %s117
      %s132 = sphi 0, %s118
      %s138 = sphi 0, %s140
      %s141 = sphi 0, %s138
      %s142 = sphi 0, %s141
      %s158 = sphi 0, %s142
    $region4: #{tpu_custom_call.1} parent=1 // loop_header_branch
      %21 = sbr.rel (%p19) target = $region8
    $region5: #{tpu_custom_call.1} parent=1 // loop_body
      %s23 = ssub.s32 %s18, 1
      %s24 = ssub.s32 %s18, 2
      %s25 = sadd.s32 %s18, 1
      %s26 = ssub.s32 %s18, %s25
      %p27 = scmp.eq.s32.totalorder %s26, 0
      %s29 = sadd.s32 %s28, 1
      %s30 = scalar_select %p27, %s28, %s29
      %p33 = pneg %p27
      %p34 = scmp.eq.s32.totalorder %s18, 1
      %p35 = por %p33, %p34
      %p36 = scmp.ne.s32.totalorder %s28, %s31
      %p37 = scmp.eq.s32.totalorder %s18, 0
      %p38 = por %p36, %p37
      %p39 = scmp.ne.s32.totalorder %s28, %s31
      %p40 = scmp.eq.s32.totalorder %s23, 1
      %p41 = por %p39, %p40
      %p42 = scmp.ne.s32.totalorder %s31, %s32
      %p43 = scmp.eq.s32.totalorder %s23, 0
      %p44 = por %p42, %p43
      %p45 = scmp.ne.s32.totalorder %s31, %s32
      %p46 = scmp.eq.s32.totalorder %s24, 1
      %p47 = por %p45, %p46
      %p49 = scmp.ne.s32.totalorder %s32, %s48
      %p50 = scmp.eq.s32.totalorder %s24, 0
      %p51 = por %p49, %p50
      %s53 = sadd.s32 %s52, 1
      %p56 = scmp.eq.s32.totalorder %s18, 1
      %p57 = scmp.ne.s32.totalorder %s52, %s54
      %p58 = scmp.eq.s32.totalorder %s18, 0
      %p59 = por %p57, %p58
      %p60 = scmp.ne.s32.totalorder %s52, %s54
      %p61 = scmp.eq.s32.totalorder %s23, 1
      %p62 = por %p60, %p61
      %p63 = scmp.ne.s32.totalorder %s54, %s55
      %p64 = scmp.eq.s32.totalorder %s23, 0
      %p65 = por %p63, %p64
      %p66 = scmp.ne.s32.totalorder %s54, %s55
      %p67 = scmp.eq.s32.totalorder %s24, 1
      %p68 = por %p66, %p67
      %p70 = scmp.ne.s32.totalorder %s55, %s69
      %p71 = scmp.eq.s32.totalorder %s24, 0
      %p72 = por %p70, %p71
      %s74 = sadd.s32 %s73, 1
      %p77 = scmp.eq.s32.totalorder %s18, 1
      %p78 = scmp.ne.s32.totalorder %s73, %s75
      %p79 = scmp.eq.s32.totalorder %s18, 0
      %p80 = por %p78, %p79
      %p81 = scmp.ne.s32.totalorder %s73, %s75
      %p82 = scmp.eq.s32.totalorder %s23, 1
      %p83 = por %p81, %p82
      %p84 = scmp.ne.s32.totalorder %s75, %s76
      %p85 = scmp.eq.s32.totalorder %s23, 0
      %p86 = por %p84, %p85
      %p87 = scmp.ne.s32.totalorder %s75, %s76
      %p88 = scmp.eq.s32.totalorder %s24, 1
      %p89 = por %p87, %p88
      %p91 = scmp.ne.s32.totalorder %s76, %s90
      %p92 = scmp.eq.s32.totalorder %s24, 0
      %p93 = por %p91, %p92
      %s95 = sadd.s32 %s94, 1
      %p98 = scmp.eq.s32.totalorder %s18, 1
      %p99 = scmp.ne.s32.totalorder %s94, %s96
      %p100 = scmp.eq.s32.totalorder %s18, 0
      %p101 = por %p99, %p100
      %p102 = scmp.ne.s32.totalorder %s94, %s96
      %p103 = scmp.eq.s32.totalorder %s23, 1
      %p104 = por %p102, %p103
      %p105 = scmp.ne.s32.totalorder %s96, %s97
      %p106 = scmp.eq.s32.totalorder %s23, 0
      %p107 = por %p105, %p106
      %p108 = scmp.ne.s32.totalorder %s96, %s97
      %p109 = scmp.eq.s32.totalorder %s24, 1
      %p110 = por %p108, %p109
      %p112 = scmp.ne.s32.totalorder %s97, %s111
      %p113 = scmp.eq.s32.totalorder %s24, 0
      %p114 = por %p112, %p113
      %s116 = sadd.s32 %s115, 1
      %p119 = scmp.eq.s32.totalorder %s18, 1
      %p120 = scmp.ne.s32.totalorder %s115, %s117
      %p121 = scmp.eq.s32.totalorder %s18, 0
      %p122 = por %p120, %p121
      %p123 = scmp.ne.s32.totalorder %s115, %s117
      %p124 = scmp.eq.s32.totalorder %s23, 1
      %p125 = por %p123, %p124
      %p126 = scmp.ne.s32.totalorder %s117, %s118
      %p127 = scmp.eq.s32.totalorder %s23, 0
      %p128 = por %p126, %p127
      %p129 = scmp.ne.s32.totalorder %s117, %s118
      %p130 = scmp.eq.s32.totalorder %s24, 1
      %p131 = por %p129, %p130
      %p133 = scmp.ne.s32.totalorder %s118, %s132
      %p134 = scmp.eq.s32.totalorder %s24, 0
      %p135 = por %p133, %p134
      %s136 = ssub.s32 %s18, %s25
      %p137 = scmp.eq.s32.totalorder %s136, 0
      %s139 = sadd.s32 %s138, 1
      %s140 = scalar_select %p137, %s138, %s139
      %p143 = pneg %p137
      %p144 = scmp.eq.s32.totalorder %s18, 1
      %p145 = por %p143, %p144
      %p146 = scmp.ne.s32.totalorder %s138, %s141
      %p147 = scmp.eq.s32.totalorder %s18, 0
      %p148 = por %p146, %p147
      %p149 = scmp.ne.s32.totalorder %s138, %s141
      %p150 = scmp.eq.s32.totalorder %s23, 1
      %p151 = por %p149, %p150
      %p152 = scmp.ne.s32.totalorder %s141, %s142
      %p153 = scmp.eq.s32.totalorder %s23, 0
      %p154 = por %p152, %p153
      %p155 = scmp.ne.s32.totalorder %s141, %s142
      %p156 = scmp.eq.s32.totalorder %s24, 1
      %p157 = por %p155, %p156
      %p159 = scmp.ne.s32.totalorder %s142, %s158
      %p160 = scmp.eq.s32.totalorder %s24, 0
      %p161 = por %p159, %p160
      %p162 = scmp.le.s32.totalorder 1, %s18
      %p163 = scmp.lt.s32.totalorder %s18, 3
      %p164 = pnand %p162, %p163
      %p165 = pneg %p164
      // Predicated region
      $region9: #{tpu_custom_call.1} parent=5 // pred_check
        _
      $region10: #{tpu_custom_call.1} parent=5 // pred_check_branch
        %167 = sbr.rel (%p164) target = $region12
      $region11: #{tpu_custom_call.1} parent=5 // pred_region
        %s168 = ssub.s32 %s18, 1
        // Predicated region
        $region13: #{tpu_custom_call.1} parent=11 // pred_check
          %p169 = pneg %p65
        $region14: #{tpu_custom_call.1} parent=11 // pred_check_branch
          %171 = sbr.rel (%p169) target = $region16
        $region15: #{tpu_custom_call.1} parent=11 // pred_region
          %173 = vsyncadd [#allocation8], 0
          %s174 = sshll.u32 %s1, 4
          %s175 = int_to_ptr.hbm [resolvable:$true] %s174
          %s176 = sshll.u32 [#allocation7], 4
          %s177 = int_to_ptr.vmem [resolvable:$true] %s176
          %182 = dma.hbm_to_vmem [thread:$0]  %s175, 9216, %s177, [#allocation8], 64, 64, 4
        $region16: #{tpu_custom_call.1} parent=11 // pred_fallthru
          _
        // Predicated region
        $region17: #{tpu_custom_call.1} parent=11 // pred_check
          %p183 = pneg %p86
        $region18: #{tpu_custom_call.1} parent=11 // pred_check_branch
          %185 = sbr.rel (%p183) target = $region20
        $region19: #{tpu_custom_call.1} parent=11 // pred_region
          _
        $region20: #{tpu_custom_call.1} parent=11 // pred_fallthru
          _
        // Predicated region
        $region21: #{tpu_custom_call.1} parent=11 // pred_check
          %p186 = pneg %p107
        $region22: #{tpu_custom_call.1} parent=11 // pred_check_branch
          %188 = sbr.rel (%p186) target = $region24
        $region23: #{tpu_custom_call.1} parent=11 // pred_region
          %190 = vsyncadd [#allocation8], 0
          %s191 = sshll.u32 %s3, 4
          %s192 = int_to_ptr.hbm [resolvable:$true] %s191
          %s193 = sshll.u32 [#allocation9], 4
          %s194 = int_to_ptr.vmem [resolvable:$true] %s193
          %199 = dma.hbm_to_vmem [thread:$0]  %s192, 9216, %s194, [#allocation8], 64, 64, 4
        $region24: #{tpu_custom_call.1} parent=11 // pred_fallthru
          _
        // Predicated region
        $region25: #{tpu_custom_call.1} parent=11 // pred_check
          %p200 = pneg %p128
        $region26: #{tpu_custom_call.1} parent=11 // pred_check_branch
          %202 = sbr.rel (%p200) target = $region28
        $region27: #{tpu_custom_call.1} parent=11 // pred_region
          _
        $region28: #{tpu_custom_call.1} parent=11 // pred_fallthru
          _
      $region12: #{tpu_custom_call.1} parent=5 // pred_fallthru
        _
      %p203 = scmp.lt.s32.totalorder %s18, 2
      // Predicated region
      $region29: #{tpu_custom_call.1} parent=5 // pred_check
        %p204 = pneg %p203
      $region30: #{tpu_custom_call.1} parent=5 // pred_check_branch
        %206 = sbr.rel (%p204) target = $region32
      $region31: #{tpu_custom_call.1} parent=5 // pred_region
        // Predicated region
        $region33: #{tpu_custom_call.1} parent=31 // pred_check
          %p207 = pneg %p38
        $region34: #{tpu_custom_call.1} parent=31 // pred_check_branch
          %209 = sbr.rel (%p207) target = $region36
        $region35: #{tpu_custom_call.1} parent=31 // pred_region
          %s210 = sand.u32 %s28, 1
          %s211 = scalar_lea.sflag [#allocation5], %s210
          %s212 = sand.u32 %s28, 1
          %s213 = smul.addr %s212, 128
          %s214 = scalar_lea.vmem [#allocation4], %s213
          %216 = vsyncadd %s211, 0
          %s217 = smul.addr %s18, 32
          %s218 = smul.addr %s217, 4
          %s219 = scalar_lea.hbm %s0, %s218
          %s220 = sshll.u32 %s219, 4
          %s221 = int_to_ptr.hbm [resolvable:$true] %s220
          %s222 = sshll.u32 %s214, 4
          %s223 = int_to_ptr.vmem [resolvable:$true] %s222
          %228 = dma.hbm_to_vmem [thread:$0]  %s221, 2048, %s223, %s211, 64, 64, 4
        $region36: #{tpu_custom_call.1} parent=31 // pred_fallthru
          _
      $region32: #{tpu_custom_call.1} parent=5 // pred_fallthru
        _
      %p229 = scmp.le.s32.totalorder 1, %s18
      %p230 = scmp.lt.s32.totalorder %s18, 3
      %p231 = pnand %p229, %p230
      %p232 = pneg %p231
      // Predicated region
      $region37: #{tpu_custom_call.1} parent=5 // pred_check
        _
      $region38: #{tpu_custom_call.1} parent=5 // pred_check_branch
        %234 = sbr.rel (%p231) target = $region40
      $region39: #{tpu_custom_call.1} parent=5 // pred_region
        %s235 = ssub.s32 %s18, 1
        %s236 = sand.u32 %s31, 1
        %s237 = scalar_lea.sflag [#allocation5], %s236
        %s238 = sand.u32 %s31, 1
        %s239 = smul.addr %s238, 128
        %s240 = scalar_lea.vmem [#allocation4], %s239
        // Predicated region
        $region41: #{tpu_custom_call.1} parent=39 // pred_check
          %p241 = pneg %p44
        $region42: #{tpu_custom_call.1} parent=39 // pred_check_branch
          %243 = sbr.rel (%p241) target = $region44
        $region43: #{tpu_custom_call.1} parent=39 // pred_region
          %245 = dma.done %s237, 2048
        $region44: #{tpu_custom_call.1} parent=39 // pred_fallthru
          _
        // Predicated region
        $region45: #{tpu_custom_call.1} parent=39 // pred_check
          %p246 = pneg %p65
        $region46: #{tpu_custom_call.1} parent=39 // pred_check_branch
          %248 = sbr.rel (%p246) target = $region48
        $region47: #{tpu_custom_call.1} parent=39 // pred_region
          %250 = dma.done [#allocation8], 9216
        $region48: #{tpu_custom_call.1} parent=39 // pred_fallthru
          _
        // Predicated region
        $region49: #{tpu_custom_call.1} parent=39 // pred_check
          %p251 = pneg %p107
        $region50: #{tpu_custom_call.1} parent=39 // pred_check_branch
          %253 = sbr.rel (%p251) target = $region52
        $region51: #{tpu_custom_call.1} parent=39 // pred_region
          %255 = dma.done [#allocation8], 9216
        $region52: #{tpu_custom_call.1} parent=39 // pred_fallthru
          _
        %s256 = sand.u32 %s31, 1
        %s257 = scalar_lea.sflag [#allocation5], %s256
        %s258 = sand.u32 %s31, 1
        %s259 = smul.addr %s258, 128
        %s260 = scalar_lea.vmem [#allocation4], %s259
        %p261 = pneg %p44
        %p262 = pneg %p41
        %p263 = pneg %p65
        %p264 = pneg %p62
        %p265 = pneg %p86
        %p266 = pneg %p83
        %p267 = pneg %p107
        %p268 = pneg %p104
        %p269 = pneg %p128
        %p270 = pneg %p125
        %p271 = pneg %p154
        %p272 = pneg %p151
        %s273 = sand.u32 %s141, 1
        %s274 = scalar_lea.sflag [#allocation6], %s273
        %s275 = sand.u32 %s141, 1
        %s276 = smul.addr %s275, 256
        %s277 = scalar_lea.vmem [#allocation10], %s276
        %279 = vst [vmem:[#allocation2] sm:$0xff] 0
        %280 = vst [vmem:[#allocation2 + $0x8] sm:$0xf] 0
        %281 = vst [vmem:[#allocation2 + $0xc] sm:$0xff] 0
        %282 = vst [vmem:[#allocation2 + $0x14] sm:$0xf] 0
        %s283 = scalar_lea.vmem [#allocation2], 408
        %284 = vst [vmem:[%s283] sm:$0xff] 0
        %285 = vst [vmem:[%s283 + $0x8] sm:$0xf] 0
        %286 = vst [vmem:[%s283 + $0xc] sm:$0xff] 0
        %287 = vst [vmem:[%s283 + $0x14] sm:$0xf] 0
        %288 = vst [vmem:[#allocation3] sm:$0xff] 0
        %289 = vst [vmem:[#allocation3 + $0x8] sm:$0xf] 0
        %290 = vst [vmem:[#allocation3 + $0xc] sm:$0xff] 0
        %291 = vst [vmem:[#allocation3 + $0x14] sm:$0xf] 0
        %s292 = scalar_lea.vmem [#allocation3], 408
        %293 = vst [vmem:[%s292] sm:$0xff] 0
        %294 = vst [vmem:[%s292 + $0x8] sm:$0xf] 0
        %295 = vst [vmem:[%s292 + $0xc] sm:$0xff] 0
        %296 = vst [vmem:[%s292 + $0x14] sm:$0xf] 0
        %v297 = vld [vmem:[%s240] sm:$0xf]
        %v298 = vld [vmem:[%s240 + $0x4] sm:$0xf]
        %v299 = vld [vmem:[%s240 + $0x8] sm:$0xf]
        %v300 = vld [vmem:[%s240 + $0xc] sm:$0xf]
        %v301 = vld [vmem:[%s240 + $0x10] sm:$0xf]
        %v302 = vld [vmem:[%s240 + $0x14] sm:$0xf]
        %v303 = vld [vmem:[%s240 + $0x18] sm:$0xf]
        %v304 = vld [vmem:[%s240 + $0x1c] sm:$0xf]
        %v305 = vld [vmem:[%s240 + $0x20] sm:$0xf]
        %v306 = vld [vmem:[%s240 + $0x24] sm:$0xf]
        %v307 = vld [vmem:[%s240 + $0x28] sm:$0xf]
        %v308 = vld [vmem:[%s240 + $0x2c] sm:$0xf]
        %v309 = vld [vmem:[%s240 + $0x30] sm:$0xf]
        %v310 = vld [vmem:[%s240 + $0x34] sm:$0xf]
        %v311 = vld [vmem:[%s240 + $0x38] sm:$0xf]
        %v312 = vld [vmem:[%s240 + $0x3c] sm:$0xf]
        %v329 = vunpack.c.l.b16 %v297
        %v330 = vunpack.c.l.b16 %v298
        %v331 = vunpack.c.l.b16 %v299
        %v332 = vunpack.c.l.b16 %v300
        %v333 = vunpack.c.l.b16 %v301
        %v334 = vunpack.c.l.b16 %v302
        %v335 = vunpack.c.l.b16 %v303
        %v336 = vunpack.c.l.b16 %v304
        %v337 = vunpack.c.l.b16 %v305
        %v338 = vunpack.c.l.b16 %v306
        %v339 = vunpack.c.l.b16 %v307
        %v340 = vunpack.c.l.b16 %v308
        %v341 = vunpack.c.l.b16 %v309
        %v342 = vunpack.c.l.b16 %v310
        %v343 = vunpack.c.l.b16 %v311
        %v344 = vunpack.c.l.b16 %v312
        %v345 = vpack.c.b16 %v330, %v329
        %v346 = vpack.c.b16 %v332, %v331
        %v347 = vpack.c.b16 %v334, %v333
        %v348 = vpack.c.b16 %v336, %v335
        %v349 = vpack.c.b16 %v338, %v337
        %v350 = vpack.c.b16 %v340, %v339
        %v351 = vpack.c.b16 %v342, %v341
        %v352 = vpack.c.b16 %v344, %v343
        %v354 = vshrl.u32 %v345, 16
        %v356 = vrot.slane %v354, 7
        %v357 = vshll.u32 %v345, 16
        %v359 = vor.u32 %v356, %v357
        %v361 = vshrl.u32 %v346, 16
        %v363 = vrot.slane %v361, 7
        %v364 = vshll.u32 %v346, 16
        %v366 = vor.u32 %v363, %v364
        %v368 = vshrl.u32 %v347, 16
        %v370 = vrot.slane %v368, 7
        %v371 = vshll.u32 %v347, 16
        %v373 = vor.u32 %v370, %v371
        %v375 = vshrl.u32 %v348, 16
        %v377 = vrot.slane %v375, 7
        %v378 = vshll.u32 %v348, 16
        %v380 = vor.u32 %v377, %v378
        %v382 = vshrl.u32 %v349, 16
        %v384 = vrot.slane %v382, 7
        %v385 = vshll.u32 %v349, 16
        %v387 = vor.u32 %v384, %v385
        %v389 = vshrl.u32 %v350, 16
        %v391 = vrot.slane %v389, 7
        %v392 = vshll.u32 %v350, 16
        %v394 = vor.u32 %v391, %v392
        %v396 = vshrl.u32 %v351, 16
        %v398 = vrot.slane %v396, 7
        %v399 = vshll.u32 %v351, 16
        %v401 = vor.u32 %v398, %v399
        %v403 = vshrl.u32 %v352, 16
        %v405 = vrot.slane %v403, 7
        %v406 = vshll.u32 %v352, 16
        %v408 = vor.u32 %v405, %v406
        %vm417 = vcmask 1040384
        %vm418 = vsmask.f32 256
        %vm419 = vmand %vm417, %vm418
        %v420 = vsel %vm419, 0, %v359
        %v421 = vsel %vm419, 0, %v366
        %v422 = vsel %vm419, 0, %v373
        %v423 = vsel %vm419, 0, %v380
        %v424 = vsel %vm419, 0, %v387
        %v425 = vsel %vm419, 0, %v394
        %v426 = vsel %vm419, 0, %v401
        %v427 = vsel %vm419, 0, %v408
        %v428 = vrot.slane %v357, 1
        %v429 = vor.u32 %v354, %v428
        %v430 = vrot.slane %v364, 1
        %v431 = vor.u32 %v361, %v430
        %v432 = vrot.slane %v371, 1
        %v433 = vor.u32 %v368, %v432
        %v434 = vrot.slane %v378, 1
        %v435 = vor.u32 %v375, %v434
        %v436 = vrot.slane %v385, 1
        %v437 = vor.u32 %v382, %v436
        %v438 = vrot.slane %v392, 1
        %v439 = vor.u32 %v389, %v438
        %v440 = vrot.slane %v399, 1
        %v441 = vor.u32 %v396, %v440
        %v442 = vrot.slane %v406, 1
        %v443 = vor.u32 %v403, %v442
        %vm452 = vcmask 1047552
        %vm453 = vsmask.f32 7424
        %vm454 = vmand %vm452, %vm453
        %v455 = vsel %vm454, %v429, 0
        %v456 = vsel %vm454, %v431, 0
        %v457 = vsel %vm454, %v433, 0
        %v458 = vsel %vm454, %v435, 0
        %v459 = vsel %vm454, %v437, 0
        %v460 = vsel %vm454, %v439, 0
        %v461 = vsel %vm454, %v441, 0
        %v462 = vsel %vm454, %v443, 0
        %v479 = vunpack.c.l.b16 %v420
        %v480 = vunpack.c.l.b16 %v455
        %v481 = vunpack.c.h.b16 %v420
        %v482 = vunpack.c.h.b16 %v455
        %v483 = vunpack.c.l.b16 %v421
        %v484 = vunpack.c.l.b16 %v456
        %v485 = vunpack.c.h.b16 %v421
        %v486 = vunpack.c.h.b16 %v456
        %v487 = vunpack.c.l.b16 %v422
        %v488 = vunpack.c.l.b16 %v457
        %v489 = vunpack.c.h.b16 %v422
        %v490 = vunpack.c.h.b16 %v457
        %v491 = vunpack.c.l.b16 %v423
        %v492 = vunpack.c.l.b16 %v458
        %v493 = vunpack.c.h.b16 %v423
        %v494 = vunpack.c.h.b16 %v458
        %v495 = vunpack.c.l.b16 %v424
        %v496 = vunpack.c.l.b16 %v459
        %v497 = vunpack.c.h.b16 %v424
        %v498 = vunpack.c.h.b16 %v459
        %v499 = vunpack.c.l.b16 %v425
        %v500 = vunpack.c.l.b16 %v460
        %v501 = vunpack.c.h.b16 %v425
        %v502 = vunpack.c.h.b16 %v460
        %v503 = vunpack.c.l.b16 %v426
        %v504 = vunpack.c.l.b16 %v461
        %v505 = vunpack.c.h.b16 %v426
        %v506 = vunpack.c.h.b16 %v461
        %v507 = vunpack.c.l.b16 %v427
        %v508 = vunpack.c.l.b16 %v462
        %v509 = vunpack.c.h.b16 %v427
        %v510 = vunpack.c.h.b16 %v462
        %v511 = vpack.c.b16 %v329, %v479
        %v512 = vpack.c.b16 %v480, %v480
        %v513 = vpack.c.b16 %v330, %v481
        %v514 = vpack.c.b16 %v482, %v482
        %v515 = vpack.c.b16 %v331, %v483
        %v516 = vpack.c.b16 %v484, %v484
        %v517 = vpack.c.b16 %v332, %v485
        %v518 = vpack.c.b16 %v486, %v486
        %v519 = vpack.c.b16 %v333, %v487
        %v520 = vpack.c.b16 %v488, %v488
        %v521 = vpack.c.b16 %v334, %v489
        %v522 = vpack.c.b16 %v490, %v490
        %v523 = vpack.c.b16 %v335, %v491
        %v524 = vpack.c.b16 %v492, %v492
        %v525 = vpack.c.b16 %v336, %v493
        %v526 = vpack.c.b16 %v494, %v494
        %v527 = vpack.c.b16 %v337, %v495
        %v528 = vpack.c.b16 %v496, %v496
        %v529 = vpack.c.b16 %v338, %v497
        %v530 = vpack.c.b16 %v498, %v498
        %v531 = vpack.c.b16 %v339, %v499
        %v532 = vpack.c.b16 %v500, %v500
        %v533 = vpack.c.b16 %v340, %v501
        %v534 = vpack.c.b16 %v502, %v502
        %v535 = vpack.c.b16 %v341, %v503
        %v536 = vpack.c.b16 %v504, %v504
        %v537 = vpack.c.b16 %v342, %v505
        %v538 = vpack.c.b16 %v506, %v506
        %v539 = vpack.c.b16 %v343, %v507
        %v540 = vpack.c.b16 %v508, %v508
        %v541 = vpack.c.b16 %v344, %v509
        %v542 = vpack.c.b16 %v510, %v510
        %s575 = scalar_lea.vmem [#allocation2], 24
        %576 = vst [vmem:[%s575] sm:$0xff] %v511
        %577 = vst [vmem:[%s575 + $0x8] sm:$0xf] %v512
        %578 = vst [vmem:[%s575 + $0xc] sm:$0xff] %v513
        %579 = vst [vmem:[%s575 + $0x14] sm:$0xf] %v514
        %580 = vst [vmem:[%s575 + $0x18] sm:$0xff] %v515
        %581 = vst [vmem:[%s575 + $0x20] sm:$0xf] %v516
        %582 = vst [vmem:[%s575 + $0x24] sm:$0xff] %v517
        %583 = vst [vmem:[%s575 + $0x2c] sm:$0xf] %v518
        %584 = vst [vmem:[%s575 + $0x30] sm:$0xff] %v519
        %585 = vst [vmem:[%s575 + $0x38] sm:$0xf] %v520
        %586 = vst [vmem:[%s575 + $0x3c] sm:$0xff] %v521
        %587 = vst [vmem:[%s575 + $0x44] sm:$0xf] %v522
        %588 = vst [vmem:[%s575 + $0x48] sm:$0xff] %v523
        %589 = vst [vmem:[%s575 + $0x50] sm:$0xf] %v524
        %590 = vst [vmem:[%s575 + $0x54] sm:$0xff] %v525
        %591 = vst [vmem:[%s575 + $0x5c] sm:$0xf] %v526
        %592 = vst [vmem:[%s575 + $0x60] sm:$0xff] %v527
        %593 = vst [vmem:[%s575 + $0x68] sm:$0xf] %v528
        %594 = vst [vmem:[%s575 + $0x6c] sm:$0xff] %v529
        %595 = vst [vmem:[%s575 + $0x74] sm:$0xf] %v530
        %596 = vst [vmem:[%s575 + $0x78] sm:$0xff] %v531
        %597 = vst [vmem:[%s575 + $0x80] sm:$0xf] %v532
        %598 = vst [vmem:[%s575 + $0x84] sm:$0xff] %v533
        %599 = vst [vmem:[%s575 + $0x8c] sm:$0xf] %v534
        %600 = vst [vmem:[%s575 + $0x90] sm:$0xff] %v535
        %601 = vst [vmem:[%s575 + $0x98] sm:$0xf] %v536
        %602 = vst [vmem:[%s575 + $0x9c] sm:$0xff] %v537
        %603 = vst [vmem:[%s575 + $0xa4] sm:$0xf] %v538
        %604 = vst [vmem:[%s575 + $0xa8] sm:$0xff] %v539
        %605 = vst [vmem:[%s575 + $0xb0] sm:$0xf] %v540
        %606 = vst [vmem:[%s575 + $0xb4] sm:$0xff] %v541
        %607 = vst [vmem:[%s575 + $0xbc] sm:$0xf] %v542
        %s608 = scalar_lea.vmem %s240, 64 [#allocation4]
        %v609 = vld [vmem:[%s608] sm:$0xf]
        %v610 = vld [vmem:[%s608 + $0x4] sm:$0xf]
        %v611 = vld [vmem:[%s608 + $0x8] sm:$0xf]
        %v612 = vld [vmem:[%s608 + $0xc] sm:$0xf]
        %v613 = vld [vmem:[%s608 + $0x10] sm:$0xf]
        %v614 = vld [vmem:[%s608 + $0x14] sm:$0xf]
        %v615 = vld [vmem:[%s608 + $0x18] sm:$0xf]
        %v616 = vld [vmem:[%s608 + $0x1c] sm:$0xf]
        %v617 = vld [vmem:[%s608 + $0x20] sm:$0xf]
        %v618 = vld [vmem:[%s608 + $0x24] sm:$0xf]
        %v619 = vld [vmem:[%s608 + $0x28] sm:$0xf]
        %v620 = vld [vmem:[%s608 + $0x2c] sm:$0xf]
        %v621 = vld [vmem:[%s608 + $0x30] sm:$0xf]
        %v622 = vld [vmem:[%s608 + $0x34] sm:$0xf]
        %v623 = vld [vmem:[%s608 + $0x38] sm:$0xf]
        %v624 = vld [vmem:[%s608 + $0x3c] sm:$0xf]
        %v641 = vunpack.c.l.b16 %v609
        %v642 = vunpack.c.l.b16 %v610
        %v643 = vunpack.c.l.b16 %v611
        %v644 = vunpack.c.l.b16 %v612
        %v645 = vunpack.c.l.b16 %v613
        %v646 = vunpack.c.l.b16 %v614
        %v647 = vunpack.c.l.b16 %v615
        %v648 = vunpack.c.l.b16 %v616
        %v649 = vunpack.c.l.b16 %v617
        %v650 = vunpack.c.l.b16 %v618
        %v651 = vunpack.c.l.b16 %v619
        %v652 = vunpack.c.l.b16 %v620
        %v653 = vunpack.c.l.b16 %v621
        %v654 = vunpack.c.l.b16 %v622
        %v655 = vunpack.c.l.b16 %v623
        %v656 = vunpack.c.l.b16 %v624
        %v657 = vpack.c.b16 %v642, %v641
        %v658 = vpack.c.b16 %v644, %v643
        %v659 = vpack.c.b16 %v646, %v645
        %v660 = vpack.c.b16 %v648, %v647
        %v661 = vpack.c.b16 %v650, %v649
        %v662 = vpack.c.b16 %v652, %v651
        %v663 = vpack.c.b16 %v654, %v653
        %v664 = vpack.c.b16 %v656, %v655
        %v666 = vshrl.u32 %v657, 16
        %v668 = vrot.slane %v666, 7
        %v669 = vshll.u32 %v657, 16
        %v671 = vor.u32 %v668, %v669
        %v673 = vshrl.u32 %v658, 16
        %v675 = vrot.slane %v673, 7
        %v676 = vshll.u32 %v658, 16
        %v678 = vor.u32 %v675, %v676
        %v680 = vshrl.u32 %v659, 16
        %v682 = vrot.slane %v680, 7
        %v683 = vshll.u32 %v659, 16
        %v685 = vor.u32 %v682, %v683
        %v687 = vshrl.u32 %v660, 16
        %v689 = vrot.slane %v687, 7
        %v690 = vshll.u32 %v660, 16
        %v692 = vor.u32 %v689, %v690
        %v694 = vshrl.u32 %v661, 16
        %v696 = vrot.slane %v694, 7
        %v697 = vshll.u32 %v661, 16
        %v699 = vor.u32 %v696, %v697
        %v701 = vshrl.u32 %v662, 16
        %v703 = vrot.slane %v701, 7
        %v704 = vshll.u32 %v662, 16
        %v706 = vor.u32 %v703, %v704
        %v708 = vshrl.u32 %v663, 16
        %v710 = vrot.slane %v708, 7
        %v711 = vshll.u32 %v663, 16
        %v713 = vor.u32 %v710, %v711
        %v715 = vshrl.u32 %v664, 16
        %v717 = vrot.slane %v715, 7
        %v718 = vshll.u32 %v664, 16
        %v720 = vor.u32 %v717, %v718
        %v729 = vsel %vm419, 0, %v671
        %v730 = vsel %vm419, 0, %v678
        %v731 = vsel %vm419, 0, %v685
        %v732 = vsel %vm419, 0, %v692
        %v733 = vsel %vm419, 0, %v699
        %v734 = vsel %vm419, 0, %v706
        %v735 = vsel %vm419, 0, %v713
        %v736 = vsel %vm419, 0, %v720
        %v737 = vrot.slane %v669, 1
        %v738 = vor.u32 %v666, %v737
        %v739 = vrot.slane %v676, 1
        %v740 = vor.u32 %v673, %v739
        %v741 = vrot.slane %v683, 1
        %v742 = vor.u32 %v680, %v741
        %v743 = vrot.slane %v690, 1
        %v744 = vor.u32 %v687, %v743
        %v745 = vrot.slane %v697, 1
        %v746 = vor.u32 %v694, %v745
        %v747 = vrot.slane %v704, 1
        %v748 = vor.u32 %v701, %v747
        %v749 = vrot.slane %v711, 1
        %v750 = vor.u32 %v708, %v749
        %v751 = vrot.slane %v718, 1
        %v752 = vor.u32 %v715, %v751
        %v761 = vsel %vm454, %v738, 0
        %v762 = vsel %vm454, %v740, 0
        %v763 = vsel %vm454, %v742, 0
        %v764 = vsel %vm454, %v744, 0
        %v765 = vsel %vm454, %v746, 0
        %v766 = vsel %vm454, %v748, 0
        %v767 = vsel %vm454, %v750, 0
        %v768 = vsel %vm454, %v752, 0
        %v785 = vunpack.c.l.b16 %v729
        %v786 = vunpack.c.l.b16 %v761
        %v787 = vunpack.c.h.b16 %v729
        %v788 = vunpack.c.h.b16 %v761
        %v789 = vunpack.c.l.b16 %v730
        %v790 = vunpack.c.l.b16 %v762
        %v791 = vunpack.c.h.b16 %v730
        %v792 = vunpack.c.h.b16 %v762
        %v793 = vunpack.c.l.b16 %v731
        %v794 = vunpack.c.l.b16 %v763
        %v795 = vunpack.c.h.b16 %v731
        %v796 = vunpack.c.h.b16 %v763
        %v797 = vunpack.c.l.b16 %v732
        %v798 = vunpack.c.l.b16 %v764
        %v799 = vunpack.c.h.b16 %v732
        %v800 = vunpack.c.h.b16 %v764
        %v801 = vunpack.c.l.b16 %v733
        %v802 = vunpack.c.l.b16 %v765
        %v803 = vunpack.c.h.b16 %v733
        %v804 = vunpack.c.h.b16 %v765
        %v805 = vunpack.c.l.b16 %v734
        %v806 = vunpack.c.l.b16 %v766
        %v807 = vunpack.c.h.b16 %v734
        %v808 = vunpack.c.h.b16 %v766
        %v809 = vunpack.c.l.b16 %v735
        %v810 = vunpack.c.l.b16 %v767
        %v811 = vunpack.c.h.b16 %v735
        %v812 = vunpack.c.h.b16 %v767
        %v813 = vunpack.c.l.b16 %v736
        %v814 = vunpack.c.l.b16 %v768
        %v815 = vunpack.c.h.b16 %v736
        %v816 = vunpack.c.h.b16 %v768
        %v817 = vpack.c.b16 %v641, %v785
        %v818 = vpack.c.b16 %v786, %v786
        %v819 = vpack.c.b16 %v642, %v787
        %v820 = vpack.c.b16 %v788, %v788
        %v821 = vpack.c.b16 %v643, %v789
        %v822 = vpack.c.b16 %v790, %v790
        %v823 = vpack.c.b16 %v644, %v791
        %v824 = vpack.c.b16 %v792, %v792
        %v825 = vpack.c.b16 %v645, %v793
        %v826 = vpack.c.b16 %v794, %v794
        %v827 = vpack.c.b16 %v646, %v795
        %v828 = vpack.c.b16 %v796, %v796
        %v829 = vpack.c.b16 %v647, %v797
        %v830 = vpack.c.b16 %v798, %v798
        %v831 = vpack.c.b16 %v648, %v799
        %v832 = vpack.c.b16 %v800, %v800
        %v833 = vpack.c.b16 %v649, %v801
        %v834 = vpack.c.b16 %v802, %v802
        %v835 = vpack.c.b16 %v650, %v803
        %v836 = vpack.c.b16 %v804, %v804
        %v837 = vpack.c.b16 %v651, %v805
        %v838 = vpack.c.b16 %v806, %v806
        %v839 = vpack.c.b16 %v652, %v807
        %v840 = vpack.c.b16 %v808, %v808
        %v841 = vpack.c.b16 %v653, %v809
        %v842 = vpack.c.b16 %v810, %v810
        %v843 = vpack.c.b16 %v654, %v811
        %v844 = vpack.c.b16 %v812, %v812
        %v845 = vpack.c.b16 %v655, %v813
        %v846 = vpack.c.b16 %v814, %v814
        %v847 = vpack.c.b16 %v656, %v815
        %v848 = vpack.c.b16 %v816, %v816
        %s881 = scalar_lea.vmem [#allocation2], 216
        %882 = vst [vmem:[%s881] sm:$0xff] %v817
        %883 = vst [vmem:[%s881 + $0x8] sm:$0xf] %v818
        %884 = vst [vmem:[%s881 + $0xc] sm:$0xff] %v819
        %885 = vst [vmem:[%s881 + $0x14] sm:$0xf] %v820
        %886 = vst [vmem:[%s881 + $0x18] sm:$0xff] %v821
        %887 = vst [vmem:[%s881 + $0x20] sm:$0xf] %v822
        %888 = vst [vmem:[%s881 + $0x24] sm:$0xff] %v823
        %889 = vst [vmem:[%s881 + $0x2c] sm:$0xf] %v824
        %890 = vst [vmem:[%s881 + $0x30] sm:$0xff] %v825
        %891 = vst [vmem:[%s881 + $0x38] sm:$0xf] %v826
        %892 = vst [vmem:[%s881 + $0x3c] sm:$0xff] %v827
        %893 = vst [vmem:[%s881 + $0x44] sm:$0xf] %v828
        %894 = vst [vmem:[%s881 + $0x48] sm:$0xff] %v829
        %895 = vst [vmem:[%s881 + $0x50] sm:$0xf] %v830
        %896 = vst [vmem:[%s881 + $0x54] sm:$0xff] %v831
        %897 = vst [vmem:[%s881 + $0x5c] sm:$0xf] %v832
        %898 = vst [vmem:[%s881 + $0x60] sm:$0xff] %v833
        %899 = vst [vmem:[%s881 + $0x68] sm:$0xf] %v834
        %900 = vst [vmem:[%s881 + $0x6c] sm:$0xff] %v835
        %901 = vst [vmem:[%s881 + $0x74] sm:$0xf] %v836
        %902 = vst [vmem:[%s881 + $0x78] sm:$0xff] %v837
        %903 = vst [vmem:[%s881 + $0x80] sm:$0xf] %v838
        %904 = vst [vmem:[%s881 + $0x84] sm:$0xff] %v839
        %905 = vst [vmem:[%s881 + $0x8c] sm:$0xf] %v840
        %906 = vst [vmem:[%s881 + $0x90] sm:$0xff] %v841
        %907 = vst [vmem:[%s881 + $0x98] sm:$0xf] %v842
        %908 = vst [vmem:[%s881 + $0x9c] sm:$0xff] %v843
        %909 = vst [vmem:[%s881 + $0xa4] sm:$0xf] %v844
        %910 = vst [vmem:[%s881 + $0xa8] sm:$0xff] %v845
        %911 = vst [vmem:[%s881 + $0xb0] sm:$0xf] %v846
        %912 = vst [vmem:[%s881 + $0xb4] sm:$0xff] %v847
        %913 = vst [vmem:[%s881 + $0xbc] sm:$0xf] %v848
        %v914 = vld [vmem:[#allocation2] sm:$0xff]
        %v915 = vld [vmem:[#allocation2 + $0x8] sm:$0xf]
        %v916 = vld [vmem:[#allocation2 + $0xc] sm:$0xff]
        %v917 = vld [vmem:[#allocation2 + $0x14] sm:$0xf]
        %v918 = vld [vmem:[#allocation2 + $0x18] sm:$0xff]
        %v919 = vld [vmem:[#allocation2 + $0x20] sm:$0xf]
        %v920 = vld [vmem:[#allocation2 + $0x24] sm:$0xff]
        %v921 = vld [vmem:[#allocation2 + $0x2c] sm:$0xf]
        %v922 = vld [vmem:[#allocation2 + $0x30] sm:$0xff]
        %v923 = vld [vmem:[#allocation2 + $0x38] sm:$0xf]
        %v924 = vld [vmem:[#allocation2 + $0x3c] sm:$0xff]
        %v925 = vld [vmem:[#allocation2 + $0x44] sm:$0xf]
        %v926 = vld [vmem:[#allocation2 + $0x48] sm:$0xff]
        %v927 = vld [vmem:[#allocation2 + $0x50] sm:$0xf]
        %v928 = vld [vmem:[#allocation2 + $0x54] sm:$0xff]
        %v929 = vld [vmem:[#allocation2 + $0x5c] sm:$0xf]
        %v930 = vld [vmem:[#allocation2 + $0x60] sm:$0xff]
        %v931 = vld [vmem:[#allocation2 + $0x68] sm:$0xf]
        %v932 = vld [vmem:[#allocation2 + $0x6c] sm:$0xff]
        %v933 = vld [vmem:[#allocation2 + $0x74] sm:$0xf]
        %v934 = vld [vmem:[#allocation2 + $0x78] sm:$0xff]
        %v935 = vld [vmem:[#allocation2 + $0x80] sm:$0xf]
        %v936 = vld [vmem:[#allocation2 + $0x84] sm:$0xff]
        %v937 = vld [vmem:[#allocation2 + $0x8c] sm:$0xf]
        %v938 = vld [vmem:[#allocation2 + $0x90] sm:$0xff]
        %v939 = vld [vmem:[#allocation2 + $0x98] sm:$0xf]
        %v940 = vld [vmem:[#allocation2 + $0x9c] sm:$0xff]
        %v941 = vld [vmem:[#allocation2 + $0xa4] sm:$0xf]
        %v942 = vld [vmem:[#allocation2 + $0xa8] sm:$0xff]
        %v943 = vld [vmem:[#allocation2 + $0xb0] sm:$0xf]
        %v944 = vld [vmem:[#allocation2 + $0xb4] sm:$0xff]
        %v945 = vld [vmem:[#allocation2 + $0xbc] sm:$0xf]
        %v946 = vld [vmem:[#allocation7] sm:$0xf]
        %v947 = vld [vmem:[#allocation7 + $0x4] sm:$0xf]
        %v948 = vld [vmem:[#allocation7 + $0x8] sm:$0xf]
        %v949 = vld [vmem:[#allocation7 + $0xc] sm:$0xf]
        %v950 = vld [vmem:[#allocation7 + $0x10] sm:$0xf]
        %v951 = vld [vmem:[#allocation7 + $0x14] sm:$0xf]
        %v952 = vld [vmem:[#allocation7 + $0x18] sm:$0xf]
        %v953 = vld [vmem:[#allocation7 + $0x1c] sm:$0xf]
        %v954 = vld [vmem:[#allocation7 + $0x20] sm:$0xf]
        %v955 = vld [vmem:[#allocation7 + $0x24] sm:$0xf]
        %v956 = vld [vmem:[#allocation7 + $0x28] sm:$0xf]
        %v957 = vld [vmem:[#allocation7 + $0x2c] sm:$0xf]
        %v958 = vld [vmem:[#allocation7 + $0x30] sm:$0xf]
        %v959 = vld [vmem:[#allocation7 + $0x34] sm:$0xf]
        %v960 = vld [vmem:[#allocation7 + $0x38] sm:$0xf]
        %v961 = vld [vmem:[#allocation7 + $0x3c] sm:$0xf]
        %v962 = vld [vmem:[#allocation7 + $0x40] sm:$0xf]
        %v963 = vld [vmem:[#allocation7 + $0x44] sm:$0xf]
        %v964 = vld [vmem:[#allocation7 + $0x48] sm:$0xf]
        %v965 = vld [vmem:[#allocation7 + $0x4c] sm:$0xf]
        %v966 = vld [vmem:[#allocation7 + $0x50] sm:$0xf]
        %v967 = vld [vmem:[#allocation7 + $0x54] sm:$0xf]
        %v968 = vld [vmem:[#allocation7 + $0x58] sm:$0xf]
        %v969 = vld [vmem:[#allocation7 + $0x5c] sm:$0xf]
        %v970 = vld [vmem:[#allocation7 + $0x60] sm:$0xf]
        %v971 = vld [vmem:[#allocation7 + $0x64] sm:$0xf]
        %v972 = vld [vmem:[#allocation7 + $0x68] sm:$0xf]
        %v973 = vld [vmem:[#allocation7 + $0x6c] sm:$0xf]
        %v974 = vld [vmem:[#allocation7 + $0x70] sm:$0xf]
        %v975 = vld [vmem:[#allocation7 + $0x74] sm:$0xf]
        %v976 = vld [vmem:[#allocation7 + $0x78] sm:$0xf]
        %v977 = vld [vmem:[#allocation7 + $0x7c] sm:$0xf]
        %v978 = vld [vmem:[#allocation7 + $0x80] sm:$0xf]
        %v979 = vld [vmem:[#allocation7 + $0x84] sm:$0xf]
        %v980 = vld [vmem:[#allocation7 + $0x88] sm:$0xf]
        %v981 = vld [vmem:[#allocation7 + $0x8c] sm:$0xf]
        %v982 = vld [vmem:[#allocation7 + $0x90] sm:$0xf]
        %v983 = vld [vmem:[#allocation7 + $0x94] sm:$0xf]
        %v984 = vld [vmem:[#allocation7 + $0x98] sm:$0xf]
        %v985 = vld [vmem:[#allocation7 + $0x9c] sm:$0xf]
        %v986 = vld [vmem:[#allocation7 + $0xa0] sm:$0xf]
        %v987 = vld [vmem:[#allocation7 + $0xa4] sm:$0xf]
        %v988 = vld [vmem:[#allocation7 + $0xa8] sm:$0xf]
        %v989 = vld [vmem:[#allocation7 + $0xac] sm:$0xf]
        %v990 = vld [vmem:[#allocation7 + $0xb0] sm:$0xf]
        %v991 = vld [vmem:[#allocation7 + $0xb4] sm:$0xf]
        %v992 = vld [vmem:[#allocation7 + $0xb8] sm:$0xf]
        %v993 = vld [vmem:[#allocation7 + $0xbc] sm:$0xf]
        %v994 = vld [vmem:[%s575] sm:$0xff]
        %v995 = vld [vmem:[%s575 + $0x8] sm:$0xf]
        %v996 = vld [vmem:[%s575 + $0xc] sm:$0xff]
        %v997 = vld [vmem:[%s575 + $0x14] sm:$0xf]
        %v998 = vld [vmem:[%s575 + $0x18] sm:$0xff]
        %v999 = vld [vmem:[%s575 + $0x20] sm:$0xf]
        %v1000 = vld [vmem:[%s575 + $0x24] sm:$0xff]
        %v1001 = vld [vmem:[%s575 + $0x2c] sm:$0xf]
        %v1002 = vld [vmem:[%s575 + $0x30] sm:$0xff]
        %v1003 = vld [vmem:[%s575 + $0x38] sm:$0xf]
        %v1004 = vld [vmem:[%s575 + $0x3c] sm:$0xff]
        %v1005 = vld [vmem:[%s575 + $0x44] sm:$0xf]
        %v1006 = vld [vmem:[%s575 + $0x48] sm:$0xff]
        %v1007 = vld [vmem:[%s575 + $0x50] sm:$0xf]
        %v1008 = vld [vmem:[%s575 + $0x54] sm:$0xff]
        %v1009 = vld [vmem:[%s575 + $0x5c] sm:$0xf]
        %v1010 = vld [vmem:[%s575 + $0x60] sm:$0xff]
        %v1011 = vld [vmem:[%s575 + $0x68] sm:$0xf]
        %v1012 = vld [vmem:[%s575 + $0x6c] sm:$0xff]
        %v1013 = vld [vmem:[%s575 + $0x74] sm:$0xf]
        %v1014 = vld [vmem:[%s575 + $0x78] sm:$0xff]
        %v1015 = vld [vmem:[%s575 + $0x80] sm:$0xf]
        %v1016 = vld [vmem:[%s575 + $0x84] sm:$0xff]
        %v1017 = vld [vmem:[%s575 + $0x8c] sm:$0xf]
        %v1018 = vld [vmem:[%s575 + $0x90] sm:$0xff]
        %v1019 = vld [vmem:[%s575 + $0x98] sm:$0xf]
        %v1020 = vld [vmem:[%s575 + $0x9c] sm:$0xff]
        %v1021 = vld [vmem:[%s575 + $0xa4] sm:$0xf]
        %v1022 = vld [vmem:[%s575 + $0xa8] sm:$0xff]
        %v1023 = vld [vmem:[%s575 + $0xb0] sm:$0xf]
        %v1024 = vld [vmem:[%s575 + $0xb4] sm:$0xff]
        %v1025 = vld [vmem:[%s575 + $0xbc] sm:$0xf]
        %s1026 = scalar_lea.vmem [#allocation7], 192
        %v1027 = vld [vmem:[%s1026] sm:$0xf]
        %v1028 = vld [vmem:[%s1026 + $0x4] sm:$0xf]
        %v1029 = vld [vmem:[%s1026 + $0x8] sm:$0xf]
        %v1030 = vld [vmem:[%s1026 + $0xc] sm:$0xf]
        %v1031 = vld [vmem:[%s1026 + $0x10] sm:$0xf]
        %v1032 = vld [vmem:[%s1026 + $0x14] sm:$0xf]
        %v1033 = vld [vmem:[%s1026 + $0x18] sm:$0xf]
        %v1034 = vld [vmem:[%s1026 + $0x1c] sm:$0xf]
        %v1035 = vld [vmem:[%s1026 + $0x20] sm:$0xf]
        %v1036 = vld [vmem:[%s1026 + $0x24] sm:$0xf]
        %v1037 = vld [vmem:[%s1026 + $0x28] sm:$0xf]
        %v1038 = vld [vmem:[%s1026 + $0x2c] sm:$0xf]
        %v1039 = vld [vmem:[%s1026 + $0x30] sm:$0xf]
        %v1040 = vld [vmem:[%s1026 + $0x34] sm:$0xf]
        %v1041 = vld [vmem:[%s1026 + $0x38] sm:$0xf]
        %v1042 = vld [vmem:[%s1026 + $0x3c] sm:$0xf]
        %v1043 = vld [vmem:[%s1026 + $0x40] sm:$0xf]
        %v1044 = vld [vmem:[%s1026 + $0x44] sm:$0xf]
        %v1045 = vld [vmem:[%s1026 + $0x48] sm:$0xf]
        %v1046 = vld [vmem:[%s1026 + $0x4c] sm:$0xf]
        %v1047 = vld [vmem:[%s1026 + $0x50] sm:$0xf]
        %v1048 = vld [vmem:[%s1026 + $0x54] sm:$0xf]
        %v1049 = vld [vmem:[%s1026 + $0x58] sm:$0xf]
        %v1050 = vld [vmem:[%s1026 + $0x5c] sm:$0xf]
        %v1051 = vld [vmem:[%s1026 + $0x60] sm:$0xf]
        %v1052 = vld [vmem:[%s1026 + $0x64] sm:$0xf]
        %v1053 = vld [vmem:[%s1026 + $0x68] sm:$0xf]
        %v1054 = vld [vmem:[%s1026 + $0x6c] sm:$0xf]
        %v1055 = vld [vmem:[%s1026 + $0x70] sm:$0xf]
        %v1056 = vld [vmem:[%s1026 + $0x74] sm:$0xf]
        %v1057 = vld [vmem:[%s1026 + $0x78] sm:$0xf]
        %v1058 = vld [vmem:[%s1026 + $0x7c] sm:$0xf]
        %v1059 = vld [vmem:[%s1026 + $0x80] sm:$0xf]
        %v1060 = vld [vmem:[%s1026 + $0x84] sm:$0xf]
        %v1061 = vld [vmem:[%s1026 + $0x88] sm:$0xf]
        %v1062 = vld [vmem:[%s1026 + $0x8c] sm:$0xf]
        %v1063 = vld [vmem:[%s1026 + $0x90] sm:$0xf]
        %v1064 = vld [vmem:[%s1026 + $0x94] sm:$0xf]
        %v1065 = vld [vmem:[%s1026 + $0x98] sm:$0xf]
        %v1066 = vld [vmem:[%s1026 + $0x9c] sm:$0xf]
        %v1067 = vld [vmem:[%s1026 + $0xa0] sm:$0xf]
        %v1068 = vld [vmem:[%s1026 + $0xa4] sm:$0xf]
        %v1069 = vld [vmem:[%s1026 + $0xa8] sm:$0xf]
        %v1070 = vld [vmem:[%s1026 + $0xac] sm:$0xf]
        %v1071 = vld [vmem:[%s1026 + $0xb0] sm:$0xf]
        %v1072 = vld [vmem:[%s1026 + $0xb4] sm:$0xf]
        %v1073 = vld [vmem:[%s1026 + $0xb8] sm:$0xf]
        %v1074 = vld [vmem:[%s1026 + $0xbc] sm:$0xf]
        %v1107 = vunpack.c.l.b16 %v994
        %v1108 = vunpack.c.h.b16 %v994
        %v1109 = vunpack.c.l.b16 %v995
        %v1110 = vunpack.c.l.b16 %v996
        %v1111 = vunpack.c.h.b16 %v996
        %v1112 = vunpack.c.l.b16 %v997
        %v1113 = vunpack.c.l.b16 %v998
        %v1114 = vunpack.c.h.b16 %v998
        %v1115 = vunpack.c.l.b16 %v999
        %v1116 = vunpack.c.l.b16 %v1000
        %v1117 = vunpack.c.h.b16 %v1000
        %v1118 = vunpack.c.l.b16 %v1001
        %v1119 = vunpack.c.l.b16 %v1002
        %v1120 = vunpack.c.h.b16 %v1002
        %v1121 = vunpack.c.l.b16 %v1003
        %v1122 = vunpack.c.l.b16 %v1004
        %v1123 = vunpack.c.h.b16 %v1004
        %v1124 = vunpack.c.l.b16 %v1005
        %v1125 = vunpack.c.l.b16 %v1006
        %v1126 = vunpack.c.h.b16 %v1006
        %v1127 = vunpack.c.l.b16 %v1007
        %v1128 = vunpack.c.l.b16 %v1008
        %v1129 = vunpack.c.h.b16 %v1008
        %v1130 = vunpack.c.l.b16 %v1009
        %v1131 = vunpack.c.l.b16 %v1010
        %v1132 = vunpack.c.h.b16 %v1010
        %v1133 = vunpack.c.l.b16 %v1011
        %v1134 = vunpack.c.l.b16 %v1012
        %v1135 = vunpack.c.h.b16 %v1012
        %v1136 = vunpack.c.l.b16 %v1013
        %v1137 = vunpack.c.l.b16 %v1014
        %v1138 = vunpack.c.h.b16 %v1014
        %v1139 = vunpack.c.l.b16 %v1015
        %v1140 = vunpack.c.l.b16 %v1016
        %v1141 = vunpack.c.h.b16 %v1016
        %v1142 = vunpack.c.l.b16 %v1017
        %v1143 = vunpack.c.l.b16 %v1018
        %v1144 = vunpack.c.h.b16 %v1018
        %v1145 = vunpack.c.l.b16 %v1019
        %v1146 = vunpack.c.l.b16 %v1020
        %v1147 = vunpack.c.h.b16 %v1020
        %v1148 = vunpack.c.l.b16 %v1021
        %v1149 = vunpack.c.l.b16 %v1022
        %v1150 = vunpack.c.h.b16 %v1022
        %v1151 = vunpack.c.l.b16 %v1023
        %v1152 = vunpack.c.l.b16 %v1024
        %v1153 = vunpack.c.h.b16 %v1024
        %v1154 = vunpack.c.l.b16 %v1025
        %v1155 = vpack.c.b16 %v1110, %v1107
        %v1156 = vpack.c.b16 %v1111, %v1108
        %v1157 = vpack.c.b16 %v1112, %v1109
        %v1158 = vpack.c.b16 %v1116, %v1113
        %v1159 = vpack.c.b16 %v1117, %v1114
        %v1160 = vpack.c.b16 %v1118, %v1115
        %v1161 = vpack.c.b16 %v1122, %v1119
        %v1162 = vpack.c.b16 %v1123, %v1120
        %v1163 = vpack.c.b16 %v1124, %v1121
        %v1164 = vpack.c.b16 %v1128, %v1125
        %v1165 = vpack.c.b16 %v1129, %v1126
        %v1166 = vpack.c.b16 %v1130, %v1127
        %v1167 = vpack.c.b16 %v1134, %v1131
        %v1168 = vpack.c.b16 %v1135, %v1132
        %v1169 = vpack.c.b16 %v1136, %v1133
        %v1170 = vpack.c.b16 %v1140, %v1137
        %v1171 = vpack.c.b16 %v1141, %v1138
        %v1172 = vpack.c.b16 %v1142, %v1139
        %v1173 = vpack.c.b16 %v1146, %v1143
        %v1174 = vpack.c.b16 %v1147, %v1144
        %v1175 = vpack.c.b16 %v1148, %v1145
        %v1176 = vpack.c.b16 %v1152, %v1149
        %v1177 = vpack.c.b16 %v1153, %v1150
        %v1178 = vpack.c.b16 %v1154, %v1151
        %v1251 = vunpack.c.l.b16 %v1027
        %v1252 = vunpack.c.l.b16 %v1028
        %v1253 = vunpack.c.l.b16 %v1029
        %v1254 = vunpack.c.l.b16 %v1030
        %v1255 = vunpack.c.l.b16 %v1031
        %v1256 = vunpack.c.l.b16 %v1032
        %v1257 = vunpack.c.l.b16 %v1033
        %v1258 = vunpack.c.l.b16 %v1034
        %v1259 = vunpack.c.l.b16 %v1035
        %v1260 = vunpack.c.l.b16 %v1036
        %v1261 = vunpack.c.l.b16 %v1037
        %v1262 = vunpack.c.l.b16 %v1038
        %v1263 = vunpack.c.l.b16 %v1039
        %v1264 = vunpack.c.l.b16 %v1040
        %v1265 = vunpack.c.l.b16 %v1041
        %v1266 = vunpack.c.l.b16 %v1042
        %v1267 = vunpack.c.l.b16 %v1043
        %v1268 = vunpack.c.l.b16 %v1044
        %v1269 = vunpack.c.l.b16 %v1045
        %v1270 = vunpack.c.l.b16 %v1046
        %v1271 = vunpack.c.l.b16 %v1047
        %v1272 = vunpack.c.l.b16 %v1048
        %v1273 = vunpack.c.l.b16 %v1049
        %v1274 = vunpack.c.l.b16 %v1050
        %v1275 = vunpack.c.l.b16 %v1051
        %v1276 = vunpack.c.l.b16 %v1052
        %v1277 = vunpack.c.l.b16 %v1053
        %v1278 = vunpack.c.l.b16 %v1054
        %v1279 = vunpack.c.l.b16 %v1055
        %v1280 = vunpack.c.l.b16 %v1056
        %v1281 = vunpack.c.l.b16 %v1057
        %v1282 = vunpack.c.l.b16 %v1058
        %v1283 = vunpack.c.l.b16 %v1059
        %v1284 = vunpack.c.l.b16 %v1060
        %v1285 = vunpack.c.l.b16 %v1061
        %v1286 = vunpack.c.l.b16 %v1062
        %v1287 = vunpack.c.l.b16 %v1063
        %v1288 = vunpack.c.l.b16 %v1064
        %v1289 = vunpack.c.l.b16 %v1065
        %v1290 = vunpack.c.l.b16 %v1066
        %v1291 = vunpack.c.l.b16 %v1067
        %v1292 = vunpack.c.l.b16 %v1068
        %v1293 = vunpack.c.l.b16 %v1069
        %v1294 = vunpack.c.l.b16 %v1070
        %v1295 = vunpack.c.l.b16 %v1071
        %v1296 = vunpack.c.l.b16 %v1072
        %v1297 = vunpack.c.l.b16 %v1073
        %v1298 = vunpack.c.l.b16 %v1074
        %v1299 = vpack.c.b16 %v1252, %v1251
        %v1300 = vpack.c.b16 %v1254, %v1253
        %v1301 = vpack.c.b16 %v1256, %v1255
        %v1302 = vpack.c.b16 %v1258, %v1257
        %v1303 = vpack.c.b16 %v1260, %v1259
        %v1304 = vpack.c.b16 %v1262, %v1261
        %v1305 = vpack.c.b16 %v1264, %v1263
        %v1306 = vpack.c.b16 %v1266, %v1265
        %v1307 = vpack.c.b16 %v1268, %v1267
        %v1308 = vpack.c.b16 %v1270, %v1269
        %v1309 = vpack.c.b16 %v1272, %v1271
        %v1310 = vpack.c.b16 %v1274, %v1273
        %v1311 = vpack.c.b16 %v1276, %v1275
        %v1312 = vpack.c.b16 %v1278, %v1277
        %v1313 = vpack.c.b16 %v1280, %v1279
        %v1314 = vpack.c.b16 %v1282, %v1281
        %v1315 = vpack.c.b16 %v1284, %v1283
        %v1316 = vpack.c.b16 %v1286, %v1285
        %v1317 = vpack.c.b16 %v1288, %v1287
        %v1318 = vpack.c.b16 %v1290, %v1289
        %v1319 = vpack.c.b16 %v1292, %v1291
        %v1320 = vpack.c.b16 %v1294, %v1293
        %v1321 = vpack.c.b16 %v1296, %v1295
        %v1322 = vpack.c.b16 %v1298, %v1297
        %1347 = vmatpush.bf16.msra.mxu0 %v1306
        %1348 = vmatpush.bf16.msra.mxu0 %v1305
        %1349 = vmatpush.bf16.msra.mxu0 %v1304
        %1350 = vmatpush.bf16.msra.mxu0 %v1303
        %1351 = vmatpush.bf16.msra.mxu0 %v1302
        %1352 = vmatpush.bf16.msra.mxu0 %v1301
        %1353 = vmatpush.bf16.msra.mxu0 %v1300
        %1354 = vmatpush.bf16.msra.mxu0 %v1299
        %1355 = vmatmul.bf16.gmra.mxu0 %v1155
        %v1356 = vpop.f32.mrf.mxu0
        %v1357 = vadd.f32 0.0, %v1356
        %v1358 = vpop.f32.mrf.mxu0
        %v1359 = vadd.f32 0.0, %v1358
        %1360 = vmatmul.bf16.gmra.mxu0 %v1158
        %v1361 = vpop.f32.mrf.mxu0
        %v1362 = vadd.f32 0.0, %v1361
        %v1363 = vpop.f32.mrf.mxu0
        %v1364 = vadd.f32 0.0, %v1363
        %1365 = vmatmul.bf16.gmra.mxu0 %v1161
        %v1366 = vpop.f32.mrf.mxu0
        %v1367 = vadd.f32 0.0, %v1366
        %v1368 = vpop.f32.mrf.mxu0
        %v1369 = vadd.f32 0.0, %v1368
        %1370 = vmatmul.bf16.gmra.mxu0 %v1164
        %v1371 = vpop.f32.mrf.mxu0
        %v1372 = vadd.f32 0.0, %v1371
        %v1373 = vpop.f32.mrf.mxu0
        %v1374 = vadd.f32 0.0, %v1373
        %1375 = vmatmul.bf16.gmra.mxu0 %v1167
        %v1376 = vpop.f32.mrf.mxu0
        %v1377 = vadd.f32 0.0, %v1376
        %v1378 = vpop.f32.mrf.mxu0
        %v1379 = vadd.f32 0.0, %v1378
        %1380 = vmatmul.bf16.gmra.mxu0 %v1170
        %v1381 = vpop.f32.mrf.mxu0
        %v1382 = vadd.f32 0.0, %v1381
        %v1383 = vpop.f32.mrf.mxu0
        %v1384 = vadd.f32 0.0, %v1383
        %1385 = vmatmul.bf16.gmra.mxu0 %v1173
        %v1386 = vpop.f32.mrf.mxu0
        %v1387 = vadd.f32 0.0, %v1386
        %v1388 = vpop.f32.mrf.mxu0
        %v1389 = vadd.f32 0.0, %v1388
        %1390 = vmatmul.bf16.gmra.mxu0 %v1176
        %v1391 = vpop.f32.mrf.mxu0
        %v1392 = vadd.f32 0.0, %v1391
        %v1393 = vpop.f32.mrf.mxu0
        %v1394 = vadd.f32 0.0, %v1393
        %1395 = vdwg.mxu0
        %1396 = vmatpush.bf16.msra.mxu0 %v1314
        %1397 = vmatpush.bf16.msra.mxu0 %v1313
        %1398 = vmatpush.bf16.msra.mxu0 %v1312
        %1399 = vmatpush.bf16.msra.mxu0 %v1311
        %1400 = vmatpush.bf16.msra.mxu0 %v1310
        %1401 = vmatpush.bf16.msra.mxu0 %v1309
        %1402 = vmatpush.bf16.msra.mxu0 %v1308
        %1403 = vmatpush.bf16.msra.mxu0 %v1307
        %1404 = vmatmul.bf16.gmra.mxu0 %v1156
        %v1405 = vpop.f32.mrf.mxu0
        %v1406 = vadd.f32 %v1357, %v1405
        %v1407 = vpop.f32.mrf.mxu0
        %v1408 = vadd.f32 %v1359, %v1407
        %1409 = vmatmul.bf16.gmra.mxu0 %v1159
        %v1410 = vpop.f32.mrf.mxu0
        %v1411 = vadd.f32 %v1362, %v1410
        %v1412 = vpop.f32.mrf.mxu0
        %v1413 = vadd.f32 %v1364, %v1412
        %1414 = vmatmul.bf16.gmra.mxu0 %v1162
        %v1415 = vpop.f32.mrf.mxu0
        %v1416 = vadd.f32 %v1367, %v1415
        %v1417 = vpop.f32.mrf.mxu0
        %v1418 = vadd.f32 %v1369, %v1417
        %1419 = vmatmul.bf16.gmra.mxu0 %v1165
        %v1420 = vpop.f32.mrf.mxu0
        %v1421 = vadd.f32 %v1372, %v1420
        %v1422 = vpop.f32.mrf.mxu0
        %v1423 = vadd.f32 %v1374, %v1422
        %1424 = vmatmul.bf16.gmra.mxu0 %v1168
        %v1425 = vpop.f32.mrf.mxu0
        %v1426 = vadd.f32 %v1377, %v1425
        %v1427 = vpop.f32.mrf.mxu0
        %v1428 = vadd.f32 %v1379, %v1427
        %1429 = vmatmul.bf16.gmra.mxu0 %v1171
        %v1430 = vpop.f32.mrf.mxu0
        %v1431 = vadd.f32 %v1382, %v1430
        %v1432 = vpop.f32.mrf.mxu0
        %v1433 = vadd.f32 %v1384, %v1432
        %1434 = vmatmul.bf16.gmra.mxu0 %v1174
        %v1435 = vpop.f32.mrf.mxu0
        %v1436 = vadd.f32 %v1387, %v1435
        %v1437 = vpop.f32.mrf.mxu0
        %v1438 = vadd.f32 %v1389, %v1437
        %1439 = vmatmul.bf16.gmra.mxu0 %v1177
        %v1440 = vpop.f32.mrf.mxu0
        %v1441 = vadd.f32 %v1392, %v1440
        %v1442 = vpop.f32.mrf.mxu0
        %v1443 = vadd.f32 %v1394, %v1442
        %1444 = vdwg.mxu0
        %1445 = vmatpush.bf16.msra.mxu0 %v1322
        %1446 = vmatpush.bf16.msra.mxu0 %v1321
        %1447 = vmatpush.bf16.msra.mxu0 %v1320
        %1448 = vmatpush.bf16.msra.mxu0 %v1319
        %1449 = vmatpush.bf16.msra.mxu0 %v1318
        %1450 = vmatpush.bf16.msra.mxu0 %v1317
        %1451 = vmatpush.bf16.msra.mxu0 %v1316
        %1452 = vmatpush.bf16.msra.mxu0 %v1315
        %1453 = vmatmul.bf16.gmra.mxu0 %v1157
        %v1454 = vpop.f32.mrf.mxu0
        %v1455 = vadd.f32 %v1406, %v1454
        %v1456 = vpop.f32.mrf.mxu0
        %v1457 = vadd.f32 %v1408, %v1456
        %1458 = vmatmul.bf16.gmra.mxu0 %v1160
        %v1459 = vpop.f32.mrf.mxu0
        %v1460 = vadd.f32 %v1411, %v1459
        %v1461 = vpop.f32.mrf.mxu0
        %v1462 = vadd.f32 %v1413, %v1461
        %1463 = vmatmul.bf16.gmra.mxu0 %v1163
        %v1464 = vpop.f32.mrf.mxu0
        %v1465 = vadd.f32 %v1416, %v1464
        %v1466 = vpop.f32.mrf.mxu0
        %v1467 = vadd.f32 %v1418, %v1466
        %1468 = vmatmul.bf16.gmra.mxu0 %v1166
        %v1469 = vpop.f32.mrf.mxu0
        %v1470 = vadd.f32 %v1421, %v1469
        %v1471 = vpop.f32.mrf.mxu0
        %v1472 = vadd.f32 %v1423, %v1471
        %1473 = vmatmul.bf16.gmra.mxu0 %v1169
        %v1474 = vpop.f32.mrf.mxu0
        %v1475 = vadd.f32 %v1426, %v1474
        %v1476 = vpop.f32.mrf.mxu0
        %v1477 = vadd.f32 %v1428, %v1476
        %1478 = vmatmul.bf16.gmra.mxu0 %v1172
        %v1479 = vpop.f32.mrf.mxu0
        %v1480 = vadd.f32 %v1431, %v1479
        %v1481 = vpop.f32.mrf.mxu0
        %v1482 = vadd.f32 %v1433, %v1481
        %1483 = vmatmul.bf16.gmra.mxu0 %v1175
        %v1484 = vpop.f32.mrf.mxu0
        %v1485 = vadd.f32 %v1436, %v1484
        %v1486 = vpop.f32.mrf.mxu0
        %v1487 = vadd.f32 %v1438, %v1486
        %1488 = vmatmul.bf16.gmra.mxu0 %v1178
        %v1489 = vpop.f32.mrf.mxu0
        %v1490 = vadd.f32 %v1441, %v1489
        %v1491 = vpop.f32.mrf.mxu0
        %v1492 = vadd.f32 %v1443, %v1491
        %1493 = vdwg.mxu0
        %v1526 = vunpack.c.l.b16 %v914
        %v1527 = vunpack.c.h.b16 %v914
        %v1528 = vunpack.c.l.b16 %v915
        %v1529 = vunpack.c.l.b16 %v916
        %v1530 = vunpack.c.h.b16 %v916
        %v1531 = vunpack.c.l.b16 %v917
        %v1532 = vunpack.c.l.b16 %v918
        %v1533 = vunpack.c.h.b16 %v918
        %v1534 = vunpack.c.l.b16 %v919
        %v1535 = vunpack.c.l.b16 %v920
        %v1536 = vunpack.c.h.b16 %v920
        %v1537 = vunpack.c.l.b16 %v921
        %v1538 = vunpack.c.l.b16 %v922
        %v1539 = vunpack.c.h.b16 %v922
        %v1540 = vunpack.c.l.b16 %v923
        %v1541 = vunpack.c.l.b16 %v924
        %v1542 = vunpack.c.h.b16 %v924
        %v1543 = vunpack.c.l.b16 %v925
        %v1544 = vunpack.c.l.b16 %v926
        %v1545 = vunpack.c.h.b16 %v926
        %v1546 = vunpack.c.l.b16 %v927
        %v1547 = vunpack.c.l.b16 %v928
        %v1548 = vunpack.c.h.b16 %v928
        %v1549 = vunpack.c.l.b16 %v929
        %v1550 = vunpack.c.l.b16 %v930
        %v1551 = vunpack.c.h.b16 %v930
        %v1552 = vunpack.c.l.b16 %v931
        %v1553 = vunpack.c.l.b16 %v932
        %v1554 = vunpack.c.h.b16 %v932
        %v1555 = vunpack.c.l.b16 %v933
        %v1556 = vunpack.c.l.b16 %v934
        %v1557 = vunpack.c.h.b16 %v934
        %v1558 = vunpack.c.l.b16 %v935
        %v1559 = vunpack.c.l.b16 %v936
        %v1560 = vunpack.c.h.b16 %v936
        %v1561 = vunpack.c.l.b16 %v937
        %v1562 = vunpack.c.l.b16 %v938
        %v1563 = vunpack.c.h.b16 %v938
        %v1564 = vunpack.c.l.b16 %v939
        %v1565 = vunpack.c.l.b16 %v940
        %v1566 = vunpack.c.h.b16 %v940
        %v1567 = vunpack.c.l.b16 %v941
        %v1568 = vunpack.c.l.b16 %v942
        %v1569 = vunpack.c.h.b16 %v942
        %v1570 = vunpack.c.l.b16 %v943
        %v1571 = vunpack.c.l.b16 %v944
        %v1572 = vunpack.c.h.b16 %v944
        %v1573 = vunpack.c.l.b16 %v945
        %v1574 = vpack.c.b16 %v1529, %v1526
        %v1575 = vpack.c.b16 %v1530, %v1527
        %v1576 = vpack.c.b16 %v1531, %v1528
        %v1577 = vpack.c.b16 %v1535, %v1532
        %v1578 = vpack.c.b16 %v1536, %v1533
        %v1579 = vpack.c.b16 %v1537, %v1534
        %v1580 = vpack.c.b16 %v1541, %v1538
        %v1581 = vpack.c.b16 %v1542, %v1539
        %v1582 = vpack.c.b16 %v1543, %v1540
        %v1583 = vpack.c.b16 %v1547, %v1544
        %v1584 = vpack.c.b16 %v1548, %v1545
        %v1585 = vpack.c.b16 %v1549, %v1546
        %v1586 = vpack.c.b16 %v1553, %v1550
        %v1587 = vpack.c.b16 %v1554, %v1551
        %v1588 = vpack.c.b16 %v1555, %v1552
        %v1589 = vpack.c.b16 %v1559, %v1556
        %v1590 = vpack.c.b16 %v1560, %v1557
        %v1591 = vpack.c.b16 %v1561, %v1558
        %v1592 = vpack.c.b16 %v1565, %v1562
        %v1593 = vpack.c.b16 %v1566, %v1563
        %v1594 = vpack.c.b16 %v1567, %v1564
        %v1595 = vpack.c.b16 %v1571, %v1568
        %v1596 = vpack.c.b16 %v1572, %v1569
        %v1597 = vpack.c.b16 %v1573, %v1570
        %v1670 = vunpack.c.l.b16 %v946
        %v1671 = vunpack.c.l.b16 %v947
        %v1672 = vunpack.c.l.b16 %v948
        %v1673 = vunpack.c.l.b16 %v949
        %v1674 = vunpack.c.l.b16 %v950
        %v1675 = vunpack.c.l.b16 %v951
        %v1676 = vunpack.c.l.b16 %v952
        %v1677 = vunpack.c.l.b16 %v953
        %v1678 = vunpack.c.l.b16 %v954
        %v1679 = vunpack.c.l.b16 %v955
        %v1680 = vunpack.c.l.b16 %v956
        %v1681 = vunpack.c.l.b16 %v957
        %v1682 = vunpack.c.l.b16 %v958
        %v1683 = vunpack.c.l.b16 %v959
        %v1684 = vunpack.c.l.b16 %v960
        %v1685 = vunpack.c.l.b16 %v961
        %v1686 = vunpack.c.l.b16 %v962
        %v1687 = vunpack.c.l.b16 %v963
        %v1688 = vunpack.c.l.b16 %v964
        %v1689 = vunpack.c.l.b16 %v965
        %v1690 = vunpack.c.l.b16 %v966
        %v1691 = vunpack.c.l.b16 %v967
        %v1692 = vunpack.c.l.b16 %v968
        %v1693 = vunpack.c.l.b16 %v969
        %v1694 = vunpack.c.l.b16 %v970
        %v1695 = vunpack.c.l.b16 %v971
        %v1696 = vunpack.c.l.b16 %v972
        %v1697 = vunpack.c.l.b16 %v973
        %v1698 = vunpack.c.l.b16 %v974
        %v1699 = vunpack.c.l.b16 %v975
        %v1700 = vunpack.c.l.b16 %v976
        %v1701 = vunpack.c.l.b16 %v977
        %v1702 = vunpack.c.l.b16 %v978
        %v1703 = vunpack.c.l.b16 %v979
        %v1704 = vunpack.c.l.b16 %v980
        %v1705 = vunpack.c.l.b16 %v981
        %v1706 = vunpack.c.l.b16 %v982
        %v1707 = vunpack.c.l.b16 %v983
        %v1708 = vunpack.c.l.b16 %v984
        %v1709 = vunpack.c.l.b16 %v985
        %v1710 = vunpack.c.l.b16 %v986
        %v1711 = vunpack.c.l.b16 %v987
        %v1712 = vunpack.c.l.b16 %v988
        %v1713 = vunpack.c.l.b16 %v989
        %v1714 = vunpack.c.l.b16 %v990
        %v1715 = vunpack.c.l.b16 %v991
        %v1716 = vunpack.c.l.b16 %v992
        %v1717 = vunpack.c.l.b16 %v993
        %v1718 = vpack.c.b16 %v1671, %v1670
        %v1719 = vpack.c.b16 %v1673, %v1672
        %v1720 = vpack.c.b16 %v1675, %v1674
        %v1721 = vpack.c.b16 %v1677, %v1676
        %v1722 = vpack.c.b16 %v1679, %v1678
        %v1723 = vpack.c.b16 %v1681, %v1680
        %v1724 = vpack.c.b16 %v1683, %v1682
        %v1725 = vpack.c.b16 %v1685, %v1684
        %v1726 = vpack.c.b16 %v1687, %v1686
        %v1727 = vpack.c.b16 %v1689, %v1688
        %v1728 = vpack.c.b16 %v1691, %v1690
        %v1729 = vpack.c.b16 %v1693, %v1692
        %v1730 = vpack.c.b16 %v1695, %v1694
        %v1731 = vpack.c.b16 %v1697, %v1696
        %v1732 = vpack.c.b16 %v1699, %v1698
        %v1733 = vpack.c.b16 %v1701, %v1700
        %v1734 = vpack.c.b16 %v1703, %v1702
        %v1735 = vpack.c.b16 %v1705, %v1704
        %v1736 = vpack.c.b16 %v1707, %v1706
        %v1737 = vpack.c.b16 %v1709, %v1708
        %v1738 = vpack.c.b16 %v1711, %v1710
        %v1739 = vpack.c.b16 %v1713, %v1712
        %v1740 = vpack.c.b16 %v1715, %v1714
        %v1741 = vpack.c.b16 %v1717, %v1716
        %1766 = vmatpush.bf16.msra.mxu0 %v1725
        %1767 = vmatpush.bf16.msra.mxu0 %v1724
        %1768 = vmatpush.bf16.msra.mxu0 %v1723
        %1769 = vmatpush.bf16.msra.mxu0 %v1722
        %1770 = vmatpush.bf16.msra.mxu0 %v1721
        %1771 = vmatpush.bf16.msra.mxu0 %v1720
        %1772 = vmatpush.bf16.msra.mxu0 %v1719
        %1773 = vmatpush.bf16.msra.mxu0 %v1718
        %1774 = vmatmul.bf16.gmra.mxu0 %v1574
        %v1775 = vpop.f32.mrf.mxu0
        %v1776 = vadd.f32 %v1455, %v1775
        %v1777 = vpop.f32.mrf.mxu0
        %v1778 = vadd.f32 %v1457, %v1777
        %1779 = vmatmul.bf16.gmra.mxu0 %v1577
        %v1780 = vpop.f32.mrf.mxu0
        %v1781 = vadd.f32 %v1460, %v1780
        %v1782 = vpop.f32.mrf.mxu0
        %v1783 = vadd.f32 %v1462, %v1782
        %1784 = vmatmul.bf16.gmra.mxu0 %v1580
        %v1785 = vpop.f32.mrf.mxu0
        %v1786 = vadd.f32 %v1465, %v1785
        %v1787 = vpop.f32.mrf.mxu0
        %v1788 = vadd.f32 %v1467, %v1787
        %1789 = vmatmul.bf16.gmra.mxu0 %v1583
        %v1790 = vpop.f32.mrf.mxu0
        %v1791 = vadd.f32 %v1470, %v1790
        %v1792 = vpop.f32.mrf.mxu0
        %v1793 = vadd.f32 %v1472, %v1792
        %1794 = vmatmul.bf16.gmra.mxu0 %v1586
        %v1795 = vpop.f32.mrf.mxu0
        %v1796 = vadd.f32 %v1475, %v1795
        %v1797 = vpop.f32.mrf.mxu0
        %v1798 = vadd.f32 %v1477, %v1797
        %1799 = vmatmul.bf16.gmra.mxu0 %v1589
        %v1800 = vpop.f32.mrf.mxu0
        %v1801 = vadd.f32 %v1480, %v1800
        %v1802 = vpop.f32.mrf.mxu0
        %v1803 = vadd.f32 %v1482, %v1802
        %1804 = vmatmul.bf16.gmra.mxu0 %v1592
        %v1805 = vpop.f32.mrf.mxu0
        %v1806 = vadd.f32 %v1485, %v1805
        %v1807 = vpop.f32.mrf.mxu0
        %v1808 = vadd.f32 %v1487, %v1807
        %1809 = vmatmul.bf16.gmra.mxu0 %v1595
        %v1810 = vpop.f32.mrf.mxu0
        %v1811 = vadd.f32 %v1490, %v1810
        %v1812 = vpop.f32.mrf.mxu0
        %v1813 = vadd.f32 %v1492, %v1812
        %1814 = vdwg.mxu0
        %1815 = vmatpush.bf16.msra.mxu0 %v1733
        %1816 = vmatpush.bf16.msra.mxu0 %v1732
        %1817 = vmatpush.bf16.msra.mxu0 %v1731
        %1818 = vmatpush.bf16.msra.mxu0 %v1730
        %1819 = vmatpush.bf16.msra.mxu0 %v1729
        %1820 = vmatpush.bf16.msra.mxu0 %v1728
        %1821 = vmatpush.bf16.msra.mxu0 %v1727
        %1822 = vmatpush.bf16.msra.mxu0 %v1726
        %1823 = vmatmul.bf16.gmra.mxu0 %v1575
        %v1824 = vpop.f32.mrf.mxu0
        %v1825 = vadd.f32 %v1776, %v1824
        %v1826 = vpop.f32.mrf.mxu0
        %v1827 = vadd.f32 %v1778, %v1826
        %1828 = vmatmul.bf16.gmra.mxu0 %v1578
        %v1829 = vpop.f32.mrf.mxu0
        %v1830 = vadd.f32 %v1781, %v1829
        %v1831 = vpop.f32.mrf.mxu0
        %v1832 = vadd.f32 %v1783, %v1831
        %1833 = vmatmul.bf16.gmra.mxu0 %v1581
        %v1834 = vpop.f32.mrf.mxu0
        %v1835 = vadd.f32 %v1786, %v1834
        %v1836 = vpop.f32.mrf.mxu0
        %v1837 = vadd.f32 %v1788, %v1836
        %1838 = vmatmul.bf16.gmra.mxu0 %v1584
        %v1839 = vpop.f32.mrf.mxu0
        %v1840 = vadd.f32 %v1791, %v1839
        %v1841 = vpop.f32.mrf.mxu0
        %v1842 = vadd.f32 %v1793, %v1841
        %1843 = vmatmul.bf16.gmra.mxu0 %v1587
        %v1844 = vpop.f32.mrf.mxu0
        %v1845 = vadd.f32 %v1796, %v1844
        %v1846 = vpop.f32.mrf.mxu0
        %v1847 = vadd.f32 %v1798, %v1846
        %1848 = vmatmul.bf16.gmra.mxu0 %v1590
        %v1849 = vpop.f32.mrf.mxu0
        %v1850 = vadd.f32 %v1801, %v1849
        %v1851 = vpop.f32.mrf.mxu0
        %v1852 = vadd.f32 %v1803, %v1851
        %1853 = vmatmul.bf16.gmra.mxu0 %v1593
        %v1854 = vpop.f32.mrf.mxu0
        %v1855 = vadd.f32 %v1806, %v1854
        %v1856 = vpop.f32.mrf.mxu0
        %v1857 = vadd.f32 %v1808, %v1856
        %1858 = vmatmul.bf16.gmra.mxu0 %v1596
        %v1859 = vpop.f32.mrf.mxu0
        %v1860 = vadd.f32 %v1811, %v1859
        %v1861 = vpop.f32.mrf.mxu0
        %v1862 = vadd.f32 %v1813, %v1861
        %1863 = vdwg.mxu0
        %1864 = vmatpush.bf16.msra.mxu0 %v1741
        %1865 = vmatpush.bf16.msra.mxu0 %v1740
        %1866 = vmatpush.bf16.msra.mxu0 %v1739
        %1867 = vmatpush.bf16.msra.mxu0 %v1738
        %1868 = vmatpush.bf16.msra.mxu0 %v1737
        %1869 = vmatpush.bf16.msra.mxu0 %v1736
        %1870 = vmatpush.bf16.msra.mxu0 %v1735
        %1871 = vmatpush.bf16.msra.mxu0 %v1734
        %1872 = vmatmul.bf16.gmra.mxu0 %v1576
        %v1873 = vpop.f32.mrf.mxu0
        %v1874 = vadd.f32 %v1825, %v1873
        %v1875 = vpop.f32.mrf.mxu0
        %v1876 = vadd.f32 %v1827, %v1875
        %1877 = vmatmul.bf16.gmra.mxu0 %v1579
        %v1878 = vpop.f32.mrf.mxu0
        %v1879 = vadd.f32 %v1830, %v1878
        %v1880 = vpop.f32.mrf.mxu0
        %v1881 = vadd.f32 %v1832, %v1880
        %1882 = vmatmul.bf16.gmra.mxu0 %v1582
        %v1883 = vpop.f32.mrf.mxu0
        %v1884 = vadd.f32 %v1835, %v1883
        %v1885 = vpop.f32.mrf.mxu0
        %v1886 = vadd.f32 %v1837, %v1885
        %1887 = vmatmul.bf16.gmra.mxu0 %v1585
        %v1888 = vpop.f32.mrf.mxu0
        %v1889 = vadd.f32 %v1840, %v1888
        %v1890 = vpop.f32.mrf.mxu0
        %v1891 = vadd.f32 %v1842, %v1890
        %1892 = vmatmul.bf16.gmra.mxu0 %v1588
        %v1893 = vpop.f32.mrf.mxu0
        %v1894 = vadd.f32 %v1845, %v1893
        %v1895 = vpop.f32.mrf.mxu0
        %v1896 = vadd.f32 %v1847, %v1895
        %1897 = vmatmul.bf16.gmra.mxu0 %v1591
        %v1898 = vpop.f32.mrf.mxu0
        %v1899 = vadd.f32 %v1850, %v1898
        %v1900 = vpop.f32.mrf.mxu0
        %v1901 = vadd.f32 %v1852, %v1900
        %1902 = vmatmul.bf16.gmra.mxu0 %v1594
        %v1903 = vpop.f32.mrf.mxu0
        %v1904 = vadd.f32 %v1855, %v1903
        %v1905 = vpop.f32.mrf.mxu0
        %v1906 = vadd.f32 %v1857, %v1905
        %1907 = vmatmul.bf16.gmra.mxu0 %v1597
        %v1908 = vpop.f32.mrf.mxu0
        %v1909 = vadd.f32 %v1860, %v1908
        %v1910 = vpop.f32.mrf.mxu0
        %v1911 = vadd.f32 %v1862, %v1910
        %1912 = vdwg.mxu0
        %s1913 = scalar_lea.vmem [#allocation2], 48
        %v1914 = vld [vmem:[%s1913] sm:$0xff]
        %v1915 = vld [vmem:[%s1913 + $0x8] sm:$0xf]
        %v1916 = vld [vmem:[%s1913 + $0xc] sm:$0xff]
        %v1917 = vld [vmem:[%s1913 + $0x14] sm:$0xf]
        %v1918 = vld [vmem:[%s1913 + $0x18] sm:$0xff]
        %v1919 = vld [vmem:[%s1913 + $0x20] sm:$0xf]
        %v1920 = vld [vmem:[%s1913 + $0x24] sm:$0xff]
        %v1921 = vld [vmem:[%s1913 + $0x2c] sm:$0xf]
        %v1922 = vld [vmem:[%s1913 + $0x30] sm:$0xff]
        %v1923 = vld [vmem:[%s1913 + $0x38] sm:$0xf]
        %v1924 = vld [vmem:[%s1913 + $0x3c] sm:$0xff]
        %v1925 = vld [vmem:[%s1913 + $0x44] sm:$0xf]
        %v1926 = vld [vmem:[%s1913 + $0x48] sm:$0xff]
        %v1927 = vld [vmem:[%s1913 + $0x50] sm:$0xf]
        %v1928 = vld [vmem:[%s1913 + $0x54] sm:$0xff]
        %v1929 = vld [vmem:[%s1913 + $0x5c] sm:$0xf]
        %v1930 = vld [vmem:[%s1913 + $0x60] sm:$0xff]
        %v1931 = vld [vmem:[%s1913 + $0x68] sm:$0xf]
        %v1932 = vld [vmem:[%s1913 + $0x6c] sm:$0xff]
        %v1933 = vld [vmem:[%s1913 + $0x74] sm:$0xf]
        %v1934 = vld [vmem:[%s1913 + $0x78] sm:$0xff]
        %v1935 = vld [vmem:[%s1913 + $0x80] sm:$0xf]
        %v1936 = vld [vmem:[%s1913 + $0x84] sm:$0xff]
        %v1937 = vld [vmem:[%s1913 + $0x8c] sm:$0xf]
        %v1938 = vld [vmem:[%s1913 + $0x90] sm:$0xff]
        %v1939 = vld [vmem:[%s1913 + $0x98] sm:$0xf]
        %v1940 = vld [vmem:[%s1913 + $0x9c] sm:$0xff]
        %v1941 = vld [vmem:[%s1913 + $0xa4] sm:$0xf]
        %v1942 = vld [vmem:[%s1913 + $0xa8] sm:$0xff]
        %v1943 = vld [vmem:[%s1913 + $0xb0] sm:$0xf]
        %v1944 = vld [vmem:[%s1913 + $0xb4] sm:$0xff]
        %v1945 = vld [vmem:[%s1913 + $0xbc] sm:$0xf]
        %s1946 = scalar_lea.vmem [#allocation7], 384
        %v1947 = vld [vmem:[%s1946] sm:$0xf]
        %v1948 = vld [vmem:[%s1946 + $0x4] sm:$0xf]
        %v1949 = vld [vmem:[%s1946 + $0x8] sm:$0xf]
        %v1950 = vld [vmem:[%s1946 + $0xc] sm:$0xf]
        %v1951 = vld [vmem:[%s1946 + $0x10] sm:$0xf]
        %v1952 = vld [vmem:[%s1946 + $0x14] sm:$0xf]
        %v1953 = vld [vmem:[%s1946 + $0x18] sm:$0xf]
        %v1954 = vld [vmem:[%s1946 + $0x1c] sm:$0xf]
        %v1955 = vld [vmem:[%s1946 + $0x20] sm:$0xf]
        %v1956 = vld [vmem:[%s1946 + $0x24] sm:$0xf]
        %v1957 = vld [vmem:[%s1946 + $0x28] sm:$0xf]
        %v1958 = vld [vmem:[%s1946 + $0x2c] sm:$0xf]
        %v1959 = vld [vmem:[%s1946 + $0x30] sm:$0xf]
        %v1960 = vld [vmem:[%s1946 + $0x34] sm:$0xf]
        %v1961 = vld [vmem:[%s1946 + $0x38] sm:$0xf]
        %v1962 = vld [vmem:[%s1946 + $0x3c] sm:$0xf]
        %v1963 = vld [vmem:[%s1946 + $0x40] sm:$0xf]
        %v1964 = vld [vmem:[%s1946 + $0x44] sm:$0xf]
        %v1965 = vld [vmem:[%s1946 + $0x48] sm:$0xf]
        %v1966 = vld [vmem:[%s1946 + $0x4c] sm:$0xf]
        %v1967 = vld [vmem:[%s1946 + $0x50] sm:$0xf]
        %v1968 = vld [vmem:[%s1946 + $0x54] sm:$0xf]
        %v1969 = vld [vmem:[%s1946 + $0x58] sm:$0xf]
        %v1970 = vld [vmem:[%s1946 + $0x5c] sm:$0xf]
        %v1971 = vld [vmem:[%s1946 + $0x60] sm:$0xf]
        %v1972 = vld [vmem:[%s1946 + $0x64] sm:$0xf]
        %v1973 = vld [vmem:[%s1946 + $0x68] sm:$0xf]
        %v1974 = vld [vmem:[%s1946 + $0x6c] sm:$0xf]
        %v1975 = vld [vmem:[%s1946 + $0x70] sm:$0xf]
        %v1976 = vld [vmem:[%s1946 + $0x74] sm:$0xf]
        %v1977 = vld [vmem:[%s1946 + $0x78] sm:$0xf]
        %v1978 = vld [vmem:[%s1946 + $0x7c] sm:$0xf]
        %v1979 = vld [vmem:[%s1946 + $0x80] sm:$0xf]
        %v1980 = vld [vmem:[%s1946 + $0x84] sm:$0xf]
        %v1981 = vld [vmem:[%s1946 + $0x88] sm:$0xf]
        %v1982 = vld [vmem:[%s1946 + $0x8c] sm:$0xf]
        %v1983 = vld [vmem:[%s1946 + $0x90] sm:$0xf]
        %v1984 = vld [vmem:[%s1946 + $0x94] sm:$0xf]
        %v1985 = vld [vmem:[%s1946 + $0x98] sm:$0xf]
        %v1986 = vld [vmem:[%s1946 + $0x9c] sm:$0xf]
        %v1987 = vld [vmem:[%s1946 + $0xa0] sm:$0xf]
        %v1988 = vld [vmem:[%s1946 + $0xa4] sm:$0xf]
        %v1989 = vld [vmem:[%s1946 + $0xa8] sm:$0xf]
        %v1990 = vld [vmem:[%s1946 + $0xac] sm:$0xf]
        %v1991 = vld [vmem:[%s1946 + $0xb0] sm:$0xf]
        %v1992 = vld [vmem:[%s1946 + $0xb4] sm:$0xf]
        %v1993 = vld [vmem:[%s1946 + $0xb8] sm:$0xf]
        %v1994 = vld [vmem:[%s1946 + $0xbc] sm:$0xf]
        %v2027 = vunpack.c.l.b16 %v1914
        %v2028 = vunpack.c.h.b16 %v1914
        %v2029 = vunpack.c.l.b16 %v1915
        %v2030 = vunpack.c.l.b16 %v1916
        %v2031 = vunpack.c.h.b16 %v1916
        %v2032 = vunpack.c.l.b16 %v1917
        %v2033 = vunpack.c.l.b16 %v1918
        %v2034 = vunpack.c.h.b16 %v1918
        %v2035 = vunpack.c.l.b16 %v1919
        %v2036 = vunpack.c.l.b16 %v1920
        %v2037 = vunpack.c.h.b16 %v1920
        %v2038 = vunpack.c.l.b16 %v1921
        %v2039 = vunpack.c.l.b16 %v1922
        %v2040 = vunpack.c.h.b16 %v1922
        %v2041 = vunpack.c.l.b16 %v1923
        %v2042 = vunpack.c.l.b16 %v1924
        %v2043 = vunpack.c.h.b16 %v1924
        %v2044 = vunpack.c.l.b16 %v1925
        %v2045 = vunpack.c.l.b16 %v1926
        %v2046 = vunpack.c.h.b16 %v1926
        %v2047 = vunpack.c.l.b16 %v1927
        %v2048 = vunpack.c.l.b16 %v1928
        %v2049 = vunpack.c.h.b16 %v1928
        %v2050 = vunpack.c.l.b16 %v1929
        %v2051 = vunpack.c.l.b16 %v1930
        %v2052 = vunpack.c.h.b16 %v1930
        %v2053 = vunpack.c.l.b16 %v1931
        %v2054 = vunpack.c.l.b16 %v1932
        %v2055 = vunpack.c.h.b16 %v1932
        %v2056 = vunpack.c.l.b16 %v1933
        %v2057 = vunpack.c.l.b16 %v1934
        %v2058 = vunpack.c.h.b16 %v1934
        %v2059 = vunpack.c.l.b16 %v1935
        %v2060 = vunpack.c.l.b16 %v1936
        %v2061 = vunpack.c.h.b16 %v1936
        %v2062 = vunpack.c.l.b16 %v1937
        %v2063 = vunpack.c.l.b16 %v1938
        %v2064 = vunpack.c.h.b16 %v1938
        %v2065 = vunpack.c.l.b16 %v1939
        %v2066 = vunpack.c.l.b16 %v1940
        %v2067 = vunpack.c.h.b16 %v1940
        %v2068 = vunpack.c.l.b16 %v1941
        %v2069 = vunpack.c.l.b16 %v1942
        %v2070 = vunpack.c.h.b16 %v1942
        %v2071 = vunpack.c.l.b16 %v1943
        %v2072 = vunpack.c.l.b16 %v1944
        %v2073 = vunpack.c.h.b16 %v1944
        %v2074 = vunpack.c.l.b16 %v1945
        %v2075 = vpack.c.b16 %v2030, %v2027
        %v2076 = vpack.c.b16 %v2031, %v2028
        %v2077 = vpack.c.b16 %v2032, %v2029
        %v2078 = vpack.c.b16 %v2036, %v2033
        %v2079 = vpack.c.b16 %v2037, %v2034
        %v2080 = vpack.c.b16 %v2038, %v2035
        %v2081 = vpack.c.b16 %v2042, %v2039
        %v2082 = vpack.c.b16 %v2043, %v2040
        %v2083 = vpack.c.b16 %v2044, %v2041
        %v2084 = vpack.c.b16 %v2048, %v2045
        %v2085 = vpack.c.b16 %v2049, %v2046
        %v2086 = vpack.c.b16 %v2050, %v2047
        %v2087 = vpack.c.b16 %v2054, %v2051
        %v2088 = vpack.c.b16 %v2055, %v2052
        %v2089 = vpack.c.b16 %v2056, %v2053
        %v2090 = vpack.c.b16 %v2060, %v2057
        %v2091 = vpack.c.b16 %v2061, %v2058
        %v2092 = vpack.c.b16 %v2062, %v2059
        %v2093 = vpack.c.b16 %v2066, %v2063
        %v2094 = vpack.c.b16 %v2067, %v2064
        %v2095 = vpack.c.b16 %v2068, %v2065
        %v2096 = vpack.c.b16 %v2072, %v2069
        %v2097 = vpack.c.b16 %v2073, %v2070
        %v2098 = vpack.c.b16 %v2074, %v2071
        %v2171 = vunpack.c.l.b16 %v1947
        %v2172 = vunpack.c.l.b16 %v1948
        %v2173 = vunpack.c.l.b16 %v1949
        %v2174 = vunpack.c.l.b16 %v1950
        %v2175 = vunpack.c.l.b16 %v1951
        %v2176 = vunpack.c.l.b16 %v1952
        %v2177 = vunpack.c.l.b16 %v1953
        %v2178 = vunpack.c.l.b16 %v1954
        %v2179 = vunpack.c.l.b16 %v1955
        %v2180 = vunpack.c.l.b16 %v1956
        %v2181 = vunpack.c.l.b16 %v1957
        %v2182 = vunpack.c.l.b16 %v1958
        %v2183 = vunpack.c.l.b16 %v1959
        %v2184 = vunpack.c.l.b16 %v1960
        %v2185 = vunpack.c.l.b16 %v1961
        %v2186 = vunpack.c.l.b16 %v1962
        %v2187 = vunpack.c.l.b16 %v1963
        %v2188 = vunpack.c.l.b16 %v1964
        %v2189 = vunpack.c.l.b16 %v1965
        %v2190 = vunpack.c.l.b16 %v1966
        %v2191 = vunpack.c.l.b16 %v1967
        %v2192 = vunpack.c.l.b16 %v1968
        %v2193 = vunpack.c.l.b16 %v1969
        %v2194 = vunpack.c.l.b16 %v1970
        %v2195 = vunpack.c.l.b16 %v1971
        %v2196 = vunpack.c.l.b16 %v1972
        %v2197 = vunpack.c.l.b16 %v1973
        %v2198 = vunpack.c.l.b16 %v1974
        %v2199 = vunpack.c.l.b16 %v1975
        %v2200 = vunpack.c.l.b16 %v1976
        %v2201 = vunpack.c.l.b16 %v1977
        %v2202 = vunpack.c.l.b16 %v1978
        %v2203 = vunpack.c.l.b16 %v1979
        %v2204 = vunpack.c.l.b16 %v1980
        %v2205 = vunpack.c.l.b16 %v1981
        %v2206 = vunpack.c.l.b16 %v1982
        %v2207 = vunpack.c.l.b16 %v1983
        %v2208 = vunpack.c.l.b16 %v1984
        %v2209 = vunpack.c.l.b16 %v1985
        %v2210 = vunpack.c.l.b16 %v1986
        %v2211 = vunpack.c.l.b16 %v1987
        %v2212 = vunpack.c.l.b16 %v1988
        %v2213 = vunpack.c.l.b16 %v1989
        %v2214 = vunpack.c.l.b16 %v1990
        %v2215 = vunpack.c.l.b16 %v1991
        %v2216 = vunpack.c.l.b16 %v1992
        %v2217 = vunpack.c.l.b16 %v1993
        %v2218 = vunpack.c.l.b16 %v1994
        %v2219 = vpack.c.b16 %v2172, %v2171
        %v2220 = vpack.c.b16 %v2174, %v2173
        %v2221 = vpack.c.b16 %v2176, %v2175
        %v2222 = vpack.c.b16 %v2178, %v2177
        %v2223 = vpack.c.b16 %v2180, %v2179
        %v2224 = vpack.c.b16 %v2182, %v2181
        %v2225 = vpack.c.b16 %v2184, %v2183
        %v2226 = vpack.c.b16 %v2186, %v2185
        %v2227 = vpack.c.b16 %v2188, %v2187
        %v2228 = vpack.c.b16 %v2190, %v2189
        %v2229 = vpack.c.b16 %v2192, %v2191
        %v2230 = vpack.c.b16 %v2194, %v2193
        %v2231 = vpack.c.b16 %v2196, %v2195
        %v2232 = vpack.c.b16 %v2198, %v2197
        %v2233 = vpack.c.b16 %v2200, %v2199
        %v2234 = vpack.c.b16 %v2202, %v2201
        %v2235 = vpack.c.b16 %v2204, %v2203
        %v2236 = vpack.c.b16 %v2206, %v2205
        %v2237 = vpack.c.b16 %v2208, %v2207
        %v2238 = vpack.c.b16 %v2210, %v2209
        %v2239 = vpack.c.b16 %v2212, %v2211
        %v2240 = vpack.c.b16 %v2214, %v2213
        %v2241 = vpack.c.b16 %v2216, %v2215
        %v2242 = vpack.c.b16 %v2218, %v2217
        %2267 = vmatpush.bf16.msra.mxu0 %v2226
        %2268 = vmatpush.bf16.msra.mxu0 %v2225
        %2269 = vmatpush.bf16.msra.mxu0 %v2224
        %2270 = vmatpush.bf16.msra.mxu0 %v2223
        %2271 = vmatpush.bf16.msra.mxu0 %v2222
        %2272 = vmatpush.bf16.msra.mxu0 %v2221
        %2273 = vmatpush.bf16.msra.mxu0 %v2220
        %2274 = vmatpush.bf16.msra.mxu0 %v2219
        %2275 = vmatmul.bf16.gmra.mxu0 %v2075
        %v2276 = vpop.f32.mrf.mxu0
        %v2277 = vadd.f32 0.0, %v2276
        %v2278 = vpop.f32.mrf.mxu0
        %v2279 = vadd.f32 0.0, %v2278
        %2280 = vmatmul.bf16.gmra.mxu0 %v2078
        %v2281 = vpop.f32.mrf.mxu0
        %v2282 = vadd.f32 0.0, %v2281
        %v2283 = vpop.f32.mrf.mxu0
        %v2284 = vadd.f32 0.0, %v2283
        %2285 = vmatmul.bf16.gmra.mxu0 %v2081
        %v2286 = vpop.f32.mrf.mxu0
        %v2287 = vadd.f32 0.0, %v2286
        %v2288 = vpop.f32.mrf.mxu0
        %v2289 = vadd.f32 0.0, %v2288
        %2290 = vmatmul.bf16.gmra.mxu0 %v2084
        %v2291 = vpop.f32.mrf.mxu0
        %v2292 = vadd.f32 0.0, %v2291
        %v2293 = vpop.f32.mrf.mxu0
        %v2294 = vadd.f32 0.0, %v2293
        %2295 = vmatmul.bf16.gmra.mxu0 %v2087
        %v2296 = vpop.f32.mrf.mxu0
        %v2297 = vadd.f32 0.0, %v2296
        %v2298 = vpop.f32.mrf.mxu0
        %v2299 = vadd.f32 0.0, %v2298
        %2300 = vmatmul.bf16.gmra.mxu0 %v2090
        %v2301 = vpop.f32.mrf.mxu0
        %v2302 = vadd.f32 0.0, %v2301
        %v2303 = vpop.f32.mrf.mxu0
        %v2304 = vadd.f32 0.0, %v2303
        %2305 = vmatmul.bf16.gmra.mxu0 %v2093
        %v2306 = vpop.f32.mrf.mxu0
        %v2307 = vadd.f32 0.0, %v2306
        %v2308 = vpop.f32.mrf.mxu0
        %v2309 = vadd.f32 0.0, %v2308
        %2310 = vmatmul.bf16.gmra.mxu0 %v2096
        %v2311 = vpop.f32.mrf.mxu0
        %v2312 = vadd.f32 0.0, %v2311
        %v2313 = vpop.f32.mrf.mxu0
        %v2314 = vadd.f32 0.0, %v2313
        %2315 = vdwg.mxu0
        %2316 = vmatpush.bf16.msra.mxu0 %v2234
        %2317 = vmatpush.bf16.msra.mxu0 %v2233
        %2318 = vmatpush.bf16.msra.mxu0 %v2232
        %2319 = vmatpush.bf16.msra.mxu0 %v2231
        %2320 = vmatpush.bf16.msra.mxu0 %v2230
        %2321 = vmatpush.bf16.msra.mxu0 %v2229
        %2322 = vmatpush.bf16.msra.mxu0 %v2228
        %2323 = vmatpush.bf16.msra.mxu0 %v2227
        %2324 = vmatmul.bf16.gmra.mxu0 %v2076
        %v2325 = vpop.f32.mrf.mxu0
        %v2326 = vadd.f32 %v2277, %v2325
        %v2327 = vpop.f32.mrf.mxu0
        %v2328 = vadd.f32 %v2279, %v2327
        %2329 = vmatmul.bf16.gmra.mxu0 %v2079
        %v2330 = vpop.f32.mrf.mxu0
        %v2331 = vadd.f32 %v2282, %v2330
        %v2332 = vpop.f32.mrf.mxu0
        %v2333 = vadd.f32 %v2284, %v2332
        %2334 = vmatmul.bf16.gmra.mxu0 %v2082
        %v2335 = vpop.f32.mrf.mxu0
        %v2336 = vadd.f32 %v2287, %v2335
        %v2337 = vpop.f32.mrf.mxu0
        %v2338 = vadd.f32 %v2289, %v2337
        %2339 = vmatmul.bf16.gmra.mxu0 %v2085
        %v2340 = vpop.f32.mrf.mxu0
        %v2341 = vadd.f32 %v2292, %v2340
        %v2342 = vpop.f32.mrf.mxu0
        %v2343 = vadd.f32 %v2294, %v2342
        %2344 = vmatmul.bf16.gmra.mxu0 %v2088
        %v2345 = vpop.f32.mrf.mxu0
        %v2346 = vadd.f32 %v2297, %v2345
        %v2347 = vpop.f32.mrf.mxu0
        %v2348 = vadd.f32 %v2299, %v2347
        %2349 = vmatmul.bf16.gmra.mxu0 %v2091
        %v2350 = vpop.f32.mrf.mxu0
        %v2351 = vadd.f32 %v2302, %v2350
        %v2352 = vpop.f32.mrf.mxu0
        %v2353 = vadd.f32 %v2304, %v2352
        %2354 = vmatmul.bf16.gmra.mxu0 %v2094
        %v2355 = vpop.f32.mrf.mxu0
        %v2356 = vadd.f32 %v2307, %v2355
        %v2357 = vpop.f32.mrf.mxu0
        %v2358 = vadd.f32 %v2309, %v2357
        %2359 = vmatmul.bf16.gmra.mxu0 %v2097
        %v2360 = vpop.f32.mrf.mxu0
        %v2361 = vadd.f32 %v2312, %v2360
        %v2362 = vpop.f32.mrf.mxu0
        %v2363 = vadd.f32 %v2314, %v2362
        %2364 = vdwg.mxu0
        %2365 = vmatpush.bf16.msra.mxu0 %v2242
        %2366 = vmatpush.bf16.msra.mxu0 %v2241
        %2367 = vmatpush.bf16.msra.mxu0 %v2240
        %2368 = vmatpush.bf16.msra.mxu0 %v2239
        %2369 = vmatpush.bf16.msra.mxu0 %v2238
        %2370 = vmatpush.bf16.msra.mxu0 %v2237
        %2371 = vmatpush.bf16.msra.mxu0 %v2236
        %2372 = vmatpush.bf16.msra.mxu0 %v2235
        %2373 = vmatmul.bf16.gmra.mxu0 %v2077
        %v2374 = vpop.f32.mrf.mxu0
        %v2375 = vadd.f32 %v2326, %v2374
        %v2376 = vpop.f32.mrf.mxu0
        %v2377 = vadd.f32 %v2328, %v2376
        %2378 = vmatmul.bf16.gmra.mxu0 %v2080
        %v2379 = vpop.f32.mrf.mxu0
        %v2380 = vadd.f32 %v2331, %v2379
        %v2381 = vpop.f32.mrf.mxu0
        %v2382 = vadd.f32 %v2333, %v2381
        %2383 = vmatmul.bf16.gmra.mxu0 %v2083
        %v2384 = vpop.f32.mrf.mxu0
        %v2385 = vadd.f32 %v2336, %v2384
        %v2386 = vpop.f32.mrf.mxu0
        %v2387 = vadd.f32 %v2338, %v2386
        %2388 = vmatmul.bf16.gmra.mxu0 %v2086
        %v2389 = vpop.f32.mrf.mxu0
        %v2390 = vadd.f32 %v2341, %v2389
        %v2391 = vpop.f32.mrf.mxu0
        %v2392 = vadd.f32 %v2343, %v2391
        %2393 = vmatmul.bf16.gmra.mxu0 %v2089
        %v2394 = vpop.f32.mrf.mxu0
        %v2395 = vadd.f32 %v2346, %v2394
        %v2396 = vpop.f32.mrf.mxu0
        %v2397 = vadd.f32 %v2348, %v2396
        %2398 = vmatmul.bf16.gmra.mxu0 %v2092
        %v2399 = vpop.f32.mrf.mxu0
        %v2400 = vadd.f32 %v2351, %v2399
        %v2401 = vpop.f32.mrf.mxu0
        %v2402 = vadd.f32 %v2353, %v2401
        %2403 = vmatmul.bf16.gmra.mxu0 %v2095
        %v2404 = vpop.f32.mrf.mxu0
        %v2405 = vadd.f32 %v2356, %v2404
        %v2406 = vpop.f32.mrf.mxu0
        %v2407 = vadd.f32 %v2358, %v2406
        %2408 = vmatmul.bf16.gmra.mxu0 %v2098
        %v2409 = vpop.f32.mrf.mxu0
        %v2410 = vadd.f32 %v2361, %v2409
        %v2411 = vpop.f32.mrf.mxu0
        %v2412 = vadd.f32 %v2363, %v2411
        %2413 = vdwg.mxu0
        %v2414 = vadd.f32 %v1874, %v2375
        %v2415 = vadd.f32 %v1876, %v2377
        %v2416 = vadd.f32 %v1879, %v2380
        %v2417 = vadd.f32 %v1881, %v2382
        %v2418 = vadd.f32 %v1884, %v2385
        %v2419 = vadd.f32 %v1886, %v2387
        %v2420 = vadd.f32 %v1889, %v2390
        %v2421 = vadd.f32 %v1891, %v2392
        %v2422 = vadd.f32 %v1894, %v2395
        %v2423 = vadd.f32 %v1896, %v2397
        %v2424 = vadd.f32 %v1899, %v2400
        %v2425 = vadd.f32 %v1901, %v2402
        %v2426 = vadd.f32 %v1904, %v2405
        %v2427 = vadd.f32 %v1906, %v2407
        %v2428 = vadd.f32 %v1909, %v2410
        %v2429 = vadd.f32 %v1911, %v2412
        %v2430 = vld [vmem:[%s2] sm:$0x1]
        %v2432 = vperm.slane %v2430, 0
        %v2434 = vadd.f32 %v2414, %v2432
        %v2435 = vadd.f32 %v2415, %v2432
        %v2436 = vadd.f32 %v2416, %v2432
        %v2437 = vadd.f32 %v2417, %v2432
        %v2438 = vadd.f32 %v2418, %v2432
        %v2439 = vadd.f32 %v2419, %v2432
        %v2440 = vadd.f32 %v2420, %v2432
        %v2441 = vadd.f32 %v2421, %v2432
        %v2442 = vadd.f32 %v2422, %v2432
        %v2443 = vadd.f32 %v2423, %v2432
        %v2444 = vadd.f32 %v2424, %v2432
        %v2445 = vadd.f32 %v2425, %v2432
        %v2446 = vadd.f32 %v2426, %v2432
        %v2447 = vadd.f32 %v2427, %v2432
        %v2448 = vadd.f32 %v2428, %v2432
        %v2449 = vadd.f32 %v2429, %v2432
        %v2450 = vsub.f32 0.0, %v2434
        %v2451 = vsub.f32 0.0, %v2435
        %v2452 = vsub.f32 0.0, %v2436
        %v2453 = vsub.f32 0.0, %v2437
        %v2454 = vsub.f32 0.0, %v2438
        %v2455 = vsub.f32 0.0, %v2439
        %v2456 = vsub.f32 0.0, %v2440
        %v2457 = vsub.f32 0.0, %v2441
        %v2458 = vsub.f32 0.0, %v2442
        %v2459 = vsub.f32 0.0, %v2443
        %v2460 = vsub.f32 0.0, %v2444
        %v2461 = vsub.f32 0.0, %v2445
        %v2462 = vsub.f32 0.0, %v2446
        %v2463 = vsub.f32 0.0, %v2447
        %v2464 = vsub.f32 0.0, %v2448
        %v2465 = vsub.f32 0.0, %v2449
        %v2466 = vmul.f32 %v2450, 1.442695
        %v2467 = vpow.pop %v2466
        %v2468 = vmul.f32 %v2451, 1.442695
        %v2469 = vpow.pop %v2468
        %v2470 = vmul.f32 %v2452, 1.442695
        %v2471 = vpow.pop %v2470
        %v2472 = vmul.f32 %v2453, 1.442695
        %v2473 = vpow.pop %v2472
        %v2474 = vmul.f32 %v2454, 1.442695
        %v2475 = vpow.pop %v2474
        %v2476 = vmul.f32 %v2455, 1.442695
        %v2477 = vpow.pop %v2476
        %v2478 = vmul.f32 %v2456, 1.442695
        %v2479 = vpow.pop %v2478
        %v2480 = vmul.f32 %v2457, 1.442695
        %v2481 = vpow.pop %v2480
        %v2482 = vmul.f32 %v2458, 1.442695
        %v2483 = vpow.pop %v2482
        %v2484 = vmul.f32 %v2459, 1.442695
        %v2485 = vpow.pop %v2484
        %v2486 = vmul.f32 %v2460, 1.442695
        %v2487 = vpow.pop %v2486
        %v2488 = vmul.f32 %v2461, 1.442695
        %v2489 = vpow.pop %v2488
        %v2490 = vmul.f32 %v2462, 1.442695
        %v2491 = vpow.pop %v2490
        %v2492 = vmul.f32 %v2463, 1.442695
        %v2493 = vpow.pop %v2492
        %v2494 = vmul.f32 %v2464, 1.442695
        %v2495 = vpow.pop %v2494
        %v2496 = vmul.f32 %v2465, 1.442695
        %v2497 = vpow.pop %v2496
        %v2498 = vadd.f32 %v2467, 1.0
        %v2499 = vadd.f32 %v2469, 1.0
        %v2500 = vadd.f32 %v2471, 1.0
        %v2501 = vadd.f32 %v2473, 1.0
        %v2502 = vadd.f32 %v2475, 1.0
        %v2503 = vadd.f32 %v2477, 1.0
        %v2504 = vadd.f32 %v2479, 1.0
        %v2505 = vadd.f32 %v2481, 1.0
        %v2506 = vadd.f32 %v2483, 1.0
        %v2507 = vadd.f32 %v2485, 1.0
        %v2508 = vadd.f32 %v2487, 1.0
        %v2509 = vadd.f32 %v2489, 1.0
        %v2510 = vadd.f32 %v2491, 1.0
        %v2511 = vadd.f32 %v2493, 1.0
        %v2512 = vadd.f32 %v2495, 1.0
        %v2513 = vadd.f32 %v2497, 1.0
        %v2514 = vrcp.pop %v2498
        %v2515 = vrcp.pop %v2499
        %v2516 = vrcp.pop %v2500
        %v2517 = vrcp.pop %v2501
        %v2518 = vrcp.pop %v2502
        %v2519 = vrcp.pop %v2503
        %v2520 = vrcp.pop %v2504
        %v2521 = vrcp.pop %v2505
        %v2522 = vrcp.pop %v2506
        %v2523 = vrcp.pop %v2507
        %v2524 = vrcp.pop %v2508
        %v2525 = vrcp.pop %v2509
        %v2526 = vrcp.pop %v2510
        %v2527 = vrcp.pop %v2511
        %v2528 = vrcp.pop %v2512
        %v2529 = vrcp.pop %v2513
        %v2530 = vmul.f32 %v2434, %v2514
        %v2531 = vmul.f32 %v2435, %v2515
        %v2532 = vmul.f32 %v2436, %v2516
        %v2533 = vmul.f32 %v2437, %v2517
        %v2534 = vmul.f32 %v2438, %v2518
        %v2535 = vmul.f32 %v2439, %v2519
        %v2536 = vmul.f32 %v2440, %v2520
        %v2537 = vmul.f32 %v2441, %v2521
        %v2538 = vmul.f32 %v2442, %v2522
        %v2539 = vmul.f32 %v2443, %v2523
        %v2540 = vmul.f32 %v2444, %v2524
        %v2541 = vmul.f32 %v2445, %v2525
        %v2542 = vmul.f32 %v2446, %v2526
        %v2543 = vmul.f32 %v2447, %v2527
        %v2544 = vmul.f32 %v2448, %v2528
        %v2545 = vmul.f32 %v2449, %v2529
        %v2546 = vpack.c.bf16 %v2530, %v2530
        %v2547 = vpack.c.bf16 %v2531, %v2531
        %v2548 = vpack.c.bf16 %v2532, %v2532
        %v2549 = vpack.c.bf16 %v2533, %v2533
        %v2550 = vpack.c.bf16 %v2534, %v2534
        %v2551 = vpack.c.bf16 %v2535, %v2535
        %v2552 = vpack.c.bf16 %v2536, %v2536
        %v2553 = vpack.c.bf16 %v2537, %v2537
        %v2554 = vpack.c.bf16 %v2538, %v2538
        %v2555 = vpack.c.bf16 %v2539, %v2539
        %v2556 = vpack.c.bf16 %v2540, %v2540
        %v2557 = vpack.c.bf16 %v2541, %v2541
        %v2558 = vpack.c.bf16 %v2542, %v2542
        %v2559 = vpack.c.bf16 %v2543, %v2543
        %v2560 = vpack.c.bf16 %v2544, %v2544
        %v2561 = vpack.c.bf16 %v2545, %v2545
        %v2578 = vunpack.c.l.b16 %v2546
        %v2579 = vunpack.c.l.b16 %v2547
        %v2580 = vunpack.c.l.b16 %v2548
        %v2581 = vunpack.c.l.b16 %v2549
        %v2582 = vunpack.c.l.b16 %v2550
        %v2583 = vunpack.c.l.b16 %v2551
        %v2584 = vunpack.c.l.b16 %v2552
        %v2585 = vunpack.c.l.b16 %v2553
        %v2586 = vunpack.c.l.b16 %v2554
        %v2587 = vunpack.c.l.b16 %v2555
        %v2588 = vunpack.c.l.b16 %v2556
        %v2589 = vunpack.c.l.b16 %v2557
        %v2590 = vunpack.c.l.b16 %v2558
        %v2591 = vunpack.c.l.b16 %v2559
        %v2592 = vunpack.c.l.b16 %v2560
        %v2593 = vunpack.c.l.b16 %v2561
        %v2594 = vpack.c.b16 %v2579, %v2578
        %v2595 = vpack.c.b16 %v2581, %v2580
        %v2596 = vpack.c.b16 %v2583, %v2582
        %v2597 = vpack.c.b16 %v2585, %v2584
        %v2598 = vpack.c.b16 %v2587, %v2586
        %v2599 = vpack.c.b16 %v2589, %v2588
        %v2600 = vpack.c.b16 %v2591, %v2590
        %v2601 = vpack.c.b16 %v2593, %v2592
        %v2603 = vshrl.u32 %v2594, 16
        %v2605 = vrot.slane %v2603, 7
        %v2606 = vshll.u32 %v2594, 16
        %v2608 = vor.u32 %v2605, %v2606
        %v2610 = vshrl.u32 %v2595, 16
        %v2612 = vrot.slane %v2610, 7
        %v2613 = vshll.u32 %v2595, 16
        %v2615 = vor.u32 %v2612, %v2613
        %v2617 = vshrl.u32 %v2596, 16
        %v2619 = vrot.slane %v2617, 7
        %v2620 = vshll.u32 %v2596, 16
        %v2622 = vor.u32 %v2619, %v2620
        %v2624 = vshrl.u32 %v2597, 16
        %v2626 = vrot.slane %v2624, 7
        %v2627 = vshll.u32 %v2597, 16
        %v2629 = vor.u32 %v2626, %v2627
        %v2631 = vshrl.u32 %v2598, 16
        %v2633 = vrot.slane %v2631, 7
        %v2634 = vshll.u32 %v2598, 16
        %v2636 = vor.u32 %v2633, %v2634
        %v2638 = vshrl.u32 %v2599, 16
        %v2640 = vrot.slane %v2638, 7
        %v2641 = vshll.u32 %v2599, 16
        %v2643 = vor.u32 %v2640, %v2641
        %v2645 = vshrl.u32 %v2600, 16
        %v2647 = vrot.slane %v2645, 7
        %v2648 = vshll.u32 %v2600, 16
        %v2650 = vor.u32 %v2647, %v2648
        %v2652 = vshrl.u32 %v2601, 16
        %v2654 = vrot.slane %v2652, 7
        %v2655 = vshll.u32 %v2601, 16
        %v2657 = vor.u32 %v2654, %v2655
        %v2666 = vsel %vm419, 0, %v2608
        %v2667 = vsel %vm419, 0, %v2615
        %v2668 = vsel %vm419, 0, %v2622
        %v2669 = vsel %vm419, 0, %v2629
        %v2670 = vsel %vm419, 0, %v2636
        %v2671 = vsel %vm419, 0, %v2643
        %v2672 = vsel %vm419, 0, %v2650
        %v2673 = vsel %vm419, 0, %v2657
        %v2674 = vrot.slane %v2606, 1
        %v2675 = vor.u32 %v2603, %v2674
        %v2676 = vrot.slane %v2613, 1
        %v2677 = vor.u32 %v2610, %v2676
        %v2678 = vrot.slane %v2620, 1
        %v2679 = vor.u32 %v2617, %v2678
        %v2680 = vrot.slane %v2627, 1
        %v2681 = vor.u32 %v2624, %v2680
        %v2682 = vrot.slane %v2634, 1
        %v2683 = vor.u32 %v2631, %v2682
        %v2684 = vrot.slane %v2641, 1
        %v2685 = vor.u32 %v2638, %v2684
        %v2686 = vrot.slane %v2648, 1
        %v2687 = vor.u32 %v2645, %v2686
        %v2688 = vrot.slane %v2655, 1
        %v2689 = vor.u32 %v2652, %v2688
        %v2698 = vsel %vm454, %v2675, 0
        %v2699 = vsel %vm454, %v2677, 0
        %v2700 = vsel %vm454, %v2679, 0
        %v2701 = vsel %vm454, %v2681, 0
        %v2702 = vsel %vm454, %v2683, 0
        %v2703 = vsel %vm454, %v2685, 0
        %v2704 = vsel %vm454, %v2687, 0
        %v2705 = vsel %vm454, %v2689, 0
        %v2722 = vunpack.c.l.b16 %v2666
        %v2723 = vunpack.c.l.b16 %v2698
        %v2724 = vunpack.c.h.b16 %v2666
        %v2725 = vunpack.c.h.b16 %v2698
        %v2726 = vunpack.c.l.b16 %v2667
        %v2727 = vunpack.c.l.b16 %v2699
        %v2728 = vunpack.c.h.b16 %v2667
        %v2729 = vunpack.c.h.b16 %v2699
        %v2730 = vunpack.c.l.b16 %v2668
        %v2731 = vunpack.c.l.b16 %v2700
        %v2732 = vunpack.c.h.b16 %v2668
        %v2733 = vunpack.c.h.b16 %v2700
        %v2734 = vunpack.c.l.b16 %v2669
        %v2735 = vunpack.c.l.b16 %v2701
        %v2736 = vunpack.c.h.b16 %v2669
        %v2737 = vunpack.c.h.b16 %v2701
        %v2738 = vunpack.c.l.b16 %v2670
        %v2739 = vunpack.c.l.b16 %v2702
        %v2740 = vunpack.c.h.b16 %v2670
        %v2741 = vunpack.c.h.b16 %v2702
        %v2742 = vunpack.c.l.b16 %v2671
        %v2743 = vunpack.c.l.b16 %v2703
        %v2744 = vunpack.c.h.b16 %v2671
        %v2745 = vunpack.c.h.b16 %v2703
        %v2746 = vunpack.c.l.b16 %v2672
        %v2747 = vunpack.c.l.b16 %v2704
        %v2748 = vunpack.c.h.b16 %v2672
        %v2749 = vunpack.c.h.b16 %v2704
        %v2750 = vunpack.c.l.b16 %v2673
        %v2751 = vunpack.c.l.b16 %v2705
        %v2752 = vunpack.c.h.b16 %v2673
        %v2753 = vunpack.c.h.b16 %v2705
        %v2754 = vpack.c.b16 %v2578, %v2722
        %v2755 = vpack.c.b16 %v2723, %v2723
        %v2756 = vpack.c.b16 %v2579, %v2724
        %v2757 = vpack.c.b16 %v2725, %v2725
        %v2758 = vpack.c.b16 %v2580, %v2726
        %v2759 = vpack.c.b16 %v2727, %v2727
        %v2760 = vpack.c.b16 %v2581, %v2728
        %v2761 = vpack.c.b16 %v2729, %v2729
        %v2762 = vpack.c.b16 %v2582, %v2730
        %v2763 = vpack.c.b16 %v2731, %v2731
        %v2764 = vpack.c.b16 %v2583, %v2732
        %v2765 = vpack.c.b16 %v2733, %v2733
        %v2766 = vpack.c.b16 %v2584, %v2734
        %v2767 = vpack.c.b16 %v2735, %v2735
        %v2768 = vpack.c.b16 %v2585, %v2736
        %v2769 = vpack.c.b16 %v2737, %v2737
        %v2770 = vpack.c.b16 %v2586, %v2738
        %v2771 = vpack.c.b16 %v2739, %v2739
        %v2772 = vpack.c.b16 %v2587, %v2740
        %v2773 = vpack.c.b16 %v2741, %v2741
        %v2774 = vpack.c.b16 %v2588, %v2742
        %v2775 = vpack.c.b16 %v2743, %v2743
        %v2776 = vpack.c.b16 %v2589, %v2744
        %v2777 = vpack.c.b16 %v2745, %v2745
        %v2778 = vpack.c.b16 %v2590, %v2746
        %v2779 = vpack.c.b16 %v2747, %v2747
        %v2780 = vpack.c.b16 %v2591, %v2748
        %v2781 = vpack.c.b16 %v2749, %v2749
        %v2782 = vpack.c.b16 %v2592, %v2750
        %v2783 = vpack.c.b16 %v2751, %v2751
        %v2784 = vpack.c.b16 %v2593, %v2752
        %v2785 = vpack.c.b16 %v2753, %v2753
        %s2818 = scalar_lea.vmem [#allocation3], 24
        %2819 = vst [vmem:[%s2818] sm:$0xff] %v2754
        %2820 = vst [vmem:[%s2818 + $0x8] sm:$0xf] %v2755
        %2821 = vst [vmem:[%s2818 + $0xc] sm:$0xff] %v2756
        %2822 = vst [vmem:[%s2818 + $0x14] sm:$0xf] %v2757
        %2823 = vst [vmem:[%s2818 + $0x18] sm:$0xff] %v2758
        %2824 = vst [vmem:[%s2818 + $0x20] sm:$0xf] %v2759
        %2825 = vst [vmem:[%s2818 + $0x24] sm:$0xff] %v2760
        %2826 = vst [vmem:[%s2818 + $0x2c] sm:$0xf] %v2761
        %2827 = vst [vmem:[%s2818 + $0x30] sm:$0xff] %v2762
        %2828 = vst [vmem:[%s2818 + $0x38] sm:$0xf] %v2763
        %2829 = vst [vmem:[%s2818 + $0x3c] sm:$0xff] %v2764
        %2830 = vst [vmem:[%s2818 + $0x44] sm:$0xf] %v2765
        %2831 = vst [vmem:[%s2818 + $0x48] sm:$0xff] %v2766
        %2832 = vst [vmem:[%s2818 + $0x50] sm:$0xf] %v2767
        %2833 = vst [vmem:[%s2818 + $0x54] sm:$0xff] %v2768
        %2834 = vst [vmem:[%s2818 + $0x5c] sm:$0xf] %v2769
        %2835 = vst [vmem:[%s2818 + $0x60] sm:$0xff] %v2770
        %2836 = vst [vmem:[%s2818 + $0x68] sm:$0xf] %v2771
        %2837 = vst [vmem:[%s2818 + $0x6c] sm:$0xff] %v2772
        %2838 = vst [vmem:[%s2818 + $0x74] sm:$0xf] %v2773
        %2839 = vst [vmem:[%s2818 + $0x78] sm:$0xff] %v2774
        %2840 = vst [vmem:[%s2818 + $0x80] sm:$0xf] %v2775
        %2841 = vst [vmem:[%s2818 + $0x84] sm:$0xff] %v2776
        %2842 = vst [vmem:[%s2818 + $0x8c] sm:$0xf] %v2777
        %2843 = vst [vmem:[%s2818 + $0x90] sm:$0xff] %v2778
        %2844 = vst [vmem:[%s2818 + $0x98] sm:$0xf] %v2779
        %2845 = vst [vmem:[%s2818 + $0x9c] sm:$0xff] %v2780
        %2846 = vst [vmem:[%s2818 + $0xa4] sm:$0xf] %v2781
        %2847 = vst [vmem:[%s2818 + $0xa8] sm:$0xff] %v2782
        %2848 = vst [vmem:[%s2818 + $0xb0] sm:$0xf] %v2783
        %2849 = vst [vmem:[%s2818 + $0xb4] sm:$0xff] %v2784
        %2850 = vst [vmem:[%s2818 + $0xbc] sm:$0xf] %v2785
        %s2851 = scalar_lea.vmem [#allocation2], 192
        %v2852 = vld [vmem:[%s2851] sm:$0xff]
        %v2853 = vld [vmem:[%s2851 + $0x8] sm:$0xf]
        %v2854 = vld [vmem:[%s2851 + $0xc] sm:$0xff]
        %v2855 = vld [vmem:[%s2851 + $0x14] sm:$0xf]
        %v2856 = vld [vmem:[%s2851 + $0x18] sm:$0xff]
        %v2857 = vld [vmem:[%s2851 + $0x20] sm:$0xf]
        %v2858 = vld [vmem:[%s2851 + $0x24] sm:$0xff]
        %v2859 = vld [vmem:[%s2851 + $0x2c] sm:$0xf]
        %v2860 = vld [vmem:[%s2851 + $0x30] sm:$0xff]
        %v2861 = vld [vmem:[%s2851 + $0x38] sm:$0xf]
        %v2862 = vld [vmem:[%s2851 + $0x3c] sm:$0xff]
        %v2863 = vld [vmem:[%s2851 + $0x44] sm:$0xf]
        %v2864 = vld [vmem:[%s2851 + $0x48] sm:$0xff]
        %v2865 = vld [vmem:[%s2851 + $0x50] sm:$0xf]
        %v2866 = vld [vmem:[%s2851 + $0x54] sm:$0xff]
        %v2867 = vld [vmem:[%s2851 + $0x5c] sm:$0xf]
        %v2868 = vld [vmem:[%s2851 + $0x60] sm:$0xff]
        %v2869 = vld [vmem:[%s2851 + $0x68] sm:$0xf]
        %v2870 = vld [vmem:[%s2851 + $0x6c] sm:$0xff]
        %v2871 = vld [vmem:[%s2851 + $0x74] sm:$0xf]
        %v2872 = vld [vmem:[%s2851 + $0x78] sm:$0xff]
        %v2873 = vld [vmem:[%s2851 + $0x80] sm:$0xf]
        %v2874 = vld [vmem:[%s2851 + $0x84] sm:$0xff]
        %v2875 = vld [vmem:[%s2851 + $0x8c] sm:$0xf]
        %v2876 = vld [vmem:[%s2851 + $0x90] sm:$0xff]
        %v2877 = vld [vmem:[%s2851 + $0x98] sm:$0xf]
        %v2878 = vld [vmem:[%s2851 + $0x9c] sm:$0xff]
        %v2879 = vld [vmem:[%s2851 + $0xa4] sm:$0xf]
        %v2880 = vld [vmem:[%s2851 + $0xa8] sm:$0xff]
        %v2881 = vld [vmem:[%s2851 + $0xb0] sm:$0xf]
        %v2882 = vld [vmem:[%s2851 + $0xb4] sm:$0xff]
        %v2883 = vld [vmem:[%s2851 + $0xbc] sm:$0xf]
        %v2884 = vld [vmem:[#allocation7] sm:$0xf]
        %v2885 = vld [vmem:[#allocation7 + $0x4] sm:$0xf]
        %v2886 = vld [vmem:[#allocation7 + $0x8] sm:$0xf]
        %v2887 = vld [vmem:[#allocation7 + $0xc] sm:$0xf]
        %v2888 = vld [vmem:[#allocation7 + $0x10] sm:$0xf]
        %v2889 = vld [vmem:[#allocation7 + $0x14] sm:$0xf]
        %v2890 = vld [vmem:[#allocation7 + $0x18] sm:$0xf]
        %v2891 = vld [vmem:[#allocation7 + $0x1c] sm:$0xf]
        %v2892 = vld [vmem:[#allocation7 + $0x20] sm:$0xf]
        %v2893 = vld [vmem:[#allocation7 + $0x24] sm:$0xf]
        %v2894 = vld [vmem:[#allocation7 + $0x28] sm:$0xf]
        %v2895 = vld [vmem:[#allocation7 + $0x2c] sm:$0xf]
        %v2896 = vld [vmem:[#allocation7 + $0x30] sm:$0xf]
        %v2897 = vld [vmem:[#allocation7 + $0x34] sm:$0xf]
        %v2898 = vld [vmem:[#allocation7 + $0x38] sm:$0xf]
        %v2899 = vld [vmem:[#allocation7 + $0x3c] sm:$0xf]
        %v2900 = vld [vmem:[#allocation7 + $0x40] sm:$0xf]
        %v2901 = vld [vmem:[#allocation7 + $0x44] sm:$0xf]
        %v2902 = vld [vmem:[#allocation7 + $0x48] sm:$0xf]
        %v2903 = vld [vmem:[#allocation7 + $0x4c] sm:$0xf]
        %v2904 = vld [vmem:[#allocation7 + $0x50] sm:$0xf]
        %v2905 = vld [vmem:[#allocation7 + $0x54] sm:$0xf]
        %v2906 = vld [vmem:[#allocation7 + $0x58] sm:$0xf]
        %v2907 = vld [vmem:[#allocation7 + $0x5c] sm:$0xf]
        %v2908 = vld [vmem:[#allocation7 + $0x60] sm:$0xf]
        %v2909 = vld [vmem:[#allocation7 + $0x64] sm:$0xf]
        %v2910 = vld [vmem:[#allocation7 + $0x68] sm:$0xf]
        %v2911 = vld [vmem:[#allocation7 + $0x6c] sm:$0xf]
        %v2912 = vld [vmem:[#allocation7 + $0x70] sm:$0xf]
        %v2913 = vld [vmem:[#allocation7 + $0x74] sm:$0xf]
        %v2914 = vld [vmem:[#allocation7 + $0x78] sm:$0xf]
        %v2915 = vld [vmem:[#allocation7 + $0x7c] sm:$0xf]
        %v2916 = vld [vmem:[#allocation7 + $0x80] sm:$0xf]
        %v2917 = vld [vmem:[#allocation7 + $0x84] sm:$0xf]
        %v2918 = vld [vmem:[#allocation7 + $0x88] sm:$0xf]
        %v2919 = vld [vmem:[#allocation7 + $0x8c] sm:$0xf]
        %v2920 = vld [vmem:[#allocation7 + $0x90] sm:$0xf]
        %v2921 = vld [vmem:[#allocation7 + $0x94] sm:$0xf]
        %v2922 = vld [vmem:[#allocation7 + $0x98] sm:$0xf]
        %v2923 = vld [vmem:[#allocation7 + $0x9c] sm:$0xf]
        %v2924 = vld [vmem:[#allocation7 + $0xa0] sm:$0xf]
        %v2925 = vld [vmem:[#allocation7 + $0xa4] sm:$0xf]
        %v2926 = vld [vmem:[#allocation7 + $0xa8] sm:$0xf]
        %v2927 = vld [vmem:[#allocation7 + $0xac] sm:$0xf]
        %v2928 = vld [vmem:[#allocation7 + $0xb0] sm:$0xf]
        %v2929 = vld [vmem:[#allocation7 + $0xb4] sm:$0xf]
        %v2930 = vld [vmem:[#allocation7 + $0xb8] sm:$0xf]
        %v2931 = vld [vmem:[#allocation7 + $0xbc] sm:$0xf]
        %v2932 = vld [vmem:[%s881] sm:$0xff]
        %v2933 = vld [vmem:[%s881 + $0x8] sm:$0xf]
        %v2934 = vld [vmem:[%s881 + $0xc] sm:$0xff]
        %v2935 = vld [vmem:[%s881 + $0x14] sm:$0xf]
        %v2936 = vld [vmem:[%s881 + $0x18] sm:$0xff]
        %v2937 = vld [vmem:[%s881 + $0x20] sm:$0xf]
        %v2938 = vld [vmem:[%s881 + $0x24] sm:$0xff]
        %v2939 = vld [vmem:[%s881 + $0x2c] sm:$0xf]
        %v2940 = vld [vmem:[%s881 + $0x30] sm:$0xff]
        %v2941 = vld [vmem:[%s881 + $0x38] sm:$0xf]
        %v2942 = vld [vmem:[%s881 + $0x3c] sm:$0xff]
        %v2943 = vld [vmem:[%s881 + $0x44] sm:$0xf]
        %v2944 = vld [vmem:[%s881 + $0x48] sm:$0xff]
        %v2945 = vld [vmem:[%s881 + $0x50] sm:$0xf]
        %v2946 = vld [vmem:[%s881 + $0x54] sm:$0xff]
        %v2947 = vld [vmem:[%s881 + $0x5c] sm:$0xf]
        %v2948 = vld [vmem:[%s881 + $0x60] sm:$0xff]
        %v2949 = vld [vmem:[%s881 + $0x68] sm:$0xf]
        %v2950 = vld [vmem:[%s881 + $0x6c] sm:$0xff]
        %v2951 = vld [vmem:[%s881 + $0x74] sm:$0xf]
        %v2952 = vld [vmem:[%s881 + $0x78] sm:$0xff]
        %v2953 = vld [vmem:[%s881 + $0x80] sm:$0xf]
        %v2954 = vld [vmem:[%s881 + $0x84] sm:$0xff]
        %v2955 = vld [vmem:[%s881 + $0x8c] sm:$0xf]
        %v2956 = vld [vmem:[%s881 + $0x90] sm:$0xff]
        %v2957 = vld [vmem:[%s881 + $0x98] sm:$0xf]
        %v2958 = vld [vmem:[%s881 + $0x9c] sm:$0xff]
        %v2959 = vld [vmem:[%s881 + $0xa4] sm:$0xf]
        %v2960 = vld [vmem:[%s881 + $0xa8] sm:$0xff]
        %v2961 = vld [vmem:[%s881 + $0xb0] sm:$0xf]
        %v2962 = vld [vmem:[%s881 + $0xb4] sm:$0xff]
        %v2963 = vld [vmem:[%s881 + $0xbc] sm:$0xf]
        %v2964 = vld [vmem:[%s1026] sm:$0xf]
        %v2965 = vld [vmem:[%s1026 + $0x4] sm:$0xf]
        %v2966 = vld [vmem:[%s1026 + $0x8] sm:$0xf]
        %v2967 = vld [vmem:[%s1026 + $0xc] sm:$0xf]
        %v2968 = vld [vmem:[%s1026 + $0x10] sm:$0xf]
        %v2969 = vld [vmem:[%s1026 + $0x14] sm:$0xf]
        %v2970 = vld [vmem:[%s1026 + $0x18] sm:$0xf]
        %v2971 = vld [vmem:[%s1026 + $0x1c] sm:$0xf]
        %v2972 = vld [vmem:[%s1026 + $0x20] sm:$0xf]
        %v2973 = vld [vmem:[%s1026 + $0x24] sm:$0xf]
        %v2974 = vld [vmem:[%s1026 + $0x28] sm:$0xf]
        %v2975 = vld [vmem:[%s1026 + $0x2c] sm:$0xf]
        %v2976 = vld [vmem:[%s1026 + $0x30] sm:$0xf]
        %v2977 = vld [vmem:[%s1026 + $0x34] sm:$0xf]
        %v2978 = vld [vmem:[%s1026 + $0x38] sm:$0xf]
        %v2979 = vld [vmem:[%s1026 + $0x3c] sm:$0xf]
        %v2980 = vld [vmem:[%s1026 + $0x40] sm:$0xf]
        %v2981 = vld [vmem:[%s1026 + $0x44] sm:$0xf]
        %v2982 = vld [vmem:[%s1026 + $0x48] sm:$0xf]
        %v2983 = vld [vmem:[%s1026 + $0x4c] sm:$0xf]
        %v2984 = vld [vmem:[%s1026 + $0x50] sm:$0xf]
        %v2985 = vld [vmem:[%s1026 + $0x54] sm:$0xf]
        %v2986 = vld [vmem:[%s1026 + $0x58] sm:$0xf]
        %v2987 = vld [vmem:[%s1026 + $0x5c] sm:$0xf]
        %v2988 = vld [vmem:[%s1026 + $0x60] sm:$0xf]
        %v2989 = vld [vmem:[%s1026 + $0x64] sm:$0xf]
        %v2990 = vld [vmem:[%s1026 + $0x68] sm:$0xf]
        %v2991 = vld [vmem:[%s1026 + $0x6c] sm:$0xf]
        %v2992 = vld [vmem:[%s1026 + $0x70] sm:$0xf]
        %v2993 = vld [vmem:[%s1026 + $0x74] sm:$0xf]
        %v2994 = vld [vmem:[%s1026 + $0x78] sm:$0xf]
        %v2995 = vld [vmem:[%s1026 + $0x7c] sm:$0xf]
        %v2996 = vld [vmem:[%s1026 + $0x80] sm:$0xf]
        %v2997 = vld [vmem:[%s1026 + $0x84] sm:$0xf]
        %v2998 = vld [vmem:[%s1026 + $0x88] sm:$0xf]
        %v2999 = vld [vmem:[%s1026 + $0x8c] sm:$0xf]
        %v3000 = vld [vmem:[%s1026 + $0x90] sm:$0xf]
        %v3001 = vld [vmem:[%s1026 + $0x94] sm:$0xf]
        %v3002 = vld [vmem:[%s1026 + $0x98] sm:$0xf]
        %v3003 = vld [vmem:[%s1026 + $0x9c] sm:$0xf]
        %v3004 = vld [vmem:[%s1026 + $0xa0] sm:$0xf]
        %v3005 = vld [vmem:[%s1026 + $0xa4] sm:$0xf]
        %v3006 = vld [vmem:[%s1026 + $0xa8] sm:$0xf]
        %v3007 = vld [vmem:[%s1026 + $0xac] sm:$0xf]
        %v3008 = vld [vmem:[%s1026 + $0xb0] sm:$0xf]
        %v3009 = vld [vmem:[%s1026 + $0xb4] sm:$0xf]
        %v3010 = vld [vmem:[%s1026 + $0xb8] sm:$0xf]
        %v3011 = vld [vmem:[%s1026 + $0xbc] sm:$0xf]
        %v3044 = vunpack.c.l.b16 %v2932
        %v3045 = vunpack.c.h.b16 %v2932
        %v3046 = vunpack.c.l.b16 %v2933
        %v3047 = vunpack.c.l.b16 %v2934
        %v3048 = vunpack.c.h.b16 %v2934
        %v3049 = vunpack.c.l.b16 %v2935
        %v3050 = vunpack.c.l.b16 %v2936
        %v3051 = vunpack.c.h.b16 %v2936
        %v3052 = vunpack.c.l.b16 %v2937
        %v3053 = vunpack.c.l.b16 %v2938
        %v3054 = vunpack.c.h.b16 %v2938
        %v3055 = vunpack.c.l.b16 %v2939
        %v3056 = vunpack.c.l.b16 %v2940
        %v3057 = vunpack.c.h.b16 %v2940
        %v3058 = vunpack.c.l.b16 %v2941
        %v3059 = vunpack.c.l.b16 %v2942
        %v3060 = vunpack.c.h.b16 %v2942
        %v3061 = vunpack.c.l.b16 %v2943
        %v3062 = vunpack.c.l.b16 %v2944
        %v3063 = vunpack.c.h.b16 %v2944
        %v3064 = vunpack.c.l.b16 %v2945
        %v3065 = vunpack.c.l.b16 %v2946
        %v3066 = vunpack.c.h.b16 %v2946
        %v3067 = vunpack.c.l.b16 %v2947
        %v3068 = vunpack.c.l.b16 %v2948
        %v3069 = vunpack.c.h.b16 %v2948
        %v3070 = vunpack.c.l.b16 %v2949
        %v3071 = vunpack.c.l.b16 %v2950
        %v3072 = vunpack.c.h.b16 %v2950
        %v3073 = vunpack.c.l.b16 %v2951
        %v3074 = vunpack.c.l.b16 %v2952
        %v3075 = vunpack.c.h.b16 %v2952
        %v3076 = vunpack.c.l.b16 %v2953
        %v3077 = vunpack.c.l.b16 %v2954
        %v3078 = vunpack.c.h.b16 %v2954
        %v3079 = vunpack.c.l.b16 %v2955
        %v3080 = vunpack.c.l.b16 %v2956
        %v3081 = vunpack.c.h.b16 %v2956
        %v3082 = vunpack.c.l.b16 %v2957
        %v3083 = vunpack.c.l.b16 %v2958
        %v3084 = vunpack.c.h.b16 %v2958
        %v3085 = vunpack.c.l.b16 %v2959
        %v3086 = vunpack.c.l.b16 %v2960
        %v3087 = vunpack.c.h.b16 %v2960
        %v3088 = vunpack.c.l.b16 %v2961
        %v3089 = vunpack.c.l.b16 %v2962
        %v3090 = vunpack.c.h.b16 %v2962
        %v3091 = vunpack.c.l.b16 %v2963
        %v3092 = vpack.c.b16 %v3047, %v3044
        %v3093 = vpack.c.b16 %v3048, %v3045
        %v3094 = vpack.c.b16 %v3049, %v3046
        %v3095 = vpack.c.b16 %v3053, %v3050
        %v3096 = vpack.c.b16 %v3054, %v3051
        %v3097 = vpack.c.b16 %v3055, %v3052
        %v3098 = vpack.c.b16 %v3059, %v3056
        %v3099 = vpack.c.b16 %v3060, %v3057
        %v3100 = vpack.c.b16 %v3061, %v3058
        %v3101 = vpack.c.b16 %v3065, %v3062
        %v3102 = vpack.c.b16 %v3066, %v3063
        %v3103 = vpack.c.b16 %v3067, %v3064
        %v3104 = vpack.c.b16 %v3071, %v3068
        %v3105 = vpack.c.b16 %v3072, %v3069
        %v3106 = vpack.c.b16 %v3073, %v3070
        %v3107 = vpack.c.b16 %v3077, %v3074
        %v3108 = vpack.c.b16 %v3078, %v3075
        %v3109 = vpack.c.b16 %v3079, %v3076
        %v3110 = vpack.c.b16 %v3083, %v3080
        %v3111 = vpack.c.b16 %v3084, %v3081
        %v3112 = vpack.c.b16 %v3085, %v3082
        %v3113 = vpack.c.b16 %v3089, %v3086
        %v3114 = vpack.c.b16 %v3090, %v3087
        %v3115 = vpack.c.b16 %v3091, %v3088
        %v3188 = vunpack.c.l.b16 %v2964
        %v3189 = vunpack.c.l.b16 %v2965
        %v3190 = vunpack.c.l.b16 %v2966
        %v3191 = vunpack.c.l.b16 %v2967
        %v3192 = vunpack.c.l.b16 %v2968
        %v3193 = vunpack.c.l.b16 %v2969
        %v3194 = vunpack.c.l.b16 %v2970
        %v3195 = vunpack.c.l.b16 %v2971
        %v3196 = vunpack.c.l.b16 %v2972
        %v3197 = vunpack.c.l.b16 %v2973
        %v3198 = vunpack.c.l.b16 %v2974
        %v3199 = vunpack.c.l.b16 %v2975
        %v3200 = vunpack.c.l.b16 %v2976
        %v3201 = vunpack.c.l.b16 %v2977
        %v3202 = vunpack.c.l.b16 %v2978
        %v3203 = vunpack.c.l.b16 %v2979
        %v3204 = vunpack.c.l.b16 %v2980
        %v3205 = vunpack.c.l.b16 %v2981
        %v3206 = vunpack.c.l.b16 %v2982
        %v3207 = vunpack.c.l.b16 %v2983
        %v3208 = vunpack.c.l.b16 %v2984
        %v3209 = vunpack.c.l.b16 %v2985
        %v3210 = vunpack.c.l.b16 %v2986
        %v3211 = vunpack.c.l.b16 %v2987
        %v3212 = vunpack.c.l.b16 %v2988
        %v3213 = vunpack.c.l.b16 %v2989
        %v3214 = vunpack.c.l.b16 %v2990
        %v3215 = vunpack.c.l.b16 %v2991
        %v3216 = vunpack.c.l.b16 %v2992
        %v3217 = vunpack.c.l.b16 %v2993
        %v3218 = vunpack.c.l.b16 %v2994
        %v3219 = vunpack.c.l.b16 %v2995
        %v3220 = vunpack.c.l.b16 %v2996
        %v3221 = vunpack.c.l.b16 %v2997
        %v3222 = vunpack.c.l.b16 %v2998
        %v3223 = vunpack.c.l.b16 %v2999
        %v3224 = vunpack.c.l.b16 %v3000
        %v3225 = vunpack.c.l.b16 %v3001
        %v3226 = vunpack.c.l.b16 %v3002
        %v3227 = vunpack.c.l.b16 %v3003
        %v3228 = vunpack.c.l.b16 %v3004
        %v3229 = vunpack.c.l.b16 %v3005
        %v3230 = vunpack.c.l.b16 %v3006
        %v3231 = vunpack.c.l.b16 %v3007
        %v3232 = vunpack.c.l.b16 %v3008
        %v3233 = vunpack.c.l.b16 %v3009
        %v3234 = vunpack.c.l.b16 %v3010
        %v3235 = vunpack.c.l.b16 %v3011
        %v3236 = vpack.c.b16 %v3189, %v3188
        %v3237 = vpack.c.b16 %v3191, %v3190
        %v3238 = vpack.c.b16 %v3193, %v3192
        %v3239 = vpack.c.b16 %v3195, %v3194
        %v3240 = vpack.c.b16 %v3197, %v3196
        %v3241 = vpack.c.b16 %v3199, %v3198
        %v3242 = vpack.c.b16 %v3201, %v3200
        %v3243 = vpack.c.b16 %v3203, %v3202
        %v3244 = vpack.c.b16 %v3205, %v3204
        %v3245 = vpack.c.b16 %v3207, %v3206
        %v3246 = vpack.c.b16 %v3209, %v3208
        %v3247 = vpack.c.b16 %v3211, %v3210
        %v3248 = vpack.c.b16 %v3213, %v3212
        %v3249 = vpack.c.b16 %v3215, %v3214
        %v3250 = vpack.c.b16 %v3217, %v3216
        %v3251 = vpack.c.b16 %v3219, %v3218
        %v3252 = vpack.c.b16 %v3221, %v3220
        %v3253 = vpack.c.b16 %v3223, %v3222
        %v3254 = vpack.c.b16 %v3225, %v3224
        %v3255 = vpack.c.b16 %v3227, %v3226
        %v3256 = vpack.c.b16 %v3229, %v3228
        %v3257 = vpack.c.b16 %v3231, %v3230
        %v3258 = vpack.c.b16 %v3233, %v3232
        %v3259 = vpack.c.b16 %v3235, %v3234
        %3284 = vmatpush.bf16.msra.mxu0 %v3243
        %3285 = vmatpush.bf16.msra.mxu0 %v3242
        %3286 = vmatpush.bf16.msra.mxu0 %v3241
        %3287 = vmatpush.bf16.msra.mxu0 %v3240
        %3288 = vmatpush.bf16.msra.mxu0 %v3239
        %3289 = vmatpush.bf16.msra.mxu0 %v3238
        %3290 = vmatpush.bf16.msra.mxu0 %v3237
        %3291 = vmatpush.bf16.msra.mxu0 %v3236
        %3292 = vmatmul.bf16.gmra.mxu0 %v3092
        %v3293 = vpop.f32.mrf.mxu0
        %v3294 = vadd.f32 0.0, %v3293
        %v3295 = vpop.f32.mrf.mxu0
        %v3296 = vadd.f32 0.0, %v3295
        %3297 = vmatmul.bf16.gmra.mxu0 %v3095
        %v3298 = vpop.f32.mrf.mxu0
        %v3299 = vadd.f32 0.0, %v3298
        %v3300 = vpop.f32.mrf.mxu0
        %v3301 = vadd.f32 0.0, %v3300
        %3302 = vmatmul.bf16.gmra.mxu0 %v3098
        %v3303 = vpop.f32.mrf.mxu0
        %v3304 = vadd.f32 0.0, %v3303
        %v3305 = vpop.f32.mrf.mxu0
        %v3306 = vadd.f32 0.0, %v3305
        %3307 = vmatmul.bf16.gmra.mxu0 %v3101
        %v3308 = vpop.f32.mrf.mxu0
        %v3309 = vadd.f32 0.0, %v3308
        %v3310 = vpop.f32.mrf.mxu0
        %v3311 = vadd.f32 0.0, %v3310
        %3312 = vmatmul.bf16.gmra.mxu0 %v3104
        %v3313 = vpop.f32.mrf.mxu0
        %v3314 = vadd.f32 0.0, %v3313
        %v3315 = vpop.f32.mrf.mxu0
        %v3316 = vadd.f32 0.0, %v3315
        %3317 = vmatmul.bf16.gmra.mxu0 %v3107
        %v3318 = vpop.f32.mrf.mxu0
        %v3319 = vadd.f32 0.0, %v3318
        %v3320 = vpop.f32.mrf.mxu0
        %v3321 = vadd.f32 0.0, %v3320
        %3322 = vmatmul.bf16.gmra.mxu0 %v3110
        %v3323 = vpop.f32.mrf.mxu0
        %v3324 = vadd.f32 0.0, %v3323
        %v3325 = vpop.f32.mrf.mxu0
        %v3326 = vadd.f32 0.0, %v3325
        %3327 = vmatmul.bf16.gmra.mxu0 %v3113
        %v3328 = vpop.f32.mrf.mxu0
        %v3329 = vadd.f32 0.0, %v3328
        %v3330 = vpop.f32.mrf.mxu0
        %v3331 = vadd.f32 0.0, %v3330
        %3332 = vdwg.mxu0
        %3333 = vmatpush.bf16.msra.mxu0 %v3251
        %3334 = vmatpush.bf16.msra.mxu0 %v3250
        %3335 = vmatpush.bf16.msra.mxu0 %v3249
        %3336 = vmatpush.bf16.msra.mxu0 %v3248
        %3337 = vmatpush.bf16.msra.mxu0 %v3247
        %3338 = vmatpush.bf16.msra.mxu0 %v3246
        %3339 = vmatpush.bf16.msra.mxu0 %v3245
        %3340 = vmatpush.bf16.msra.mxu0 %v3244
        %3341 = vmatmul.bf16.gmra.mxu0 %v3093
        %v3342 = vpop.f32.mrf.mxu0
        %v3343 = vadd.f32 %v3294, %v3342
        %v3344 = vpop.f32.mrf.mxu0
        %v3345 = vadd.f32 %v3296, %v3344
        %3346 = vmatmul.bf16.gmra.mxu0 %v3096
        %v3347 = vpop.f32.mrf.mxu0
        %v3348 = vadd.f32 %v3299, %v3347
        %v3349 = vpop.f32.mrf.mxu0
        %v3350 = vadd.f32 %v3301, %v3349
        %3351 = vmatmul.bf16.gmra.mxu0 %v3099
        %v3352 = vpop.f32.mrf.mxu0
        %v3353 = vadd.f32 %v3304, %v3352
        %v3354 = vpop.f32.mrf.mxu0
        %v3355 = vadd.f32 %v3306, %v3354
        %3356 = vmatmul.bf16.gmra.mxu0 %v3102
        %v3357 = vpop.f32.mrf.mxu0
        %v3358 = vadd.f32 %v3309, %v3357
        %v3359 = vpop.f32.mrf.mxu0
        %v3360 = vadd.f32 %v3311, %v3359
        %3361 = vmatmul.bf16.gmra.mxu0 %v3105
        %v3362 = vpop.f32.mrf.mxu0
        %v3363 = vadd.f32 %v3314, %v3362
        %v3364 = vpop.f32.mrf.mxu0
        %v3365 = vadd.f32 %v3316, %v3364
        %3366 = vmatmul.bf16.gmra.mxu0 %v3108
        %v3367 = vpop.f32.mrf.mxu0
        %v3368 = vadd.f32 %v3319, %v3367
        %v3369 = vpop.f32.mrf.mxu0
        %v3370 = vadd.f32 %v3321, %v3369
        %3371 = vmatmul.bf16.gmra.mxu0 %v3111
        %v3372 = vpop.f32.mrf.mxu0
        %v3373 = vadd.f32 %v3324, %v3372
        %v3374 = vpop.f32.mrf.mxu0
        %v3375 = vadd.f32 %v3326, %v3374
        %3376 = vmatmul.bf16.gmra.mxu0 %v3114
        %v3377 = vpop.f32.mrf.mxu0
        %v3378 = vadd.f32 %v3329, %v3377
        %v3379 = vpop.f32.mrf.mxu0
        %v3380 = vadd.f32 %v3331, %v3379
        %3381 = vdwg.mxu0
        %3382 = vmatpush.bf16.msra.mxu0 %v3259
        %3383 = vmatpush.bf16.msra.mxu0 %v3258
        %3384 = vmatpush.bf16.msra.mxu0 %v3257
        %3385 = vmatpush.bf16.msra.mxu0 %v3256
        %3386 = vmatpush.bf16.msra.mxu0 %v3255
        %3387 = vmatpush.bf16.msra.mxu0 %v3254
        %3388 = vmatpush.bf16.msra.mxu0 %v3253
        %3389 = vmatpush.bf16.msra.mxu0 %v3252
        %3390 = vmatmul.bf16.gmra.mxu0 %v3094
        %v3391 = vpop.f32.mrf.mxu0
        %v3392 = vadd.f32 %v3343, %v3391
        %v3393 = vpop.f32.mrf.mxu0
        %v3394 = vadd.f32 %v3345, %v3393
        %3395 = vmatmul.bf16.gmra.mxu0 %v3097
        %v3396 = vpop.f32.mrf.mxu0
        %v3397 = vadd.f32 %v3348, %v3396
        %v3398 = vpop.f32.mrf.mxu0
        %v3399 = vadd.f32 %v3350, %v3398
        %3400 = vmatmul.bf16.gmra.mxu0 %v3100
        %v3401 = vpop.f32.mrf.mxu0
        %v3402 = vadd.f32 %v3353, %v3401
        %v3403 = vpop.f32.mrf.mxu0
        %v3404 = vadd.f32 %v3355, %v3403
        %3405 = vmatmul.bf16.gmra.mxu0 %v3103
        %v3406 = vpop.f32.mrf.mxu0
        %v3407 = vadd.f32 %v3358, %v3406
        %v3408 = vpop.f32.mrf.mxu0
        %v3409 = vadd.f32 %v3360, %v3408
        %3410 = vmatmul.bf16.gmra.mxu0 %v3106
        %v3411 = vpop.f32.mrf.mxu0
        %v3412 = vadd.f32 %v3363, %v3411
        %v3413 = vpop.f32.mrf.mxu0
        %v3414 = vadd.f32 %v3365, %v3413
        %3415 = vmatmul.bf16.gmra.mxu0 %v3109
        %v3416 = vpop.f32.mrf.mxu0
        %v3417 = vadd.f32 %v3368, %v3416
        %v3418 = vpop.f32.mrf.mxu0
        %v3419 = vadd.f32 %v3370, %v3418
        %3420 = vmatmul.bf16.gmra.mxu0 %v3112
        %v3421 = vpop.f32.mrf.mxu0
        %v3422 = vadd.f32 %v3373, %v3421
        %v3423 = vpop.f32.mrf.mxu0
        %v3424 = vadd.f32 %v3375, %v3423
        %3425 = vmatmul.bf16.gmra.mxu0 %v3115
        %v3426 = vpop.f32.mrf.mxu0
        %v3427 = vadd.f32 %v3378, %v3426
        %v3428 = vpop.f32.mrf.mxu0
        %v3429 = vadd.f32 %v3380, %v3428
        %3430 = vdwg.mxu0
        %v3463 = vunpack.c.l.b16 %v2852
        %v3464 = vunpack.c.h.b16 %v2852
        %v3465 = vunpack.c.l.b16 %v2853
        %v3466 = vunpack.c.l.b16 %v2854
        %v3467 = vunpack.c.h.b16 %v2854
        %v3468 = vunpack.c.l.b16 %v2855
        %v3469 = vunpack.c.l.b16 %v2856
        %v3470 = vunpack.c.h.b16 %v2856
        %v3471 = vunpack.c.l.b16 %v2857
        %v3472 = vunpack.c.l.b16 %v2858
        %v3473 = vunpack.c.h.b16 %v2858
        %v3474 = vunpack.c.l.b16 %v2859
        %v3475 = vunpack.c.l.b16 %v2860
        %v3476 = vunpack.c.h.b16 %v2860
        %v3477 = vunpack.c.l.b16 %v2861
        %v3478 = vunpack.c.l.b16 %v2862
        %v3479 = vunpack.c.h.b16 %v2862
        %v3480 = vunpack.c.l.b16 %v2863
        %v3481 = vunpack.c.l.b16 %v2864
        %v3482 = vunpack.c.h.b16 %v2864
        %v3483 = vunpack.c.l.b16 %v2865
        %v3484 = vunpack.c.l.b16 %v2866
        %v3485 = vunpack.c.h.b16 %v2866
        %v3486 = vunpack.c.l.b16 %v2867
        %v3487 = vunpack.c.l.b16 %v2868
        %v3488 = vunpack.c.h.b16 %v2868
        %v3489 = vunpack.c.l.b16 %v2869
        %v3490 = vunpack.c.l.b16 %v2870
        %v3491 = vunpack.c.h.b16 %v2870
        %v3492 = vunpack.c.l.b16 %v2871
        %v3493 = vunpack.c.l.b16 %v2872
        %v3494 = vunpack.c.h.b16 %v2872
        %v3495 = vunpack.c.l.b16 %v2873
        %v3496 = vunpack.c.l.b16 %v2874
        %v3497 = vunpack.c.h.b16 %v2874
        %v3498 = vunpack.c.l.b16 %v2875
        %v3499 = vunpack.c.l.b16 %v2876
        %v3500 = vunpack.c.h.b16 %v2876
        %v3501 = vunpack.c.l.b16 %v2877
        %v3502 = vunpack.c.l.b16 %v2878
        %v3503 = vunpack.c.h.b16 %v2878
        %v3504 = vunpack.c.l.b16 %v2879
        %v3505 = vunpack.c.l.b16 %v2880
        %v3506 = vunpack.c.h.b16 %v2880
        %v3507 = vunpack.c.l.b16 %v2881
        %v3508 = vunpack.c.l.b16 %v2882
        %v3509 = vunpack.c.h.b16 %v2882
        %v3510 = vunpack.c.l.b16 %v2883
        %v3511 = vpack.c.b16 %v3466, %v3463
        %v3512 = vpack.c.b16 %v3467, %v3464
        %v3513 = vpack.c.b16 %v3468, %v3465
        %v3514 = vpack.c.b16 %v3472, %v3469
        %v3515 = vpack.c.b16 %v3473, %v3470
        %v3516 = vpack.c.b16 %v3474, %v3471
        %v3517 = vpack.c.b16 %v3478, %v3475
        %v3518 = vpack.c.b16 %v3479, %v3476
        %v3519 = vpack.c.b16 %v3480, %v3477
        %v3520 = vpack.c.b16 %v3484, %v3481
        %v3521 = vpack.c.b16 %v3485, %v3482
        %v3522 = vpack.c.b16 %v3486, %v3483
        %v3523 = vpack.c.b16 %v3490, %v3487
        %v3524 = vpack.c.b16 %v3491, %v3488
        %v3525 = vpack.c.b16 %v3492, %v3489
        %v3526 = vpack.c.b16 %v3496, %v3493
        %v3527 = vpack.c.b16 %v3497, %v3494
        %v3528 = vpack.c.b16 %v3498, %v3495
        %v3529 = vpack.c.b16 %v3502, %v3499
        %v3530 = vpack.c.b16 %v3503, %v3500
        %v3531 = vpack.c.b16 %v3504, %v3501
        %v3532 = vpack.c.b16 %v3508, %v3505
        %v3533 = vpack.c.b16 %v3509, %v3506
        %v3534 = vpack.c.b16 %v3510, %v3507
        %v3607 = vunpack.c.l.b16 %v2884
        %v3608 = vunpack.c.l.b16 %v2885
        %v3609 = vunpack.c.l.b16 %v2886
        %v3610 = vunpack.c.l.b16 %v2887
        %v3611 = vunpack.c.l.b16 %v2888
        %v3612 = vunpack.c.l.b16 %v2889
        %v3613 = vunpack.c.l.b16 %v2890
        %v3614 = vunpack.c.l.b16 %v2891
        %v3615 = vunpack.c.l.b16 %v2892
        %v3616 = vunpack.c.l.b16 %v2893
        %v3617 = vunpack.c.l.b16 %v2894
        %v3618 = vunpack.c.l.b16 %v2895
        %v3619 = vunpack.c.l.b16 %v2896
        %v3620 = vunpack.c.l.b16 %v2897
        %v3621 = vunpack.c.l.b16 %v2898
        %v3622 = vunpack.c.l.b16 %v2899
        %v3623 = vunpack.c.l.b16 %v2900
        %v3624 = vunpack.c.l.b16 %v2901
        %v3625 = vunpack.c.l.b16 %v2902
        %v3626 = vunpack.c.l.b16 %v2903
        %v3627 = vunpack.c.l.b16 %v2904
        %v3628 = vunpack.c.l.b16 %v2905
        %v3629 = vunpack.c.l.b16 %v2906
        %v3630 = vunpack.c.l.b16 %v2907
        %v3631 = vunpack.c.l.b16 %v2908
        %v3632 = vunpack.c.l.b16 %v2909
        %v3633 = vunpack.c.l.b16 %v2910
        %v3634 = vunpack.c.l.b16 %v2911
        %v3635 = vunpack.c.l.b16 %v2912
        %v3636 = vunpack.c.l.b16 %v2913
        %v3637 = vunpack.c.l.b16 %v2914
        %v3638 = vunpack.c.l.b16 %v2915
        %v3639 = vunpack.c.l.b16 %v2916
        %v3640 = vunpack.c.l.b16 %v2917
        %v3641 = vunpack.c.l.b16 %v2918
        %v3642 = vunpack.c.l.b16 %v2919
        %v3643 = vunpack.c.l.b16 %v2920
        %v3644 = vunpack.c.l.b16 %v2921
        %v3645 = vunpack.c.l.b16 %v2922
        %v3646 = vunpack.c.l.b16 %v2923
        %v3647 = vunpack.c.l.b16 %v2924
        %v3648 = vunpack.c.l.b16 %v2925
        %v3649 = vunpack.c.l.b16 %v2926
        %v3650 = vunpack.c.l.b16 %v2927
        %v3651 = vunpack.c.l.b16 %v2928
        %v3652 = vunpack.c.l.b16 %v2929
        %v3653 = vunpack.c.l.b16 %v2930
        %v3654 = vunpack.c.l.b16 %v2931
        %v3655 = vpack.c.b16 %v3608, %v3607
        %v3656 = vpack.c.b16 %v3610, %v3609
        %v3657 = vpack.c.b16 %v3612, %v3611
        %v3658 = vpack.c.b16 %v3614, %v3613
        %v3659 = vpack.c.b16 %v3616, %v3615
        %v3660 = vpack.c.b16 %v3618, %v3617
        %v3661 = vpack.c.b16 %v3620, %v3619
        %v3662 = vpack.c.b16 %v3622, %v3621
        %v3663 = vpack.c.b16 %v3624, %v3623
        %v3664 = vpack.c.b16 %v3626, %v3625
        %v3665 = vpack.c.b16 %v3628, %v3627
        %v3666 = vpack.c.b16 %v3630, %v3629
        %v3667 = vpack.c.b16 %v3632, %v3631
        %v3668 = vpack.c.b16 %v3634, %v3633
        %v3669 = vpack.c.b16 %v3636, %v3635
        %v3670 = vpack.c.b16 %v3638, %v3637
        %v3671 = vpack.c.b16 %v3640, %v3639
        %v3672 = vpack.c.b16 %v3642, %v3641
        %v3673 = vpack.c.b16 %v3644, %v3643
        %v3674 = vpack.c.b16 %v3646, %v3645
        %v3675 = vpack.c.b16 %v3648, %v3647
        %v3676 = vpack.c.b16 %v3650, %v3649
        %v3677 = vpack.c.b16 %v3652, %v3651
        %v3678 = vpack.c.b16 %v3654, %v3653
        %3703 = vmatpush.bf16.msra.mxu0 %v3662
        %3704 = vmatpush.bf16.msra.mxu0 %v3661
        %3705 = vmatpush.bf16.msra.mxu0 %v3660
        %3706 = vmatpush.bf16.msra.mxu0 %v3659
        %3707 = vmatpush.bf16.msra.mxu0 %v3658
        %3708 = vmatpush.bf16.msra.mxu0 %v3657
        %3709 = vmatpush.bf16.msra.mxu0 %v3656
        %3710 = vmatpush.bf16.msra.mxu0 %v3655
        %3711 = vmatmul.bf16.gmra.mxu0 %v3511
        %v3712 = vpop.f32.mrf.mxu0
        %v3713 = vadd.f32 %v3392, %v3712
        %v3714 = vpop.f32.mrf.mxu0
        %v3715 = vadd.f32 %v3394, %v3714
        %3716 = vmatmul.bf16.gmra.mxu0 %v3514
        %v3717 = vpop.f32.mrf.mxu0
        %v3718 = vadd.f32 %v3397, %v3717
        %v3719 = vpop.f32.mrf.mxu0
        %v3720 = vadd.f32 %v3399, %v3719
        %3721 = vmatmul.bf16.gmra.mxu0 %v3517
        %v3722 = vpop.f32.mrf.mxu0
        %v3723 = vadd.f32 %v3402, %v3722
        %v3724 = vpop.f32.mrf.mxu0
        %v3725 = vadd.f32 %v3404, %v3724
        %3726 = vmatmul.bf16.gmra.mxu0 %v3520
        %v3727 = vpop.f32.mrf.mxu0
        %v3728 = vadd.f32 %v3407, %v3727
        %v3729 = vpop.f32.mrf.mxu0
        %v3730 = vadd.f32 %v3409, %v3729
        %3731 = vmatmul.bf16.gmra.mxu0 %v3523
        %v3732 = vpop.f32.mrf.mxu0
        %v3733 = vadd.f32 %v3412, %v3732
        %v3734 = vpop.f32.mrf.mxu0
        %v3735 = vadd.f32 %v3414, %v3734
        %3736 = vmatmul.bf16.gmra.mxu0 %v3526
        %v3737 = vpop.f32.mrf.mxu0
        %v3738 = vadd.f32 %v3417, %v3737
        %v3739 = vpop.f32.mrf.mxu0
        %v3740 = vadd.f32 %v3419, %v3739
        %3741 = vmatmul.bf16.gmra.mxu0 %v3529
        %v3742 = vpop.f32.mrf.mxu0
        %v3743 = vadd.f32 %v3422, %v3742
        %v3744 = vpop.f32.mrf.mxu0
        %v3745 = vadd.f32 %v3424, %v3744
        %3746 = vmatmul.bf16.gmra.mxu0 %v3532
        %v3747 = vpop.f32.mrf.mxu0
        %v3748 = vadd.f32 %v3427, %v3747
        %v3749 = vpop.f32.mrf.mxu0
        %v3750 = vadd.f32 %v3429, %v3749
        %3751 = vdwg.mxu0
        %3752 = vmatpush.bf16.msra.mxu0 %v3670
        %3753 = vmatpush.bf16.msra.mxu0 %v3669
        %3754 = vmatpush.bf16.msra.mxu0 %v3668
        %3755 = vmatpush.bf16.msra.mxu0 %v3667
        %3756 = vmatpush.bf16.msra.mxu0 %v3666
        %3757 = vmatpush.bf16.msra.mxu0 %v3665
        %3758 = vmatpush.bf16.msra.mxu0 %v3664
        %3759 = vmatpush.bf16.msra.mxu0 %v3663
        %3760 = vmatmul.bf16.gmra.mxu0 %v3512
        %v3761 = vpop.f32.mrf.mxu0
        %v3762 = vadd.f32 %v3713, %v3761
        %v3763 = vpop.f32.mrf.mxu0
        %v3764 = vadd.f32 %v3715, %v3763
        %3765 = vmatmul.bf16.gmra.mxu0 %v3515
        %v3766 = vpop.f32.mrf.mxu0
        %v3767 = vadd.f32 %v3718, %v3766
        %v3768 = vpop.f32.mrf.mxu0
        %v3769 = vadd.f32 %v3720, %v3768
        %3770 = vmatmul.bf16.gmra.mxu0 %v3518
        %v3771 = vpop.f32.mrf.mxu0
        %v3772 = vadd.f32 %v3723, %v3771
        %v3773 = vpop.f32.mrf.mxu0
        %v3774 = vadd.f32 %v3725, %v3773
        %3775 = vmatmul.bf16.gmra.mxu0 %v3521
        %v3776 = vpop.f32.mrf.mxu0
        %v3777 = vadd.f32 %v3728, %v3776
        %v3778 = vpop.f32.mrf.mxu0
        %v3779 = vadd.f32 %v3730, %v3778
        %3780 = vmatmul.bf16.gmra.mxu0 %v3524
        %v3781 = vpop.f32.mrf.mxu0
        %v3782 = vadd.f32 %v3733, %v3781
        %v3783 = vpop.f32.mrf.mxu0
        %v3784 = vadd.f32 %v3735, %v3783
        %3785 = vmatmul.bf16.gmra.mxu0 %v3527
        %v3786 = vpop.f32.mrf.mxu0
        %v3787 = vadd.f32 %v3738, %v3786
        %v3788 = vpop.f32.mrf.mxu0
        %v3789 = vadd.f32 %v3740, %v3788
        %3790 = vmatmul.bf16.gmra.mxu0 %v3530
        %v3791 = vpop.f32.mrf.mxu0
        %v3792 = vadd.f32 %v3743, %v3791
        %v3793 = vpop.f32.mrf.mxu0
        %v3794 = vadd.f32 %v3745, %v3793
        %3795 = vmatmul.bf16.gmra.mxu0 %v3533
        %v3796 = vpop.f32.mrf.mxu0
        %v3797 = vadd.f32 %v3748, %v3796
        %v3798 = vpop.f32.mrf.mxu0
        %v3799 = vadd.f32 %v3750, %v3798
        %3800 = vdwg.mxu0
        %3801 = vmatpush.bf16.msra.mxu0 %v3678
        %3802 = vmatpush.bf16.msra.mxu0 %v3677
        %3803 = vmatpush.bf16.msra.mxu0 %v3676
        %3804 = vmatpush.bf16.msra.mxu0 %v3675
        %3805 = vmatpush.bf16.msra.mxu0 %v3674
        %3806 = vmatpush.bf16.msra.mxu0 %v3673
        %3807 = vmatpush.bf16.msra.mxu0 %v3672
        %3808 = vmatpush.bf16.msra.mxu0 %v3671
        %3809 = vmatmul.bf16.gmra.mxu0 %v3513
        %v3810 = vpop.f32.mrf.mxu0
        %v3811 = vadd.f32 %v3762, %v3810
        %v3812 = vpop.f32.mrf.mxu0
        %v3813 = vadd.f32 %v3764, %v3812
        %3814 = vmatmul.bf16.gmra.mxu0 %v3516
        %v3815 = vpop.f32.mrf.mxu0
        %v3816 = vadd.f32 %v3767, %v3815
        %v3817 = vpop.f32.mrf.mxu0
        %v3818 = vadd.f32 %v3769, %v3817
        %3819 = vmatmul.bf16.gmra.mxu0 %v3519
        %v3820 = vpop.f32.mrf.mxu0
        %v3821 = vadd.f32 %v3772, %v3820
        %v3822 = vpop.f32.mrf.mxu0
        %v3823 = vadd.f32 %v3774, %v3822
        %3824 = vmatmul.bf16.gmra.mxu0 %v3522
        %v3825 = vpop.f32.mrf.mxu0
        %v3826 = vadd.f32 %v3777, %v3825
        %v3827 = vpop.f32.mrf.mxu0
        %v3828 = vadd.f32 %v3779, %v3827
        %3829 = vmatmul.bf16.gmra.mxu0 %v3525
        %v3830 = vpop.f32.mrf.mxu0
        %v3831 = vadd.f32 %v3782, %v3830
        %v3832 = vpop.f32.mrf.mxu0
        %v3833 = vadd.f32 %v3784, %v3832
        %3834 = vmatmul.bf16.gmra.mxu0 %v3528
        %v3835 = vpop.f32.mrf.mxu0
        %v3836 = vadd.f32 %v3787, %v3835
        %v3837 = vpop.f32.mrf.mxu0
        %v3838 = vadd.f32 %v3789, %v3837
        %3839 = vmatmul.bf16.gmra.mxu0 %v3531
        %v3840 = vpop.f32.mrf.mxu0
        %v3841 = vadd.f32 %v3792, %v3840
        %v3842 = vpop.f32.mrf.mxu0
        %v3843 = vadd.f32 %v3794, %v3842
        %3844 = vmatmul.bf16.gmra.mxu0 %v3534
        %v3845 = vpop.f32.mrf.mxu0
        %v3846 = vadd.f32 %v3797, %v3845
        %v3847 = vpop.f32.mrf.mxu0
        %v3848 = vadd.f32 %v3799, %v3847
        %3849 = vdwg.mxu0
        %s3850 = scalar_lea.vmem [#allocation2], 240
        %v3851 = vld [vmem:[%s3850] sm:$0xff]
        %v3852 = vld [vmem:[%s3850 + $0x8] sm:$0xf]
        %v3853 = vld [vmem:[%s3850 + $0xc] sm:$0xff]
        %v3854 = vld [vmem:[%s3850 + $0x14] sm:$0xf]
        %v3855 = vld [vmem:[%s3850 + $0x18] sm:$0xff]
        %v3856 = vld [vmem:[%s3850 + $0x20] sm:$0xf]
        %v3857 = vld [vmem:[%s3850 + $0x24] sm:$0xff]
        %v3858 = vld [vmem:[%s3850 + $0x2c] sm:$0xf]
        %v3859 = vld [vmem:[%s3850 + $0x30] sm:$0xff]
        %v3860 = vld [vmem:[%s3850 + $0x38] sm:$0xf]
        %v3861 = vld [vmem:[%s3850 + $0x3c] sm:$0xff]
        %v3862 = vld [vmem:[%s3850 + $0x44] sm:$0xf]
        %v3863 = vld [vmem:[%s3850 + $0x48] sm:$0xff]
        %v3864 = vld [vmem:[%s3850 + $0x50] sm:$0xf]
        %v3865 = vld [vmem:[%s3850 + $0x54] sm:$0xff]
        %v3866 = vld [vmem:[%s3850 + $0x5c] sm:$0xf]
        %v3867 = vld [vmem:[%s3850 + $0x60] sm:$0xff]
        %v3868 = vld [vmem:[%s3850 + $0x68] sm:$0xf]
        %v3869 = vld [vmem:[%s3850 + $0x6c] sm:$0xff]
        %v3870 = vld [vmem:[%s3850 + $0x74] sm:$0xf]
        %v3871 = vld [vmem:[%s3850 + $0x78] sm:$0xff]
        %v3872 = vld [vmem:[%s3850 + $0x80] sm:$0xf]
        %v3873 = vld [vmem:[%s3850 + $0x84] sm:$0xff]
        %v3874 = vld [vmem:[%s3850 + $0x8c] sm:$0xf]
        %v3875 = vld [vmem:[%s3850 + $0x90] sm:$0xff]
        %v3876 = vld [vmem:[%s3850 + $0x98] sm:$0xf]
        %v3877 = vld [vmem:[%s3850 + $0x9c] sm:$0xff]
        %v3878 = vld [vmem:[%s3850 + $0xa4] sm:$0xf]
        %v3879 = vld [vmem:[%s3850 + $0xa8] sm:$0xff]
        %v3880 = vld [vmem:[%s3850 + $0xb0] sm:$0xf]
        %v3881 = vld [vmem:[%s3850 + $0xb4] sm:$0xff]
        %v3882 = vld [vmem:[%s3850 + $0xbc] sm:$0xf]
        %v3883 = vld [vmem:[%s1946] sm:$0xf]
        %v3884 = vld [vmem:[%s1946 + $0x4] sm:$0xf]
        %v3885 = vld [vmem:[%s1946 + $0x8] sm:$0xf]
        %v3886 = vld [vmem:[%s1946 + $0xc] sm:$0xf]
        %v3887 = vld [vmem:[%s1946 + $0x10] sm:$0xf]
        %v3888 = vld [vmem:[%s1946 + $0x14] sm:$0xf]
        %v3889 = vld [vmem:[%s1946 + $0x18] sm:$0xf]
        %v3890 = vld [vmem:[%s1946 + $0x1c] sm:$0xf]
        %v3891 = vld [vmem:[%s1946 + $0x20] sm:$0xf]
        %v3892 = vld [vmem:[%s1946 + $0x24] sm:$0xf]
        %v3893 = vld [vmem:[%s1946 + $0x28] sm:$0xf]
        %v3894 = vld [vmem:[%s1946 + $0x2c] sm:$0xf]
        %v3895 = vld [vmem:[%s1946 + $0x30] sm:$0xf]
        %v3896 = vld [vmem:[%s1946 + $0x34] sm:$0xf]
        %v3897 = vld [vmem:[%s1946 + $0x38] sm:$0xf]
        %v3898 = vld [vmem:[%s1946 + $0x3c] sm:$0xf]
        %v3899 = vld [vmem:[%s1946 + $0x40] sm:$0xf]
        %v3900 = vld [vmem:[%s1946 + $0x44] sm:$0xf]
        %v3901 = vld [vmem:[%s1946 + $0x48] sm:$0xf]
        %v3902 = vld [vmem:[%s1946 + $0x4c] sm:$0xf]
        %v3903 = vld [vmem:[%s1946 + $0x50] sm:$0xf]
        %v3904 = vld [vmem:[%s1946 + $0x54] sm:$0xf]
        %v3905 = vld [vmem:[%s1946 + $0x58] sm:$0xf]
        %v3906 = vld [vmem:[%s1946 + $0x5c] sm:$0xf]
        %v3907 = vld [vmem:[%s1946 + $0x60] sm:$0xf]
        %v3908 = vld [vmem:[%s1946 + $0x64] sm:$0xf]
        %v3909 = vld [vmem:[%s1946 + $0x68] sm:$0xf]
        %v3910 = vld [vmem:[%s1946 + $0x6c] sm:$0xf]
        %v3911 = vld [vmem:[%s1946 + $0x70] sm:$0xf]
        %v3912 = vld [vmem:[%s1946 + $0x74] sm:$0xf]
        %v3913 = vld [vmem:[%s1946 + $0x78] sm:$0xf]
        %v3914 = vld [vmem:[%s1946 + $0x7c] sm:$0xf]
        %v3915 = vld [vmem:[%s1946 + $0x80] sm:$0xf]
        %v3916 = vld [vmem:[%s1946 + $0x84] sm:$0xf]
        %v3917 = vld [vmem:[%s1946 + $0x88] sm:$0xf]
        %v3918 = vld [vmem:[%s1946 + $0x8c] sm:$0xf]
        %v3919 = vld [vmem:[%s1946 + $0x90] sm:$0xf]
        %v3920 = vld [vmem:[%s1946 + $0x94] sm:$0xf]
        %v3921 = vld [vmem:[%s1946 + $0x98] sm:$0xf]
        %v3922 = vld [vmem:[%s1946 + $0x9c] sm:$0xf]
        %v3923 = vld [vmem:[%s1946 + $0xa0] sm:$0xf]
        %v3924 = vld [vmem:[%s1946 + $0xa4] sm:$0xf]
        %v3925 = vld [vmem:[%s1946 + $0xa8] sm:$0xf]
        %v3926 = vld [vmem:[%s1946 + $0xac] sm:$0xf]
        %v3927 = vld [vmem:[%s1946 + $0xb0] sm:$0xf]
        %v3928 = vld [vmem:[%s1946 + $0xb4] sm:$0xf]
        %v3929 = vld [vmem:[%s1946 + $0xb8] sm:$0xf]
        %v3930 = vld [vmem:[%s1946 + $0xbc] sm:$0xf]
        %v3963 = vunpack.c.l.b16 %v3851
        %v3964 = vunpack.c.h.b16 %v3851
        %v3965 = vunpack.c.l.b16 %v3852
        %v3966 = vunpack.c.l.b16 %v3853
        %v3967 = vunpack.c.h.b16 %v3853
        %v3968 = vunpack.c.l.b16 %v3854
        %v3969 = vunpack.c.l.b16 %v3855
        %v3970 = vunpack.c.h.b16 %v3855
        %v3971 = vunpack.c.l.b16 %v3856
        %v3972 = vunpack.c.l.b16 %v3857
        %v3973 = vunpack.c.h.b16 %v3857
        %v3974 = vunpack.c.l.b16 %v3858
        %v3975 = vunpack.c.l.b16 %v3859
        %v3976 = vunpack.c.h.b16 %v3859
        %v3977 = vunpack.c.l.b16 %v3860
        %v3978 = vunpack.c.l.b16 %v3861
        %v3979 = vunpack.c.h.b16 %v3861
        %v3980 = vunpack.c.l.b16 %v3862
        %v3981 = vunpack.c.l.b16 %v3863
        %v3982 = vunpack.c.h.b16 %v3863
        %v3983 = vunpack.c.l.b16 %v3864
        %v3984 = vunpack.c.l.b16 %v3865
        %v3985 = vunpack.c.h.b16 %v3865
        %v3986 = vunpack.c.l.b16 %v3866
        %v3987 = vunpack.c.l.b16 %v3867
        %v3988 = vunpack.c.h.b16 %v3867
        %v3989 = vunpack.c.l.b16 %v3868
        %v3990 = vunpack.c.l.b16 %v3869
        %v3991 = vunpack.c.h.b16 %v3869
        %v3992 = vunpack.c.l.b16 %v3870
        %v3993 = vunpack.c.l.b16 %v3871
        %v3994 = vunpack.c.h.b16 %v3871
        %v3995 = vunpack.c.l.b16 %v3872
        %v3996 = vunpack.c.l.b16 %v3873
        %v3997 = vunpack.c.h.b16 %v3873
        %v3998 = vunpack.c.l.b16 %v3874
        %v3999 = vunpack.c.l.b16 %v3875
        %v4000 = vunpack.c.h.b16 %v3875
        %v4001 = vunpack.c.l.b16 %v3876
        %v4002 = vunpack.c.l.b16 %v3877
        %v4003 = vunpack.c.h.b16 %v3877
        %v4004 = vunpack.c.l.b16 %v3878
        %v4005 = vunpack.c.l.b16 %v3879
        %v4006 = vunpack.c.h.b16 %v3879
        %v4007 = vunpack.c.l.b16 %v3880
        %v4008 = vunpack.c.l.b16 %v3881
        %v4009 = vunpack.c.h.b16 %v3881
        %v4010 = vunpack.c.l.b16 %v3882
        %v4011 = vpack.c.b16 %v3966, %v3963
        %v4012 = vpack.c.b16 %v3967, %v3964
        %v4013 = vpack.c.b16 %v3968, %v3965
        %v4014 = vpack.c.b16 %v3972, %v3969
        %v4015 = vpack.c.b16 %v3973, %v3970
        %v4016 = vpack.c.b16 %v3974, %v3971
        %v4017 = vpack.c.b16 %v3978, %v3975
        %v4018 = vpack.c.b16 %v3979, %v3976
        %v4019 = vpack.c.b16 %v3980, %v3977
        %v4020 = vpack.c.b16 %v3984, %v3981
        %v4021 = vpack.c.b16 %v3985, %v3982
        %v4022 = vpack.c.b16 %v3986, %v3983
        %v4023 = vpack.c.b16 %v3990, %v3987
        %v4024 = vpack.c.b16 %v3991, %v3988
        %v4025 = vpack.c.b16 %v3992, %v3989
        %v4026 = vpack.c.b16 %v3996, %v3993
        %v4027 = vpack.c.b16 %v3997, %v3994
        %v4028 = vpack.c.b16 %v3998, %v3995
        %v4029 = vpack.c.b16 %v4002, %v3999
        %v4030 = vpack.c.b16 %v4003, %v4000
        %v4031 = vpack.c.b16 %v4004, %v4001
        %v4032 = vpack.c.b16 %v4008, %v4005
        %v4033 = vpack.c.b16 %v4009, %v4006
        %v4034 = vpack.c.b16 %v4010, %v4007
        %v4107 = vunpack.c.l.b16 %v3883
        %v4108 = vunpack.c.l.b16 %v3884
        %v4109 = vunpack.c.l.b16 %v3885
        %v4110 = vunpack.c.l.b16 %v3886
        %v4111 = vunpack.c.l.b16 %v3887
        %v4112 = vunpack.c.l.b16 %v3888
        %v4113 = vunpack.c.l.b16 %v3889
        %v4114 = vunpack.c.l.b16 %v3890
        %v4115 = vunpack.c.l.b16 %v3891
        %v4116 = vunpack.c.l.b16 %v3892
        %v4117 = vunpack.c.l.b16 %v3893
        %v4118 = vunpack.c.l.b16 %v3894
        %v4119 = vunpack.c.l.b16 %v3895
        %v4120 = vunpack.c.l.b16 %v3896
        %v4121 = vunpack.c.l.b16 %v3897
        %v4122 = vunpack.c.l.b16 %v3898
        %v4123 = vunpack.c.l.b16 %v3899
        %v4124 = vunpack.c.l.b16 %v3900
        %v4125 = vunpack.c.l.b16 %v3901
        %v4126 = vunpack.c.l.b16 %v3902
        %v4127 = vunpack.c.l.b16 %v3903
        %v4128 = vunpack.c.l.b16 %v3904
        %v4129 = vunpack.c.l.b16 %v3905
        %v4130 = vunpack.c.l.b16 %v3906
        %v4131 = vunpack.c.l.b16 %v3907
        %v4132 = vunpack.c.l.b16 %v3908
        %v4133 = vunpack.c.l.b16 %v3909
        %v4134 = vunpack.c.l.b16 %v3910
        %v4135 = vunpack.c.l.b16 %v3911
        %v4136 = vunpack.c.l.b16 %v3912
        %v4137 = vunpack.c.l.b16 %v3913
        %v4138 = vunpack.c.l.b16 %v3914
        %v4139 = vunpack.c.l.b16 %v3915
        %v4140 = vunpack.c.l.b16 %v3916
        %v4141 = vunpack.c.l.b16 %v3917
        %v4142 = vunpack.c.l.b16 %v3918
        %v4143 = vunpack.c.l.b16 %v3919
        %v4144 = vunpack.c.l.b16 %v3920
        %v4145 = vunpack.c.l.b16 %v3921
        %v4146 = vunpack.c.l.b16 %v3922
        %v4147 = vunpack.c.l.b16 %v3923
        %v4148 = vunpack.c.l.b16 %v3924
        %v4149 = vunpack.c.l.b16 %v3925
        %v4150 = vunpack.c.l.b16 %v3926
        %v4151 = vunpack.c.l.b16 %v3927
        %v4152 = vunpack.c.l.b16 %v3928
        %v4153 = vunpack.c.l.b16 %v3929
        %v4154 = vunpack.c.l.b16 %v3930
        %v4155 = vpack.c.b16 %v4108, %v4107
        %v4156 = vpack.c.b16 %v4110, %v4109
        %v4157 = vpack.c.b16 %v4112, %v4111
        %v4158 = vpack.c.b16 %v4114, %v4113
        %v4159 = vpack.c.b16 %v4116, %v4115
        %v4160 = vpack.c.b16 %v4118, %v4117
        %v4161 = vpack.c.b16 %v4120, %v4119
        %v4162 = vpack.c.b16 %v4122, %v4121
        %v4163 = vpack.c.b16 %v4124, %v4123
        %v4164 = vpack.c.b16 %v4126, %v4125
        %v4165 = vpack.c.b16 %v4128, %v4127
        %v4166 = vpack.c.b16 %v4130, %v4129
        %v4167 = vpack.c.b16 %v4132, %v4131
        %v4168 = vpack.c.b16 %v4134, %v4133
        %v4169 = vpack.c.b16 %v4136, %v4135
        %v4170 = vpack.c.b16 %v4138, %v4137
        %v4171 = vpack.c.b16 %v4140, %v4139
        %v4172 = vpack.c.b16 %v4142, %v4141
        %v4173 = vpack.c.b16 %v4144, %v4143
        %v4174 = vpack.c.b16 %v4146, %v4145
        %v4175 = vpack.c.b16 %v4148, %v4147
        %v4176 = vpack.c.b16 %v4150, %v4149
        %v4177 = vpack.c.b16 %v4152, %v4151
        %v4178 = vpack.c.b16 %v4154, %v4153
        %4203 = vmatpush.bf16.msra.mxu0 %v4162
        %4204 = vmatpush.bf16.msra.mxu0 %v4161
        %4205 = vmatpush.bf16.msra.mxu0 %v4160
        %4206 = vmatpush.bf16.msra.mxu0 %v4159
        %4207 = vmatpush.bf16.msra.mxu0 %v4158
        %4208 = vmatpush.bf16.msra.mxu0 %v4157
        %4209 = vmatpush.bf16.msra.mxu0 %v4156
        %4210 = vmatpush.bf16.msra.mxu0 %v4155
        %4211 = vmatmul.bf16.gmra.mxu0 %v4011
        %v4212 = vpop.f32.mrf.mxu0
        %v4213 = vadd.f32 0.0, %v4212
        %v4214 = vpop.f32.mrf.mxu0
        %v4215 = vadd.f32 0.0, %v4214
        %4216 = vmatmul.bf16.gmra.mxu0 %v4014
        %v4217 = vpop.f32.mrf.mxu0
        %v4218 = vadd.f32 0.0, %v4217
        %v4219 = vpop.f32.mrf.mxu0
        %v4220 = vadd.f32 0.0, %v4219
        %4221 = vmatmul.bf16.gmra.mxu0 %v4017
        %v4222 = vpop.f32.mrf.mxu0
        %v4223 = vadd.f32 0.0, %v4222
        %v4224 = vpop.f32.mrf.mxu0
        %v4225 = vadd.f32 0.0, %v4224
        %4226 = vmatmul.bf16.gmra.mxu0 %v4020
        %v4227 = vpop.f32.mrf.mxu0
        %v4228 = vadd.f32 0.0, %v4227
        %v4229 = vpop.f32.mrf.mxu0
        %v4230 = vadd.f32 0.0, %v4229
        %4231 = vmatmul.bf16.gmra.mxu0 %v4023
        %v4232 = vpop.f32.mrf.mxu0
        %v4233 = vadd.f32 0.0, %v4232
        %v4234 = vpop.f32.mrf.mxu0
        %v4235 = vadd.f32 0.0, %v4234
        %4236 = vmatmul.bf16.gmra.mxu0 %v4026
        %v4237 = vpop.f32.mrf.mxu0
        %v4238 = vadd.f32 0.0, %v4237
        %v4239 = vpop.f32.mrf.mxu0
        %v4240 = vadd.f32 0.0, %v4239
        %4241 = vmatmul.bf16.gmra.mxu0 %v4029
        %v4242 = vpop.f32.mrf.mxu0
        %v4243 = vadd.f32 0.0, %v4242
        %v4244 = vpop.f32.mrf.mxu0
        %v4245 = vadd.f32 0.0, %v4244
        %4246 = vmatmul.bf16.gmra.mxu0 %v4032
        %v4247 = vpop.f32.mrf.mxu0
        %v4248 = vadd.f32 0.0, %v4247
        %v4249 = vpop.f32.mrf.mxu0
        %v4250 = vadd.f32 0.0, %v4249
        %4251 = vdwg.mxu0
        %4252 = vmatpush.bf16.msra.mxu0 %v4170
        %4253 = vmatpush.bf16.msra.mxu0 %v4169
        %4254 = vmatpush.bf16.msra.mxu0 %v4168
        %4255 = vmatpush.bf16.msra.mxu0 %v4167
        %4256 = vmatpush.bf16.msra.mxu0 %v4166
        %4257 = vmatpush.bf16.msra.mxu0 %v4165
        %4258 = vmatpush.bf16.msra.mxu0 %v4164
        %4259 = vmatpush.bf16.msra.mxu0 %v4163
        %4260 = vmatmul.bf16.gmra.mxu0 %v4012
        %v4261 = vpop.f32.mrf.mxu0
        %v4262 = vadd.f32 %v4213, %v4261
        %v4263 = vpop.f32.mrf.mxu0
        %v4264 = vadd.f32 %v4215, %v4263
        %4265 = vmatmul.bf16.gmra.mxu0 %v4015
        %v4266 = vpop.f32.mrf.mxu0
        %v4267 = vadd.f32 %v4218, %v4266
        %v4268 = vpop.f32.mrf.mxu0
        %v4269 = vadd.f32 %v4220, %v4268
        %4270 = vmatmul.bf16.gmra.mxu0 %v4018
        %v4271 = vpop.f32.mrf.mxu0
        %v4272 = vadd.f32 %v4223, %v4271
        %v4273 = vpop.f32.mrf.mxu0
        %v4274 = vadd.f32 %v4225, %v4273
        %4275 = vmatmul.bf16.gmra.mxu0 %v4021
        %v4276 = vpop.f32.mrf.mxu0
        %v4277 = vadd.f32 %v4228, %v4276
        %v4278 = vpop.f32.mrf.mxu0
        %v4279 = vadd.f32 %v4230, %v4278
        %4280 = vmatmul.bf16.gmra.mxu0 %v4024
        %v4281 = vpop.f32.mrf.mxu0
        %v4282 = vadd.f32 %v4233, %v4281
        %v4283 = vpop.f32.mrf.mxu0
        %v4284 = vadd.f32 %v4235, %v4283
        %4285 = vmatmul.bf16.gmra.mxu0 %v4027
        %v4286 = vpop.f32.mrf.mxu0
        %v4287 = vadd.f32 %v4238, %v4286
        %v4288 = vpop.f32.mrf.mxu0
        %v4289 = vadd.f32 %v4240, %v4288
        %4290 = vmatmul.bf16.gmra.mxu0 %v4030
        %v4291 = vpop.f32.mrf.mxu0
        %v4292 = vadd.f32 %v4243, %v4291
        %v4293 = vpop.f32.mrf.mxu0
        %v4294 = vadd.f32 %v4245, %v4293
        %4295 = vmatmul.bf16.gmra.mxu0 %v4033
        %v4296 = vpop.f32.mrf.mxu0
        %v4297 = vadd.f32 %v4248, %v4296
        %v4298 = vpop.f32.mrf.mxu0
        %v4299 = vadd.f32 %v4250, %v4298
        %4300 = vdwg.mxu0
        %4301 = vmatpush.bf16.msra.mxu0 %v4178
        %4302 = vmatpush.bf16.msra.mxu0 %v4177
        %4303 = vmatpush.bf16.msra.mxu0 %v4176
        %4304 = vmatpush.bf16.msra.mxu0 %v4175
        %4305 = vmatpush.bf16.msra.mxu0 %v4174
        %4306 = vmatpush.bf16.msra.mxu0 %v4173
        %4307 = vmatpush.bf16.msra.mxu0 %v4172
        %4308 = vmatpush.bf16.msra.mxu0 %v4171
        %4309 = vmatmul.bf16.gmra.mxu0 %v4013
        %v4310 = vpop.f32.mrf.mxu0
        %v4311 = vadd.f32 %v4262, %v4310
        %v4312 = vpop.f32.mrf.mxu0
        %v4313 = vadd.f32 %v4264, %v4312
        %4314 = vmatmul.bf16.gmra.mxu0 %v4016
        %v4315 = vpop.f32.mrf.mxu0
        %v4316 = vadd.f32 %v4267, %v4315
        %v4317 = vpop.f32.mrf.mxu0
        %v4318 = vadd.f32 %v4269, %v4317
        %4319 = vmatmul.bf16.gmra.mxu0 %v4019
        %v4320 = vpop.f32.mrf.mxu0
        %v4321 = vadd.f32 %v4272, %v4320
        %v4322 = vpop.f32.mrf.mxu0
        %v4323 = vadd.f32 %v4274, %v4322
        %4324 = vmatmul.bf16.gmra.mxu0 %v4022
        %v4325 = vpop.f32.mrf.mxu0
        %v4326 = vadd.f32 %v4277, %v4325
        %v4327 = vpop.f32.mrf.mxu0
        %v4328 = vadd.f32 %v4279, %v4327
        %4329 = vmatmul.bf16.gmra.mxu0 %v4025
        %v4330 = vpop.f32.mrf.mxu0
        %v4331 = vadd.f32 %v4282, %v4330
        %v4332 = vpop.f32.mrf.mxu0
        %v4333 = vadd.f32 %v4284, %v4332
        %4334 = vmatmul.bf16.gmra.mxu0 %v4028
        %v4335 = vpop.f32.mrf.mxu0
        %v4336 = vadd.f32 %v4287, %v4335
        %v4337 = vpop.f32.mrf.mxu0
        %v4338 = vadd.f32 %v4289, %v4337
        %4339 = vmatmul.bf16.gmra.mxu0 %v4031
        %v4340 = vpop.f32.mrf.mxu0
        %v4341 = vadd.f32 %v4292, %v4340
        %v4342 = vpop.f32.mrf.mxu0
        %v4343 = vadd.f32 %v4294, %v4342
        %4344 = vmatmul.bf16.gmra.mxu0 %v4034
        %v4345 = vpop.f32.mrf.mxu0
        %v4346 = vadd.f32 %v4297, %v4345
        %v4347 = vpop.f32.mrf.mxu0
        %v4348 = vadd.f32 %v4299, %v4347
        %4349 = vdwg.mxu0
        %v4350 = vadd.f32 %v3811, %v4311
        %v4351 = vadd.f32 %v3813, %v4313
        %v4352 = vadd.f32 %v3816, %v4316
        %v4353 = vadd.f32 %v3818, %v4318
        %v4354 = vadd.f32 %v3821, %v4321
        %v4355 = vadd.f32 %v3823, %v4323
        %v4356 = vadd.f32 %v3826, %v4326
        %v4357 = vadd.f32 %v3828, %v4328
        %v4358 = vadd.f32 %v3831, %v4331
        %v4359 = vadd.f32 %v3833, %v4333
        %v4360 = vadd.f32 %v3836, %v4336
        %v4361 = vadd.f32 %v3838, %v4338
        %v4362 = vadd.f32 %v3841, %v4341
        %v4363 = vadd.f32 %v3843, %v4343
        %v4364 = vadd.f32 %v3846, %v4346
        %v4365 = vadd.f32 %v3848, %v4348
        %v4366 = vld [vmem:[%s2] sm:$0x1]
        %v4368 = vperm.slane %v4366, 0
        %v4370 = vadd.f32 %v4350, %v4368
        %v4371 = vadd.f32 %v4351, %v4368
        %v4372 = vadd.f32 %v4352, %v4368
        %v4373 = vadd.f32 %v4353, %v4368
        %v4374 = vadd.f32 %v4354, %v4368
        %v4375 = vadd.f32 %v4355, %v4368
        %v4376 = vadd.f32 %v4356, %v4368
        %v4377 = vadd.f32 %v4357, %v4368
        %v4378 = vadd.f32 %v4358, %v4368
        %v4379 = vadd.f32 %v4359, %v4368
        %v4380 = vadd.f32 %v4360, %v4368
        %v4381 = vadd.f32 %v4361, %v4368
        %v4382 = vadd.f32 %v4362, %v4368
        %v4383 = vadd.f32 %v4363, %v4368
        %v4384 = vadd.f32 %v4364, %v4368
        %v4385 = vadd.f32 %v4365, %v4368
        %v4386 = vsub.f32 0.0, %v4370
        %v4387 = vsub.f32 0.0, %v4371
        %v4388 = vsub.f32 0.0, %v4372
        %v4389 = vsub.f32 0.0, %v4373
        %v4390 = vsub.f32 0.0, %v4374
        %v4391 = vsub.f32 0.0, %v4375
        %v4392 = vsub.f32 0.0, %v4376
        %v4393 = vsub.f32 0.0, %v4377
        %v4394 = vsub.f32 0.0, %v4378
        %v4395 = vsub.f32 0.0, %v4379
        %v4396 = vsub.f32 0.0, %v4380
        %v4397 = vsub.f32 0.0, %v4381
        %v4398 = vsub.f32 0.0, %v4382
        %v4399 = vsub.f32 0.0, %v4383
        %v4400 = vsub.f32 0.0, %v4384
        %v4401 = vsub.f32 0.0, %v4385
        %v4402 = vmul.f32 %v4386, 1.442695
        %v4403 = vpow.pop %v4402
        %v4404 = vmul.f32 %v4387, 1.442695
        %v4405 = vpow.pop %v4404
        %v4406 = vmul.f32 %v4388, 1.442695
        %v4407 = vpow.pop %v4406
        %v4408 = vmul.f32 %v4389, 1.442695
        %v4409 = vpow.pop %v4408
        %v4410 = vmul.f32 %v4390, 1.442695
        %v4411 = vpow.pop %v4410
        %v4412 = vmul.f32 %v4391, 1.442695
        %v4413 = vpow.pop %v4412
        %v4414 = vmul.f32 %v4392, 1.442695
        %v4415 = vpow.pop %v4414
        %v4416 = vmul.f32 %v4393, 1.442695
        %v4417 = vpow.pop %v4416
        %v4418 = vmul.f32 %v4394, 1.442695
        %v4419 = vpow.pop %v4418
        %v4420 = vmul.f32 %v4395, 1.442695
        %v4421 = vpow.pop %v4420
        %v4422 = vmul.f32 %v4396, 1.442695
        %v4423 = vpow.pop %v4422
        %v4424 = vmul.f32 %v4397, 1.442695
        %v4425 = vpow.pop %v4424
        %v4426 = vmul.f32 %v4398, 1.442695
        %v4427 = vpow.pop %v4426
        %v4428 = vmul.f32 %v4399, 1.442695
        %v4429 = vpow.pop %v4428
        %v4430 = vmul.f32 %v4400, 1.442695
        %v4431 = vpow.pop %v4430
        %v4432 = vmul.f32 %v4401, 1.442695
        %v4433 = vpow.pop %v4432
        %v4434 = vadd.f32 %v4403, 1.0
        %v4435 = vadd.f32 %v4405, 1.0
        %v4436 = vadd.f32 %v4407, 1.0
        %v4437 = vadd.f32 %v4409, 1.0
        %v4438 = vadd.f32 %v4411, 1.0
        %v4439 = vadd.f32 %v4413, 1.0
        %v4440 = vadd.f32 %v4415, 1.0
        %v4441 = vadd.f32 %v4417, 1.0
        %v4442 = vadd.f32 %v4419, 1.0
        %v4443 = vadd.f32 %v4421, 1.0
        %v4444 = vadd.f32 %v4423, 1.0
        %v4445 = vadd.f32 %v4425, 1.0
        %v4446 = vadd.f32 %v4427, 1.0
        %v4447 = vadd.f32 %v4429, 1.0
        %v4448 = vadd.f32 %v4431, 1.0
        %v4449 = vadd.f32 %v4433, 1.0
        %v4450 = vrcp.pop %v4434
        %v4451 = vrcp.pop %v4435
        %v4452 = vrcp.pop %v4436
        %v4453 = vrcp.pop %v4437
        %v4454 = vrcp.pop %v4438
        %v4455 = vrcp.pop %v4439
        %v4456 = vrcp.pop %v4440
        %v4457 = vrcp.pop %v4441
        %v4458 = vrcp.pop %v4442
        %v4459 = vrcp.pop %v4443
        %v4460 = vrcp.pop %v4444
        %v4461 = vrcp.pop %v4445
        %v4462 = vrcp.pop %v4446
        %v4463 = vrcp.pop %v4447
        %v4464 = vrcp.pop %v4448
        %v4465 = vrcp.pop %v4449
        %v4466 = vmul.f32 %v4370, %v4450
        %v4467 = vmul.f32 %v4371, %v4451
        %v4468 = vmul.f32 %v4372, %v4452
        %v4469 = vmul.f32 %v4373, %v4453
        %v4470 = vmul.f32 %v4374, %v4454
        %v4471 = vmul.f32 %v4375, %v4455
        %v4472 = vmul.f32 %v4376, %v4456
        %v4473 = vmul.f32 %v4377, %v4457
        %v4474 = vmul.f32 %v4378, %v4458
        %v4475 = vmul.f32 %v4379, %v4459
        %v4476 = vmul.f32 %v4380, %v4460
        %v4477 = vmul.f32 %v4381, %v4461
        %v4478 = vmul.f32 %v4382, %v4462
        %v4479 = vmul.f32 %v4383, %v4463
        %v4480 = vmul.f32 %v4384, %v4464
        %v4481 = vmul.f32 %v4385, %v4465
        %v4482 = vpack.c.bf16 %v4466, %v4466
        %v4483 = vpack.c.bf16 %v4467, %v4467
        %v4484 = vpack.c.bf16 %v4468, %v4468
        %v4485 = vpack.c.bf16 %v4469, %v4469
        %v4486 = vpack.c.bf16 %v4470, %v4470
        %v4487 = vpack.c.bf16 %v4471, %v4471
        %v4488 = vpack.c.bf16 %v4472, %v4472
        %v4489 = vpack.c.bf16 %v4473, %v4473
        %v4490 = vpack.c.bf16 %v4474, %v4474
        %v4491 = vpack.c.bf16 %v4475, %v4475
        %v4492 = vpack.c.bf16 %v4476, %v4476
        %v4493 = vpack.c.bf16 %v4477, %v4477
        %v4494 = vpack.c.bf16 %v4478, %v4478
        %v4495 = vpack.c.bf16 %v4479, %v4479
        %v4496 = vpack.c.bf16 %v4480, %v4480
        %v4497 = vpack.c.bf16 %v4481, %v4481
        %v4514 = vunpack.c.l.b16 %v4482
        %v4515 = vunpack.c.l.b16 %v4483
        %v4516 = vunpack.c.l.b16 %v4484
        %v4517 = vunpack.c.l.b16 %v4485
        %v4518 = vunpack.c.l.b16 %v4486
        %v4519 = vunpack.c.l.b16 %v4487
        %v4520 = vunpack.c.l.b16 %v4488
        %v4521 = vunpack.c.l.b16 %v4489
        %v4522 = vunpack.c.l.b16 %v4490
        %v4523 = vunpack.c.l.b16 %v4491
        %v4524 = vunpack.c.l.b16 %v4492
        %v4525 = vunpack.c.l.b16 %v4493
        %v4526 = vunpack.c.l.b16 %v4494
        %v4527 = vunpack.c.l.b16 %v4495
        %v4528 = vunpack.c.l.b16 %v4496
        %v4529 = vunpack.c.l.b16 %v4497
        %v4530 = vpack.c.b16 %v4515, %v4514
        %v4531 = vpack.c.b16 %v4517, %v4516
        %v4532 = vpack.c.b16 %v4519, %v4518
        %v4533 = vpack.c.b16 %v4521, %v4520
        %v4534 = vpack.c.b16 %v4523, %v4522
        %v4535 = vpack.c.b16 %v4525, %v4524
        %v4536 = vpack.c.b16 %v4527, %v4526
        %v4537 = vpack.c.b16 %v4529, %v4528
        %v4539 = vshrl.u32 %v4530, 16
        %v4541 = vrot.slane %v4539, 7
        %v4542 = vshll.u32 %v4530, 16
        %v4544 = vor.u32 %v4541, %v4542
        %v4546 = vshrl.u32 %v4531, 16
        %v4548 = vrot.slane %v4546, 7
        %v4549 = vshll.u32 %v4531, 16
        %v4551 = vor.u32 %v4548, %v4549
        %v4553 = vshrl.u32 %v4532, 16
        %v4555 = vrot.slane %v4553, 7
        %v4556 = vshll.u32 %v4532, 16
        %v4558 = vor.u32 %v4555, %v4556
        %v4560 = vshrl.u32 %v4533, 16
        %v4562 = vrot.slane %v4560, 7
        %v4563 = vshll.u32 %v4533, 16
        %v4565 = vor.u32 %v4562, %v4563
        %v4567 = vshrl.u32 %v4534, 16
        %v4569 = vrot.slane %v4567, 7
        %v4570 = vshll.u32 %v4534, 16
        %v4572 = vor.u32 %v4569, %v4570
        %v4574 = vshrl.u32 %v4535, 16
        %v4576 = vrot.slane %v4574, 7
        %v4577 = vshll.u32 %v4535, 16
        %v4579 = vor.u32 %v4576, %v4577
        %v4581 = vshrl.u32 %v4536, 16
        %v4583 = vrot.slane %v4581, 7
        %v4584 = vshll.u32 %v4536, 16
        %v4586 = vor.u32 %v4583, %v4584
        %v4588 = vshrl.u32 %v4537, 16
        %v4590 = vrot.slane %v4588, 7
        %v4591 = vshll.u32 %v4537, 16
        %v4593 = vor.u32 %v4590, %v4591
        %v4602 = vsel %vm419, 0, %v4544
        %v4603 = vsel %vm419, 0, %v4551
        %v4604 = vsel %vm419, 0, %v4558
        %v4605 = vsel %vm419, 0, %v4565
        %v4606 = vsel %vm419, 0, %v4572
        %v4607 = vsel %vm419, 0, %v4579
        %v4608 = vsel %vm419, 0, %v4586
        %v4609 = vsel %vm419, 0, %v4593
        %v4610 = vrot.slane %v4542, 1
        %v4611 = vor.u32 %v4539, %v4610
        %v4612 = vrot.slane %v4549, 1
        %v4613 = vor.u32 %v4546, %v4612
        %v4614 = vrot.slane %v4556, 1
        %v4615 = vor.u32 %v4553, %v4614
        %v4616 = vrot.slane %v4563, 1
        %v4617 = vor.u32 %v4560, %v4616
        %v4618 = vrot.slane %v4570, 1
        %v4619 = vor.u32 %v4567, %v4618
        %v4620 = vrot.slane %v4577, 1
        %v4621 = vor.u32 %v4574, %v4620
        %v4622 = vrot.slane %v4584, 1
        %v4623 = vor.u32 %v4581, %v4622
        %v4624 = vrot.slane %v4591, 1
        %v4625 = vor.u32 %v4588, %v4624
        %v4634 = vsel %vm454, %v4611, 0
        %v4635 = vsel %vm454, %v4613, 0
        %v4636 = vsel %vm454, %v4615, 0
        %v4637 = vsel %vm454, %v4617, 0
        %v4638 = vsel %vm454, %v4619, 0
        %v4639 = vsel %vm454, %v4621, 0
        %v4640 = vsel %vm454, %v4623, 0
        %v4641 = vsel %vm454, %v4625, 0
        %v4658 = vunpack.c.l.b16 %v4602
        %v4659 = vunpack.c.l.b16 %v4634
        %v4660 = vunpack.c.h.b16 %v4602
        %v4661 = vunpack.c.h.b16 %v4634
        %v4662 = vunpack.c.l.b16 %v4603
        %v4663 = vunpack.c.l.b16 %v4635
        %v4664 = vunpack.c.h.b16 %v4603
        %v4665 = vunpack.c.h.b16 %v4635
        %v4666 = vunpack.c.l.b16 %v4604
        %v4667 = vunpack.c.l.b16 %v4636
        %v4668 = vunpack.c.h.b16 %v4604
        %v4669 = vunpack.c.h.b16 %v4636
        %v4670 = vunpack.c.l.b16 %v4605
        %v4671 = vunpack.c.l.b16 %v4637
        %v4672 = vunpack.c.h.b16 %v4605
        %v4673 = vunpack.c.h.b16 %v4637
        %v4674 = vunpack.c.l.b16 %v4606
        %v4675 = vunpack.c.l.b16 %v4638
        %v4676 = vunpack.c.h.b16 %v4606
        %v4677 = vunpack.c.h.b16 %v4638
        %v4678 = vunpack.c.l.b16 %v4607
        %v4679 = vunpack.c.l.b16 %v4639
        %v4680 = vunpack.c.h.b16 %v4607
        %v4681 = vunpack.c.h.b16 %v4639
        %v4682 = vunpack.c.l.b16 %v4608
        %v4683 = vunpack.c.l.b16 %v4640
        %v4684 = vunpack.c.h.b16 %v4608
        %v4685 = vunpack.c.h.b16 %v4640
        %v4686 = vunpack.c.l.b16 %v4609
        %v4687 = vunpack.c.l.b16 %v4641
        %v4688 = vunpack.c.h.b16 %v4609
        %v4689 = vunpack.c.h.b16 %v4641
        %v4690 = vpack.c.b16 %v4514, %v4658
        %v4691 = vpack.c.b16 %v4659, %v4659
        %v4692 = vpack.c.b16 %v4515, %v4660
        %v4693 = vpack.c.b16 %v4661, %v4661
        %v4694 = vpack.c.b16 %v4516, %v4662
        %v4695 = vpack.c.b16 %v4663, %v4663
        %v4696 = vpack.c.b16 %v4517, %v4664
        %v4697 = vpack.c.b16 %v4665, %v4665
        %v4698 = vpack.c.b16 %v4518, %v4666
        %v4699 = vpack.c.b16 %v4667, %v4667
        %v4700 = vpack.c.b16 %v4519, %v4668
        %v4701 = vpack.c.b16 %v4669, %v4669
        %v4702 = vpack.c.b16 %v4520, %v4670
        %v4703 = vpack.c.b16 %v4671, %v4671
        %v4704 = vpack.c.b16 %v4521, %v4672
        %v4705 = vpack.c.b16 %v4673, %v4673
        %v4706 = vpack.c.b16 %v4522, %v4674
        %v4707 = vpack.c.b16 %v4675, %v4675
        %v4708 = vpack.c.b16 %v4523, %v4676
        %v4709 = vpack.c.b16 %v4677, %v4677
        %v4710 = vpack.c.b16 %v4524, %v4678
        %v4711 = vpack.c.b16 %v4679, %v4679
        %v4712 = vpack.c.b16 %v4525, %v4680
        %v4713 = vpack.c.b16 %v4681, %v4681
        %v4714 = vpack.c.b16 %v4526, %v4682
        %v4715 = vpack.c.b16 %v4683, %v4683
        %v4716 = vpack.c.b16 %v4527, %v4684
        %v4717 = vpack.c.b16 %v4685, %v4685
        %v4718 = vpack.c.b16 %v4528, %v4686
        %v4719 = vpack.c.b16 %v4687, %v4687
        %v4720 = vpack.c.b16 %v4529, %v4688
        %v4721 = vpack.c.b16 %v4689, %v4689
        %s4754 = scalar_lea.vmem [#allocation3], 216
        %4755 = vst [vmem:[%s4754] sm:$0xff] %v4690
        %4756 = vst [vmem:[%s4754 + $0x8] sm:$0xf] %v4691
        %4757 = vst [vmem:[%s4754 + $0xc] sm:$0xff] %v4692
        %4758 = vst [vmem:[%s4754 + $0x14] sm:$0xf] %v4693
        %4759 = vst [vmem:[%s4754 + $0x18] sm:$0xff] %v4694
        %4760 = vst [vmem:[%s4754 + $0x20] sm:$0xf] %v4695
        %4761 = vst [vmem:[%s4754 + $0x24] sm:$0xff] %v4696
        %4762 = vst [vmem:[%s4754 + $0x2c] sm:$0xf] %v4697
        %4763 = vst [vmem:[%s4754 + $0x30] sm:$0xff] %v4698
        %4764 = vst [vmem:[%s4754 + $0x38] sm:$0xf] %v4699
        %4765 = vst [vmem:[%s4754 + $0x3c] sm:$0xff] %v4700
        %4766 = vst [vmem:[%s4754 + $0x44] sm:$0xf] %v4701
        %4767 = vst [vmem:[%s4754 + $0x48] sm:$0xff] %v4702
        %4768 = vst [vmem:[%s4754 + $0x50] sm:$0xf] %v4703
        %4769 = vst [vmem:[%s4754 + $0x54] sm:$0xff] %v4704
        %4770 = vst [vmem:[%s4754 + $0x5c] sm:$0xf] %v4705
        %4771 = vst [vmem:[%s4754 + $0x60] sm:$0xff] %v4706
        %4772 = vst [vmem:[%s4754 + $0x68] sm:$0xf] %v4707
        %4773 = vst [vmem:[%s4754 + $0x6c] sm:$0xff] %v4708
        %4774 = vst [vmem:[%s4754 + $0x74] sm:$0xf] %v4709
        %4775 = vst [vmem:[%s4754 + $0x78] sm:$0xff] %v4710
        %4776 = vst [vmem:[%s4754 + $0x80] sm:$0xf] %v4711
        %4777 = vst [vmem:[%s4754 + $0x84] sm:$0xff] %v4712
        %4778 = vst [vmem:[%s4754 + $0x8c] sm:$0xf] %v4713
        %4779 = vst [vmem:[%s4754 + $0x90] sm:$0xff] %v4714
        %4780 = vst [vmem:[%s4754 + $0x98] sm:$0xf] %v4715
        %4781 = vst [vmem:[%s4754 + $0x9c] sm:$0xff] %v4716
        %4782 = vst [vmem:[%s4754 + $0xa4] sm:$0xf] %v4717
        %4783 = vst [vmem:[%s4754 + $0xa8] sm:$0xff] %v4718
        %4784 = vst [vmem:[%s4754 + $0xb0] sm:$0xf] %v4719
        %4785 = vst [vmem:[%s4754 + $0xb4] sm:$0xff] %v4720
        %4786 = vst [vmem:[%s4754 + $0xbc] sm:$0xf] %v4721
        %v4787 = vld [vmem:[#allocation3] sm:$0xff]
        %v4788 = vld [vmem:[#allocation3 + $0x8] sm:$0xf]
        %v4789 = vld [vmem:[#allocation3 + $0xc] sm:$0xff]
        %v4790 = vld [vmem:[#allocation3 + $0x14] sm:$0xf]
        %v4791 = vld [vmem:[#allocation3 + $0x18] sm:$0xff]
        %v4792 = vld [vmem:[#allocation3 + $0x20] sm:$0xf]
        %v4793 = vld [vmem:[#allocation3 + $0x24] sm:$0xff]
        %v4794 = vld [vmem:[#allocation3 + $0x2c] sm:$0xf]
        %v4795 = vld [vmem:[#allocation3 + $0x30] sm:$0xff]
        %v4796 = vld [vmem:[#allocation3 + $0x38] sm:$0xf]
        %v4797 = vld [vmem:[#allocation3 + $0x3c] sm:$0xff]
        %v4798 = vld [vmem:[#allocation3 + $0x44] sm:$0xf]
        %v4799 = vld [vmem:[#allocation3 + $0x48] sm:$0xff]
        %v4800 = vld [vmem:[#allocation3 + $0x50] sm:$0xf]
        %v4801 = vld [vmem:[#allocation3 + $0x54] sm:$0xff]
        %v4802 = vld [vmem:[#allocation3 + $0x5c] sm:$0xf]
        %v4803 = vld [vmem:[#allocation3 + $0x60] sm:$0xff]
        %v4804 = vld [vmem:[#allocation3 + $0x68] sm:$0xf]
        %v4805 = vld [vmem:[#allocation3 + $0x6c] sm:$0xff]
        %v4806 = vld [vmem:[#allocation3 + $0x74] sm:$0xf]
        %v4807 = vld [vmem:[#allocation3 + $0x78] sm:$0xff]
        %v4808 = vld [vmem:[#allocation3 + $0x80] sm:$0xf]
        %v4809 = vld [vmem:[#allocation3 + $0x84] sm:$0xff]
        %v4810 = vld [vmem:[#allocation3 + $0x8c] sm:$0xf]
        %v4811 = vld [vmem:[#allocation3 + $0x90] sm:$0xff]
        %v4812 = vld [vmem:[#allocation3 + $0x98] sm:$0xf]
        %v4813 = vld [vmem:[#allocation3 + $0x9c] sm:$0xff]
        %v4814 = vld [vmem:[#allocation3 + $0xa4] sm:$0xf]
        %v4815 = vld [vmem:[#allocation3 + $0xa8] sm:$0xff]
        %v4816 = vld [vmem:[#allocation3 + $0xb0] sm:$0xf]
        %v4817 = vld [vmem:[#allocation3 + $0xb4] sm:$0xff]
        %v4818 = vld [vmem:[#allocation3 + $0xbc] sm:$0xf]
        %v4819 = vld [vmem:[#allocation9] sm:$0xf]
        %v4820 = vld [vmem:[#allocation9 + $0x4] sm:$0xf]
        %v4821 = vld [vmem:[#allocation9 + $0x8] sm:$0xf]
        %v4822 = vld [vmem:[#allocation9 + $0xc] sm:$0xf]
        %v4823 = vld [vmem:[#allocation9 + $0x10] sm:$0xf]
        %v4824 = vld [vmem:[#allocation9 + $0x14] sm:$0xf]
        %v4825 = vld [vmem:[#allocation9 + $0x18] sm:$0xf]
        %v4826 = vld [vmem:[#allocation9 + $0x1c] sm:$0xf]
        %v4827 = vld [vmem:[#allocation9 + $0x20] sm:$0xf]
        %v4828 = vld [vmem:[#allocation9 + $0x24] sm:$0xf]
        %v4829 = vld [vmem:[#allocation9 + $0x28] sm:$0xf]
        %v4830 = vld [vmem:[#allocation9 + $0x2c] sm:$0xf]
        %v4831 = vld [vmem:[#allocation9 + $0x30] sm:$0xf]
        %v4832 = vld [vmem:[#allocation9 + $0x34] sm:$0xf]
        %v4833 = vld [vmem:[#allocation9 + $0x38] sm:$0xf]
        %v4834 = vld [vmem:[#allocation9 + $0x3c] sm:$0xf]
        %v4835 = vld [vmem:[#allocation9 + $0x40] sm:$0xf]
        %v4836 = vld [vmem:[#allocation9 + $0x44] sm:$0xf]
        %v4837 = vld [vmem:[#allocation9 + $0x48] sm:$0xf]
        %v4838 = vld [vmem:[#allocation9 + $0x4c] sm:$0xf]
        %v4839 = vld [vmem:[#allocation9 + $0x50] sm:$0xf]
        %v4840 = vld [vmem:[#allocation9 + $0x54] sm:$0xf]
        %v4841 = vld [vmem:[#allocation9 + $0x58] sm:$0xf]
        %v4842 = vld [vmem:[#allocation9 + $0x5c] sm:$0xf]
        %v4843 = vld [vmem:[#allocation9 + $0x60] sm:$0xf]
        %v4844 = vld [vmem:[#allocation9 + $0x64] sm:$0xf]
        %v4845 = vld [vmem:[#allocation9 + $0x68] sm:$0xf]
        %v4846 = vld [vmem:[#allocation9 + $0x6c] sm:$0xf]
        %v4847 = vld [vmem:[#allocation9 + $0x70] sm:$0xf]
        %v4848 = vld [vmem:[#allocation9 + $0x74] sm:$0xf]
        %v4849 = vld [vmem:[#allocation9 + $0x78] sm:$0xf]
        %v4850 = vld [vmem:[#allocation9 + $0x7c] sm:$0xf]
        %v4851 = vld [vmem:[#allocation9 + $0x80] sm:$0xf]
        %v4852 = vld [vmem:[#allocation9 + $0x84] sm:$0xf]
        %v4853 = vld [vmem:[#allocation9 + $0x88] sm:$0xf]
        %v4854 = vld [vmem:[#allocation9 + $0x8c] sm:$0xf]
        %v4855 = vld [vmem:[#allocation9 + $0x90] sm:$0xf]
        %v4856 = vld [vmem:[#allocation9 + $0x94] sm:$0xf]
        %v4857 = vld [vmem:[#allocation9 + $0x98] sm:$0xf]
        %v4858 = vld [vmem:[#allocation9 + $0x9c] sm:$0xf]
        %v4859 = vld [vmem:[#allocation9 + $0xa0] sm:$0xf]
        %v4860 = vld [vmem:[#allocation9 + $0xa4] sm:$0xf]
        %v4861 = vld [vmem:[#allocation9 + $0xa8] sm:$0xf]
        %v4862 = vld [vmem:[#allocation9 + $0xac] sm:$0xf]
        %v4863 = vld [vmem:[#allocation9 + $0xb0] sm:$0xf]
        %v4864 = vld [vmem:[#allocation9 + $0xb4] sm:$0xf]
        %v4865 = vld [vmem:[#allocation9 + $0xb8] sm:$0xf]
        %v4866 = vld [vmem:[#allocation9 + $0xbc] sm:$0xf]
        %v4867 = vld [vmem:[%s2818] sm:$0xff]
        %v4868 = vld [vmem:[%s2818 + $0x8] sm:$0xf]
        %v4869 = vld [vmem:[%s2818 + $0xc] sm:$0xff]
        %v4870 = vld [vmem:[%s2818 + $0x14] sm:$0xf]
        %v4871 = vld [vmem:[%s2818 + $0x18] sm:$0xff]
        %v4872 = vld [vmem:[%s2818 + $0x20] sm:$0xf]
        %v4873 = vld [vmem:[%s2818 + $0x24] sm:$0xff]
        %v4874 = vld [vmem:[%s2818 + $0x2c] sm:$0xf]
        %v4875 = vld [vmem:[%s2818 + $0x30] sm:$0xff]
        %v4876 = vld [vmem:[%s2818 + $0x38] sm:$0xf]
        %v4877 = vld [vmem:[%s2818 + $0x3c] sm:$0xff]
        %v4878 = vld [vmem:[%s2818 + $0x44] sm:$0xf]
        %v4879 = vld [vmem:[%s2818 + $0x48] sm:$0xff]
        %v4880 = vld [vmem:[%s2818 + $0x50] sm:$0xf]
        %v4881 = vld [vmem:[%s2818 + $0x54] sm:$0xff]
        %v4882 = vld [vmem:[%s2818 + $0x5c] sm:$0xf]
        %v4883 = vld [vmem:[%s2818 + $0x60] sm:$0xff]
        %v4884 = vld [vmem:[%s2818 + $0x68] sm:$0xf]
        %v4885 = vld [vmem:[%s2818 + $0x6c] sm:$0xff]
        %v4886 = vld [vmem:[%s2818 + $0x74] sm:$0xf]
        %v4887 = vld [vmem:[%s2818 + $0x78] sm:$0xff]
        %v4888 = vld [vmem:[%s2818 + $0x80] sm:$0xf]
        %v4889 = vld [vmem:[%s2818 + $0x84] sm:$0xff]
        %v4890 = vld [vmem:[%s2818 + $0x8c] sm:$0xf]
        %v4891 = vld [vmem:[%s2818 + $0x90] sm:$0xff]
        %v4892 = vld [vmem:[%s2818 + $0x98] sm:$0xf]
        %v4893 = vld [vmem:[%s2818 + $0x9c] sm:$0xff]
        %v4894 = vld [vmem:[%s2818 + $0xa4] sm:$0xf]
        %v4895 = vld [vmem:[%s2818 + $0xa8] sm:$0xff]
        %v4896 = vld [vmem:[%s2818 + $0xb0] sm:$0xf]
        %v4897 = vld [vmem:[%s2818 + $0xb4] sm:$0xff]
        %v4898 = vld [vmem:[%s2818 + $0xbc] sm:$0xf]
        %s4899 = scalar_lea.vmem [#allocation9], 192
        %v4900 = vld [vmem:[%s4899] sm:$0xf]
        %v4901 = vld [vmem:[%s4899 + $0x4] sm:$0xf]
        %v4902 = vld [vmem:[%s4899 + $0x8] sm:$0xf]
        %v4903 = vld [vmem:[%s4899 + $0xc] sm:$0xf]
        %v4904 = vld [vmem:[%s4899 + $0x10] sm:$0xf]
        %v4905 = vld [vmem:[%s4899 + $0x14] sm:$0xf]
        %v4906 = vld [vmem:[%s4899 + $0x18] sm:$0xf]
        %v4907 = vld [vmem:[%s4899 + $0x1c] sm:$0xf]
        %v4908 = vld [vmem:[%s4899 + $0x20] sm:$0xf]
        %v4909 = vld [vmem:[%s4899 + $0x24] sm:$0xf]
        %v4910 = vld [vmem:[%s4899 + $0x28] sm:$0xf]
        %v4911 = vld [vmem:[%s4899 + $0x2c] sm:$0xf]
        %v4912 = vld [vmem:[%s4899 + $0x30] sm:$0xf]
        %v4913 = vld [vmem:[%s4899 + $0x34] sm:$0xf]
        %v4914 = vld [vmem:[%s4899 + $0x38] sm:$0xf]
        %v4915 = vld [vmem:[%s4899 + $0x3c] sm:$0xf]
        %v4916 = vld [vmem:[%s4899 + $0x40] sm:$0xf]
        %v4917 = vld [vmem:[%s4899 + $0x44] sm:$0xf]
        %v4918 = vld [vmem:[%s4899 + $0x48] sm:$0xf]
        %v4919 = vld [vmem:[%s4899 + $0x4c] sm:$0xf]
        %v4920 = vld [vmem:[%s4899 + $0x50] sm:$0xf]
        %v4921 = vld [vmem:[%s4899 + $0x54] sm:$0xf]
        %v4922 = vld [vmem:[%s4899 + $0x58] sm:$0xf]
        %v4923 = vld [vmem:[%s4899 + $0x5c] sm:$0xf]
        %v4924 = vld [vmem:[%s4899 + $0x60] sm:$0xf]
        %v4925 = vld [vmem:[%s4899 + $0x64] sm:$0xf]
        %v4926 = vld [vmem:[%s4899 + $0x68] sm:$0xf]
        %v4927 = vld [vmem:[%s4899 + $0x6c] sm:$0xf]
        %v4928 = vld [vmem:[%s4899 + $0x70] sm:$0xf]
        %v4929 = vld [vmem:[%s4899 + $0x74] sm:$0xf]
        %v4930 = vld [vmem:[%s4899 + $0x78] sm:$0xf]
        %v4931 = vld [vmem:[%s4899 + $0x7c] sm:$0xf]
        %v4932 = vld [vmem:[%s4899 + $0x80] sm:$0xf]
        %v4933 = vld [vmem:[%s4899 + $0x84] sm:$0xf]
        %v4934 = vld [vmem:[%s4899 + $0x88] sm:$0xf]
        %v4935 = vld [vmem:[%s4899 + $0x8c] sm:$0xf]
        %v4936 = vld [vmem:[%s4899 + $0x90] sm:$0xf]
        %v4937 = vld [vmem:[%s4899 + $0x94] sm:$0xf]
        %v4938 = vld [vmem:[%s4899 + $0x98] sm:$0xf]
        %v4939 = vld [vmem:[%s4899 + $0x9c] sm:$0xf]
        %v4940 = vld [vmem:[%s4899 + $0xa0] sm:$0xf]
        %v4941 = vld [vmem:[%s4899 + $0xa4] sm:$0xf]
        %v4942 = vld [vmem:[%s4899 + $0xa8] sm:$0xf]
        %v4943 = vld [vmem:[%s4899 + $0xac] sm:$0xf]
        %v4944 = vld [vmem:[%s4899 + $0xb0] sm:$0xf]
        %v4945 = vld [vmem:[%s4899 + $0xb4] sm:$0xf]
        %v4946 = vld [vmem:[%s4899 + $0xb8] sm:$0xf]
        %v4947 = vld [vmem:[%s4899 + $0xbc] sm:$0xf]
        %v4980 = vunpack.c.l.b16 %v4867
        %v4981 = vunpack.c.h.b16 %v4867
        %v4982 = vunpack.c.l.b16 %v4868
        %v4983 = vunpack.c.l.b16 %v4869
        %v4984 = vunpack.c.h.b16 %v4869
        %v4985 = vunpack.c.l.b16 %v4870
        %v4986 = vunpack.c.l.b16 %v4871
        %v4987 = vunpack.c.h.b16 %v4871
        %v4988 = vunpack.c.l.b16 %v4872
        %v4989 = vunpack.c.l.b16 %v4873
        %v4990 = vunpack.c.h.b16 %v4873
        %v4991 = vunpack.c.l.b16 %v4874
        %v4992 = vunpack.c.l.b16 %v4875
        %v4993 = vunpack.c.h.b16 %v4875
        %v4994 = vunpack.c.l.b16 %v4876
        %v4995 = vunpack.c.l.b16 %v4877
        %v4996 = vunpack.c.h.b16 %v4877
        %v4997 = vunpack.c.l.b16 %v4878
        %v4998 = vunpack.c.l.b16 %v4879
        %v4999 = vunpack.c.h.b16 %v4879
        %v5000 = vunpack.c.l.b16 %v4880
        %v5001 = vunpack.c.l.b16 %v4881
        %v5002 = vunpack.c.h.b16 %v4881
        %v5003 = vunpack.c.l.b16 %v4882
        %v5004 = vunpack.c.l.b16 %v4883
        %v5005 = vunpack.c.h.b16 %v4883
        %v5006 = vunpack.c.l.b16 %v4884
        %v5007 = vunpack.c.l.b16 %v4885
        %v5008 = vunpack.c.h.b16 %v4885
        %v5009 = vunpack.c.l.b16 %v4886
        %v5010 = vunpack.c.l.b16 %v4887
        %v5011 = vunpack.c.h.b16 %v4887
        %v5012 = vunpack.c.l.b16 %v4888
        %v5013 = vunpack.c.l.b16 %v4889
        %v5014 = vunpack.c.h.b16 %v4889
        %v5015 = vunpack.c.l.b16 %v4890
        %v5016 = vunpack.c.l.b16 %v4891
        %v5017 = vunpack.c.h.b16 %v4891
        %v5018 = vunpack.c.l.b16 %v4892
        %v5019 = vunpack.c.l.b16 %v4893
        %v5020 = vunpack.c.h.b16 %v4893
        %v5021 = vunpack.c.l.b16 %v4894
        %v5022 = vunpack.c.l.b16 %v4895
        %v5023 = vunpack.c.h.b16 %v4895
        %v5024 = vunpack.c.l.b16 %v4896
        %v5025 = vunpack.c.l.b16 %v4897
        %v5026 = vunpack.c.h.b16 %v4897
        %v5027 = vunpack.c.l.b16 %v4898
        %v5028 = vpack.c.b16 %v4983, %v4980
        %v5029 = vpack.c.b16 %v4984, %v4981
        %v5030 = vpack.c.b16 %v4985, %v4982
        %v5031 = vpack.c.b16 %v4989, %v4986
        %v5032 = vpack.c.b16 %v4990, %v4987
        %v5033 = vpack.c.b16 %v4991, %v4988
        %v5034 = vpack.c.b16 %v4995, %v4992
        %v5035 = vpack.c.b16 %v4996, %v4993
        %v5036 = vpack.c.b16 %v4997, %v4994
        %v5037 = vpack.c.b16 %v5001, %v4998
        %v5038 = vpack.c.b16 %v5002, %v4999
        %v5039 = vpack.c.b16 %v5003, %v5000
        %v5040 = vpack.c.b16 %v5007, %v5004
        %v5041 = vpack.c.b16 %v5008, %v5005
        %v5042 = vpack.c.b16 %v5009, %v5006
        %v5043 = vpack.c.b16 %v5013, %v5010
        %v5044 = vpack.c.b16 %v5014, %v5011
        %v5045 = vpack.c.b16 %v5015, %v5012
        %v5046 = vpack.c.b16 %v5019, %v5016
        %v5047 = vpack.c.b16 %v5020, %v5017
        %v5048 = vpack.c.b16 %v5021, %v5018
        %v5049 = vpack.c.b16 %v5025, %v5022
        %v5050 = vpack.c.b16 %v5026, %v5023
        %v5051 = vpack.c.b16 %v5027, %v5024
        %v5124 = vunpack.c.l.b16 %v4900
        %v5125 = vunpack.c.l.b16 %v4901
        %v5126 = vunpack.c.l.b16 %v4902
        %v5127 = vunpack.c.l.b16 %v4903
        %v5128 = vunpack.c.l.b16 %v4904
        %v5129 = vunpack.c.l.b16 %v4905
        %v5130 = vunpack.c.l.b16 %v4906
        %v5131 = vunpack.c.l.b16 %v4907
        %v5132 = vunpack.c.l.b16 %v4908
        %v5133 = vunpack.c.l.b16 %v4909
        %v5134 = vunpack.c.l.b16 %v4910
        %v5135 = vunpack.c.l.b16 %v4911
        %v5136 = vunpack.c.l.b16 %v4912
        %v5137 = vunpack.c.l.b16 %v4913
        %v5138 = vunpack.c.l.b16 %v4914
        %v5139 = vunpack.c.l.b16 %v4915
        %v5140 = vunpack.c.l.b16 %v4916
        %v5141 = vunpack.c.l.b16 %v4917
        %v5142 = vunpack.c.l.b16 %v4918
        %v5143 = vunpack.c.l.b16 %v4919
        %v5144 = vunpack.c.l.b16 %v4920
        %v5145 = vunpack.c.l.b16 %v4921
        %v5146 = vunpack.c.l.b16 %v4922
        %v5147 = vunpack.c.l.b16 %v4923
        %v5148 = vunpack.c.l.b16 %v4924
        %v5149 = vunpack.c.l.b16 %v4925
        %v5150 = vunpack.c.l.b16 %v4926
        %v5151 = vunpack.c.l.b16 %v4927
        %v5152 = vunpack.c.l.b16 %v4928
        %v5153 = vunpack.c.l.b16 %v4929
        %v5154 = vunpack.c.l.b16 %v4930
        %v5155 = vunpack.c.l.b16 %v4931
        %v5156 = vunpack.c.l.b16 %v4932
        %v5157 = vunpack.c.l.b16 %v4933
        %v5158 = vunpack.c.l.b16 %v4934
        %v5159 = vunpack.c.l.b16 %v4935
        %v5160 = vunpack.c.l.b16 %v4936
        %v5161 = vunpack.c.l.b16 %v4937
        %v5162 = vunpack.c.l.b16 %v4938
        %v5163 = vunpack.c.l.b16 %v4939
        %v5164 = vunpack.c.l.b16 %v4940
        %v5165 = vunpack.c.l.b16 %v4941
        %v5166 = vunpack.c.l.b16 %v4942
        %v5167 = vunpack.c.l.b16 %v4943
        %v5168 = vunpack.c.l.b16 %v4944
        %v5169 = vunpack.c.l.b16 %v4945
        %v5170 = vunpack.c.l.b16 %v4946
        %v5171 = vunpack.c.l.b16 %v4947
        %v5172 = vpack.c.b16 %v5125, %v5124
        %v5173 = vpack.c.b16 %v5127, %v5126
        %v5174 = vpack.c.b16 %v5129, %v5128
        %v5175 = vpack.c.b16 %v5131, %v5130
        %v5176 = vpack.c.b16 %v5133, %v5132
        %v5177 = vpack.c.b16 %v5135, %v5134
        %v5178 = vpack.c.b16 %v5137, %v5136
        %v5179 = vpack.c.b16 %v5139, %v5138
        %v5180 = vpack.c.b16 %v5141, %v5140
        %v5181 = vpack.c.b16 %v5143, %v5142
        %v5182 = vpack.c.b16 %v5145, %v5144
        %v5183 = vpack.c.b16 %v5147, %v5146
        %v5184 = vpack.c.b16 %v5149, %v5148
        %v5185 = vpack.c.b16 %v5151, %v5150
        %v5186 = vpack.c.b16 %v5153, %v5152
        %v5187 = vpack.c.b16 %v5155, %v5154
        %v5188 = vpack.c.b16 %v5157, %v5156
        %v5189 = vpack.c.b16 %v5159, %v5158
        %v5190 = vpack.c.b16 %v5161, %v5160
        %v5191 = vpack.c.b16 %v5163, %v5162
        %v5192 = vpack.c.b16 %v5165, %v5164
        %v5193 = vpack.c.b16 %v5167, %v5166
        %v5194 = vpack.c.b16 %v5169, %v5168
        %v5195 = vpack.c.b16 %v5171, %v5170
        %5220 = vmatpush.bf16.msra.mxu0 %v5179
        %5221 = vmatpush.bf16.msra.mxu0 %v5178
        %5222 = vmatpush.bf16.msra.mxu0 %v5177
        %5223 = vmatpush.bf16.msra.mxu0 %v5176
        %5224 = vmatpush.bf16.msra.mxu0 %v5175
        %5225 = vmatpush.bf16.msra.mxu0 %v5174
        %5226 = vmatpush.bf16.msra.mxu0 %v5173
        %5227 = vmatpush.bf16.msra.mxu0 %v5172
        %5228 = vmatmul.bf16.gmra.mxu0 %v5028
        %v5229 = vpop.f32.mrf.mxu0
        %v5230 = vadd.f32 0.0, %v5229
        %v5231 = vpop.f32.mrf.mxu0
        %v5232 = vadd.f32 0.0, %v5231
        %5233 = vmatmul.bf16.gmra.mxu0 %v5031
        %v5234 = vpop.f32.mrf.mxu0
        %v5235 = vadd.f32 0.0, %v5234
        %v5236 = vpop.f32.mrf.mxu0
        %v5237 = vadd.f32 0.0, %v5236
        %5238 = vmatmul.bf16.gmra.mxu0 %v5034
        %v5239 = vpop.f32.mrf.mxu0
        %v5240 = vadd.f32 0.0, %v5239
        %v5241 = vpop.f32.mrf.mxu0
        %v5242 = vadd.f32 0.0, %v5241
        %5243 = vmatmul.bf16.gmra.mxu0 %v5037
        %v5244 = vpop.f32.mrf.mxu0
        %v5245 = vadd.f32 0.0, %v5244
        %v5246 = vpop.f32.mrf.mxu0
        %v5247 = vadd.f32 0.0, %v5246
        %5248 = vmatmul.bf16.gmra.mxu0 %v5040
        %v5249 = vpop.f32.mrf.mxu0
        %v5250 = vadd.f32 0.0, %v5249
        %v5251 = vpop.f32.mrf.mxu0
        %v5252 = vadd.f32 0.0, %v5251
        %5253 = vmatmul.bf16.gmra.mxu0 %v5043
        %v5254 = vpop.f32.mrf.mxu0
        %v5255 = vadd.f32 0.0, %v5254
        %v5256 = vpop.f32.mrf.mxu0
        %v5257 = vadd.f32 0.0, %v5256
        %5258 = vmatmul.bf16.gmra.mxu0 %v5046
        %v5259 = vpop.f32.mrf.mxu0
        %v5260 = vadd.f32 0.0, %v5259
        %v5261 = vpop.f32.mrf.mxu0
        %v5262 = vadd.f32 0.0, %v5261
        %5263 = vmatmul.bf16.gmra.mxu0 %v5049
        %v5264 = vpop.f32.mrf.mxu0
        %v5265 = vadd.f32 0.0, %v5264
        %v5266 = vpop.f32.mrf.mxu0
        %v5267 = vadd.f32 0.0, %v5266
        %5268 = vdwg.mxu0
        %5269 = vmatpush.bf16.msra.mxu0 %v5187
        %5270 = vmatpush.bf16.msra.mxu0 %v5186
        %5271 = vmatpush.bf16.msra.mxu0 %v5185
        %5272 = vmatpush.bf16.msra.mxu0 %v5184
        %5273 = vmatpush.bf16.msra.mxu0 %v5183
        %5274 = vmatpush.bf16.msra.mxu0 %v5182
        %5275 = vmatpush.bf16.msra.mxu0 %v5181
        %5276 = vmatpush.bf16.msra.mxu0 %v5180
        %5277 = vmatmul.bf16.gmra.mxu0 %v5029
        %v5278 = vpop.f32.mrf.mxu0
        %v5279 = vadd.f32 %v5230, %v5278
        %v5280 = vpop.f32.mrf.mxu0
        %v5281 = vadd.f32 %v5232, %v5280
        %5282 = vmatmul.bf16.gmra.mxu0 %v5032
        %v5283 = vpop.f32.mrf.mxu0
        %v5284 = vadd.f32 %v5235, %v5283
        %v5285 = vpop.f32.mrf.mxu0
        %v5286 = vadd.f32 %v5237, %v5285
        %5287 = vmatmul.bf16.gmra.mxu0 %v5035
        %v5288 = vpop.f32.mrf.mxu0
        %v5289 = vadd.f32 %v5240, %v5288
        %v5290 = vpop.f32.mrf.mxu0
        %v5291 = vadd.f32 %v5242, %v5290
        %5292 = vmatmul.bf16.gmra.mxu0 %v5038
        %v5293 = vpop.f32.mrf.mxu0
        %v5294 = vadd.f32 %v5245, %v5293
        %v5295 = vpop.f32.mrf.mxu0
        %v5296 = vadd.f32 %v5247, %v5295
        %5297 = vmatmul.bf16.gmra.mxu0 %v5041
        %v5298 = vpop.f32.mrf.mxu0
        %v5299 = vadd.f32 %v5250, %v5298
        %v5300 = vpop.f32.mrf.mxu0
        %v5301 = vadd.f32 %v5252, %v5300
        %5302 = vmatmul.bf16.gmra.mxu0 %v5044
        %v5303 = vpop.f32.mrf.mxu0
        %v5304 = vadd.f32 %v5255, %v5303
        %v5305 = vpop.f32.mrf.mxu0
        %v5306 = vadd.f32 %v5257, %v5305
        %5307 = vmatmul.bf16.gmra.mxu0 %v5047
        %v5308 = vpop.f32.mrf.mxu0
        %v5309 = vadd.f32 %v5260, %v5308
        %v5310 = vpop.f32.mrf.mxu0
        %v5311 = vadd.f32 %v5262, %v5310
        %5312 = vmatmul.bf16.gmra.mxu0 %v5050
        %v5313 = vpop.f32.mrf.mxu0
        %v5314 = vadd.f32 %v5265, %v5313
        %v5315 = vpop.f32.mrf.mxu0
        %v5316 = vadd.f32 %v5267, %v5315
        %5317 = vdwg.mxu0
        %5318 = vmatpush.bf16.msra.mxu0 %v5195
        %5319 = vmatpush.bf16.msra.mxu0 %v5194
        %5320 = vmatpush.bf16.msra.mxu0 %v5193
        %5321 = vmatpush.bf16.msra.mxu0 %v5192
        %5322 = vmatpush.bf16.msra.mxu0 %v5191
        %5323 = vmatpush.bf16.msra.mxu0 %v5190
        %5324 = vmatpush.bf16.msra.mxu0 %v5189
        %5325 = vmatpush.bf16.msra.mxu0 %v5188
        %5326 = vmatmul.bf16.gmra.mxu0 %v5030
        %v5327 = vpop.f32.mrf.mxu0
        %v5328 = vadd.f32 %v5279, %v5327
        %v5329 = vpop.f32.mrf.mxu0
        %v5330 = vadd.f32 %v5281, %v5329
        %5331 = vmatmul.bf16.gmra.mxu0 %v5033
        %v5332 = vpop.f32.mrf.mxu0
        %v5333 = vadd.f32 %v5284, %v5332
        %v5334 = vpop.f32.mrf.mxu0
        %v5335 = vadd.f32 %v5286, %v5334
        %5336 = vmatmul.bf16.gmra.mxu0 %v5036
        %v5337 = vpop.f32.mrf.mxu0
        %v5338 = vadd.f32 %v5289, %v5337
        %v5339 = vpop.f32.mrf.mxu0
        %v5340 = vadd.f32 %v5291, %v5339
        %5341 = vmatmul.bf16.gmra.mxu0 %v5039
        %v5342 = vpop.f32.mrf.mxu0
        %v5343 = vadd.f32 %v5294, %v5342
        %v5344 = vpop.f32.mrf.mxu0
        %v5345 = vadd.f32 %v5296, %v5344
        %5346 = vmatmul.bf16.gmra.mxu0 %v5042
        %v5347 = vpop.f32.mrf.mxu0
        %v5348 = vadd.f32 %v5299, %v5347
        %v5349 = vpop.f32.mrf.mxu0
        %v5350 = vadd.f32 %v5301, %v5349
        %5351 = vmatmul.bf16.gmra.mxu0 %v5045
        %v5352 = vpop.f32.mrf.mxu0
        %v5353 = vadd.f32 %v5304, %v5352
        %v5354 = vpop.f32.mrf.mxu0
        %v5355 = vadd.f32 %v5306, %v5354
        %5356 = vmatmul.bf16.gmra.mxu0 %v5048
        %v5357 = vpop.f32.mrf.mxu0
        %v5358 = vadd.f32 %v5309, %v5357
        %v5359 = vpop.f32.mrf.mxu0
        %v5360 = vadd.f32 %v5311, %v5359
        %5361 = vmatmul.bf16.gmra.mxu0 %v5051
        %v5362 = vpop.f32.mrf.mxu0
        %v5363 = vadd.f32 %v5314, %v5362
        %v5364 = vpop.f32.mrf.mxu0
        %v5365 = vadd.f32 %v5316, %v5364
        %5366 = vdwg.mxu0
        %v5399 = vunpack.c.l.b16 %v4787
        %v5400 = vunpack.c.h.b16 %v4787
        %v5401 = vunpack.c.l.b16 %v4788
        %v5402 = vunpack.c.l.b16 %v4789
        %v5403 = vunpack.c.h.b16 %v4789
        %v5404 = vunpack.c.l.b16 %v4790
        %v5405 = vunpack.c.l.b16 %v4791
        %v5406 = vunpack.c.h.b16 %v4791
        %v5407 = vunpack.c.l.b16 %v4792
        %v5408 = vunpack.c.l.b16 %v4793
        %v5409 = vunpack.c.h.b16 %v4793
        %v5410 = vunpack.c.l.b16 %v4794
        %v5411 = vunpack.c.l.b16 %v4795
        %v5412 = vunpack.c.h.b16 %v4795
        %v5413 = vunpack.c.l.b16 %v4796
        %v5414 = vunpack.c.l.b16 %v4797
        %v5415 = vunpack.c.h.b16 %v4797
        %v5416 = vunpack.c.l.b16 %v4798
        %v5417 = vunpack.c.l.b16 %v4799
        %v5418 = vunpack.c.h.b16 %v4799
        %v5419 = vunpack.c.l.b16 %v4800
        %v5420 = vunpack.c.l.b16 %v4801
        %v5421 = vunpack.c.h.b16 %v4801
        %v5422 = vunpack.c.l.b16 %v4802
        %v5423 = vunpack.c.l.b16 %v4803
        %v5424 = vunpack.c.h.b16 %v4803
        %v5425 = vunpack.c.l.b16 %v4804
        %v5426 = vunpack.c.l.b16 %v4805
        %v5427 = vunpack.c.h.b16 %v4805
        %v5428 = vunpack.c.l.b16 %v4806
        %v5429 = vunpack.c.l.b16 %v4807
        %v5430 = vunpack.c.h.b16 %v4807
        %v5431 = vunpack.c.l.b16 %v4808
        %v5432 = vunpack.c.l.b16 %v4809
        %v5433 = vunpack.c.h.b16 %v4809
        %v5434 = vunpack.c.l.b16 %v4810
        %v5435 = vunpack.c.l.b16 %v4811
        %v5436 = vunpack.c.h.b16 %v4811
        %v5437 = vunpack.c.l.b16 %v4812
        %v5438 = vunpack.c.l.b16 %v4813
        %v5439 = vunpack.c.h.b16 %v4813
        %v5440 = vunpack.c.l.b16 %v4814
        %v5441 = vunpack.c.l.b16 %v4815
        %v5442 = vunpack.c.h.b16 %v4815
        %v5443 = vunpack.c.l.b16 %v4816
        %v5444 = vunpack.c.l.b16 %v4817
        %v5445 = vunpack.c.h.b16 %v4817
        %v5446 = vunpack.c.l.b16 %v4818
        %v5447 = vpack.c.b16 %v5402, %v5399
        %v5448 = vpack.c.b16 %v5403, %v5400
        %v5449 = vpack.c.b16 %v5404, %v5401
        %v5450 = vpack.c.b16 %v5408, %v5405
        %v5451 = vpack.c.b16 %v5409, %v5406
        %v5452 = vpack.c.b16 %v5410, %v5407
        %v5453 = vpack.c.b16 %v5414, %v5411
        %v5454 = vpack.c.b16 %v5415, %v5412
        %v5455 = vpack.c.b16 %v5416, %v5413
        %v5456 = vpack.c.b16 %v5420, %v5417
        %v5457 = vpack.c.b16 %v5421, %v5418
        %v5458 = vpack.c.b16 %v5422, %v5419
        %v5459 = vpack.c.b16 %v5426, %v5423
        %v5460 = vpack.c.b16 %v5427, %v5424
        %v5461 = vpack.c.b16 %v5428, %v5425
        %v5462 = vpack.c.b16 %v5432, %v5429
        %v5463 = vpack.c.b16 %v5433, %v5430
        %v5464 = vpack.c.b16 %v5434, %v5431
        %v5465 = vpack.c.b16 %v5438, %v5435
        %v5466 = vpack.c.b16 %v5439, %v5436
        %v5467 = vpack.c.b16 %v5440, %v5437
        %v5468 = vpack.c.b16 %v5444, %v5441
        %v5469 = vpack.c.b16 %v5445, %v5442
        %v5470 = vpack.c.b16 %v5446, %v5443
        %v5543 = vunpack.c.l.b16 %v4819
        %v5544 = vunpack.c.l.b16 %v4820
        %v5545 = vunpack.c.l.b16 %v4821
        %v5546 = vunpack.c.l.b16 %v4822
        %v5547 = vunpack.c.l.b16 %v4823
        %v5548 = vunpack.c.l.b16 %v4824
        %v5549 = vunpack.c.l.b16 %v4825
        %v5550 = vunpack.c.l.b16 %v4826
        %v5551 = vunpack.c.l.b16 %v4827
        %v5552 = vunpack.c.l.b16 %v4828
        %v5553 = vunpack.c.l.b16 %v4829
        %v5554 = vunpack.c.l.b16 %v4830
        %v5555 = vunpack.c.l.b16 %v4831
        %v5556 = vunpack.c.l.b16 %v4832
        %v5557 = vunpack.c.l.b16 %v4833
        %v5558 = vunpack.c.l.b16 %v4834
        %v5559 = vunpack.c.l.b16 %v4835
        %v5560 = vunpack.c.l.b16 %v4836
        %v5561 = vunpack.c.l.b16 %v4837
        %v5562 = vunpack.c.l.b16 %v4838
        %v5563 = vunpack.c.l.b16 %v4839
        %v5564 = vunpack.c.l.b16 %v4840
        %v5565 = vunpack.c.l.b16 %v4841
        %v5566 = vunpack.c.l.b16 %v4842
        %v5567 = vunpack.c.l.b16 %v4843
        %v5568 = vunpack.c.l.b16 %v4844
        %v5569 = vunpack.c.l.b16 %v4845
        %v5570 = vunpack.c.l.b16 %v4846
        %v5571 = vunpack.c.l.b16 %v4847
        %v5572 = vunpack.c.l.b16 %v4848
        %v5573 = vunpack.c.l.b16 %v4849
        %v5574 = vunpack.c.l.b16 %v4850
        %v5575 = vunpack.c.l.b16 %v4851
        %v5576 = vunpack.c.l.b16 %v4852
        %v5577 = vunpack.c.l.b16 %v4853
        %v5578 = vunpack.c.l.b16 %v4854
        %v5579 = vunpack.c.l.b16 %v4855
        %v5580 = vunpack.c.l.b16 %v4856
        %v5581 = vunpack.c.l.b16 %v4857
        %v5582 = vunpack.c.l.b16 %v4858
        %v5583 = vunpack.c.l.b16 %v4859
        %v5584 = vunpack.c.l.b16 %v4860
        %v5585 = vunpack.c.l.b16 %v4861
        %v5586 = vunpack.c.l.b16 %v4862
        %v5587 = vunpack.c.l.b16 %v4863
        %v5588 = vunpack.c.l.b16 %v4864
        %v5589 = vunpack.c.l.b16 %v4865
        %v5590 = vunpack.c.l.b16 %v4866
        %v5591 = vpack.c.b16 %v5544, %v5543
        %v5592 = vpack.c.b16 %v5546, %v5545
        %v5593 = vpack.c.b16 %v5548, %v5547
        %v5594 = vpack.c.b16 %v5550, %v5549
        %v5595 = vpack.c.b16 %v5552, %v5551
        %v5596 = vpack.c.b16 %v5554, %v5553
        %v5597 = vpack.c.b16 %v5556, %v5555
        %v5598 = vpack.c.b16 %v5558, %v5557
        %v5599 = vpack.c.b16 %v5560, %v5559
        %v5600 = vpack.c.b16 %v5562, %v5561
        %v5601 = vpack.c.b16 %v5564, %v5563
        %v5602 = vpack.c.b16 %v5566, %v5565
        %v5603 = vpack.c.b16 %v5568, %v5567
        %v5604 = vpack.c.b16 %v5570, %v5569
        %v5605 = vpack.c.b16 %v5572, %v5571
        %v5606 = vpack.c.b16 %v5574, %v5573
        %v5607 = vpack.c.b16 %v5576, %v5575
        %v5608 = vpack.c.b16 %v5578, %v5577
        %v5609 = vpack.c.b16 %v5580, %v5579
        %v5610 = vpack.c.b16 %v5582, %v5581
        %v5611 = vpack.c.b16 %v5584, %v5583
        %v5612 = vpack.c.b16 %v5586, %v5585
        %v5613 = vpack.c.b16 %v5588, %v5587
        %v5614 = vpack.c.b16 %v5590, %v5589
        %5639 = vmatpush.bf16.msra.mxu0 %v5598
        %5640 = vmatpush.bf16.msra.mxu0 %v5597
        %5641 = vmatpush.bf16.msra.mxu0 %v5596
        %5642 = vmatpush.bf16.msra.mxu0 %v5595
        %5643 = vmatpush.bf16.msra.mxu0 %v5594
        %5644 = vmatpush.bf16.msra.mxu0 %v5593
        %5645 = vmatpush.bf16.msra.mxu0 %v5592
        %5646 = vmatpush.bf16.msra.mxu0 %v5591
        %5647 = vmatmul.bf16.gmra.mxu0 %v5447
        %v5648 = vpop.f32.mrf.mxu0
        %v5649 = vadd.f32 %v5328, %v5648
        %v5650 = vpop.f32.mrf.mxu0
        %v5651 = vadd.f32 %v5330, %v5650
        %5652 = vmatmul.bf16.gmra.mxu0 %v5450
        %v5653 = vpop.f32.mrf.mxu0
        %v5654 = vadd.f32 %v5333, %v5653
        %v5655 = vpop.f32.mrf.mxu0
        %v5656 = vadd.f32 %v5335, %v5655
        %5657 = vmatmul.bf16.gmra.mxu0 %v5453
        %v5658 = vpop.f32.mrf.mxu0
        %v5659 = vadd.f32 %v5338, %v5658
        %v5660 = vpop.f32.mrf.mxu0
        %v5661 = vadd.f32 %v5340, %v5660
        %5662 = vmatmul.bf16.gmra.mxu0 %v5456
        %v5663 = vpop.f32.mrf.mxu0
        %v5664 = vadd.f32 %v5343, %v5663
        %v5665 = vpop.f32.mrf.mxu0
        %v5666 = vadd.f32 %v5345, %v5665
        %5667 = vmatmul.bf16.gmra.mxu0 %v5459
        %v5668 = vpop.f32.mrf.mxu0
        %v5669 = vadd.f32 %v5348, %v5668
        %v5670 = vpop.f32.mrf.mxu0
        %v5671 = vadd.f32 %v5350, %v5670
        %5672 = vmatmul.bf16.gmra.mxu0 %v5462
        %v5673 = vpop.f32.mrf.mxu0
        %v5674 = vadd.f32 %v5353, %v5673
        %v5675 = vpop.f32.mrf.mxu0
        %v5676 = vadd.f32 %v5355, %v5675
        %5677 = vmatmul.bf16.gmra.mxu0 %v5465
        %v5678 = vpop.f32.mrf.mxu0
        %v5679 = vadd.f32 %v5358, %v5678
        %v5680 = vpop.f32.mrf.mxu0
        %v5681 = vadd.f32 %v5360, %v5680
        %5682 = vmatmul.bf16.gmra.mxu0 %v5468
        %v5683 = vpop.f32.mrf.mxu0
        %v5684 = vadd.f32 %v5363, %v5683
        %v5685 = vpop.f32.mrf.mxu0
        %v5686 = vadd.f32 %v5365, %v5685
        %5687 = vdwg.mxu0
        %5688 = vmatpush.bf16.msra.mxu0 %v5606
        %5689 = vmatpush.bf16.msra.mxu0 %v5605
        %5690 = vmatpush.bf16.msra.mxu0 %v5604
        %5691 = vmatpush.bf16.msra.mxu0 %v5603
        %5692 = vmatpush.bf16.msra.mxu0 %v5602
        %5693 = vmatpush.bf16.msra.mxu0 %v5601
        %5694 = vmatpush.bf16.msra.mxu0 %v5600
        %5695 = vmatpush.bf16.msra.mxu0 %v5599
        %5696 = vmatmul.bf16.gmra.mxu0 %v5448
        %v5697 = vpop.f32.mrf.mxu0
        %v5698 = vadd.f32 %v5649, %v5697
        %v5699 = vpop.f32.mrf.mxu0
        %v5700 = vadd.f32 %v5651, %v5699
        %5701 = vmatmul.bf16.gmra.mxu0 %v5451
        %v5702 = vpop.f32.mrf.mxu0
        %v5703 = vadd.f32 %v5654, %v5702
        %v5704 = vpop.f32.mrf.mxu0
        %v5705 = vadd.f32 %v5656, %v5704
        %5706 = vmatmul.bf16.gmra.mxu0 %v5454
        %v5707 = vpop.f32.mrf.mxu0
        %v5708 = vadd.f32 %v5659, %v5707
        %v5709 = vpop.f32.mrf.mxu0
        %v5710 = vadd.f32 %v5661, %v5709
        %5711 = vmatmul.bf16.gmra.mxu0 %v5457
        %v5712 = vpop.f32.mrf.mxu0
        %v5713 = vadd.f32 %v5664, %v5712
        %v5714 = vpop.f32.mrf.mxu0
        %v5715 = vadd.f32 %v5666, %v5714
        %5716 = vmatmul.bf16.gmra.mxu0 %v5460
        %v5717 = vpop.f32.mrf.mxu0
        %v5718 = vadd.f32 %v5669, %v5717
        %v5719 = vpop.f32.mrf.mxu0
        %v5720 = vadd.f32 %v5671, %v5719
        %5721 = vmatmul.bf16.gmra.mxu0 %v5463
        %v5722 = vpop.f32.mrf.mxu0
        %v5723 = vadd.f32 %v5674, %v5722
        %v5724 = vpop.f32.mrf.mxu0
        %v5725 = vadd.f32 %v5676, %v5724
        %5726 = vmatmul.bf16.gmra.mxu0 %v5466
        %v5727 = vpop.f32.mrf.mxu0
        %v5728 = vadd.f32 %v5679, %v5727
        %v5729 = vpop.f32.mrf.mxu0
        %v5730 = vadd.f32 %v5681, %v5729
        %5731 = vmatmul.bf16.gmra.mxu0 %v5469
        %v5732 = vpop.f32.mrf.mxu0
        %v5733 = vadd.f32 %v5684, %v5732
        %v5734 = vpop.f32.mrf.mxu0
        %v5735 = vadd.f32 %v5686, %v5734
        %5736 = vdwg.mxu0
        %5737 = vmatpush.bf16.msra.mxu0 %v5614
        %5738 = vmatpush.bf16.msra.mxu0 %v5613
        %5739 = vmatpush.bf16.msra.mxu0 %v5612
        %5740 = vmatpush.bf16.msra.mxu0 %v5611
        %5741 = vmatpush.bf16.msra.mxu0 %v5610
        %5742 = vmatpush.bf16.msra.mxu0 %v5609
        %5743 = vmatpush.bf16.msra.mxu0 %v5608
        %5744 = vmatpush.bf16.msra.mxu0 %v5607
        %5745 = vmatmul.bf16.gmra.mxu0 %v5449
        %v5746 = vpop.f32.mrf.mxu0
        %v5747 = vadd.f32 %v5698, %v5746
        %v5748 = vpop.f32.mrf.mxu0
        %v5749 = vadd.f32 %v5700, %v5748
        %5750 = vmatmul.bf16.gmra.mxu0 %v5452
        %v5751 = vpop.f32.mrf.mxu0
        %v5752 = vadd.f32 %v5703, %v5751
        %v5753 = vpop.f32.mrf.mxu0
        %v5754 = vadd.f32 %v5705, %v5753
        %5755 = vmatmul.bf16.gmra.mxu0 %v5455
        %v5756 = vpop.f32.mrf.mxu0
        %v5757 = vadd.f32 %v5708, %v5756
        %v5758 = vpop.f32.mrf.mxu0
        %v5759 = vadd.f32 %v5710, %v5758
        %5760 = vmatmul.bf16.gmra.mxu0 %v5458
        %v5761 = vpop.f32.mrf.mxu0
        %v5762 = vadd.f32 %v5713, %v5761
        %v5763 = vpop.f32.mrf.mxu0
        %v5764 = vadd.f32 %v5715, %v5763
        %5765 = vmatmul.bf16.gmra.mxu0 %v5461
        %v5766 = vpop.f32.mrf.mxu0
        %v5767 = vadd.f32 %v5718, %v5766
        %v5768 = vpop.f32.mrf.mxu0
        %v5769 = vadd.f32 %v5720, %v5768
        %5770 = vmatmul.bf16.gmra.mxu0 %v5464
        %v5771 = vpop.f32.mrf.mxu0
        %v5772 = vadd.f32 %v5723, %v5771
        %v5773 = vpop.f32.mrf.mxu0
        %v5774 = vadd.f32 %v5725, %v5773
        %5775 = vmatmul.bf16.gmra.mxu0 %v5467
        %v5776 = vpop.f32.mrf.mxu0
        %v5777 = vadd.f32 %v5728, %v5776
        %v5778 = vpop.f32.mrf.mxu0
        %v5779 = vadd.f32 %v5730, %v5778
        %5780 = vmatmul.bf16.gmra.mxu0 %v5470
        %v5781 = vpop.f32.mrf.mxu0
        %v5782 = vadd.f32 %v5733, %v5781
        %v5783 = vpop.f32.mrf.mxu0
        %v5784 = vadd.f32 %v5735, %v5783
        %5785 = vdwg.mxu0
        %s5786 = scalar_lea.vmem [#allocation3], 48
        %v5787 = vld [vmem:[%s5786] sm:$0xff]
        %v5788 = vld [vmem:[%s5786 + $0x8] sm:$0xf]
        %v5789 = vld [vmem:[%s5786 + $0xc] sm:$0xff]
        %v5790 = vld [vmem:[%s5786 + $0x14] sm:$0xf]
        %v5791 = vld [vmem:[%s5786 + $0x18] sm:$0xff]
        %v5792 = vld [vmem:[%s5786 + $0x20] sm:$0xf]
        %v5793 = vld [vmem:[%s5786 + $0x24] sm:$0xff]
        %v5794 = vld [vmem:[%s5786 + $0x2c] sm:$0xf]
        %v5795 = vld [vmem:[%s5786 + $0x30] sm:$0xff]
        %v5796 = vld [vmem:[%s5786 + $0x38] sm:$0xf]
        %v5797 = vld [vmem:[%s5786 + $0x3c] sm:$0xff]
        %v5798 = vld [vmem:[%s5786 + $0x44] sm:$0xf]
        %v5799 = vld [vmem:[%s5786 + $0x48] sm:$0xff]
        %v5800 = vld [vmem:[%s5786 + $0x50] sm:$0xf]
        %v5801 = vld [vmem:[%s5786 + $0x54] sm:$0xff]
        %v5802 = vld [vmem:[%s5786 + $0x5c] sm:$0xf]
        %v5803 = vld [vmem:[%s5786 + $0x60] sm:$0xff]
        %v5804 = vld [vmem:[%s5786 + $0x68] sm:$0xf]
        %v5805 = vld [vmem:[%s5786 + $0x6c] sm:$0xff]
        %v5806 = vld [vmem:[%s5786 + $0x74] sm:$0xf]
        %v5807 = vld [vmem:[%s5786 + $0x78] sm:$0xff]
        %v5808 = vld [vmem:[%s5786 + $0x80] sm:$0xf]
        %v5809 = vld [vmem:[%s5786 + $0x84] sm:$0xff]
        %v5810 = vld [vmem:[%s5786 + $0x8c] sm:$0xf]
        %v5811 = vld [vmem:[%s5786 + $0x90] sm:$0xff]
        %v5812 = vld [vmem:[%s5786 + $0x98] sm:$0xf]
        %v5813 = vld [vmem:[%s5786 + $0x9c] sm:$0xff]
        %v5814 = vld [vmem:[%s5786 + $0xa4] sm:$0xf]
        %v5815 = vld [vmem:[%s5786 + $0xa8] sm:$0xff]
        %v5816 = vld [vmem:[%s5786 + $0xb0] sm:$0xf]
        %v5817 = vld [vmem:[%s5786 + $0xb4] sm:$0xff]
        %v5818 = vld [vmem:[%s5786 + $0xbc] sm:$0xf]
        %s5819 = scalar_lea.vmem [#allocation9], 384
        %v5820 = vld [vmem:[%s5819] sm:$0xf]
        %v5821 = vld [vmem:[%s5819 + $0x4] sm:$0xf]
        %v5822 = vld [vmem:[%s5819 + $0x8] sm:$0xf]
        %v5823 = vld [vmem:[%s5819 + $0xc] sm:$0xf]
        %v5824 = vld [vmem:[%s5819 + $0x10] sm:$0xf]
        %v5825 = vld [vmem:[%s5819 + $0x14] sm:$0xf]
        %v5826 = vld [vmem:[%s5819 + $0x18] sm:$0xf]
        %v5827 = vld [vmem:[%s5819 + $0x1c] sm:$0xf]
        %v5828 = vld [vmem:[%s5819 + $0x20] sm:$0xf]
        %v5829 = vld [vmem:[%s5819 + $0x24] sm:$0xf]
        %v5830 = vld [vmem:[%s5819 + $0x28] sm:$0xf]
        %v5831 = vld [vmem:[%s5819 + $0x2c] sm:$0xf]
        %v5832 = vld [vmem:[%s5819 + $0x30] sm:$0xf]
        %v5833 = vld [vmem:[%s5819 + $0x34] sm:$0xf]
        %v5834 = vld [vmem:[%s5819 + $0x38] sm:$0xf]
        %v5835 = vld [vmem:[%s5819 + $0x3c] sm:$0xf]
        %v5836 = vld [vmem:[%s5819 + $0x40] sm:$0xf]
        %v5837 = vld [vmem:[%s5819 + $0x44] sm:$0xf]
        %v5838 = vld [vmem:[%s5819 + $0x48] sm:$0xf]
        %v5839 = vld [vmem:[%s5819 + $0x4c] sm:$0xf]
        %v5840 = vld [vmem:[%s5819 + $0x50] sm:$0xf]
        %v5841 = vld [vmem:[%s5819 + $0x54] sm:$0xf]
        %v5842 = vld [vmem:[%s5819 + $0x58] sm:$0xf]
        %v5843 = vld [vmem:[%s5819 + $0x5c] sm:$0xf]
        %v5844 = vld [vmem:[%s5819 + $0x60] sm:$0xf]
        %v5845 = vld [vmem:[%s5819 + $0x64] sm:$0xf]
        %v5846 = vld [vmem:[%s5819 + $0x68] sm:$0xf]
        %v5847 = vld [vmem:[%s5819 + $0x6c] sm:$0xf]
        %v5848 = vld [vmem:[%s5819 + $0x70] sm:$0xf]
        %v5849 = vld [vmem:[%s5819 + $0x74] sm:$0xf]
        %v5850 = vld [vmem:[%s5819 + $0x78] sm:$0xf]
        %v5851 = vld [vmem:[%s5819 + $0x7c] sm:$0xf]
        %v5852 = vld [vmem:[%s5819 + $0x80] sm:$0xf]
        %v5853 = vld [vmem:[%s5819 + $0x84] sm:$0xf]
        %v5854 = vld [vmem:[%s5819 + $0x88] sm:$0xf]
        %v5855 = vld [vmem:[%s5819 + $0x8c] sm:$0xf]
        %v5856 = vld [vmem:[%s5819 + $0x90] sm:$0xf]
        %v5857 = vld [vmem:[%s5819 + $0x94] sm:$0xf]
        %v5858 = vld [vmem:[%s5819 + $0x98] sm:$0xf]
        %v5859 = vld [vmem:[%s5819 + $0x9c] sm:$0xf]
        %v5860 = vld [vmem:[%s5819 + $0xa0] sm:$0xf]
        %v5861 = vld [vmem:[%s5819 + $0xa4] sm:$0xf]
        %v5862 = vld [vmem:[%s5819 + $0xa8] sm:$0xf]
        %v5863 = vld [vmem:[%s5819 + $0xac] sm:$0xf]
        %v5864 = vld [vmem:[%s5819 + $0xb0] sm:$0xf]
        %v5865 = vld [vmem:[%s5819 + $0xb4] sm:$0xf]
        %v5866 = vld [vmem:[%s5819 + $0xb8] sm:$0xf]
        %v5867 = vld [vmem:[%s5819 + $0xbc] sm:$0xf]
        %v5900 = vunpack.c.l.b16 %v5787
        %v5901 = vunpack.c.h.b16 %v5787
        %v5902 = vunpack.c.l.b16 %v5788
        %v5903 = vunpack.c.l.b16 %v5789
        %v5904 = vunpack.c.h.b16 %v5789
        %v5905 = vunpack.c.l.b16 %v5790
        %v5906 = vunpack.c.l.b16 %v5791
        %v5907 = vunpack.c.h.b16 %v5791
        %v5908 = vunpack.c.l.b16 %v5792
        %v5909 = vunpack.c.l.b16 %v5793
        %v5910 = vunpack.c.h.b16 %v5793
        %v5911 = vunpack.c.l.b16 %v5794
        %v5912 = vunpack.c.l.b16 %v5795
        %v5913 = vunpack.c.h.b16 %v5795
        %v5914 = vunpack.c.l.b16 %v5796
        %v5915 = vunpack.c.l.b16 %v5797
        %v5916 = vunpack.c.h.b16 %v5797
        %v5917 = vunpack.c.l.b16 %v5798
        %v5918 = vunpack.c.l.b16 %v5799
        %v5919 = vunpack.c.h.b16 %v5799
        %v5920 = vunpack.c.l.b16 %v5800
        %v5921 = vunpack.c.l.b16 %v5801
        %v5922 = vunpack.c.h.b16 %v5801
        %v5923 = vunpack.c.l.b16 %v5802
        %v5924 = vunpack.c.l.b16 %v5803
        %v5925 = vunpack.c.h.b16 %v5803
        %v5926 = vunpack.c.l.b16 %v5804
        %v5927 = vunpack.c.l.b16 %v5805
        %v5928 = vunpack.c.h.b16 %v5805
        %v5929 = vunpack.c.l.b16 %v5806
        %v5930 = vunpack.c.l.b16 %v5807
        %v5931 = vunpack.c.h.b16 %v5807
        %v5932 = vunpack.c.l.b16 %v5808
        %v5933 = vunpack.c.l.b16 %v5809
        %v5934 = vunpack.c.h.b16 %v5809
        %v5935 = vunpack.c.l.b16 %v5810
        %v5936 = vunpack.c.l.b16 %v5811
        %v5937 = vunpack.c.h.b16 %v5811
        %v5938 = vunpack.c.l.b16 %v5812
        %v5939 = vunpack.c.l.b16 %v5813
        %v5940 = vunpack.c.h.b16 %v5813
        %v5941 = vunpack.c.l.b16 %v5814
        %v5942 = vunpack.c.l.b16 %v5815
        %v5943 = vunpack.c.h.b16 %v5815
        %v5944 = vunpack.c.l.b16 %v5816
        %v5945 = vunpack.c.l.b16 %v5817
        %v5946 = vunpack.c.h.b16 %v5817
        %v5947 = vunpack.c.l.b16 %v5818
        %v5948 = vpack.c.b16 %v5903, %v5900
        %v5949 = vpack.c.b16 %v5904, %v5901
        %v5950 = vpack.c.b16 %v5905, %v5902
        %v5951 = vpack.c.b16 %v5909, %v5906
        %v5952 = vpack.c.b16 %v5910, %v5907
        %v5953 = vpack.c.b16 %v5911, %v5908
        %v5954 = vpack.c.b16 %v5915, %v5912
        %v5955 = vpack.c.b16 %v5916, %v5913
        %v5956 = vpack.c.b16 %v5917, %v5914
        %v5957 = vpack.c.b16 %v5921, %v5918
        %v5958 = vpack.c.b16 %v5922, %v5919
        %v5959 = vpack.c.b16 %v5923, %v5920
        %v5960 = vpack.c.b16 %v5927, %v5924
        %v5961 = vpack.c.b16 %v5928, %v5925
        %v5962 = vpack.c.b16 %v5929, %v5926
        %v5963 = vpack.c.b16 %v5933, %v5930
        %v5964 = vpack.c.b16 %v5934, %v5931
        %v5965 = vpack.c.b16 %v5935, %v5932
        %v5966 = vpack.c.b16 %v5939, %v5936
        %v5967 = vpack.c.b16 %v5940, %v5937
        %v5968 = vpack.c.b16 %v5941, %v5938
        %v5969 = vpack.c.b16 %v5945, %v5942
        %v5970 = vpack.c.b16 %v5946, %v5943
        %v5971 = vpack.c.b16 %v5947, %v5944
        %v6044 = vunpack.c.l.b16 %v5820
        %v6045 = vunpack.c.l.b16 %v5821
        %v6046 = vunpack.c.l.b16 %v5822
        %v6047 = vunpack.c.l.b16 %v5823
        %v6048 = vunpack.c.l.b16 %v5824
        %v6049 = vunpack.c.l.b16 %v5825
        %v6050 = vunpack.c.l.b16 %v5826
        %v6051 = vunpack.c.l.b16 %v5827
        %v6052 = vunpack.c.l.b16 %v5828
        %v6053 = vunpack.c.l.b16 %v5829
        %v6054 = vunpack.c.l.b16 %v5830
        %v6055 = vunpack.c.l.b16 %v5831
        %v6056 = vunpack.c.l.b16 %v5832
        %v6057 = vunpack.c.l.b16 %v5833
        %v6058 = vunpack.c.l.b16 %v5834
        %v6059 = vunpack.c.l.b16 %v5835
        %v6060 = vunpack.c.l.b16 %v5836
        %v6061 = vunpack.c.l.b16 %v5837
        %v6062 = vunpack.c.l.b16 %v5838
        %v6063 = vunpack.c.l.b16 %v5839
        %v6064 = vunpack.c.l.b16 %v5840
        %v6065 = vunpack.c.l.b16 %v5841
        %v6066 = vunpack.c.l.b16 %v5842
        %v6067 = vunpack.c.l.b16 %v5843
        %v6068 = vunpack.c.l.b16 %v5844
        %v6069 = vunpack.c.l.b16 %v5845
        %v6070 = vunpack.c.l.b16 %v5846
        %v6071 = vunpack.c.l.b16 %v5847
        %v6072 = vunpack.c.l.b16 %v5848
        %v6073 = vunpack.c.l.b16 %v5849
        %v6074 = vunpack.c.l.b16 %v5850
        %v6075 = vunpack.c.l.b16 %v5851
        %v6076 = vunpack.c.l.b16 %v5852
        %v6077 = vunpack.c.l.b16 %v5853
        %v6078 = vunpack.c.l.b16 %v5854
        %v6079 = vunpack.c.l.b16 %v5855
        %v6080 = vunpack.c.l.b16 %v5856
        %v6081 = vunpack.c.l.b16 %v5857
        %v6082 = vunpack.c.l.b16 %v5858
        %v6083 = vunpack.c.l.b16 %v5859
        %v6084 = vunpack.c.l.b16 %v5860
        %v6085 = vunpack.c.l.b16 %v5861
        %v6086 = vunpack.c.l.b16 %v5862
        %v6087 = vunpack.c.l.b16 %v5863
        %v6088 = vunpack.c.l.b16 %v5864
        %v6089 = vunpack.c.l.b16 %v5865
        %v6090 = vunpack.c.l.b16 %v5866
        %v6091 = vunpack.c.l.b16 %v5867
        %v6092 = vpack.c.b16 %v6045, %v6044
        %v6093 = vpack.c.b16 %v6047, %v6046
        %v6094 = vpack.c.b16 %v6049, %v6048
        %v6095 = vpack.c.b16 %v6051, %v6050
        %v6096 = vpack.c.b16 %v6053, %v6052
        %v6097 = vpack.c.b16 %v6055, %v6054
        %v6098 = vpack.c.b16 %v6057, %v6056
        %v6099 = vpack.c.b16 %v6059, %v6058
        %v6100 = vpack.c.b16 %v6061, %v6060
        %v6101 = vpack.c.b16 %v6063, %v6062
        %v6102 = vpack.c.b16 %v6065, %v6064
        %v6103 = vpack.c.b16 %v6067, %v6066
        %v6104 = vpack.c.b16 %v6069, %v6068
        %v6105 = vpack.c.b16 %v6071, %v6070
        %v6106 = vpack.c.b16 %v6073, %v6072
        %v6107 = vpack.c.b16 %v6075, %v6074
        %v6108 = vpack.c.b16 %v6077, %v6076
        %v6109 = vpack.c.b16 %v6079, %v6078
        %v6110 = vpack.c.b16 %v6081, %v6080
        %v6111 = vpack.c.b16 %v6083, %v6082
        %v6112 = vpack.c.b16 %v6085, %v6084
        %v6113 = vpack.c.b16 %v6087, %v6086
        %v6114 = vpack.c.b16 %v6089, %v6088
        %v6115 = vpack.c.b16 %v6091, %v6090
        %6140 = vmatpush.bf16.msra.mxu0 %v6099
        %6141 = vmatpush.bf16.msra.mxu0 %v6098
        %6142 = vmatpush.bf16.msra.mxu0 %v6097
        %6143 = vmatpush.bf16.msra.mxu0 %v6096
        %6144 = vmatpush.bf16.msra.mxu0 %v6095
        %6145 = vmatpush.bf16.msra.mxu0 %v6094
        %6146 = vmatpush.bf16.msra.mxu0 %v6093
        %6147 = vmatpush.bf16.msra.mxu0 %v6092
        %6148 = vmatmul.bf16.gmra.mxu0 %v5948
        %v6149 = vpop.f32.mrf.mxu0
        %v6150 = vadd.f32 0.0, %v6149
        %v6151 = vpop.f32.mrf.mxu0
        %v6152 = vadd.f32 0.0, %v6151
        %6153 = vmatmul.bf16.gmra.mxu0 %v5951
        %v6154 = vpop.f32.mrf.mxu0
        %v6155 = vadd.f32 0.0, %v6154
        %v6156 = vpop.f32.mrf.mxu0
        %v6157 = vadd.f32 0.0, %v6156
        %6158 = vmatmul.bf16.gmra.mxu0 %v5954
        %v6159 = vpop.f32.mrf.mxu0
        %v6160 = vadd.f32 0.0, %v6159
        %v6161 = vpop.f32.mrf.mxu0
        %v6162 = vadd.f32 0.0, %v6161
        %6163 = vmatmul.bf16.gmra.mxu0 %v5957
        %v6164 = vpop.f32.mrf.mxu0
        %v6165 = vadd.f32 0.0, %v6164
        %v6166 = vpop.f32.mrf.mxu0
        %v6167 = vadd.f32 0.0, %v6166
        %6168 = vmatmul.bf16.gmra.mxu0 %v5960
        %v6169 = vpop.f32.mrf.mxu0
        %v6170 = vadd.f32 0.0, %v6169
        %v6171 = vpop.f32.mrf.mxu0
        %v6172 = vadd.f32 0.0, %v6171
        %6173 = vmatmul.bf16.gmra.mxu0 %v5963
        %v6174 = vpop.f32.mrf.mxu0
        %v6175 = vadd.f32 0.0, %v6174
        %v6176 = vpop.f32.mrf.mxu0
        %v6177 = vadd.f32 0.0, %v6176
        %6178 = vmatmul.bf16.gmra.mxu0 %v5966
        %v6179 = vpop.f32.mrf.mxu0
        %v6180 = vadd.f32 0.0, %v6179
        %v6181 = vpop.f32.mrf.mxu0
        %v6182 = vadd.f32 0.0, %v6181
        %6183 = vmatmul.bf16.gmra.mxu0 %v5969
        %v6184 = vpop.f32.mrf.mxu0
        %v6185 = vadd.f32 0.0, %v6184
        %v6186 = vpop.f32.mrf.mxu0
        %v6187 = vadd.f32 0.0, %v6186
        %6188 = vdwg.mxu0
        %6189 = vmatpush.bf16.msra.mxu0 %v6107
        %6190 = vmatpush.bf16.msra.mxu0 %v6106
        %6191 = vmatpush.bf16.msra.mxu0 %v6105
        %6192 = vmatpush.bf16.msra.mxu0 %v6104
        %6193 = vmatpush.bf16.msra.mxu0 %v6103
        %6194 = vmatpush.bf16.msra.mxu0 %v6102
        %6195 = vmatpush.bf16.msra.mxu0 %v6101
        %6196 = vmatpush.bf16.msra.mxu0 %v6100
        %6197 = vmatmul.bf16.gmra.mxu0 %v5949
        %v6198 = vpop.f32.mrf.mxu0
        %v6199 = vadd.f32 %v6150, %v6198
        %v6200 = vpop.f32.mrf.mxu0
        %v6201 = vadd.f32 %v6152, %v6200
        %6202 = vmatmul.bf16.gmra.mxu0 %v5952
        %v6203 = vpop.f32.mrf.mxu0
        %v6204 = vadd.f32 %v6155, %v6203
        %v6205 = vpop.f32.mrf.mxu0
        %v6206 = vadd.f32 %v6157, %v6205
        %6207 = vmatmul.bf16.gmra.mxu0 %v5955
        %v6208 = vpop.f32.mrf.mxu0
        %v6209 = vadd.f32 %v6160, %v6208
        %v6210 = vpop.f32.mrf.mxu0
        %v6211 = vadd.f32 %v6162, %v6210
        %6212 = vmatmul.bf16.gmra.mxu0 %v5958
        %v6213 = vpop.f32.mrf.mxu0
        %v6214 = vadd.f32 %v6165, %v6213
        %v6215 = vpop.f32.mrf.mxu0
        %v6216 = vadd.f32 %v6167, %v6215
        %6217 = vmatmul.bf16.gmra.mxu0 %v5961
        %v6218 = vpop.f32.mrf.mxu0
        %v6219 = vadd.f32 %v6170, %v6218
        %v6220 = vpop.f32.mrf.mxu0
        %v6221 = vadd.f32 %v6172, %v6220
        %6222 = vmatmul.bf16.gmra.mxu0 %v5964
        %v6223 = vpop.f32.mrf.mxu0
        %v6224 = vadd.f32 %v6175, %v6223
        %v6225 = vpop.f32.mrf.mxu0
        %v6226 = vadd.f32 %v6177, %v6225
        %6227 = vmatmul.bf16.gmra.mxu0 %v5967
        %v6228 = vpop.f32.mrf.mxu0
        %v6229 = vadd.f32 %v6180, %v6228
        %v6230 = vpop.f32.mrf.mxu0
        %v6231 = vadd.f32 %v6182, %v6230
        %6232 = vmatmul.bf16.gmra.mxu0 %v5970
        %v6233 = vpop.f32.mrf.mxu0
        %v6234 = vadd.f32 %v6185, %v6233
        %v6235 = vpop.f32.mrf.mxu0
        %v6236 = vadd.f32 %v6187, %v6235
        %6237 = vdwg.mxu0
        %6238 = vmatpush.bf16.msra.mxu0 %v6115
        %6239 = vmatpush.bf16.msra.mxu0 %v6114
        %6240 = vmatpush.bf16.msra.mxu0 %v6113
        %6241 = vmatpush.bf16.msra.mxu0 %v6112
        %6242 = vmatpush.bf16.msra.mxu0 %v6111
        %6243 = vmatpush.bf16.msra.mxu0 %v6110
        %6244 = vmatpush.bf16.msra.mxu0 %v6109
        %6245 = vmatpush.bf16.msra.mxu0 %v6108
        %6246 = vmatmul.bf16.gmra.mxu0 %v5950
        %v6247 = vpop.f32.mrf.mxu0
        %v6248 = vadd.f32 %v6199, %v6247
        %v6249 = vpop.f32.mrf.mxu0
        %v6250 = vadd.f32 %v6201, %v6249
        %6251 = vmatmul.bf16.gmra.mxu0 %v5953
        %v6252 = vpop.f32.mrf.mxu0
        %v6253 = vadd.f32 %v6204, %v6252
        %v6254 = vpop.f32.mrf.mxu0
        %v6255 = vadd.f32 %v6206, %v6254
        %6256 = vmatmul.bf16.gmra.mxu0 %v5956
        %v6257 = vpop.f32.mrf.mxu0
        %v6258 = vadd.f32 %v6209, %v6257
        %v6259 = vpop.f32.mrf.mxu0
        %v6260 = vadd.f32 %v6211, %v6259
        %6261 = vmatmul.bf16.gmra.mxu0 %v5959
        %v6262 = vpop.f32.mrf.mxu0
        %v6263 = vadd.f32 %v6214, %v6262
        %v6264 = vpop.f32.mrf.mxu0
        %v6265 = vadd.f32 %v6216, %v6264
        %6266 = vmatmul.bf16.gmra.mxu0 %v5962
        %v6267 = vpop.f32.mrf.mxu0
        %v6268 = vadd.f32 %v6219, %v6267
        %v6269 = vpop.f32.mrf.mxu0
        %v6270 = vadd.f32 %v6221, %v6269
        %6271 = vmatmul.bf16.gmra.mxu0 %v5965
        %v6272 = vpop.f32.mrf.mxu0
        %v6273 = vadd.f32 %v6224, %v6272
        %v6274 = vpop.f32.mrf.mxu0
        %v6275 = vadd.f32 %v6226, %v6274
        %6276 = vmatmul.bf16.gmra.mxu0 %v5968
        %v6277 = vpop.f32.mrf.mxu0
        %v6278 = vadd.f32 %v6229, %v6277
        %v6279 = vpop.f32.mrf.mxu0
        %v6280 = vadd.f32 %v6231, %v6279
        %6281 = vmatmul.bf16.gmra.mxu0 %v5971
        %v6282 = vpop.f32.mrf.mxu0
        %v6283 = vadd.f32 %v6234, %v6282
        %v6284 = vpop.f32.mrf.mxu0
        %v6285 = vadd.f32 %v6236, %v6284
        %6286 = vdwg.mxu0
        %v6287 = vadd.f32 %v5747, %v6248
        %v6288 = vadd.f32 %v5749, %v6250
        %v6289 = vadd.f32 %v5752, %v6253
        %v6290 = vadd.f32 %v5754, %v6255
        %v6291 = vadd.f32 %v5757, %v6258
        %v6292 = vadd.f32 %v5759, %v6260
        %v6293 = vadd.f32 %v5762, %v6263
        %v6294 = vadd.f32 %v5764, %v6265
        %v6295 = vadd.f32 %v5767, %v6268
        %v6296 = vadd.f32 %v5769, %v6270
        %v6297 = vadd.f32 %v5772, %v6273
        %v6298 = vadd.f32 %v5774, %v6275
        %v6299 = vadd.f32 %v5777, %v6278
        %v6300 = vadd.f32 %v5779, %v6280
        %v6301 = vadd.f32 %v5782, %v6283
        %v6302 = vadd.f32 %v5784, %v6285
        %v6303 = vld [vmem:[%s4] sm:$0x1]
        %v6305 = vperm.slane %v6303, 0
        %v6307 = vadd.f32 %v6287, %v6305
        %v6308 = vadd.f32 %v6288, %v6305
        %v6309 = vadd.f32 %v6289, %v6305
        %v6310 = vadd.f32 %v6290, %v6305
        %v6311 = vadd.f32 %v6291, %v6305
        %v6312 = vadd.f32 %v6292, %v6305
        %v6313 = vadd.f32 %v6293, %v6305
        %v6314 = vadd.f32 %v6294, %v6305
        %v6315 = vadd.f32 %v6295, %v6305
        %v6316 = vadd.f32 %v6296, %v6305
        %v6317 = vadd.f32 %v6297, %v6305
        %v6318 = vadd.f32 %v6298, %v6305
        %v6319 = vadd.f32 %v6299, %v6305
        %v6320 = vadd.f32 %v6300, %v6305
        %v6321 = vadd.f32 %v6301, %v6305
        %v6322 = vadd.f32 %v6302, %v6305
        %v6323 = vsub.f32 0.0, %v6307
        %v6324 = vsub.f32 0.0, %v6308
        %v6325 = vsub.f32 0.0, %v6309
        %v6326 = vsub.f32 0.0, %v6310
        %v6327 = vsub.f32 0.0, %v6311
        %v6328 = vsub.f32 0.0, %v6312
        %v6329 = vsub.f32 0.0, %v6313
        %v6330 = vsub.f32 0.0, %v6314
        %v6331 = vsub.f32 0.0, %v6315
        %v6332 = vsub.f32 0.0, %v6316
        %v6333 = vsub.f32 0.0, %v6317
        %v6334 = vsub.f32 0.0, %v6318
        %v6335 = vsub.f32 0.0, %v6319
        %v6336 = vsub.f32 0.0, %v6320
        %v6337 = vsub.f32 0.0, %v6321
        %v6338 = vsub.f32 0.0, %v6322
        %v6339 = vmul.f32 %v6323, 1.442695
        %v6340 = vpow.pop %v6339
        %v6341 = vmul.f32 %v6324, 1.442695
        %v6342 = vpow.pop %v6341
        %v6343 = vmul.f32 %v6325, 1.442695
        %v6344 = vpow.pop %v6343
        %v6345 = vmul.f32 %v6326, 1.442695
        %v6346 = vpow.pop %v6345
        %v6347 = vmul.f32 %v6327, 1.442695
        %v6348 = vpow.pop %v6347
        %v6349 = vmul.f32 %v6328, 1.442695
        %v6350 = vpow.pop %v6349
        %v6351 = vmul.f32 %v6329, 1.442695
        %v6352 = vpow.pop %v6351
        %v6353 = vmul.f32 %v6330, 1.442695
        %v6354 = vpow.pop %v6353
        %v6355 = vmul.f32 %v6331, 1.442695
        %v6356 = vpow.pop %v6355
        %v6357 = vmul.f32 %v6332, 1.442695
        %v6358 = vpow.pop %v6357
        %v6359 = vmul.f32 %v6333, 1.442695
        %v6360 = vpow.pop %v6359
        %v6361 = vmul.f32 %v6334, 1.442695
        %v6362 = vpow.pop %v6361
        %v6363 = vmul.f32 %v6335, 1.442695
        %v6364 = vpow.pop %v6363
        %v6365 = vmul.f32 %v6336, 1.442695
        %v6366 = vpow.pop %v6365
        %v6367 = vmul.f32 %v6337, 1.442695
        %v6368 = vpow.pop %v6367
        %v6369 = vmul.f32 %v6338, 1.442695
        %v6370 = vpow.pop %v6369
        %v6371 = vadd.f32 %v6340, 1.0
        %v6372 = vadd.f32 %v6342, 1.0
        %v6373 = vadd.f32 %v6344, 1.0
        %v6374 = vadd.f32 %v6346, 1.0
        %v6375 = vadd.f32 %v6348, 1.0
        %v6376 = vadd.f32 %v6350, 1.0
        %v6377 = vadd.f32 %v6352, 1.0
        %v6378 = vadd.f32 %v6354, 1.0
        %v6379 = vadd.f32 %v6356, 1.0
        %v6380 = vadd.f32 %v6358, 1.0
        %v6381 = vadd.f32 %v6360, 1.0
        %v6382 = vadd.f32 %v6362, 1.0
        %v6383 = vadd.f32 %v6364, 1.0
        %v6384 = vadd.f32 %v6366, 1.0
        %v6385 = vadd.f32 %v6368, 1.0
        %v6386 = vadd.f32 %v6370, 1.0
        %v6387 = vrcp.pop %v6371
        %v6388 = vrcp.pop %v6372
        %v6389 = vrcp.pop %v6373
        %v6390 = vrcp.pop %v6374
        %v6391 = vrcp.pop %v6375
        %v6392 = vrcp.pop %v6376
        %v6393 = vrcp.pop %v6377
        %v6394 = vrcp.pop %v6378
        %v6395 = vrcp.pop %v6379
        %v6396 = vrcp.pop %v6380
        %v6397 = vrcp.pop %v6381
        %v6398 = vrcp.pop %v6382
        %v6399 = vrcp.pop %v6383
        %v6400 = vrcp.pop %v6384
        %v6401 = vrcp.pop %v6385
        %v6402 = vrcp.pop %v6386
        %v6403 = vmul.f32 %v6307, %v6387
        %v6404 = vmul.f32 %v6308, %v6388
        %v6405 = vmul.f32 %v6309, %v6389
        %v6406 = vmul.f32 %v6310, %v6390
        %v6407 = vmul.f32 %v6311, %v6391
        %v6408 = vmul.f32 %v6312, %v6392
        %v6409 = vmul.f32 %v6313, %v6393
        %v6410 = vmul.f32 %v6314, %v6394
        %v6411 = vmul.f32 %v6315, %v6395
        %v6412 = vmul.f32 %v6316, %v6396
        %v6413 = vmul.f32 %v6317, %v6397
        %v6414 = vmul.f32 %v6318, %v6398
        %v6415 = vmul.f32 %v6319, %v6399
        %v6416 = vmul.f32 %v6320, %v6400
        %v6417 = vmul.f32 %v6321, %v6401
        %v6418 = vmul.f32 %v6322, %v6402
        %v6419 = vld [vmem:[%s240] sm:$0xf]
        %v6420 = vld [vmem:[%s240 + $0x4] sm:$0xf]
        %v6421 = vld [vmem:[%s240 + $0x8] sm:$0xf]
        %v6422 = vld [vmem:[%s240 + $0xc] sm:$0xf]
        %v6423 = vld [vmem:[%s240 + $0x10] sm:$0xf]
        %v6424 = vld [vmem:[%s240 + $0x14] sm:$0xf]
        %v6425 = vld [vmem:[%s240 + $0x18] sm:$0xf]
        %v6426 = vld [vmem:[%s240 + $0x1c] sm:$0xf]
        %v6427 = vld [vmem:[%s240 + $0x20] sm:$0xf]
        %v6428 = vld [vmem:[%s240 + $0x24] sm:$0xf]
        %v6429 = vld [vmem:[%s240 + $0x28] sm:$0xf]
        %v6430 = vld [vmem:[%s240 + $0x2c] sm:$0xf]
        %v6431 = vld [vmem:[%s240 + $0x30] sm:$0xf]
        %v6432 = vld [vmem:[%s240 + $0x34] sm:$0xf]
        %v6433 = vld [vmem:[%s240 + $0x38] sm:$0xf]
        %v6434 = vld [vmem:[%s240 + $0x3c] sm:$0xf]
        %v6435 = vunpack.c.l.bf16 %v6419
        %v6436 = vunpack.c.l.bf16 %v6420
        %v6437 = vunpack.c.l.bf16 %v6421
        %v6438 = vunpack.c.l.bf16 %v6422
        %v6439 = vunpack.c.l.bf16 %v6423
        %v6440 = vunpack.c.l.bf16 %v6424
        %v6441 = vunpack.c.l.bf16 %v6425
        %v6442 = vunpack.c.l.bf16 %v6426
        %v6443 = vunpack.c.l.bf16 %v6427
        %v6444 = vunpack.c.l.bf16 %v6428
        %v6445 = vunpack.c.l.bf16 %v6429
        %v6446 = vunpack.c.l.bf16 %v6430
        %v6447 = vunpack.c.l.bf16 %v6431
        %v6448 = vunpack.c.l.bf16 %v6432
        %v6449 = vunpack.c.l.bf16 %v6433
        %v6450 = vunpack.c.l.bf16 %v6434
        %v6451 = vadd.f32 %v6403, %v6435
        %v6452 = vadd.f32 %v6404, %v6436
        %v6453 = vadd.f32 %v6405, %v6437
        %v6454 = vadd.f32 %v6406, %v6438
        %v6455 = vadd.f32 %v6407, %v6439
        %v6456 = vadd.f32 %v6408, %v6440
        %v6457 = vadd.f32 %v6409, %v6441
        %v6458 = vadd.f32 %v6410, %v6442
        %v6459 = vadd.f32 %v6411, %v6443
        %v6460 = vadd.f32 %v6412, %v6444
        %v6461 = vadd.f32 %v6413, %v6445
        %v6462 = vadd.f32 %v6414, %v6446
        %v6463 = vadd.f32 %v6415, %v6447
        %v6464 = vadd.f32 %v6416, %v6448
        %v6465 = vadd.f32 %v6417, %v6449
        %v6466 = vadd.f32 %v6418, %v6450
        %6467 = vst [vmem:[%s277] sm:$0xff] %v6451
        %6468 = vst [vmem:[%s277 + $0x8] sm:$0xff] %v6452
        %6469 = vst [vmem:[%s277 + $0x10] sm:$0xff] %v6453
        %6470 = vst [vmem:[%s277 + $0x18] sm:$0xff] %v6454
        %6471 = vst [vmem:[%s277 + $0x20] sm:$0xff] %v6455
        %6472 = vst [vmem:[%s277 + $0x28] sm:$0xff] %v6456
        %6473 = vst [vmem:[%s277 + $0x30] sm:$0xff] %v6457
        %6474 = vst [vmem:[%s277 + $0x38] sm:$0xff] %v6458
        %6475 = vst [vmem:[%s277 + $0x40] sm:$0xff] %v6459
        %6476 = vst [vmem:[%s277 + $0x48] sm:$0xff] %v6460
        %6477 = vst [vmem:[%s277 + $0x50] sm:$0xff] %v6461
        %6478 = vst [vmem:[%s277 + $0x58] sm:$0xff] %v6462
        %6479 = vst [vmem:[%s277 + $0x60] sm:$0xff] %v6463
        %6480 = vst [vmem:[%s277 + $0x68] sm:$0xff] %v6464
        %6481 = vst [vmem:[%s277 + $0x70] sm:$0xff] %v6465
        %6482 = vst [vmem:[%s277 + $0x78] sm:$0xff] %v6466
        %s6483 = scalar_lea.vmem [#allocation3], 192
        %v6484 = vld [vmem:[%s6483] sm:$0xff]
        %v6485 = vld [vmem:[%s6483 + $0x8] sm:$0xf]
        %v6486 = vld [vmem:[%s6483 + $0xc] sm:$0xff]
        %v6487 = vld [vmem:[%s6483 + $0x14] sm:$0xf]
        %v6488 = vld [vmem:[%s6483 + $0x18] sm:$0xff]
        %v6489 = vld [vmem:[%s6483 + $0x20] sm:$0xf]
        %v6490 = vld [vmem:[%s6483 + $0x24] sm:$0xff]
        %v6491 = vld [vmem:[%s6483 + $0x2c] sm:$0xf]
        %v6492 = vld [vmem:[%s6483 + $0x30] sm:$0xff]
        %v6493 = vld [vmem:[%s6483 + $0x38] sm:$0xf]
        %v6494 = vld [vmem:[%s6483 + $0x3c] sm:$0xff]
        %v6495 = vld [vmem:[%s6483 + $0x44] sm:$0xf]
        %v6496 = vld [vmem:[%s6483 + $0x48] sm:$0xff]
        %v6497 = vld [vmem:[%s6483 + $0x50] sm:$0xf]
        %v6498 = vld [vmem:[%s6483 + $0x54] sm:$0xff]
        %v6499 = vld [vmem:[%s6483 + $0x5c] sm:$0xf]
        %v6500 = vld [vmem:[%s6483 + $0x60] sm:$0xff]
        %v6501 = vld [vmem:[%s6483 + $0x68] sm:$0xf]
        %v6502 = vld [vmem:[%s6483 + $0x6c] sm:$0xff]
        %v6503 = vld [vmem:[%s6483 + $0x74] sm:$0xf]
        %v6504 = vld [vmem:[%s6483 + $0x78] sm:$0xff]
        %v6505 = vld [vmem:[%s6483 + $0x80] sm:$0xf]
        %v6506 = vld [vmem:[%s6483 + $0x84] sm:$0xff]
        %v6507 = vld [vmem:[%s6483 + $0x8c] sm:$0xf]
        %v6508 = vld [vmem:[%s6483 + $0x90] sm:$0xff]
        %v6509 = vld [vmem:[%s6483 + $0x98] sm:$0xf]
        %v6510 = vld [vmem:[%s6483 + $0x9c] sm:$0xff]
        %v6511 = vld [vmem:[%s6483 + $0xa4] sm:$0xf]
        %v6512 = vld [vmem:[%s6483 + $0xa8] sm:$0xff]
        %v6513 = vld [vmem:[%s6483 + $0xb0] sm:$0xf]
        %v6514 = vld [vmem:[%s6483 + $0xb4] sm:$0xff]
        %v6515 = vld [vmem:[%s6483 + $0xbc] sm:$0xf]
        %v6516 = vld [vmem:[#allocation9] sm:$0xf]
        %v6517 = vld [vmem:[#allocation9 + $0x4] sm:$0xf]
        %v6518 = vld [vmem:[#allocation9 + $0x8] sm:$0xf]
        %v6519 = vld [vmem:[#allocation9 + $0xc] sm:$0xf]
        %v6520 = vld [vmem:[#allocation9 + $0x10] sm:$0xf]
        %v6521 = vld [vmem:[#allocation9 + $0x14] sm:$0xf]
        %v6522 = vld [vmem:[#allocation9 + $0x18] sm:$0xf]
        %v6523 = vld [vmem:[#allocation9 + $0x1c] sm:$0xf]
        %v6524 = vld [vmem:[#allocation9 + $0x20] sm:$0xf]
        %v6525 = vld [vmem:[#allocation9 + $0x24] sm:$0xf]
        %v6526 = vld [vmem:[#allocation9 + $0x28] sm:$0xf]
        %v6527 = vld [vmem:[#allocation9 + $0x2c] sm:$0xf]
        %v6528 = vld [vmem:[#allocation9 + $0x30] sm:$0xf]
        %v6529 = vld [vmem:[#allocation9 + $0x34] sm:$0xf]
        %v6530 = vld [vmem:[#allocation9 + $0x38] sm:$0xf]
        %v6531 = vld [vmem:[#allocation9 + $0x3c] sm:$0xf]
        %v6532 = vld [vmem:[#allocation9 + $0x40] sm:$0xf]
        %v6533 = vld [vmem:[#allocation9 + $0x44] sm:$0xf]
        %v6534 = vld [vmem:[#allocation9 + $0x48] sm:$0xf]
        %v6535 = vld [vmem:[#allocation9 + $0x4c] sm:$0xf]
        %v6536 = vld [vmem:[#allocation9 + $0x50] sm:$0xf]
        %v6537 = vld [vmem:[#allocation9 + $0x54] sm:$0xf]
        %v6538 = vld [vmem:[#allocation9 + $0x58] sm:$0xf]
        %v6539 = vld [vmem:[#allocation9 + $0x5c] sm:$0xf]
        %v6540 = vld [vmem:[#allocation9 + $0x60] sm:$0xf]
        %v6541 = vld [vmem:[#allocation9 + $0x64] sm:$0xf]
        %v6542 = vld [vmem:[#allocation9 + $0x68] sm:$0xf]
        %v6543 = vld [vmem:[#allocation9 + $0x6c] sm:$0xf]
        %v6544 = vld [vmem:[#allocation9 + $0x70] sm:$0xf]
        %v6545 = vld [vmem:[#allocation9 + $0x74] sm:$0xf]
        %v6546 = vld [vmem:[#allocation9 + $0x78] sm:$0xf]
        %v6547 = vld [vmem:[#allocation9 + $0x7c] sm:$0xf]
        %v6548 = vld [vmem:[#allocation9 + $0x80] sm:$0xf]
        %v6549 = vld [vmem:[#allocation9 + $0x84] sm:$0xf]
        %v6550 = vld [vmem:[#allocation9 + $0x88] sm:$0xf]
        %v6551 = vld [vmem:[#allocation9 + $0x8c] sm:$0xf]
        %v6552 = vld [vmem:[#allocation9 + $0x90] sm:$0xf]
        %v6553 = vld [vmem:[#allocation9 + $0x94] sm:$0xf]
        %v6554 = vld [vmem:[#allocation9 + $0x98] sm:$0xf]
        %v6555 = vld [vmem:[#allocation9 + $0x9c] sm:$0xf]
        %v6556 = vld [vmem:[#allocation9 + $0xa0] sm:$0xf]
        %v6557 = vld [vmem:[#allocation9 + $0xa4] sm:$0xf]
        %v6558 = vld [vmem:[#allocation9 + $0xa8] sm:$0xf]
        %v6559 = vld [vmem:[#allocation9 + $0xac] sm:$0xf]
        %v6560 = vld [vmem:[#allocation9 + $0xb0] sm:$0xf]
        %v6561 = vld [vmem:[#allocation9 + $0xb4] sm:$0xf]
        %v6562 = vld [vmem:[#allocation9 + $0xb8] sm:$0xf]
        %v6563 = vld [vmem:[#allocation9 + $0xbc] sm:$0xf]
        %v6564 = vld [vmem:[%s4754] sm:$0xff]
        %v6565 = vld [vmem:[%s4754 + $0x8] sm:$0xf]
        %v6566 = vld [vmem:[%s4754 + $0xc] sm:$0xff]
        %v6567 = vld [vmem:[%s4754 + $0x14] sm:$0xf]
        %v6568 = vld [vmem:[%s4754 + $0x18] sm:$0xff]
        %v6569 = vld [vmem:[%s4754 + $0x20] sm:$0xf]
        %v6570 = vld [vmem:[%s4754 + $0x24] sm:$0xff]
        %v6571 = vld [vmem:[%s4754 + $0x2c] sm:$0xf]
        %v6572 = vld [vmem:[%s4754 + $0x30] sm:$0xff]
        %v6573 = vld [vmem:[%s4754 + $0x38] sm:$0xf]
        %v6574 = vld [vmem:[%s4754 + $0x3c] sm:$0xff]
        %v6575 = vld [vmem:[%s4754 + $0x44] sm:$0xf]
        %v6576 = vld [vmem:[%s4754 + $0x48] sm:$0xff]
        %v6577 = vld [vmem:[%s4754 + $0x50] sm:$0xf]
        %v6578 = vld [vmem:[%s4754 + $0x54] sm:$0xff]
        %v6579 = vld [vmem:[%s4754 + $0x5c] sm:$0xf]
        %v6580 = vld [vmem:[%s4754 + $0x60] sm:$0xff]
        %v6581 = vld [vmem:[%s4754 + $0x68] sm:$0xf]
        %v6582 = vld [vmem:[%s4754 + $0x6c] sm:$0xff]
        %v6583 = vld [vmem:[%s4754 + $0x74] sm:$0xf]
        %v6584 = vld [vmem:[%s4754 + $0x78] sm:$0xff]
        %v6585 = vld [vmem:[%s4754 + $0x80] sm:$0xf]
        %v6586 = vld [vmem:[%s4754 + $0x84] sm:$0xff]
        %v6587 = vld [vmem:[%s4754 + $0x8c] sm:$0xf]
        %v6588 = vld [vmem:[%s4754 + $0x90] sm:$0xff]
        %v6589 = vld [vmem:[%s4754 + $0x98] sm:$0xf]
        %v6590 = vld [vmem:[%s4754 + $0x9c] sm:$0xff]
        %v6591 = vld [vmem:[%s4754 + $0xa4] sm:$0xf]
        %v6592 = vld [vmem:[%s4754 + $0xa8] sm:$0xff]
        %v6593 = vld [vmem:[%s4754 + $0xb0] sm:$0xf]
        %v6594 = vld [vmem:[%s4754 + $0xb4] sm:$0xff]
        %v6595 = vld [vmem:[%s4754 + $0xbc] sm:$0xf]
        %v6596 = vld [vmem:[%s4899] sm:$0xf]
        %v6597 = vld [vmem:[%s4899 + $0x4] sm:$0xf]
        %v6598 = vld [vmem:[%s4899 + $0x8] sm:$0xf]
        %v6599 = vld [vmem:[%s4899 + $0xc] sm:$0xf]
        %v6600 = vld [vmem:[%s4899 + $0x10] sm:$0xf]
        %v6601 = vld [vmem:[%s4899 + $0x14] sm:$0xf]
        %v6602 = vld [vmem:[%s4899 + $0x18] sm:$0xf]
        %v6603 = vld [vmem:[%s4899 + $0x1c] sm:$0xf]
        %v6604 = vld [vmem:[%s4899 + $0x20] sm:$0xf]
        %v6605 = vld [vmem:[%s4899 + $0x24] sm:$0xf]
        %v6606 = vld [vmem:[%s4899 + $0x28] sm:$0xf]
        %v6607 = vld [vmem:[%s4899 + $0x2c] sm:$0xf]
        %v6608 = vld [vmem:[%s4899 + $0x30] sm:$0xf]
        %v6609 = vld [vmem:[%s4899 + $0x34] sm:$0xf]
        %v6610 = vld [vmem:[%s4899 + $0x38] sm:$0xf]
        %v6611 = vld [vmem:[%s4899 + $0x3c] sm:$0xf]
        %v6612 = vld [vmem:[%s4899 + $0x40] sm:$0xf]
        %v6613 = vld [vmem:[%s4899 + $0x44] sm:$0xf]
        %v6614 = vld [vmem:[%s4899 + $0x48] sm:$0xf]
        %v6615 = vld [vmem:[%s4899 + $0x4c] sm:$0xf]
        %v6616 = vld [vmem:[%s4899 + $0x50] sm:$0xf]
        %v6617 = vld [vmem:[%s4899 + $0x54] sm:$0xf]
        %v6618 = vld [vmem:[%s4899 + $0x58] sm:$0xf]
        %v6619 = vld [vmem:[%s4899 + $0x5c] sm:$0xf]
        %v6620 = vld [vmem:[%s4899 + $0x60] sm:$0xf]
        %v6621 = vld [vmem:[%s4899 + $0x64] sm:$0xf]
        %v6622 = vld [vmem:[%s4899 + $0x68] sm:$0xf]
        %v6623 = vld [vmem:[%s4899 + $0x6c] sm:$0xf]
        %v6624 = vld [vmem:[%s4899 + $0x70] sm:$0xf]
        %v6625 = vld [vmem:[%s4899 + $0x74] sm:$0xf]
        %v6626 = vld [vmem:[%s4899 + $0x78] sm:$0xf]
        %v6627 = vld [vmem:[%s4899 + $0x7c] sm:$0xf]
        %v6628 = vld [vmem:[%s4899 + $0x80] sm:$0xf]
        %v6629 = vld [vmem:[%s4899 + $0x84] sm:$0xf]
        %v6630 = vld [vmem:[%s4899 + $0x88] sm:$0xf]
        %v6631 = vld [vmem:[%s4899 + $0x8c] sm:$0xf]
        %v6632 = vld [vmem:[%s4899 + $0x90] sm:$0xf]
        %v6633 = vld [vmem:[%s4899 + $0x94] sm:$0xf]
        %v6634 = vld [vmem:[%s4899 + $0x98] sm:$0xf]
        %v6635 = vld [vmem:[%s4899 + $0x9c] sm:$0xf]
        %v6636 = vld [vmem:[%s4899 + $0xa0] sm:$0xf]
        %v6637 = vld [vmem:[%s4899 + $0xa4] sm:$0xf]
        %v6638 = vld [vmem:[%s4899 + $0xa8] sm:$0xf]
        %v6639 = vld [vmem:[%s4899 + $0xac] sm:$0xf]
        %v6640 = vld [vmem:[%s4899 + $0xb0] sm:$0xf]
        %v6641 = vld [vmem:[%s4899 + $0xb4] sm:$0xf]
        %v6642 = vld [vmem:[%s4899 + $0xb8] sm:$0xf]
        %v6643 = vld [vmem:[%s4899 + $0xbc] sm:$0xf]
        %v6676 = vunpack.c.l.b16 %v6564
        %v6677 = vunpack.c.h.b16 %v6564
        %v6678 = vunpack.c.l.b16 %v6565
        %v6679 = vunpack.c.l.b16 %v6566
        %v6680 = vunpack.c.h.b16 %v6566
        %v6681 = vunpack.c.l.b16 %v6567
        %v6682 = vunpack.c.l.b16 %v6568
        %v6683 = vunpack.c.h.b16 %v6568
        %v6684 = vunpack.c.l.b16 %v6569
        %v6685 = vunpack.c.l.b16 %v6570
        %v6686 = vunpack.c.h.b16 %v6570
        %v6687 = vunpack.c.l.b16 %v6571
        %v6688 = vunpack.c.l.b16 %v6572
        %v6689 = vunpack.c.h.b16 %v6572
        %v6690 = vunpack.c.l.b16 %v6573
        %v6691 = vunpack.c.l.b16 %v6574
        %v6692 = vunpack.c.h.b16 %v6574
        %v6693 = vunpack.c.l.b16 %v6575
        %v6694 = vunpack.c.l.b16 %v6576
        %v6695 = vunpack.c.h.b16 %v6576
        %v6696 = vunpack.c.l.b16 %v6577
        %v6697 = vunpack.c.l.b16 %v6578
        %v6698 = vunpack.c.h.b16 %v6578
        %v6699 = vunpack.c.l.b16 %v6579
        %v6700 = vunpack.c.l.b16 %v6580
        %v6701 = vunpack.c.h.b16 %v6580
        %v6702 = vunpack.c.l.b16 %v6581
        %v6703 = vunpack.c.l.b16 %v6582
        %v6704 = vunpack.c.h.b16 %v6582
        %v6705 = vunpack.c.l.b16 %v6583
        %v6706 = vunpack.c.l.b16 %v6584
        %v6707 = vunpack.c.h.b16 %v6584
        %v6708 = vunpack.c.l.b16 %v6585
        %v6709 = vunpack.c.l.b16 %v6586
        %v6710 = vunpack.c.h.b16 %v6586
        %v6711 = vunpack.c.l.b16 %v6587
        %v6712 = vunpack.c.l.b16 %v6588
        %v6713 = vunpack.c.h.b16 %v6588
        %v6714 = vunpack.c.l.b16 %v6589
        %v6715 = vunpack.c.l.b16 %v6590
        %v6716 = vunpack.c.h.b16 %v6590
        %v6717 = vunpack.c.l.b16 %v6591
        %v6718 = vunpack.c.l.b16 %v6592
        %v6719 = vunpack.c.h.b16 %v6592
        %v6720 = vunpack.c.l.b16 %v6593
        %v6721 = vunpack.c.l.b16 %v6594
        %v6722 = vunpack.c.h.b16 %v6594
        %v6723 = vunpack.c.l.b16 %v6595
        %v6724 = vpack.c.b16 %v6679, %v6676
        %v6725 = vpack.c.b16 %v6680, %v6677
        %v6726 = vpack.c.b16 %v6681, %v6678
        %v6727 = vpack.c.b16 %v6685, %v6682
        %v6728 = vpack.c.b16 %v6686, %v6683
        %v6729 = vpack.c.b16 %v6687, %v6684
        %v6730 = vpack.c.b16 %v6691, %v6688
        %v6731 = vpack.c.b16 %v6692, %v6689
        %v6732 = vpack.c.b16 %v6693, %v6690
        %v6733 = vpack.c.b16 %v6697, %v6694
        %v6734 = vpack.c.b16 %v6698, %v6695
        %v6735 = vpack.c.b16 %v6699, %v6696
        %v6736 = vpack.c.b16 %v6703, %v6700
        %v6737 = vpack.c.b16 %v6704, %v6701
        %v6738 = vpack.c.b16 %v6705, %v6702
        %v6739 = vpack.c.b16 %v6709, %v6706
        %v6740 = vpack.c.b16 %v6710, %v6707
        %v6741 = vpack.c.b16 %v6711, %v6708
        %v6742 = vpack.c.b16 %v6715, %v6712
        %v6743 = vpack.c.b16 %v6716, %v6713
        %v6744 = vpack.c.b16 %v6717, %v6714
        %v6745 = vpack.c.b16 %v6721, %v6718
        %v6746 = vpack.c.b16 %v6722, %v6719
        %v6747 = vpack.c.b16 %v6723, %v6720
        %v6820 = vunpack.c.l.b16 %v6596
        %v6821 = vunpack.c.l.b16 %v6597
        %v6822 = vunpack.c.l.b16 %v6598
        %v6823 = vunpack.c.l.b16 %v6599
        %v6824 = vunpack.c.l.b16 %v6600
        %v6825 = vunpack.c.l.b16 %v6601
        %v6826 = vunpack.c.l.b16 %v6602
        %v6827 = vunpack.c.l.b16 %v6603
        %v6828 = vunpack.c.l.b16 %v6604
        %v6829 = vunpack.c.l.b16 %v6605
        %v6830 = vunpack.c.l.b16 %v6606
        %v6831 = vunpack.c.l.b16 %v6607
        %v6832 = vunpack.c.l.b16 %v6608
        %v6833 = vunpack.c.l.b16 %v6609
        %v6834 = vunpack.c.l.b16 %v6610
        %v6835 = vunpack.c.l.b16 %v6611
        %v6836 = vunpack.c.l.b16 %v6612
        %v6837 = vunpack.c.l.b16 %v6613
        %v6838 = vunpack.c.l.b16 %v6614
        %v6839 = vunpack.c.l.b16 %v6615
        %v6840 = vunpack.c.l.b16 %v6616
        %v6841 = vunpack.c.l.b16 %v6617
        %v6842 = vunpack.c.l.b16 %v6618
        %v6843 = vunpack.c.l.b16 %v6619
        %v6844 = vunpack.c.l.b16 %v6620
        %v6845 = vunpack.c.l.b16 %v6621
        %v6846 = vunpack.c.l.b16 %v6622
        %v6847 = vunpack.c.l.b16 %v6623
        %v6848 = vunpack.c.l.b16 %v6624
        %v6849 = vunpack.c.l.b16 %v6625
        %v6850 = vunpack.c.l.b16 %v6626
        %v6851 = vunpack.c.l.b16 %v6627
        %v6852 = vunpack.c.l.b16 %v6628
        %v6853 = vunpack.c.l.b16 %v6629
        %v6854 = vunpack.c.l.b16 %v6630
        %v6855 = vunpack.c.l.b16 %v6631
        %v6856 = vunpack.c.l.b16 %v6632
        %v6857 = vunpack.c.l.b16 %v6633
        %v6858 = vunpack.c.l.b16 %v6634
        %v6859 = vunpack.c.l.b16 %v6635
        %v6860 = vunpack.c.l.b16 %v6636
        %v6861 = vunpack.c.l.b16 %v6637
        %v6862 = vunpack.c.l.b16 %v6638
        %v6863 = vunpack.c.l.b16 %v6639
        %v6864 = vunpack.c.l.b16 %v6640
        %v6865 = vunpack.c.l.b16 %v6641
        %v6866 = vunpack.c.l.b16 %v6642
        %v6867 = vunpack.c.l.b16 %v6643
        %v6868 = vpack.c.b16 %v6821, %v6820
        %v6869 = vpack.c.b16 %v6823, %v6822
        %v6870 = vpack.c.b16 %v6825, %v6824
        %v6871 = vpack.c.b16 %v6827, %v6826
        %v6872 = vpack.c.b16 %v6829, %v6828
        %v6873 = vpack.c.b16 %v6831, %v6830
        %v6874 = vpack.c.b16 %v6833, %v6832
        %v6875 = vpack.c.b16 %v6835, %v6834
        %v6876 = vpack.c.b16 %v6837, %v6836
        %v6877 = vpack.c.b16 %v6839, %v6838
        %v6878 = vpack.c.b16 %v6841, %v6840
        %v6879 = vpack.c.b16 %v6843, %v6842
        %v6880 = vpack.c.b16 %v6845, %v6844
        %v6881 = vpack.c.b16 %v6847, %v6846
        %v6882 = vpack.c.b16 %v6849, %v6848
        %v6883 = vpack.c.b16 %v6851, %v6850
        %v6884 = vpack.c.b16 %v6853, %v6852
        %v6885 = vpack.c.b16 %v6855, %v6854
        %v6886 = vpack.c.b16 %v6857, %v6856
        %v6887 = vpack.c.b16 %v6859, %v6858
        %v6888 = vpack.c.b16 %v6861, %v6860
        %v6889 = vpack.c.b16 %v6863, %v6862
        %v6890 = vpack.c.b16 %v6865, %v6864
        %v6891 = vpack.c.b16 %v6867, %v6866
        %6916 = vmatpush.bf16.msra.mxu0 %v6875
        %6917 = vmatpush.bf16.msra.mxu0 %v6874
        %6918 = vmatpush.bf16.msra.mxu0 %v6873
        %6919 = vmatpush.bf16.msra.mxu0 %v6872
        %6920 = vmatpush.bf16.msra.mxu0 %v6871
        %6921 = vmatpush.bf16.msra.mxu0 %v6870
        %6922 = vmatpush.bf16.msra.mxu0 %v6869
        %6923 = vmatpush.bf16.msra.mxu0 %v6868
        %6924 = vmatmul.bf16.gmra.mxu0 %v6724
        %v6925 = vpop.f32.mrf.mxu0
        %v6926 = vadd.f32 0.0, %v6925
        %v6927 = vpop.f32.mrf.mxu0
        %v6928 = vadd.f32 0.0, %v6927
        %6929 = vmatmul.bf16.gmra.mxu0 %v6727
        %v6930 = vpop.f32.mrf.mxu0
        %v6931 = vadd.f32 0.0, %v6930
        %v6932 = vpop.f32.mrf.mxu0
        %v6933 = vadd.f32 0.0, %v6932
        %6934 = vmatmul.bf16.gmra.mxu0 %v6730
        %v6935 = vpop.f32.mrf.mxu0
        %v6936 = vadd.f32 0.0, %v6935
        %v6937 = vpop.f32.mrf.mxu0
        %v6938 = vadd.f32 0.0, %v6937
        %6939 = vmatmul.bf16.gmra.mxu0 %v6733
        %v6940 = vpop.f32.mrf.mxu0
        %v6941 = vadd.f32 0.0, %v6940
        %v6942 = vpop.f32.mrf.mxu0
        %v6943 = vadd.f32 0.0, %v6942
        %6944 = vmatmul.bf16.gmra.mxu0 %v6736
        %v6945 = vpop.f32.mrf.mxu0
        %v6946 = vadd.f32 0.0, %v6945
        %v6947 = vpop.f32.mrf.mxu0
        %v6948 = vadd.f32 0.0, %v6947
        %6949 = vmatmul.bf16.gmra.mxu0 %v6739
        %v6950 = vpop.f32.mrf.mxu0
        %v6951 = vadd.f32 0.0, %v6950
        %v6952 = vpop.f32.mrf.mxu0
        %v6953 = vadd.f32 0.0, %v6952
        %6954 = vmatmul.bf16.gmra.mxu0 %v6742
        %v6955 = vpop.f32.mrf.mxu0
        %v6956 = vadd.f32 0.0, %v6955
        %v6957 = vpop.f32.mrf.mxu0
        %v6958 = vadd.f32 0.0, %v6957
        %6959 = vmatmul.bf16.gmra.mxu0 %v6745
        %v6960 = vpop.f32.mrf.mxu0
        %v6961 = vadd.f32 0.0, %v6960
        %v6962 = vpop.f32.mrf.mxu0
        %v6963 = vadd.f32 0.0, %v6962
        %6964 = vdwg.mxu0
        %6965 = vmatpush.bf16.msra.mxu0 %v6883
        %6966 = vmatpush.bf16.msra.mxu0 %v6882
        %6967 = vmatpush.bf16.msra.mxu0 %v6881
        %6968 = vmatpush.bf16.msra.mxu0 %v6880
        %6969 = vmatpush.bf16.msra.mxu0 %v6879
        %6970 = vmatpush.bf16.msra.mxu0 %v6878
        %6971 = vmatpush.bf16.msra.mxu0 %v6877
        %6972 = vmatpush.bf16.msra.mxu0 %v6876
        %6973 = vmatmul.bf16.gmra.mxu0 %v6725
        %v6974 = vpop.f32.mrf.mxu0
        %v6975 = vadd.f32 %v6926, %v6974
        %v6976 = vpop.f32.mrf.mxu0
        %v6977 = vadd.f32 %v6928, %v6976
        %6978 = vmatmul.bf16.gmra.mxu0 %v6728
        %v6979 = vpop.f32.mrf.mxu0
        %v6980 = vadd.f32 %v6931, %v6979
        %v6981 = vpop.f32.mrf.mxu0
        %v6982 = vadd.f32 %v6933, %v6981
        %6983 = vmatmul.bf16.gmra.mxu0 %v6731
        %v6984 = vpop.f32.mrf.mxu0
        %v6985 = vadd.f32 %v6936, %v6984
        %v6986 = vpop.f32.mrf.mxu0
        %v6987 = vadd.f32 %v6938, %v6986
        %6988 = vmatmul.bf16.gmra.mxu0 %v6734
        %v6989 = vpop.f32.mrf.mxu0
        %v6990 = vadd.f32 %v6941, %v6989
        %v6991 = vpop.f32.mrf.mxu0
        %v6992 = vadd.f32 %v6943, %v6991
        %6993 = vmatmul.bf16.gmra.mxu0 %v6737
        %v6994 = vpop.f32.mrf.mxu0
        %v6995 = vadd.f32 %v6946, %v6994
        %v6996 = vpop.f32.mrf.mxu0
        %v6997 = vadd.f32 %v6948, %v6996
        %6998 = vmatmul.bf16.gmra.mxu0 %v6740
        %v6999 = vpop.f32.mrf.mxu0
        %v7000 = vadd.f32 %v6951, %v6999
        %v7001 = vpop.f32.mrf.mxu0
        %v7002 = vadd.f32 %v6953, %v7001
        %7003 = vmatmul.bf16.gmra.mxu0 %v6743
        %v7004 = vpop.f32.mrf.mxu0
        %v7005 = vadd.f32 %v6956, %v7004
        %v7006 = vpop.f32.mrf.mxu0
        %v7007 = vadd.f32 %v6958, %v7006
        %7008 = vmatmul.bf16.gmra.mxu0 %v6746
        %v7009 = vpop.f32.mrf.mxu0
        %v7010 = vadd.f32 %v6961, %v7009
        %v7011 = vpop.f32.mrf.mxu0
        %v7012 = vadd.f32 %v6963, %v7011
        %7013 = vdwg.mxu0
        %7014 = vmatpush.bf16.msra.mxu0 %v6891
        %7015 = vmatpush.bf16.msra.mxu0 %v6890
        %7016 = vmatpush.bf16.msra.mxu0 %v6889
        %7017 = vmatpush.bf16.msra.mxu0 %v6888
        %7018 = vmatpush.bf16.msra.mxu0 %v6887
        %7019 = vmatpush.bf16.msra.mxu0 %v6886
        %7020 = vmatpush.bf16.msra.mxu0 %v6885
        %7021 = vmatpush.bf16.msra.mxu0 %v6884
        %7022 = vmatmul.bf16.gmra.mxu0 %v6726
        %v7023 = vpop.f32.mrf.mxu0
        %v7024 = vadd.f32 %v6975, %v7023
        %v7025 = vpop.f32.mrf.mxu0
        %v7026 = vadd.f32 %v6977, %v7025
        %7027 = vmatmul.bf16.gmra.mxu0 %v6729
        %v7028 = vpop.f32.mrf.mxu0
        %v7029 = vadd.f32 %v6980, %v7028
        %v7030 = vpop.f32.mrf.mxu0
        %v7031 = vadd.f32 %v6982, %v7030
        %7032 = vmatmul.bf16.gmra.mxu0 %v6732
        %v7033 = vpop.f32.mrf.mxu0
        %v7034 = vadd.f32 %v6985, %v7033
        %v7035 = vpop.f32.mrf.mxu0
        %v7036 = vadd.f32 %v6987, %v7035
        %7037 = vmatmul.bf16.gmra.mxu0 %v6735
        %v7038 = vpop.f32.mrf.mxu0
        %v7039 = vadd.f32 %v6990, %v7038
        %v7040 = vpop.f32.mrf.mxu0
        %v7041 = vadd.f32 %v6992, %v7040
        %7042 = vmatmul.bf16.gmra.mxu0 %v6738
        %v7043 = vpop.f32.mrf.mxu0
        %v7044 = vadd.f32 %v6995, %v7043
        %v7045 = vpop.f32.mrf.mxu0
        %v7046 = vadd.f32 %v6997, %v7045
        %7047 = vmatmul.bf16.gmra.mxu0 %v6741
        %v7048 = vpop.f32.mrf.mxu0
        %v7049 = vadd.f32 %v7000, %v7048
        %v7050 = vpop.f32.mrf.mxu0
        %v7051 = vadd.f32 %v7002, %v7050
        %7052 = vmatmul.bf16.gmra.mxu0 %v6744
        %v7053 = vpop.f32.mrf.mxu0
        %v7054 = vadd.f32 %v7005, %v7053
        %v7055 = vpop.f32.mrf.mxu0
        %v7056 = vadd.f32 %v7007, %v7055
        %7057 = vmatmul.bf16.gmra.mxu0 %v6747
        %v7058 = vpop.f32.mrf.mxu0
        %v7059 = vadd.f32 %v7010, %v7058
        %v7060 = vpop.f32.mrf.mxu0
        %v7061 = vadd.f32 %v7012, %v7060
        %7062 = vdwg.mxu0
        %v7095 = vunpack.c.l.b16 %v6484
        %v7096 = vunpack.c.h.b16 %v6484
        %v7097 = vunpack.c.l.b16 %v6485
        %v7098 = vunpack.c.l.b16 %v6486
        %v7099 = vunpack.c.h.b16 %v6486
        %v7100 = vunpack.c.l.b16 %v6487
        %v7101 = vunpack.c.l.b16 %v6488
        %v7102 = vunpack.c.h.b16 %v6488
        %v7103 = vunpack.c.l.b16 %v6489
        %v7104 = vunpack.c.l.b16 %v6490
        %v7105 = vunpack.c.h.b16 %v6490
        %v7106 = vunpack.c.l.b16 %v6491
        %v7107 = vunpack.c.l.b16 %v6492
        %v7108 = vunpack.c.h.b16 %v6492
        %v7109 = vunpack.c.l.b16 %v6493
        %v7110 = vunpack.c.l.b16 %v6494
        %v7111 = vunpack.c.h.b16 %v6494
        %v7112 = vunpack.c.l.b16 %v6495
        %v7113 = vunpack.c.l.b16 %v6496
        %v7114 = vunpack.c.h.b16 %v6496
        %v7115 = vunpack.c.l.b16 %v6497
        %v7116 = vunpack.c.l.b16 %v6498
        %v7117 = vunpack.c.h.b16 %v6498
        %v7118 = vunpack.c.l.b16 %v6499
        %v7119 = vunpack.c.l.b16 %v6500
        %v7120 = vunpack.c.h.b16 %v6500
        %v7121 = vunpack.c.l.b16 %v6501
        %v7122 = vunpack.c.l.b16 %v6502
        %v7123 = vunpack.c.h.b16 %v6502
        %v7124 = vunpack.c.l.b16 %v6503
        %v7125 = vunpack.c.l.b16 %v6504
        %v7126 = vunpack.c.h.b16 %v6504
        %v7127 = vunpack.c.l.b16 %v6505
        %v7128 = vunpack.c.l.b16 %v6506
        %v7129 = vunpack.c.h.b16 %v6506
        %v7130 = vunpack.c.l.b16 %v6507
        %v7131 = vunpack.c.l.b16 %v6508
        %v7132 = vunpack.c.h.b16 %v6508
        %v7133 = vunpack.c.l.b16 %v6509
        %v7134 = vunpack.c.l.b16 %v6510
        %v7135 = vunpack.c.h.b16 %v6510
        %v7136 = vunpack.c.l.b16 %v6511
        %v7137 = vunpack.c.l.b16 %v6512
        %v7138 = vunpack.c.h.b16 %v6512
        %v7139 = vunpack.c.l.b16 %v6513
        %v7140 = vunpack.c.l.b16 %v6514
        %v7141 = vunpack.c.h.b16 %v6514
        %v7142 = vunpack.c.l.b16 %v6515
        %v7143 = vpack.c.b16 %v7098, %v7095
        %v7144 = vpack.c.b16 %v7099, %v7096
        %v7145 = vpack.c.b16 %v7100, %v7097
        %v7146 = vpack.c.b16 %v7104, %v7101
        %v7147 = vpack.c.b16 %v7105, %v7102
        %v7148 = vpack.c.b16 %v7106, %v7103
        %v7149 = vpack.c.b16 %v7110, %v7107
        %v7150 = vpack.c.b16 %v7111, %v7108
        %v7151 = vpack.c.b16 %v7112, %v7109
        %v7152 = vpack.c.b16 %v7116, %v7113
        %v7153 = vpack.c.b16 %v7117, %v7114
        %v7154 = vpack.c.b16 %v7118, %v7115
        %v7155 = vpack.c.b16 %v7122, %v7119
        %v7156 = vpack.c.b16 %v7123, %v7120
        %v7157 = vpack.c.b16 %v7124, %v7121
        %v7158 = vpack.c.b16 %v7128, %v7125
        %v7159 = vpack.c.b16 %v7129, %v7126
        %v7160 = vpack.c.b16 %v7130, %v7127
        %v7161 = vpack.c.b16 %v7134, %v7131
        %v7162 = vpack.c.b16 %v7135, %v7132
        %v7163 = vpack.c.b16 %v7136, %v7133
        %v7164 = vpack.c.b16 %v7140, %v7137
        %v7165 = vpack.c.b16 %v7141, %v7138
        %v7166 = vpack.c.b16 %v7142, %v7139
        %v7239 = vunpack.c.l.b16 %v6516
        %v7240 = vunpack.c.l.b16 %v6517
        %v7241 = vunpack.c.l.b16 %v6518
        %v7242 = vunpack.c.l.b16 %v6519
        %v7243 = vunpack.c.l.b16 %v6520
        %v7244 = vunpack.c.l.b16 %v6521
        %v7245 = vunpack.c.l.b16 %v6522
        %v7246 = vunpack.c.l.b16 %v6523
        %v7247 = vunpack.c.l.b16 %v6524
        %v7248 = vunpack.c.l.b16 %v6525
        %v7249 = vunpack.c.l.b16 %v6526
        %v7250 = vunpack.c.l.b16 %v6527
        %v7251 = vunpack.c.l.b16 %v6528
        %v7252 = vunpack.c.l.b16 %v6529
        %v7253 = vunpack.c.l.b16 %v6530
        %v7254 = vunpack.c.l.b16 %v6531
        %v7255 = vunpack.c.l.b16 %v6532
        %v7256 = vunpack.c.l.b16 %v6533
        %v7257 = vunpack.c.l.b16 %v6534
        %v7258 = vunpack.c.l.b16 %v6535
        %v7259 = vunpack.c.l.b16 %v6536
        %v7260 = vunpack.c.l.b16 %v6537
        %v7261 = vunpack.c.l.b16 %v6538
        %v7262 = vunpack.c.l.b16 %v6539
        %v7263 = vunpack.c.l.b16 %v6540
        %v7264 = vunpack.c.l.b16 %v6541
        %v7265 = vunpack.c.l.b16 %v6542
        %v7266 = vunpack.c.l.b16 %v6543
        %v7267 = vunpack.c.l.b16 %v6544
        %v7268 = vunpack.c.l.b16 %v6545
        %v7269 = vunpack.c.l.b16 %v6546
        %v7270 = vunpack.c.l.b16 %v6547
        %v7271 = vunpack.c.l.b16 %v6548
        %v7272 = vunpack.c.l.b16 %v6549
        %v7273 = vunpack.c.l.b16 %v6550
        %v7274 = vunpack.c.l.b16 %v6551
        %v7275 = vunpack.c.l.b16 %v6552
        %v7276 = vunpack.c.l.b16 %v6553
        %v7277 = vunpack.c.l.b16 %v6554
        %v7278 = vunpack.c.l.b16 %v6555
        %v7279 = vunpack.c.l.b16 %v6556
        %v7280 = vunpack.c.l.b16 %v6557
        %v7281 = vunpack.c.l.b16 %v6558
        %v7282 = vunpack.c.l.b16 %v6559
        %v7283 = vunpack.c.l.b16 %v6560
        %v7284 = vunpack.c.l.b16 %v6561
        %v7285 = vunpack.c.l.b16 %v6562
        %v7286 = vunpack.c.l.b16 %v6563
        %v7287 = vpack.c.b16 %v7240, %v7239
        %v7288 = vpack.c.b16 %v7242, %v7241
        %v7289 = vpack.c.b16 %v7244, %v7243
        %v7290 = vpack.c.b16 %v7246, %v7245
        %v7291 = vpack.c.b16 %v7248, %v7247
        %v7292 = vpack.c.b16 %v7250, %v7249
        %v7293 = vpack.c.b16 %v7252, %v7251
        %v7294 = vpack.c.b16 %v7254, %v7253
        %v7295 = vpack.c.b16 %v7256, %v7255
        %v7296 = vpack.c.b16 %v7258, %v7257
        %v7297 = vpack.c.b16 %v7260, %v7259
        %v7298 = vpack.c.b16 %v7262, %v7261
        %v7299 = vpack.c.b16 %v7264, %v7263
        %v7300 = vpack.c.b16 %v7266, %v7265
        %v7301 = vpack.c.b16 %v7268, %v7267
        %v7302 = vpack.c.b16 %v7270, %v7269
        %v7303 = vpack.c.b16 %v7272, %v7271
        %v7304 = vpack.c.b16 %v7274, %v7273
        %v7305 = vpack.c.b16 %v7276, %v7275
        %v7306 = vpack.c.b16 %v7278, %v7277
        %v7307 = vpack.c.b16 %v7280, %v7279
        %v7308 = vpack.c.b16 %v7282, %v7281
        %v7309 = vpack.c.b16 %v7284, %v7283
        %v7310 = vpack.c.b16 %v7286, %v7285
        %7335 = vmatpush.bf16.msra.mxu0 %v7294
        %7336 = vmatpush.bf16.msra.mxu0 %v7293
        %7337 = vmatpush.bf16.msra.mxu0 %v7292
        %7338 = vmatpush.bf16.msra.mxu0 %v7291
        %7339 = vmatpush.bf16.msra.mxu0 %v7290
        %7340 = vmatpush.bf16.msra.mxu0 %v7289
        %7341 = vmatpush.bf16.msra.mxu0 %v7288
        %7342 = vmatpush.bf16.msra.mxu0 %v7287
        %7343 = vmatmul.bf16.gmra.mxu0 %v7143
        %v7344 = vpop.f32.mrf.mxu0
        %v7345 = vadd.f32 %v7024, %v7344
        %v7346 = vpop.f32.mrf.mxu0
        %v7347 = vadd.f32 %v7026, %v7346
        %7348 = vmatmul.bf16.gmra.mxu0 %v7146
        %v7349 = vpop.f32.mrf.mxu0
        %v7350 = vadd.f32 %v7029, %v7349
        %v7351 = vpop.f32.mrf.mxu0
        %v7352 = vadd.f32 %v7031, %v7351
        %7353 = vmatmul.bf16.gmra.mxu0 %v7149
        %v7354 = vpop.f32.mrf.mxu0
        %v7355 = vadd.f32 %v7034, %v7354
        %v7356 = vpop.f32.mrf.mxu0
        %v7357 = vadd.f32 %v7036, %v7356
        %7358 = vmatmul.bf16.gmra.mxu0 %v7152
        %v7359 = vpop.f32.mrf.mxu0
        %v7360 = vadd.f32 %v7039, %v7359
        %v7361 = vpop.f32.mrf.mxu0
        %v7362 = vadd.f32 %v7041, %v7361
        %7363 = vmatmul.bf16.gmra.mxu0 %v7155
        %v7364 = vpop.f32.mrf.mxu0
        %v7365 = vadd.f32 %v7044, %v7364
        %v7366 = vpop.f32.mrf.mxu0
        %v7367 = vadd.f32 %v7046, %v7366
        %7368 = vmatmul.bf16.gmra.mxu0 %v7158
        %v7369 = vpop.f32.mrf.mxu0
        %v7370 = vadd.f32 %v7049, %v7369
        %v7371 = vpop.f32.mrf.mxu0
        %v7372 = vadd.f32 %v7051, %v7371
        %7373 = vmatmul.bf16.gmra.mxu0 %v7161
        %v7374 = vpop.f32.mrf.mxu0
        %v7375 = vadd.f32 %v7054, %v7374
        %v7376 = vpop.f32.mrf.mxu0
        %v7377 = vadd.f32 %v7056, %v7376
        %7378 = vmatmul.bf16.gmra.mxu0 %v7164
        %v7379 = vpop.f32.mrf.mxu0
        %v7380 = vadd.f32 %v7059, %v7379
        %v7381 = vpop.f32.mrf.mxu0
        %v7382 = vadd.f32 %v7061, %v7381
        %7383 = vdwg.mxu0
        %7384 = vmatpush.bf16.msra.mxu0 %v7302
        %7385 = vmatpush.bf16.msra.mxu0 %v7301
        %7386 = vmatpush.bf16.msra.mxu0 %v7300
        %7387 = vmatpush.bf16.msra.mxu0 %v7299
        %7388 = vmatpush.bf16.msra.mxu0 %v7298
        %7389 = vmatpush.bf16.msra.mxu0 %v7297
        %7390 = vmatpush.bf16.msra.mxu0 %v7296
        %7391 = vmatpush.bf16.msra.mxu0 %v7295
        %7392 = vmatmul.bf16.gmra.mxu0 %v7144
        %v7393 = vpop.f32.mrf.mxu0
        %v7394 = vadd.f32 %v7345, %v7393
        %v7395 = vpop.f32.mrf.mxu0
        %v7396 = vadd.f32 %v7347, %v7395
        %7397 = vmatmul.bf16.gmra.mxu0 %v7147
        %v7398 = vpop.f32.mrf.mxu0
        %v7399 = vadd.f32 %v7350, %v7398
        %v7400 = vpop.f32.mrf.mxu0
        %v7401 = vadd.f32 %v7352, %v7400
        %7402 = vmatmul.bf16.gmra.mxu0 %v7150
        %v7403 = vpop.f32.mrf.mxu0
        %v7404 = vadd.f32 %v7355, %v7403
        %v7405 = vpop.f32.mrf.mxu0
        %v7406 = vadd.f32 %v7357, %v7405
        %7407 = vmatmul.bf16.gmra.mxu0 %v7153
        %v7408 = vpop.f32.mrf.mxu0
        %v7409 = vadd.f32 %v7360, %v7408
        %v7410 = vpop.f32.mrf.mxu0
        %v7411 = vadd.f32 %v7362, %v7410
        %7412 = vmatmul.bf16.gmra.mxu0 %v7156
        %v7413 = vpop.f32.mrf.mxu0
        %v7414 = vadd.f32 %v7365, %v7413
        %v7415 = vpop.f32.mrf.mxu0
        %v7416 = vadd.f32 %v7367, %v7415
        %7417 = vmatmul.bf16.gmra.mxu0 %v7159
        %v7418 = vpop.f32.mrf.mxu0
        %v7419 = vadd.f32 %v7370, %v7418
        %v7420 = vpop.f32.mrf.mxu0
        %v7421 = vadd.f32 %v7372, %v7420
        %7422 = vmatmul.bf16.gmra.mxu0 %v7162
        %v7423 = vpop.f32.mrf.mxu0
        %v7424 = vadd.f32 %v7375, %v7423
        %v7425 = vpop.f32.mrf.mxu0
        %v7426 = vadd.f32 %v7377, %v7425
        %7427 = vmatmul.bf16.gmra.mxu0 %v7165
        %v7428 = vpop.f32.mrf.mxu0
        %v7429 = vadd.f32 %v7380, %v7428
        %v7430 = vpop.f32.mrf.mxu0
        %v7431 = vadd.f32 %v7382, %v7430
        %7432 = vdwg.mxu0
        %7433 = vmatpush.bf16.msra.mxu0 %v7310
        %7434 = vmatpush.bf16.msra.mxu0 %v7309
        %7435 = vmatpush.bf16.msra.mxu0 %v7308
        %7436 = vmatpush.bf16.msra.mxu0 %v7307
        %7437 = vmatpush.bf16.msra.mxu0 %v7306
        %7438 = vmatpush.bf16.msra.mxu0 %v7305
        %7439 = vmatpush.bf16.msra.mxu0 %v7304
        %7440 = vmatpush.bf16.msra.mxu0 %v7303
        %7441 = vmatmul.bf16.gmra.mxu0 %v7145
        %v7442 = vpop.f32.mrf.mxu0
        %v7443 = vadd.f32 %v7394, %v7442
        %v7444 = vpop.f32.mrf.mxu0
        %v7445 = vadd.f32 %v7396, %v7444
        %7446 = vmatmul.bf16.gmra.mxu0 %v7148
        %v7447 = vpop.f32.mrf.mxu0
        %v7448 = vadd.f32 %v7399, %v7447
        %v7449 = vpop.f32.mrf.mxu0
        %v7450 = vadd.f32 %v7401, %v7449
        %7451 = vmatmul.bf16.gmra.mxu0 %v7151
        %v7452 = vpop.f32.mrf.mxu0
        %v7453 = vadd.f32 %v7404, %v7452
        %v7454 = vpop.f32.mrf.mxu0
        %v7455 = vadd.f32 %v7406, %v7454
        %7456 = vmatmul.bf16.gmra.mxu0 %v7154
        %v7457 = vpop.f32.mrf.mxu0
        %v7458 = vadd.f32 %v7409, %v7457
        %v7459 = vpop.f32.mrf.mxu0
        %v7460 = vadd.f32 %v7411, %v7459
        %7461 = vmatmul.bf16.gmra.mxu0 %v7157
        %v7462 = vpop.f32.mrf.mxu0
        %v7463 = vadd.f32 %v7414, %v7462
        %v7464 = vpop.f32.mrf.mxu0
        %v7465 = vadd.f32 %v7416, %v7464
        %7466 = vmatmul.bf16.gmra.mxu0 %v7160
        %v7467 = vpop.f32.mrf.mxu0
        %v7468 = vadd.f32 %v7419, %v7467
        %v7469 = vpop.f32.mrf.mxu0
        %v7470 = vadd.f32 %v7421, %v7469
        %7471 = vmatmul.bf16.gmra.mxu0 %v7163
        %v7472 = vpop.f32.mrf.mxu0
        %v7473 = vadd.f32 %v7424, %v7472
        %v7474 = vpop.f32.mrf.mxu0
        %v7475 = vadd.f32 %v7426, %v7474
        %7476 = vmatmul.bf16.gmra.mxu0 %v7166
        %v7477 = vpop.f32.mrf.mxu0
        %v7478 = vadd.f32 %v7429, %v7477
        %v7479 = vpop.f32.mrf.mxu0
        %v7480 = vadd.f32 %v7431, %v7479
        %7481 = vdwg.mxu0
        %s7482 = scalar_lea.vmem [#allocation3], 240
        %v7483 = vld [vmem:[%s7482] sm:$0xff]
        %v7484 = vld [vmem:[%s7482 + $0x8] sm:$0xf]
        %v7485 = vld [vmem:[%s7482 + $0xc] sm:$0xff]
        %v7486 = vld [vmem:[%s7482 + $0x14] sm:$0xf]
        %v7487 = vld [vmem:[%s7482 + $0x18] sm:$0xff]
        %v7488 = vld [vmem:[%s7482 + $0x20] sm:$0xf]
        %v7489 = vld [vmem:[%s7482 + $0x24] sm:$0xff]
        %v7490 = vld [vmem:[%s7482 + $0x2c] sm:$0xf]
        %v7491 = vld [vmem:[%s7482 + $0x30] sm:$0xff]
        %v7492 = vld [vmem:[%s7482 + $0x38] sm:$0xf]
        %v7493 = vld [vmem:[%s7482 + $0x3c] sm:$0xff]
        %v7494 = vld [vmem:[%s7482 + $0x44] sm:$0xf]
        %v7495 = vld [vmem:[%s7482 + $0x48] sm:$0xff]
        %v7496 = vld [vmem:[%s7482 + $0x50] sm:$0xf]
        %v7497 = vld [vmem:[%s7482 + $0x54] sm:$0xff]
        %v7498 = vld [vmem:[%s7482 + $0x5c] sm:$0xf]
        %v7499 = vld [vmem:[%s7482 + $0x60] sm:$0xff]
        %v7500 = vld [vmem:[%s7482 + $0x68] sm:$0xf]
        %v7501 = vld [vmem:[%s7482 + $0x6c] sm:$0xff]
        %v7502 = vld [vmem:[%s7482 + $0x74] sm:$0xf]
        %v7503 = vld [vmem:[%s7482 + $0x78] sm:$0xff]
        %v7504 = vld [vmem:[%s7482 + $0x80] sm:$0xf]
        %v7505 = vld [vmem:[%s7482 + $0x84] sm:$0xff]
        %v7506 = vld [vmem:[%s7482 + $0x8c] sm:$0xf]
        %v7507 = vld [vmem:[%s7482 + $0x90] sm:$0xff]
        %v7508 = vld [vmem:[%s7482 + $0x98] sm:$0xf]
        %v7509 = vld [vmem:[%s7482 + $0x9c] sm:$0xff]
        %v7510 = vld [vmem:[%s7482 + $0xa4] sm:$0xf]
        %v7511 = vld [vmem:[%s7482 + $0xa8] sm:$0xff]
        %v7512 = vld [vmem:[%s7482 + $0xb0] sm:$0xf]
        %v7513 = vld [vmem:[%s7482 + $0xb4] sm:$0xff]
        %v7514 = vld [vmem:[%s7482 + $0xbc] sm:$0xf]
        %v7515 = vld [vmem:[%s5819] sm:$0xf]
        %v7516 = vld [vmem:[%s5819 + $0x4] sm:$0xf]
        %v7517 = vld [vmem:[%s5819 + $0x8] sm:$0xf]
        %v7518 = vld [vmem:[%s5819 + $0xc] sm:$0xf]
        %v7519 = vld [vmem:[%s5819 + $0x10] sm:$0xf]
        %v7520 = vld [vmem:[%s5819 + $0x14] sm:$0xf]
        %v7521 = vld [vmem:[%s5819 + $0x18] sm:$0xf]
        %v7522 = vld [vmem:[%s5819 + $0x1c] sm:$0xf]
        %v7523 = vld [vmem:[%s5819 + $0x20] sm:$0xf]
        %v7524 = vld [vmem:[%s5819 + $0x24] sm:$0xf]
        %v7525 = vld [vmem:[%s5819 + $0x28] sm:$0xf]
        %v7526 = vld [vmem:[%s5819 + $0x2c] sm:$0xf]
        %v7527 = vld [vmem:[%s5819 + $0x30] sm:$0xf]
        %v7528 = vld [vmem:[%s5819 + $0x34] sm:$0xf]
        %v7529 = vld [vmem:[%s5819 + $0x38] sm:$0xf]
        %v7530 = vld [vmem:[%s5819 + $0x3c] sm:$0xf]
        %v7531 = vld [vmem:[%s5819 + $0x40] sm:$0xf]
        %v7532 = vld [vmem:[%s5819 + $0x44] sm:$0xf]
        %v7533 = vld [vmem:[%s5819 + $0x48] sm:$0xf]
        %v7534 = vld [vmem:[%s5819 + $0x4c] sm:$0xf]
        %v7535 = vld [vmem:[%s5819 + $0x50] sm:$0xf]
        %v7536 = vld [vmem:[%s5819 + $0x54] sm:$0xf]
        %v7537 = vld [vmem:[%s5819 + $0x58] sm:$0xf]
        %v7538 = vld [vmem:[%s5819 + $0x5c] sm:$0xf]
        %v7539 = vld [vmem:[%s5819 + $0x60] sm:$0xf]
        %v7540 = vld [vmem:[%s5819 + $0x64] sm:$0xf]
        %v7541 = vld [vmem:[%s5819 + $0x68] sm:$0xf]
        %v7542 = vld [vmem:[%s5819 + $0x6c] sm:$0xf]
        %v7543 = vld [vmem:[%s5819 + $0x70] sm:$0xf]
        %v7544 = vld [vmem:[%s5819 + $0x74] sm:$0xf]
        %v7545 = vld [vmem:[%s5819 + $0x78] sm:$0xf]
        %v7546 = vld [vmem:[%s5819 + $0x7c] sm:$0xf]
        %v7547 = vld [vmem:[%s5819 + $0x80] sm:$0xf]
        %v7548 = vld [vmem:[%s5819 + $0x84] sm:$0xf]
        %v7549 = vld [vmem:[%s5819 + $0x88] sm:$0xf]
        %v7550 = vld [vmem:[%s5819 + $0x8c] sm:$0xf]
        %v7551 = vld [vmem:[%s5819 + $0x90] sm:$0xf]
        %v7552 = vld [vmem:[%s5819 + $0x94] sm:$0xf]
        %v7553 = vld [vmem:[%s5819 + $0x98] sm:$0xf]
        %v7554 = vld [vmem:[%s5819 + $0x9c] sm:$0xf]
        %v7555 = vld [vmem:[%s5819 + $0xa0] sm:$0xf]
        %v7556 = vld [vmem:[%s5819 + $0xa4] sm:$0xf]
        %v7557 = vld [vmem:[%s5819 + $0xa8] sm:$0xf]
        %v7558 = vld [vmem:[%s5819 + $0xac] sm:$0xf]
        %v7559 = vld [vmem:[%s5819 + $0xb0] sm:$0xf]
        %v7560 = vld [vmem:[%s5819 + $0xb4] sm:$0xf]
        %v7561 = vld [vmem:[%s5819 + $0xb8] sm:$0xf]
        %v7562 = vld [vmem:[%s5819 + $0xbc] sm:$0xf]
        %v7595 = vunpack.c.l.b16 %v7483
        %v7596 = vunpack.c.h.b16 %v7483
        %v7597 = vunpack.c.l.b16 %v7484
        %v7598 = vunpack.c.l.b16 %v7485
        %v7599 = vunpack.c.h.b16 %v7485
        %v7600 = vunpack.c.l.b16 %v7486
        %v7601 = vunpack.c.l.b16 %v7487
        %v7602 = vunpack.c.h.b16 %v7487
        %v7603 = vunpack.c.l.b16 %v7488
        %v7604 = vunpack.c.l.b16 %v7489
        %v7605 = vunpack.c.h.b16 %v7489
        %v7606 = vunpack.c.l.b16 %v7490
        %v7607 = vunpack.c.l.b16 %v7491
        %v7608 = vunpack.c.h.b16 %v7491
        %v7609 = vunpack.c.l.b16 %v7492
        %v7610 = vunpack.c.l.b16 %v7493
        %v7611 = vunpack.c.h.b16 %v7493
        %v7612 = vunpack.c.l.b16 %v7494
        %v7613 = vunpack.c.l.b16 %v7495
        %v7614 = vunpack.c.h.b16 %v7495
        %v7615 = vunpack.c.l.b16 %v7496
        %v7616 = vunpack.c.l.b16 %v7497
        %v7617 = vunpack.c.h.b16 %v7497
        %v7618 = vunpack.c.l.b16 %v7498
        %v7619 = vunpack.c.l.b16 %v7499
        %v7620 = vunpack.c.h.b16 %v7499
        %v7621 = vunpack.c.l.b16 %v7500
        %v7622 = vunpack.c.l.b16 %v7501
        %v7623 = vunpack.c.h.b16 %v7501
        %v7624 = vunpack.c.l.b16 %v7502
        %v7625 = vunpack.c.l.b16 %v7503
        %v7626 = vunpack.c.h.b16 %v7503
        %v7627 = vunpack.c.l.b16 %v7504
        %v7628 = vunpack.c.l.b16 %v7505
        %v7629 = vunpack.c.h.b16 %v7505
        %v7630 = vunpack.c.l.b16 %v7506
        %v7631 = vunpack.c.l.b16 %v7507
        %v7632 = vunpack.c.h.b16 %v7507
        %v7633 = vunpack.c.l.b16 %v7508
        %v7634 = vunpack.c.l.b16 %v7509
        %v7635 = vunpack.c.h.b16 %v7509
        %v7636 = vunpack.c.l.b16 %v7510
        %v7637 = vunpack.c.l.b16 %v7511
        %v7638 = vunpack.c.h.b16 %v7511
        %v7639 = vunpack.c.l.b16 %v7512
        %v7640 = vunpack.c.l.b16 %v7513
        %v7641 = vunpack.c.h.b16 %v7513
        %v7642 = vunpack.c.l.b16 %v7514
        %v7643 = vpack.c.b16 %v7598, %v7595
        %v7644 = vpack.c.b16 %v7599, %v7596
        %v7645 = vpack.c.b16 %v7600, %v7597
        %v7646 = vpack.c.b16 %v7604, %v7601
        %v7647 = vpack.c.b16 %v7605, %v7602
        %v7648 = vpack.c.b16 %v7606, %v7603
        %v7649 = vpack.c.b16 %v7610, %v7607
        %v7650 = vpack.c.b16 %v7611, %v7608
        %v7651 = vpack.c.b16 %v7612, %v7609
        %v7652 = vpack.c.b16 %v7616, %v7613
        %v7653 = vpack.c.b16 %v7617, %v7614
        %v7654 = vpack.c.b16 %v7618, %v7615
        %v7655 = vpack.c.b16 %v7622, %v7619
        %v7656 = vpack.c.b16 %v7623, %v7620
        %v7657 = vpack.c.b16 %v7624, %v7621
        %v7658 = vpack.c.b16 %v7628, %v7625
        %v7659 = vpack.c.b16 %v7629, %v7626
        %v7660 = vpack.c.b16 %v7630, %v7627
        %v7661 = vpack.c.b16 %v7634, %v7631
        %v7662 = vpack.c.b16 %v7635, %v7632
        %v7663 = vpack.c.b16 %v7636, %v7633
        %v7664 = vpack.c.b16 %v7640, %v7637
        %v7665 = vpack.c.b16 %v7641, %v7638
        %v7666 = vpack.c.b16 %v7642, %v7639
        %v7739 = vunpack.c.l.b16 %v7515
        %v7740 = vunpack.c.l.b16 %v7516
        %v7741 = vunpack.c.l.b16 %v7517
        %v7742 = vunpack.c.l.b16 %v7518
        %v7743 = vunpack.c.l.b16 %v7519
        %v7744 = vunpack.c.l.b16 %v7520
        %v7745 = vunpack.c.l.b16 %v7521
        %v7746 = vunpack.c.l.b16 %v7522
        %v7747 = vunpack.c.l.b16 %v7523
        %v7748 = vunpack.c.l.b16 %v7524
        %v7749 = vunpack.c.l.b16 %v7525
        %v7750 = vunpack.c.l.b16 %v7526
        %v7751 = vunpack.c.l.b16 %v7527
        %v7752 = vunpack.c.l.b16 %v7528
        %v7753 = vunpack.c.l.b16 %v7529
        %v7754 = vunpack.c.l.b16 %v7530
        %v7755 = vunpack.c.l.b16 %v7531
        %v7756 = vunpack.c.l.b16 %v7532
        %v7757 = vunpack.c.l.b16 %v7533
        %v7758 = vunpack.c.l.b16 %v7534
        %v7759 = vunpack.c.l.b16 %v7535
        %v7760 = vunpack.c.l.b16 %v7536
        %v7761 = vunpack.c.l.b16 %v7537
        %v7762 = vunpack.c.l.b16 %v7538
        %v7763 = vunpack.c.l.b16 %v7539
        %v7764 = vunpack.c.l.b16 %v7540
        %v7765 = vunpack.c.l.b16 %v7541
        %v7766 = vunpack.c.l.b16 %v7542
        %v7767 = vunpack.c.l.b16 %v7543
        %v7768 = vunpack.c.l.b16 %v7544
        %v7769 = vunpack.c.l.b16 %v7545
        %v7770 = vunpack.c.l.b16 %v7546
        %v7771 = vunpack.c.l.b16 %v7547
        %v7772 = vunpack.c.l.b16 %v7548
        %v7773 = vunpack.c.l.b16 %v7549
        %v7774 = vunpack.c.l.b16 %v7550
        %v7775 = vunpack.c.l.b16 %v7551
        %v7776 = vunpack.c.l.b16 %v7552
        %v7777 = vunpack.c.l.b16 %v7553
        %v7778 = vunpack.c.l.b16 %v7554
        %v7779 = vunpack.c.l.b16 %v7555
        %v7780 = vunpack.c.l.b16 %v7556
        %v7781 = vunpack.c.l.b16 %v7557
        %v7782 = vunpack.c.l.b16 %v7558
        %v7783 = vunpack.c.l.b16 %v7559
        %v7784 = vunpack.c.l.b16 %v7560
        %v7785 = vunpack.c.l.b16 %v7561
        %v7786 = vunpack.c.l.b16 %v7562
        %v7787 = vpack.c.b16 %v7740, %v7739
        %v7788 = vpack.c.b16 %v7742, %v7741
        %v7789 = vpack.c.b16 %v7744, %v7743
        %v7790 = vpack.c.b16 %v7746, %v7745
        %v7791 = vpack.c.b16 %v7748, %v7747
        %v7792 = vpack.c.b16 %v7750, %v7749
        %v7793 = vpack.c.b16 %v7752, %v7751
        %v7794 = vpack.c.b16 %v7754, %v7753
        %v7795 = vpack.c.b16 %v7756, %v7755
        %v7796 = vpack.c.b16 %v7758, %v7757
        %v7797 = vpack.c.b16 %v7760, %v7759
        %v7798 = vpack.c.b16 %v7762, %v7761
        %v7799 = vpack.c.b16 %v7764, %v7763
        %v7800 = vpack.c.b16 %v7766, %v7765
        %v7801 = vpack.c.b16 %v7768, %v7767
        %v7802 = vpack.c.b16 %v7770, %v7769
        %v7803 = vpack.c.b16 %v7772, %v7771
        %v7804 = vpack.c.b16 %v7774, %v7773
        %v7805 = vpack.c.b16 %v7776, %v7775
        %v7806 = vpack.c.b16 %v7778, %v7777
        %v7807 = vpack.c.b16 %v7780, %v7779
        %v7808 = vpack.c.b16 %v7782, %v7781
        %v7809 = vpack.c.b16 %v7784, %v7783
        %v7810 = vpack.c.b16 %v7786, %v7785
        %7835 = vmatpush.bf16.msra.mxu0 %v7794
        %7836 = vmatpush.bf16.msra.mxu0 %v7793
        %7837 = vmatpush.bf16.msra.mxu0 %v7792
        %7838 = vmatpush.bf16.msra.mxu0 %v7791
        %7839 = vmatpush.bf16.msra.mxu0 %v7790
        %7840 = vmatpush.bf16.msra.mxu0 %v7789
        %7841 = vmatpush.bf16.msra.mxu0 %v7788
        %7842 = vmatpush.bf16.msra.mxu0 %v7787
        %7843 = vmatmul.bf16.gmra.mxu0 %v7643
        %v7844 = vpop.f32.mrf.mxu0
        %v7845 = vadd.f32 0.0, %v7844
        %v7846 = vpop.f32.mrf.mxu0
        %v7847 = vadd.f32 0.0, %v7846
        %7848 = vmatmul.bf16.gmra.mxu0 %v7646
        %v7849 = vpop.f32.mrf.mxu0
        %v7850 = vadd.f32 0.0, %v7849
        %v7851 = vpop.f32.mrf.mxu0
        %v7852 = vadd.f32 0.0, %v7851
        %7853 = vmatmul.bf16.gmra.mxu0 %v7649
        %v7854 = vpop.f32.mrf.mxu0
        %v7855 = vadd.f32 0.0, %v7854
        %v7856 = vpop.f32.mrf.mxu0
        %v7857 = vadd.f32 0.0, %v7856
        %7858 = vmatmul.bf16.gmra.mxu0 %v7652
        %v7859 = vpop.f32.mrf.mxu0
        %v7860 = vadd.f32 0.0, %v7859
        %v7861 = vpop.f32.mrf.mxu0
        %v7862 = vadd.f32 0.0, %v7861
        %7863 = vmatmul.bf16.gmra.mxu0 %v7655
        %v7864 = vpop.f32.mrf.mxu0
        %v7865 = vadd.f32 0.0, %v7864
        %v7866 = vpop.f32.mrf.mxu0
        %v7867 = vadd.f32 0.0, %v7866
        %7868 = vmatmul.bf16.gmra.mxu0 %v7658
        %v7869 = vpop.f32.mrf.mxu0
        %v7870 = vadd.f32 0.0, %v7869
        %v7871 = vpop.f32.mrf.mxu0
        %v7872 = vadd.f32 0.0, %v7871
        %7873 = vmatmul.bf16.gmra.mxu0 %v7661
        %v7874 = vpop.f32.mrf.mxu0
        %v7875 = vadd.f32 0.0, %v7874
        %v7876 = vpop.f32.mrf.mxu0
        %v7877 = vadd.f32 0.0, %v7876
        %7878 = vmatmul.bf16.gmra.mxu0 %v7664
        %v7879 = vpop.f32.mrf.mxu0
        %v7880 = vadd.f32 0.0, %v7879
        %v7881 = vpop.f32.mrf.mxu0
        %v7882 = vadd.f32 0.0, %v7881
        %7883 = vdwg.mxu0
        %7884 = vmatpush.bf16.msra.mxu0 %v7802
        %7885 = vmatpush.bf16.msra.mxu0 %v7801
        %7886 = vmatpush.bf16.msra.mxu0 %v7800
        %7887 = vmatpush.bf16.msra.mxu0 %v7799
        %7888 = vmatpush.bf16.msra.mxu0 %v7798
        %7889 = vmatpush.bf16.msra.mxu0 %v7797
        %7890 = vmatpush.bf16.msra.mxu0 %v7796
        %7891 = vmatpush.bf16.msra.mxu0 %v7795
        %7892 = vmatmul.bf16.gmra.mxu0 %v7644
        %v7893 = vpop.f32.mrf.mxu0
        %v7894 = vadd.f32 %v7845, %v7893
        %v7895 = vpop.f32.mrf.mxu0
        %v7896 = vadd.f32 %v7847, %v7895
        %7897 = vmatmul.bf16.gmra.mxu0 %v7647
        %v7898 = vpop.f32.mrf.mxu0
        %v7899 = vadd.f32 %v7850, %v7898
        %v7900 = vpop.f32.mrf.mxu0
        %v7901 = vadd.f32 %v7852, %v7900
        %7902 = vmatmul.bf16.gmra.mxu0 %v7650
        %v7903 = vpop.f32.mrf.mxu0
        %v7904 = vadd.f32 %v7855, %v7903
        %v7905 = vpop.f32.mrf.mxu0
        %v7906 = vadd.f32 %v7857, %v7905
        %7907 = vmatmul.bf16.gmra.mxu0 %v7653
        %v7908 = vpop.f32.mrf.mxu0
        %v7909 = vadd.f32 %v7860, %v7908
        %v7910 = vpop.f32.mrf.mxu0
        %v7911 = vadd.f32 %v7862, %v7910
        %7912 = vmatmul.bf16.gmra.mxu0 %v7656
        %v7913 = vpop.f32.mrf.mxu0
        %v7914 = vadd.f32 %v7865, %v7913
        %v7915 = vpop.f32.mrf.mxu0
        %v7916 = vadd.f32 %v7867, %v7915
        %7917 = vmatmul.bf16.gmra.mxu0 %v7659
        %v7918 = vpop.f32.mrf.mxu0
        %v7919 = vadd.f32 %v7870, %v7918
        %v7920 = vpop.f32.mrf.mxu0
        %v7921 = vadd.f32 %v7872, %v7920
        %7922 = vmatmul.bf16.gmra.mxu0 %v7662
        %v7923 = vpop.f32.mrf.mxu0
        %v7924 = vadd.f32 %v7875, %v7923
        %v7925 = vpop.f32.mrf.mxu0
        %v7926 = vadd.f32 %v7877, %v7925
        %7927 = vmatmul.bf16.gmra.mxu0 %v7665
        %v7928 = vpop.f32.mrf.mxu0
        %v7929 = vadd.f32 %v7880, %v7928
        %v7930 = vpop.f32.mrf.mxu0
        %v7931 = vadd.f32 %v7882, %v7930
        %7932 = vdwg.mxu0
        %7933 = vmatpush.bf16.msra.mxu0 %v7810
        %7934 = vmatpush.bf16.msra.mxu0 %v7809
        %7935 = vmatpush.bf16.msra.mxu0 %v7808
        %7936 = vmatpush.bf16.msra.mxu0 %v7807
        %7937 = vmatpush.bf16.msra.mxu0 %v7806
        %7938 = vmatpush.bf16.msra.mxu0 %v7805
        %7939 = vmatpush.bf16.msra.mxu0 %v7804
        %7940 = vmatpush.bf16.msra.mxu0 %v7803
        %7941 = vmatmul.bf16.gmra.mxu0 %v7645
        %v7942 = vpop.f32.mrf.mxu0
        %v7943 = vadd.f32 %v7894, %v7942
        %v7944 = vpop.f32.mrf.mxu0
        %v7945 = vadd.f32 %v7896, %v7944
        %7946 = vmatmul.bf16.gmra.mxu0 %v7648
        %v7947 = vpop.f32.mrf.mxu0
        %v7948 = vadd.f32 %v7899, %v7947
        %v7949 = vpop.f32.mrf.mxu0
        %v7950 = vadd.f32 %v7901, %v7949
        %7951 = vmatmul.bf16.gmra.mxu0 %v7651
        %v7952 = vpop.f32.mrf.mxu0
        %v7953 = vadd.f32 %v7904, %v7952
        %v7954 = vpop.f32.mrf.mxu0
        %v7955 = vadd.f32 %v7906, %v7954
        %7956 = vmatmul.bf16.gmra.mxu0 %v7654
        %v7957 = vpop.f32.mrf.mxu0
        %v7958 = vadd.f32 %v7909, %v7957
        %v7959 = vpop.f32.mrf.mxu0
        %v7960 = vadd.f32 %v7911, %v7959
        %7961 = vmatmul.bf16.gmra.mxu0 %v7657
        %v7962 = vpop.f32.mrf.mxu0
        %v7963 = vadd.f32 %v7914, %v7962
        %v7964 = vpop.f32.mrf.mxu0
        %v7965 = vadd.f32 %v7916, %v7964
        %7966 = vmatmul.bf16.gmra.mxu0 %v7660
        %v7967 = vpop.f32.mrf.mxu0
        %v7968 = vadd.f32 %v7919, %v7967
        %v7969 = vpop.f32.mrf.mxu0
        %v7970 = vadd.f32 %v7921, %v7969
        %7971 = vmatmul.bf16.gmra.mxu0 %v7663
        %v7972 = vpop.f32.mrf.mxu0
        %v7973 = vadd.f32 %v7924, %v7972
        %v7974 = vpop.f32.mrf.mxu0
        %v7975 = vadd.f32 %v7926, %v7974
        %7976 = vmatmul.bf16.gmra.mxu0 %v7666
        %v7977 = vpop.f32.mrf.mxu0
        %v7978 = vadd.f32 %v7929, %v7977
        %v7979 = vpop.f32.mrf.mxu0
        %v7980 = vadd.f32 %v7931, %v7979
        %7981 = vdwg.mxu0
        %v7982 = vadd.f32 %v7443, %v7943
        %v7983 = vadd.f32 %v7445, %v7945
        %v7984 = vadd.f32 %v7448, %v7948
        %v7985 = vadd.f32 %v7450, %v7950
        %v7986 = vadd.f32 %v7453, %v7953
        %v7987 = vadd.f32 %v7455, %v7955
        %v7988 = vadd.f32 %v7458, %v7958
        %v7989 = vadd.f32 %v7460, %v7960
        %v7990 = vadd.f32 %v7463, %v7963
        %v7991 = vadd.f32 %v7465, %v7965
        %v7992 = vadd.f32 %v7468, %v7968
        %v7993 = vadd.f32 %v7470, %v7970
        %v7994 = vadd.f32 %v7473, %v7973
        %v7995 = vadd.f32 %v7475, %v7975
        %v7996 = vadd.f32 %v7478, %v7978
        %v7997 = vadd.f32 %v7480, %v7980
        %v7998 = vld [vmem:[%s4] sm:$0x1]
        %v8000 = vperm.slane %v7998, 0
        %v8002 = vadd.f32 %v7982, %v8000
        %v8003 = vadd.f32 %v7983, %v8000
        %v8004 = vadd.f32 %v7984, %v8000
        %v8005 = vadd.f32 %v7985, %v8000
        %v8006 = vadd.f32 %v7986, %v8000
        %v8007 = vadd.f32 %v7987, %v8000
        %v8008 = vadd.f32 %v7988, %v8000
        %v8009 = vadd.f32 %v7989, %v8000
        %v8010 = vadd.f32 %v7990, %v8000
        %v8011 = vadd.f32 %v7991, %v8000
        %v8012 = vadd.f32 %v7992, %v8000
        %v8013 = vadd.f32 %v7993, %v8000
        %v8014 = vadd.f32 %v7994, %v8000
        %v8015 = vadd.f32 %v7995, %v8000
        %v8016 = vadd.f32 %v7996, %v8000
        %v8017 = vadd.f32 %v7997, %v8000
        %v8018 = vsub.f32 0.0, %v8002
        %v8019 = vsub.f32 0.0, %v8003
        %v8020 = vsub.f32 0.0, %v8004
        %v8021 = vsub.f32 0.0, %v8005
        %v8022 = vsub.f32 0.0, %v8006
        %v8023 = vsub.f32 0.0, %v8007
        %v8024 = vsub.f32 0.0, %v8008
        %v8025 = vsub.f32 0.0, %v8009
        %v8026 = vsub.f32 0.0, %v8010
        %v8027 = vsub.f32 0.0, %v8011
        %v8028 = vsub.f32 0.0, %v8012
        %v8029 = vsub.f32 0.0, %v8013
        %v8030 = vsub.f32 0.0, %v8014
        %v8031 = vsub.f32 0.0, %v8015
        %v8032 = vsub.f32 0.0, %v8016
        %v8033 = vsub.f32 0.0, %v8017
        %v8034 = vmul.f32 %v8018, 1.442695
        %v8035 = vpow.pop %v8034
        %v8036 = vmul.f32 %v8019, 1.442695
        %v8037 = vpow.pop %v8036
        %v8038 = vmul.f32 %v8020, 1.442695
        %v8039 = vpow.pop %v8038
        %v8040 = vmul.f32 %v8021, 1.442695
        %v8041 = vpow.pop %v8040
        %v8042 = vmul.f32 %v8022, 1.442695
        %v8043 = vpow.pop %v8042
        %v8044 = vmul.f32 %v8023, 1.442695
        %v8045 = vpow.pop %v8044
        %v8046 = vmul.f32 %v8024, 1.442695
        %v8047 = vpow.pop %v8046
        %v8048 = vmul.f32 %v8025, 1.442695
        %v8049 = vpow.pop %v8048
        %v8050 = vmul.f32 %v8026, 1.442695
        %v8051 = vpow.pop %v8050
        %v8052 = vmul.f32 %v8027, 1.442695
        %v8053 = vpow.pop %v8052
        %v8054 = vmul.f32 %v8028, 1.442695
        %v8055 = vpow.pop %v8054
        %v8056 = vmul.f32 %v8029, 1.442695
        %v8057 = vpow.pop %v8056
        %v8058 = vmul.f32 %v8030, 1.442695
        %v8059 = vpow.pop %v8058
        %v8060 = vmul.f32 %v8031, 1.442695
        %v8061 = vpow.pop %v8060
        %v8062 = vmul.f32 %v8032, 1.442695
        %v8063 = vpow.pop %v8062
        %v8064 = vmul.f32 %v8033, 1.442695
        %v8065 = vpow.pop %v8064
        %v8066 = vadd.f32 %v8035, 1.0
        %v8067 = vadd.f32 %v8037, 1.0
        %v8068 = vadd.f32 %v8039, 1.0
        %v8069 = vadd.f32 %v8041, 1.0
        %v8070 = vadd.f32 %v8043, 1.0
        %v8071 = vadd.f32 %v8045, 1.0
        %v8072 = vadd.f32 %v8047, 1.0
        %v8073 = vadd.f32 %v8049, 1.0
        %v8074 = vadd.f32 %v8051, 1.0
        %v8075 = vadd.f32 %v8053, 1.0
        %v8076 = vadd.f32 %v8055, 1.0
        %v8077 = vadd.f32 %v8057, 1.0
        %v8078 = vadd.f32 %v8059, 1.0
        %v8079 = vadd.f32 %v8061, 1.0
        %v8080 = vadd.f32 %v8063, 1.0
        %v8081 = vadd.f32 %v8065, 1.0
        %v8082 = vrcp.pop %v8066
        %v8083 = vrcp.pop %v8067
        %v8084 = vrcp.pop %v8068
        %v8085 = vrcp.pop %v8069
        %v8086 = vrcp.pop %v8070
        %v8087 = vrcp.pop %v8071
        %v8088 = vrcp.pop %v8072
        %v8089 = vrcp.pop %v8073
        %v8090 = vrcp.pop %v8074
        %v8091 = vrcp.pop %v8075
        %v8092 = vrcp.pop %v8076
        %v8093 = vrcp.pop %v8077
        %v8094 = vrcp.pop %v8078
        %v8095 = vrcp.pop %v8079
        %v8096 = vrcp.pop %v8080
        %v8097 = vrcp.pop %v8081
        %v8098 = vmul.f32 %v8002, %v8082
        %v8099 = vmul.f32 %v8003, %v8083
        %v8100 = vmul.f32 %v8004, %v8084
        %v8101 = vmul.f32 %v8005, %v8085
        %v8102 = vmul.f32 %v8006, %v8086
        %v8103 = vmul.f32 %v8007, %v8087
        %v8104 = vmul.f32 %v8008, %v8088
        %v8105 = vmul.f32 %v8009, %v8089
        %v8106 = vmul.f32 %v8010, %v8090
        %v8107 = vmul.f32 %v8011, %v8091
        %v8108 = vmul.f32 %v8012, %v8092
        %v8109 = vmul.f32 %v8013, %v8093
        %v8110 = vmul.f32 %v8014, %v8094
        %v8111 = vmul.f32 %v8015, %v8095
        %v8112 = vmul.f32 %v8016, %v8096
        %v8113 = vmul.f32 %v8017, %v8097
        %v8114 = vld [vmem:[%s608] sm:$0xf]
        %v8115 = vld [vmem:[%s608 + $0x4] sm:$0xf]
        %v8116 = vld [vmem:[%s608 + $0x8] sm:$0xf]
        %v8117 = vld [vmem:[%s608 + $0xc] sm:$0xf]
        %v8118 = vld [vmem:[%s608 + $0x10] sm:$0xf]
        %v8119 = vld [vmem:[%s608 + $0x14] sm:$0xf]
        %v8120 = vld [vmem:[%s608 + $0x18] sm:$0xf]
        %v8121 = vld [vmem:[%s608 + $0x1c] sm:$0xf]
        %v8122 = vld [vmem:[%s608 + $0x20] sm:$0xf]
        %v8123 = vld [vmem:[%s608 + $0x24] sm:$0xf]
        %v8124 = vld [vmem:[%s608 + $0x28] sm:$0xf]
        %v8125 = vld [vmem:[%s608 + $0x2c] sm:$0xf]
        %v8126 = vld [vmem:[%s608 + $0x30] sm:$0xf]
        %v8127 = vld [vmem:[%s608 + $0x34] sm:$0xf]
        %v8128 = vld [vmem:[%s608 + $0x38] sm:$0xf]
        %v8129 = vld [vmem:[%s608 + $0x3c] sm:$0xf]
        %v8130 = vunpack.c.l.bf16 %v8114
        %v8131 = vunpack.c.l.bf16 %v8115
        %v8132 = vunpack.c.l.bf16 %v8116
        %v8133 = vunpack.c.l.bf16 %v8117
        %v8134 = vunpack.c.l.bf16 %v8118
        %v8135 = vunpack.c.l.bf16 %v8119
        %v8136 = vunpack.c.l.bf16 %v8120
        %v8137 = vunpack.c.l.bf16 %v8121
        %v8138 = vunpack.c.l.bf16 %v8122
        %v8139 = vunpack.c.l.bf16 %v8123
        %v8140 = vunpack.c.l.bf16 %v8124
        %v8141 = vunpack.c.l.bf16 %v8125
        %v8142 = vunpack.c.l.bf16 %v8126
        %v8143 = vunpack.c.l.bf16 %v8127
        %v8144 = vunpack.c.l.bf16 %v8128
        %v8145 = vunpack.c.l.bf16 %v8129
        %v8146 = vadd.f32 %v8098, %v8130
        %v8147 = vadd.f32 %v8099, %v8131
        %v8148 = vadd.f32 %v8100, %v8132
        %v8149 = vadd.f32 %v8101, %v8133
        %v8150 = vadd.f32 %v8102, %v8134
        %v8151 = vadd.f32 %v8103, %v8135
        %v8152 = vadd.f32 %v8104, %v8136
        %v8153 = vadd.f32 %v8105, %v8137
        %v8154 = vadd.f32 %v8106, %v8138
        %v8155 = vadd.f32 %v8107, %v8139
        %v8156 = vadd.f32 %v8108, %v8140
        %v8157 = vadd.f32 %v8109, %v8141
        %v8158 = vadd.f32 %v8110, %v8142
        %v8159 = vadd.f32 %v8111, %v8143
        %v8160 = vadd.f32 %v8112, %v8144
        %v8161 = vadd.f32 %v8113, %v8145
        %s8162 = scalar_lea.vmem %s277, 128 [#allocation10]
        %8163 = vst [vmem:[%s8162] sm:$0xff] %v8146
        %8164 = vst [vmem:[%s8162 + $0x8] sm:$0xff] %v8147
        %8165 = vst [vmem:[%s8162 + $0x10] sm:$0xff] %v8148
        %8166 = vst [vmem:[%s8162 + $0x18] sm:$0xff] %v8149
        %8167 = vst [vmem:[%s8162 + $0x20] sm:$0xff] %v8150
        %8168 = vst [vmem:[%s8162 + $0x28] sm:$0xff] %v8151
        %8169 = vst [vmem:[%s8162 + $0x30] sm:$0xff] %v8152
        %8170 = vst [vmem:[%s8162 + $0x38] sm:$0xff] %v8153
        %8171 = vst [vmem:[%s8162 + $0x40] sm:$0xff] %v8154
        %8172 = vst [vmem:[%s8162 + $0x48] sm:$0xff] %v8155
        %8173 = vst [vmem:[%s8162 + $0x50] sm:$0xff] %v8156
        %8174 = vst [vmem:[%s8162 + $0x58] sm:$0xff] %v8157
        %8175 = vst [vmem:[%s8162 + $0x60] sm:$0xff] %v8158
        %8176 = vst [vmem:[%s8162 + $0x68] sm:$0xff] %v8159
        %8177 = vst [vmem:[%s8162 + $0x70] sm:$0xff] %v8160
        %8178 = vst [vmem:[%s8162 + $0x78] sm:$0xff] %v8161
        %s8179 = sand.u32 %s141, 1
        %s8180 = scalar_lea.sflag [#allocation6], %s8179
        %s8181 = sand.u32 %s141, 1
        %s8182 = smul.addr %s8181, 256
        %s8183 = scalar_lea.vmem [#allocation10], %s8182
        // Predicated region
        $region53: #{tpu_custom_call.1} parent=39 // pred_check
          %p8184 = pneg %p151
        $region54: #{tpu_custom_call.1} parent=39 // pred_check_branch
          %8186 = sbr.rel (%p8184) target = $region56
        $region55: #{tpu_custom_call.1} parent=39 // pred_region
          %8188 = vsyncadd %s8180, 0
          %s8189 = smul.addr %s23, 32
          %s8190 = smul.addr %s8189, 8
          %s8191 = scalar_lea.hbm %s5, %s8190
          %s8192 = sshll.u32 %s8183, 4
          %s8193 = int_to_ptr.vmem [resolvable:$true] %s8192
          %s8194 = sshll.u32 %s8191, 4
          %s8195 = int_to_ptr.hbm [resolvable:$true] %s8194
          %8200 = dma.vmem_to_hbm [thread:$0]  %s8193, 4096, %s8195, %s8180, 128, 128, 8
        $region56: #{tpu_custom_call.1} parent=39 // pred_fallthru
          _
      $region40: #{tpu_custom_call.1} parent=5 // pred_fallthru
        _
      %p8201 = scmp.le.s32.totalorder 2, %s18
      // Predicated region
      $region57: #{tpu_custom_call.1} parent=5 // pred_check
        %p8202 = pneg %p8201
      $region58: #{tpu_custom_call.1} parent=5 // pred_check_branch
        %8204 = sbr.rel (%p8202) target = $region60
      $region59: #{tpu_custom_call.1} parent=5 // pred_region
        %s8205 = ssub.s32 %s18, 2
        // Predicated region
        $region61: #{tpu_custom_call.1} parent=59 // pred_check
          %p8206 = pneg %p157
        $region62: #{tpu_custom_call.1} parent=59 // pred_check_branch
          %8208 = sbr.rel (%p8206) target = $region64
        $region63: #{tpu_custom_call.1} parent=59 // pred_region
          %s8209 = sand.u32 %s142, 1
          %s8210 = scalar_lea.sflag [#allocation6], %s8209
          %s8211 = sand.u32 %s142, 1
          %s8212 = smul.addr %s8211, 256
          %s8213 = scalar_lea.vmem [#allocation10], %s8212
          %8215 = dma.done %s8210, 4096
        $region64: #{tpu_custom_call.1} parent=59 // pred_fallthru
          _
      $region60: #{tpu_custom_call.1} parent=5 // pred_fallthru
        _
    $region6: #{tpu_custom_call.1} parent=1 // loop_footer
      %s22 = sadd.s32 1, %s18
    $region7: #{tpu_custom_call.1} parent=1 // loop_footer_branch
      %17 = sbr.rel target = $region3
    $region8: #{tpu_custom_call.1} parent=1 // loop_exit
      _
    %8216 = vsyncpa [#allocation5], 1
    %s8217 = scalar_lea.sflag [#allocation5], 1
    %8218 = vsyncpa %s8217, 1
    %8219 = vsyncpa [#allocation8], 1
    %8220 = vsyncpa [#allocation6], 1
    %s8221 = scalar_lea.sflag [#allocation6], 1
    %8222 = vsyncpa %s8221, 1

</llo_original>
